<compile_context>
chip_gen: v7x
topology: tpu7x:2x2x1
jax: 0.10.0
libtpu: 0.0.40
codegen_flags: <defaults>
</compile_context>

<pallas_src>
import functools

import jax
import jax.numpy as jnp
import numpy as np
from jax.experimental import pallas as pl
from jax.experimental.pallas import tpu as pltpu


# ----------------------------- Pallas kernel ---------------------------------

def _fused_kernel(x_ref, m_ref, wpre_ref, wptw_ref, wo1_ref, wo2_ref,
                  wm1_ref, wm2_ref, b_ref, out_ref,
                  *, Bb, P, N, C, H, OC, MH, MO):
    f32 = jnp.float32
    cdt = wpre_ref.dtype               # matmul-operand dtype (bf16)
    R = Bb * P * N                     # points handled by this program
    PL = Bb * P                        # polylines handled by this program

    # (P, Bb, N, C) -> (R, C): merge untiled leading dims into the sublane dim
    # (N % 8 == 0 => free vreg regrouping).  Rows are polyline-major: (p, b, n).
    x = x_ref[...].reshape(R, C)       # bf16
    m = m_ref[...].reshape(R, 1)       # f32 {0,1} point mask

    b_pre = b_ref[0:1, :H]
    b1 = b_ref[1:2, :H]
    b2 = b_ref[2:3, :H]
    b_o1 = b_ref[3:4, :H]
    b_o2 = b_ref[4:5, :OC]
    b_m1 = b_ref[5:6, :MH]
    b_m2 = b_ref[6:7, :MO]

    w1a = wptw_ref[0]                  # (H, H) rows 0:H of the (2H,H) mlps weight
    w1b = wptw_ref[1]                  # (H, H) rows H:2H
    w2 = wptw_ref[2]                   # (H, H)

    # pre_mlps: Linear(no bias) + BN(eval, folded) + ReLU; invalid points zeroed.
    h1 = jnp.maximum(
        jnp.dot(x, wpre_ref[...], preferred_element_type=f32) + b_pre, 0.0) * m   # (R,H) f32

    # Per-polyline max-pool over the N points (masked points contribute zeros).
    pooled = jnp.max(h1.reshape(PL, N, H), axis=1)                                 # (PL,H)

    # concat([h1, pooled]) @ W1 == h1 @ W1a + pooled @ W1b (split matmul, no concat);
    # the pooled term is added via an implicit sublane broadcast in 3-D shape.
    t = jnp.dot(h1.astype(cdt), w1a, preferred_element_type=f32)                   # (R,H)
    pt = jnp.dot(pooled.astype(cdt), w1b, preferred_element_type=f32)              # (PL,H)
    h2 = jnp.maximum((t + b1).reshape(PL, N, H) + pt[:, None, :], 0.0).reshape(R, H)

    h3 = jnp.maximum(
        jnp.dot(h2.astype(cdt), w2, preferred_element_type=f32) + b2, 0.0) * m     # (R,H)

    feat = jnp.max(h3.reshape(PL, N, H), axis=1)                                   # (PL,H)
    # Polylines with no valid point keep a zero output (PyTorch valid_mask path).
    valid = (jnp.max(m.reshape(PL, N, 1), axis=1) > 0.0).astype(f32)               # (PL,1)

    # out_mlps (shared weights, batched over all polylines of the block).
    o1 = jnp.maximum(
        jnp.dot(feat.astype(cdt), wo1_ref[...], preferred_element_type=f32) + b_o1, 0.0)
    o2 = (jnp.dot(o1.astype(cdt), wo2_ref[...], preferred_element_type=f32)
          + b_o2) * valid                                                          # (PL,OC)

    # Head MLP.  flat(Bb, P*OC) @ w_m1 == sum_p o2[p] @ w_m1r[p]: a batched-over-p
    # matmul against the host-reshaped (P, OC, MH) weight plus a leading-axis sum
    # (no flatten loop, no VMEM scratch, no M=1 MXU push).  Rows are polyline-major,
    # so (PL, OC) -> (P, Bb, OC) is a free regrouping (Bb % 8 == 0).
    o2p = o2.reshape(P, Bb, OC)
    hp = jnp.sum(jnp.einsum('pbo,pom->pbm', o2p.astype(cdt), wm1_ref[...],
                            preferred_element_type=f32), axis=0) + b_m1            # (Bb,MH)
    hh = jnp.maximum(hp, 0.0)
    out_ref[0] = jnp.dot(hh.astype(cdt), wm2_ref[...],
                         preferred_element_type=f32) + b_m2                        # (Bb,MO)


# ------------------------------ host wrapper ---------------------------------

def _const_spec(shape):
    if len(shape) == 2:
        return pl.BlockSpec(shape, lambda g: (0, 0))
    return pl.BlockSpec(shape, lambda g: (0, 0, 0))


@jax.jit
def mlp_with_polyline_encoder(polylines, polylines_mask, params):
    compute_dtype = jnp.bfloat16       # MXU operand dtype (accumulation stays f32)
    B, P, N, C = polylines.shape
    H = params["w_pre"].shape[1]
    OC = params["w_o2"].shape[1]
    MH = params["w_m1"].shape[1]
    MO = params["w_m2"].shape[1]

    Bb = 8                             # batch elements per grid step; multiple of 8 so
                                       # the (PL,OC)->(P,Bb,OC) regroup is free
    G = pl.cdiv(B, Bb)
    B_pad = G * Bb

    # Polyline-major layout (P, B, N, C): the kernel then only needs free leading-dim /
    # 8-aligned sublane regroups between the 2-D matmul layout and the batched head.
    x = jnp.transpose(polylines, (1, 0, 2, 3)).astype(compute_dtype)
    m = jnp.transpose(polylines_mask.astype(jnp.float32), (1, 0, 2))[..., None]
    if B_pad != B:
        x = jnp.pad(x, ((0, 0), (0, B_pad - B), (0, 0), (0, 0)))
        m = jnp.pad(m, ((0, 0), (0, B_pad - B), (0, 0), (0, 0)))

    # Pack small weights / biases into a few operands.
    w_ptw = jnp.stack([params["w1a"], params["w1b"], params["w2"]]).astype(compute_dtype)
    w_m1r = params["w_m1"].reshape(P, OC, MH).astype(compute_dtype)
    bw = max(H, OC, MH, MO)

    def _pad_bias(b):
        return jnp.pad(b, ((0, 0), (0, bw - b.shape[1])))

    biases = jnp.concatenate(
        [_pad_bias(params[k]) for k in ("b_pre", "b1", "b2", "b_o1", "b_o2", "b_m1", "b_m2")]
        + [jnp.zeros((1, bw), jnp.float32)], axis=0)                   # (8, bw) f32

    kernel = functools.partial(_fused_kernel, Bb=Bb, P=P, N=N, C=C, H=H, OC=OC, MH=MH, MO=MO)

    out = pl.pallas_call(
        kernel,
        out_shape=jax.ShapeDtypeStruct((G, Bb, MO), jnp.float32),
        grid_spec=pltpu.PrefetchScalarGridSpec(
            num_scalar_prefetch=0,
            grid=(G,),
            in_specs=[
                pl.BlockSpec((P, Bb, N, C), lambda g: (0, g, 0, 0)),   # points (polyline-major)
                pl.BlockSpec((P, Bb, N, 1), lambda g: (0, g, 0, 0)),   # point mask
                _const_spec((C, H)),        # w_pre (BN folded)
                _const_spec((3, H, H)),     # [w1a, w1b, w2]
                _const_spec((H, H)),        # w_o1
                _const_spec((H, OC)),       # w_o2
                _const_spec((P, OC, MH)),   # head w1, reshaped per polyline
                _const_spec((MH, MO)),      # head w2
                _const_spec((8, bw)),       # packed biases
            ],
            out_specs=pl.BlockSpec((1, Bb, MO), lambda g: (g, 0, 0)),
        ),
        compiler_params=pltpu.CompilerParams(dimension_semantics=("parallel",)),
    )(x, m,
      params["w_pre"].astype(compute_dtype), w_ptw,
      params["w_o1"].astype(compute_dtype), params["w_o2"].astype(compute_dtype),
      w_m1r, params["w_m2"].astype(compute_dtype), biases)

    out = out.reshape(B_pad, MO)[:B]
    # output.reshape(batch, num_polylines, -1)
    return out.reshape(B, P, MO // P)


# ----------------------- deterministic parameter setup -----------------------

def _kaiming(key, fan_in, fan_out):
    # nn.init.kaiming_normal_ (fan_in, gain=sqrt(2)); stored as (in, out).
    return jax.random.normal(key, (fan_in, fan_out), dtype=jnp.float32) * np.sqrt(2.0 / fan_in)


def build_params(key, in_channels, hidden_dim, out_channels, num_polylines,
                 mlp_hidden_dim, mlp_out_dim):
    H = hidden_dim
    keys = jax.random.split(key, 8)
    eps = 1e-5
    bn_scale = 1.0 / np.sqrt(1.0 + eps)   # BN eval-mode with default running stats
    bn_shift = 0.0
    # TODO(synk): trained BatchNorm running stats would need per-channel scale/shift here.

    w_pre = _kaiming(keys[0], in_channels, H) * bn_scale
    b_pre = jnp.full((1, H), bn_shift, jnp.float32)

    w1 = _kaiming(keys[1], 2 * H, H) * bn_scale
    w1a, w1b = w1[:H, :], w1[H:, :]
    b1 = jnp.full((1, H), bn_shift, jnp.float32)

    w2 = _kaiming(keys[2], H, H) * bn_scale
    b2 = jnp.full((1, H), bn_shift, jnp.float32)

    w_o1 = _kaiming(keys[3], H, H)
    b_o1 = jnp.zeros((1, H), jnp.float32)
    w_o2 = _kaiming(keys[4], H, out_channels)
    b_o2 = jnp.zeros((1, out_channels), jnp.float32)

    mlp_in_dim = num_polylines * out_channels   # == 8 * out_channels in the module
    w_m1 = _kaiming(keys[5], mlp_in_dim, mlp_hidden_dim)
    b_m1 = jnp.zeros((1, mlp_hidden_dim), jnp.float32)
    w_m2 = _kaiming(keys[6], mlp_hidden_dim, mlp_out_dim)
    b_m2 = jnp.zeros((1, mlp_out_dim), jnp.float32)

    return dict(w_pre=w_pre, b_pre=b_pre, w1a=w1a, w1b=w1b, b1=b1, w2=w2, b2=b2,
                w_o1=w_o1, b_o1=b_o1, w_o2=w_o2, b_o2=b_o2,
                w_m1=w_m1, b_m1=b_m1, w_m2=w_m2, b_m2=b_m2)


# ------------------------------ pure-JAX reference ----------------------------

def reference(polylines, polylines_mask, params, compute_dtype=jnp.bfloat16):
    # Mirrors the kernel math (bf16 matmul operands, f32 accumulation / elementwise).
    f32 = jnp.float32

    def mm(a, b):
        return jnp.dot(a.astype(compute_dtype), b.astype(compute_dtype),
                       preferred_element_type=f32)

    B, P, N, C = polylines.shape
    m = polylines_mask.astype(f32)[..., None]                 # (B,P,N,1)
    h1 = jnp.maximum(mm(polylines, params["w_pre"]) + params["b_pre"], 0.0) * m
    pooled = jnp.max(h1, axis=2, keepdims=True)
    h2 = jnp.maximum(mm(h1, params["w1a"]) + mm(pooled, params["w1b"]) + params["b1"], 0.0)
    h3 = jnp.maximum(mm(h2, params["w2"]) + params["b2"], 0.0) * m
    feat = jnp.max(h3, axis=2)                                # (B,P,H)
    valid = (jnp.sum(polylines_mask, axis=-1) > 0).astype(f32)[..., None]
    o1 = jnp.maximum(mm(feat, params["w_o1"]) + params["b_o1"], 0.0)
    o = (mm(o1, params["w_o2"]) + params["b_o2"]) * valid     # (B,P,OC)
    flat = o.reshape(B, -1)
    h = jnp.maximum(mm(flat, params["w_m1"]) + params["b_m1"], 0.0)
    out = mm(h, params["w_m2"]) + params["b_m2"]
    return out.reshape(B, P, -1)


# ----------------------------------- main -------------------------------------

if __name__ == "__main__":
    # mlp_in_dim = 8 * out_channels in the module => num_polylines must be 8.
    B, P, N, C = 16, 8, 16, 4
    hidden_dim, out_channels = 32, 16
    mlp_hidden_dim, mlp_out_dim = 32, 16   # mlp_out_dim divisible by P for the final reshape

    key = jax.random.PRNGKey(0)
    k_x, k_m, k_p = jax.random.split(key, 3)

    polylines = jax.random.normal(k_x, (B, P, N, C), dtype=jnp.float32)
    polylines_mask = jax.random.bernoulli(k_m, 0.7, (B, P, N))
    # make one polyline fully invalid to exercise the valid_mask path
    polylines_mask = polylines_mask.at[0, 3, :].set(False)

    params = build_params(k_p, C, hidden_dim, out_channels, P, mlp_hidden_dim, mlp_out_dim)

    out = mlp_with_polyline_encoder(polylines, polylines_mask, params)
    out = jax.block_until_ready(out)

    ref = reference(polylines, polylines_mask, params)
    np.testing.assert_allclose(np.asarray(out), np.asarray(ref), rtol=5e-3, atol=5e-3)

    assert out.shape == (B, P, mlp_out_dim // P)
    print("KERNEL_OK")
</pallas_src>

<mosaic_0001>
module attributes {stable_mosaic.version = 11 : i64} {
  func.func @_fused_kernel(%arg0: i32, %arg1: memref<8x8x16x4xbf16, #tpu.memory_space<vmem>>, %arg2: memref<8x8x16x1xf32, #tpu.memory_space<vmem>>, %arg3: memref<4x32xbf16, #tpu.memory_space<vmem>>, %arg4: memref<3x32x32xbf16, #tpu.memory_space<vmem>>, %arg5: memref<32x32xbf16, #tpu.memory_space<vmem>>, %arg6: memref<32x16xbf16, #tpu.memory_space<vmem>>, %arg7: memref<8x16x32xbf16, #tpu.memory_space<vmem>>, %arg8: memref<32x16xbf16, #tpu.memory_space<vmem>>, %arg9: memref<8x32xf32, #tpu.memory_space<vmem>>, %arg10: memref<1x8x16xf32, #tpu.memory_space<vmem>>) attributes {dimension_semantics = [#tpu.dimension_semantics<parallel>], iteration_bounds = array<i64: 2>, scalar_prefetch = 0 : i64, scratch_operands = 0 : i64, tpu.core_type = #tpu.core_type<tc>, window_params = [{transform_indices = @transform_0, window_bounds = array<i64: 8, 8, 16, 4>}, {transform_indices = @transform_1, window_bounds = array<i64: 8, 8, 16, 1>}, {pipeline_mode = #tpu.pipeline_mode<synchronous>, transform_indices = @transform_2, window_bounds = array<i64: 4, 32>}, {pipeline_mode = #tpu.pipeline_mode<synchronous>, transform_indices = @transform_3, window_bounds = array<i64: 3, 32, 32>}, {pipeline_mode = #tpu.pipeline_mode<synchronous>, transform_indices = @transform_4, window_bounds = array<i64: 32, 32>}, {pipeline_mode = #tpu.pipeline_mode<synchronous>, transform_indices = @transform_5, window_bounds = array<i64: 32, 16>}, {pipeline_mode = #tpu.pipeline_mode<synchronous>, transform_indices = @transform_6, window_bounds = array<i64: 8, 16, 32>}, {pipeline_mode = #tpu.pipeline_mode<synchronous>, transform_indices = @transform_7, window_bounds = array<i64: 32, 16>}, {pipeline_mode = #tpu.pipeline_mode<synchronous>, transform_indices = @transform_8, window_bounds = array<i64: 8, 32>}, {transform_indices = @transform_9, window_bounds = array<i64: 1, 8, 16>}]} {
    %c0 = arith.constant 0 : index
    %c0_0 = arith.constant 0 : index
    %c0_1 = arith.constant 0 : index
    %c0_2 = arith.constant 0 : index
    %0 = vector.load %arg1[%c0, %c0_0, %c0_1, %c0_2] : memref<8x8x16x4xbf16, #tpu.memory_space<vmem>>, vector<8x8x16x4xbf16>
    %1 = vector.shape_cast %0 : vector<8x8x16x4xbf16> to vector<1024x4xbf16>
    %c0_3 = arith.constant 0 : index
    %c0_4 = arith.constant 0 : index
    %c0_5 = arith.constant 0 : index
    %c0_6 = arith.constant 0 : index
    %2 = vector.load %arg2[%c0_3, %c0_4, %c0_5, %c0_6] : memref<8x8x16x1xf32, #tpu.memory_space<vmem>>, vector<8x8x16x1xf32>
    %3 = vector.shape_cast %2 : vector<8x8x16x1xf32> to vector<1024x1xf32>
    %c0_7 = arith.constant 0 : index
    %c0_8 = arith.constant 0 : index
    %4 = vector.load %arg9[%c0_7, %c0_8] : memref<8x32xf32, #tpu.memory_space<vmem>>, vector<1x32xf32>
    %c1 = arith.constant 1 : index
    %c0_9 = arith.constant 0 : index
    %5 = vector.load %arg9[%c1, %c0_9] : memref<8x32xf32, #tpu.memory_space<vmem>>, vector<1x32xf32>
    %c2 = arith.constant 2 : index
    %c0_10 = arith.constant 0 : index
    %6 = vector.load %arg9[%c2, %c0_10] : memref<8x32xf32, #tpu.memory_space<vmem>>, vector<1x32xf32>
    %c3 = arith.constant 3 : index
    %c0_11 = arith.constant 0 : index
    %7 = vector.load %arg9[%c3, %c0_11] : memref<8x32xf32, #tpu.memory_space<vmem>>, vector<1x32xf32>
    %c4 = arith.constant 4 : index
    %c0_12 = arith.constant 0 : index
    %8 = vector.load %arg9[%c4, %c0_12] : memref<8x32xf32, #tpu.memory_space<vmem>>, vector<1x16xf32>
    %c5 = arith.constant 5 : index
    %c0_13 = arith.constant 0 : index
    %9 = vector.load %arg9[%c5, %c0_13] : memref<8x32xf32, #tpu.memory_space<vmem>>, vector<1x32xf32>
    %c6 = arith.constant 6 : index
    %c0_14 = arith.constant 0 : index
    %10 = vector.load %arg9[%c6, %c0_14] : memref<8x32xf32, #tpu.memory_space<vmem>>, vector<1x16xf32>
    %c0_15 = arith.constant 0 : index
    %c0_16 = arith.constant 0 : index
    %c0_17 = arith.constant 0 : index
    %11 = vector.load %arg4[%c0_15, %c0_16, %c0_17] : memref<3x32x32xbf16, #tpu.memory_space<vmem>>, vector<1x32x32xbf16>
    %12 = vector.shape_cast %11 : vector<1x32x32xbf16> to vector<32x32xbf16>
    %c1_18 = arith.constant 1 : index
    %c0_19 = arith.constant 0 : index
    %c0_20 = arith.constant 0 : index
    %13 = vector.load %arg4[%c1_18, %c0_19, %c0_20] : memref<3x32x32xbf16, #tpu.memory_space<vmem>>, vector<1x32x32xbf16>
    %14 = vector.shape_cast %13 : vector<1x32x32xbf16> to vector<32x32xbf16>
    %c2_21 = arith.constant 2 : index
    %c0_22 = arith.constant 0 : index
    %c0_23 = arith.constant 0 : index
    %15 = vector.load %arg4[%c2_21, %c0_22, %c0_23] : memref<3x32x32xbf16, #tpu.memory_space<vmem>>, vector<1x32x32xbf16>
    %16 = vector.shape_cast %15 : vector<1x32x32xbf16> to vector<32x32xbf16>
    %c0_24 = arith.constant 0 : index
    %c0_25 = arith.constant 0 : index
    %17 = vector.load %arg3[%c0_24, %c0_25] : memref<4x32xbf16, #tpu.memory_space<vmem>>, vector<4x32xbf16>
    %cst = arith.constant dense<0.000000e+00> : vector<1024x32xf32>
    %18 = tpu.matmul %1, %17, %cst {dimension_numbers = #tpu.dot_dimension_numbers<[1], [0], [0], [1], [0, 0, 1, 1], [], []>} : vector<1024x4xbf16>, vector<4x32xbf16>, vector<1024x32xf32> -> vector<1024x32xf32>
    %19 = vector.broadcast %4 : vector<1x32xf32> to vector<1024x32xf32>
    %20 = arith.addf %18, %19 : vector<1024x32xf32>
    %cst_26 = arith.constant 0.000000e+00 : f32
    %21 = vector.broadcast %cst_26 : f32 to vector<1024x32xf32>
    %22 = arith.maximumf %20, %21 : vector<1024x32xf32>
    %23 = vector.broadcast %3 : vector<1024x1xf32> to vector<1024x32xf32>
    %24 = arith.mulf %22, %23 : vector<1024x32xf32>
    %25 = vector.shape_cast %24 : vector<1024x32xf32> to vector<64x16x32xf32>
    %cst_27 = arith.constant dense<0xFF800000> : vector<64x32xf32>
    %26 = vector.multi_reduction <maximumf>, %25, %cst_27 [1] : vector<64x16x32xf32> to vector<64x32xf32>
    %27 = arith.truncf %24 : vector<1024x32xf32> to vector<1024x32xbf16>
    %cst_28 = arith.constant dense<0.000000e+00> : vector<1024x32xf32>
    %28 = tpu.matmul %27, %12, %cst_28 {dimension_numbers = #tpu.dot_dimension_numbers<[1], [0], [0], [1], [0, 0, 1, 1], [], []>} : vector<1024x32xbf16>, vector<32x32xbf16>, vector<1024x32xf32> -> vector<1024x32xf32>
    %29 = arith.truncf %26 : vector<64x32xf32> to vector<64x32xbf16>
    %cst_29 = arith.constant dense<0.000000e+00> : vector<64x32xf32>
    %30 = tpu.matmul %29, %14, %cst_29 {dimension_numbers = #tpu.dot_dimension_numbers<[1], [0], [0], [1], [0, 0, 1, 1], [], []>} : vector<64x32xbf16>, vector<32x32xbf16>, vector<64x32xf32> -> vector<64x32xf32>
    %31 = vector.broadcast %5 : vector<1x32xf32> to vector<1024x32xf32>
    %32 = arith.addf %28, %31 : vector<1024x32xf32>
    %33 = vector.shape_cast %32 : vector<1024x32xf32> to vector<64x16x32xf32>
    %34 = vector.shape_cast %30 : vector<64x32xf32> to vector<64x1x32xf32>
    %35 = vector.broadcast %34 : vector<64x1x32xf32> to vector<64x16x32xf32>
    %36 = arith.addf %33, %35 : vector<64x16x32xf32>
    %cst_30 = arith.constant 0.000000e+00 : f32
    %37 = vector.broadcast %cst_30 : f32 to vector<64x16x32xf32>
    %38 = arith.maximumf %36, %37 : vector<64x16x32xf32>
    %39 = vector.shape_cast %38 : vector<64x16x32xf32> to vector<1024x32xf32>
    %40 = arith.truncf %39 : vector<1024x32xf32> to vector<1024x32xbf16>
    %cst_31 = arith.constant dense<0.000000e+00> : vector<1024x32xf32>
    %41 = tpu.matmul %40, %16, %cst_31 {dimension_numbers = #tpu.dot_dimension_numbers<[1], [0], [0], [1], [0, 0, 1, 1], [], []>} : vector<1024x32xbf16>, vector<32x32xbf16>, vector<1024x32xf32> -> vector<1024x32xf32>
    %42 = vector.broadcast %6 : vector<1x32xf32> to vector<1024x32xf32>
    %43 = arith.addf %41, %42 : vector<1024x32xf32>
    %cst_32 = arith.constant 0.000000e+00 : f32
    %44 = vector.broadcast %cst_32 : f32 to vector<1024x32xf32>
    %45 = arith.maximumf %43, %44 : vector<1024x32xf32>
    %46 = vector.broadcast %3 : vector<1024x1xf32> to vector<1024x32xf32>
    %47 = arith.mulf %45, %46 : vector<1024x32xf32>
    %48 = vector.shape_cast %47 : vector<1024x32xf32> to vector<64x16x32xf32>
    %cst_33 = arith.constant dense<0xFF800000> : vector<64x32xf32>
    %49 = vector.multi_reduction <maximumf>, %48, %cst_33 [1] : vector<64x16x32xf32> to vector<64x32xf32>
    %50 = vector.shape_cast %3 : vector<1024x1xf32> to vector<64x16x1xf32>
    %cst_34 = arith.constant dense<0xFF800000> : vector<64x1xf32>
    %51 = vector.multi_reduction <maximumf>, %50, %cst_34 [1] : vector<64x16x1xf32> to vector<64x1xf32>
    %cst_35 = arith.constant 0.000000e+00 : f32
    %52 = vector.broadcast %cst_35 : f32 to vector<64x1xf32>
    %53 = arith.cmpf ogt, %51, %52 : vector<64x1xf32>
    %54 = arith.extui %53 : vector<64x1xi1> to vector<64x1xi32>
    %55 = arith.sitofp %54 : vector<64x1xi32> to vector<64x1xf32>
    %56 = arith.truncf %49 : vector<64x32xf32> to vector<64x32xbf16>
    %c0_36 = arith.constant 0 : index
    %c0_37 = arith.constant 0 : index
    %57 = vector.load %arg5[%c0_36, %c0_37] : memref<32x32xbf16, #tpu.memory_space<vmem>>, vector<32x32xbf16>
    %cst_38 = arith.constant dense<0.000000e+00> : vector<64x32xf32>
    %58 = tpu.matmul %56, %57, %cst_38 {dimension_numbers = #tpu.dot_dimension_numbers<[1], [0], [0], [1], [0, 0, 1, 1], [], []>} : vector<64x32xbf16>, vector<32x32xbf16>, vector<64x32xf32> -> vector<64x32xf32>
    %59 = vector.broadcast %7 : vector<1x32xf32> to vector<64x32xf32>
    %60 = arith.addf %58, %59 : vector<64x32xf32>
    %cst_39 = arith.constant 0.000000e+00 : f32
    %61 = vector.broadcast %cst_39 : f32 to vector<64x32xf32>
    %62 = arith.maximumf %60, %61 : vector<64x32xf32>
    %63 = arith.truncf %62 : vector<64x32xf32> to vector<64x32xbf16>
    %c0_40 = arith.constant 0 : index
    %c0_41 = arith.constant 0 : index
    %64 = vector.load %arg6[%c0_40, %c0_41] : memref<32x16xbf16, #tpu.memory_space<vmem>>, vector<32x16xbf16>
    %cst_42 = arith.constant dense<0.000000e+00> : vector<64x16xf32>
    %65 = tpu.matmul %63, %64, %cst_42 {dimension_numbers = #tpu.dot_dimension_numbers<[1], [0], [0], [1], [0, 0, 1, 1], [], []>} : vector<64x32xbf16>, vector<32x16xbf16>, vector<64x16xf32> -> vector<64x16xf32>
    %66 = vector.broadcast %8 : vector<1x16xf32> to vector<64x16xf32>
    %67 = arith.addf %65, %66 : vector<64x16xf32>
    %68 = vector.broadcast %55 : vector<64x1xf32> to vector<64x16xf32>
    %69 = arith.mulf %67, %68 : vector<64x16xf32>
    %70 = vector.shape_cast %69 : vector<64x16xf32> to vector<8x8x16xf32>
    %71 = arith.truncf %70 : vector<8x8x16xf32> to vector<8x8x16xbf16>
    %c0_43 = arith.constant 0 : index
    %c0_44 = arith.constant 0 : index
    %c0_45 = arith.constant 0 : index
    %72 = vector.load %arg7[%c0_43, %c0_44, %c0_45] : memref<8x16x32xbf16, #tpu.memory_space<vmem>>, vector<8x16x32xbf16>
    "tpu.trace_start"() <{level = 10 : i32, message = "pbo,pom->pbm"}> : () -> ()
    %cst_46 = arith.constant dense<0.000000e+00> : vector<8x8x32xf32>
    %73 = tpu.matmul %71, %72, %cst_46 {dimension_numbers = #tpu.dot_dimension_numbers<[2], [1], [1], [2], [0, 0, 0, 1, 1, 2], [0], [0]>} : vector<8x8x16xbf16>, vector<8x16x32xbf16>, vector<8x8x32xf32> -> vector<8x8x32xf32>
    "tpu.trace_stop"() : () -> ()
    %cst_47 = arith.constant dense<0.000000e+00> : vector<8x32xf32>
    %74 = vector.multi_reduction <add>, %73, %cst_47 [0] : vector<8x8x32xf32> to vector<8x32xf32>
    %75 = vector.broadcast %9 : vector<1x32xf32> to vector<8x32xf32>
    %76 = arith.addf %74, %75 : vector<8x32xf32>
    %cst_48 = arith.constant 0.000000e+00 : f32
    %77 = vector.broadcast %cst_48 : f32 to vector<8x32xf32>
    %78 = arith.maximumf %76, %77 : vector<8x32xf32>
    %79 = arith.truncf %78 : vector<8x32xf32> to vector<8x32xbf16>
    %c0_49 = arith.constant 0 : index
    %c0_50 = arith.constant 0 : index
    %80 = vector.load %arg8[%c0_49, %c0_50] : memref<32x16xbf16, #tpu.memory_space<vmem>>, vector<32x16xbf16>
    %cst_51 = arith.constant dense<0.000000e+00> : vector<8x16xf32>
    %81 = tpu.matmul %79, %80, %cst_51 {dimension_numbers = #tpu.dot_dimension_numbers<[1], [0], [0], [1], [0, 0, 1, 1], [], []>} : vector<8x32xbf16>, vector<32x16xbf16>, vector<8x16xf32> -> vector<8x16xf32>
    %82 = vector.broadcast %10 : vector<1x16xf32> to vector<8x16xf32>
    %83 = arith.addf %81, %82 : vector<8x16xf32>
    %c0_52 = arith.constant 0 : index
    %c0_53 = arith.constant 0 : index
    %c0_54 = arith.constant 0 : index
    %84 = vector.load %arg10[%c0_52, %c0_53, %c0_54] : memref<1x8x16xf32, #tpu.memory_space<vmem>>, vector<1x8x16xf32>
    %85 = vector.shape_cast %84 : vector<1x8x16xf32> to vector<8x16xf32>
    %86 = vector.shape_cast %83 : vector<8x16xf32> to vector<1x8x16xf32>
    tpu.vector_store %arg10[%c0_52, %c0_53, %c0_54], %86 {strides = array<i32>} : memref<1x8x16xf32, #tpu.memory_space<vmem>>, vector<1x8x16xf32>,
    return
  }
  func.func @transform_0(%arg0: i32) -> (i32, i32, i32, i32) {
    %c0_i32 = arith.constant 0 : i32
    %c0_i32_0 = arith.constant 0 : i32
    %c0_i32_1 = arith.constant 0 : i32
    %c0_i32_2 = arith.constant 0 : i32
    return %c0_i32, %arg0, %c0_i32_0, %c0_i32_1 : i32, i32, i32, i32
  }
  func.func @transform_1(%arg0: i32) -> (i32, i32, i32, i32) {
    %c0_i32 = arith.constant 0 : i32
    %c0_i32_0 = arith.constant 0 : i32
    %c0_i32_1 = arith.constant 0 : i32
    %c0_i32_2 = arith.constant 0 : i32
    return %c0_i32, %arg0, %c0_i32_0, %c0_i32_1 : i32, i32, i32, i32
  }
  func.func @transform_2(%arg0: i32) -> (i32, i32) {
    %c0_i32 = arith.constant 0 : i32
    %c0_i32_0 = arith.constant 0 : i32
    %c0_i32_1 = arith.constant 0 : i32
    return %c0_i32, %c0_i32_0 : i32, i32
  }
  func.func @transform_3(%arg0: i32) -> (i32, i32, i32) {
    %c0_i32 = arith.constant 0 : i32
    %c0_i32_0 = arith.constant 0 : i32
    %c0_i32_1 = arith.constant 0 : i32
    %c0_i32_2 = arith.constant 0 : i32
    return %c0_i32, %c0_i32_0, %c0_i32_1 : i32, i32, i32
  }
  func.func @transform_4(%arg0: i32) -> (i32, i32) {
    %c0_i32 = arith.constant 0 : i32
    %c0_i32_0 = arith.constant 0 : i32
    %c0_i32_1 = arith.constant 0 : i32
    return %c0_i32, %c0_i32_0 : i32, i32
  }
  func.func @transform_5(%arg0: i32) -> (i32, i32) {
    %c0_i32 = arith.constant 0 : i32
    %c0_i32_0 = arith.constant 0 : i32
    %c0_i32_1 = arith.constant 0 : i32
    return %c0_i32, %c0_i32_0 : i32, i32
  }
  func.func @transform_6(%arg0: i32) -> (i32, i32, i32) {
    %c0_i32 = arith.constant 0 : i32
    %c0_i32_0 = arith.constant 0 : i32
    %c0_i32_1 = arith.constant 0 : i32
    %c0_i32_2 = arith.constant 0 : i32
    return %c0_i32, %c0_i32_0, %c0_i32_1 : i32, i32, i32
  }
  func.func @transform_7(%arg0: i32) -> (i32, i32) {
    %c0_i32 = arith.constant 0 : i32
    %c0_i32_0 = arith.constant 0 : i32
    %c0_i32_1 = arith.constant 0 : i32
    return %c0_i32, %c0_i32_0 : i32, i32
  }
  func.func @transform_8(%arg0: i32) -> (i32, i32) {
    %c0_i32 = arith.constant 0 : i32
    %c0_i32_0 = arith.constant 0 : i32
    %c0_i32_1 = arith.constant 0 : i32
    return %c0_i32, %c0_i32_0 : i32, i32
  }
  func.func @transform_9(%arg0: i32) -> (i32, i32, i32) {
    %c0_i32 = arith.constant 0 : i32
    %c0_i32_0 = arith.constant 0 : i32
    %c0_i32_1 = arith.constant 0 : i32
    return %arg0, %c0_i32, %c0_i32_0 : i32, i32, i32
  }
}

</mosaic_0001>

<llo_original>
// kernel: mlp_with_polyline_encoder.1
$region0: #{mlp_with_polyline_encoder.1}
  #allocation0 [shape = 'u32[]', space=smem, size = 0x4, offset = 0x4, fixed_abs, tag = 'smem constant byte address 0x4 - core index']
  #allocation1 [shape = 'u32[144,128]{1,0:T(1,128)}', space=vmem, size = 0x12000, scoped, tag = 'internal scratch']
  %s0 = inlined_call_operand.vmem [shape: bf16[8,16,16,4], index: 0, kind: input, shape index: {}]
  %s1 = inlined_call_operand.vmem [shape: f32[8,16,16,1], index: 1, kind: input, shape index: {}]
  %s2 = inlined_call_operand.vmem [shape: bf16[4,32], index: 2, kind: input, shape index: {}]
  %s3 = inlined_call_operand.vmem [shape: bf16[3,32,32], index: 3, kind: input, shape index: {}]
  %s4 = inlined_call_operand.vmem [shape: bf16[32,32], index: 4, kind: input, shape index: {}]
  %s5 = inlined_call_operand.vmem [shape: bf16[32,16], index: 5, kind: input, shape index: {}]
  %s6 = inlined_call_operand.vmem [shape: bf16[8,16,32], index: 6, kind: input, shape index: {}]
  %s7 = inlined_call_operand.vmem [shape: bf16[32,16], index: 7, kind: input, shape index: {}]
  %s8 = inlined_call_operand.vmem [shape: f32[8,32], index: 8, kind: input, shape index: {}]
  %s9 = inlined_call_operand.vmem [shape: f32[2,8,16], index: 9, kind: output, shape index: {}]
  %s10 = sld [smem:[#allocation0]]
  $region148: #{mlp_with_polyline_encoder.1} parent=0
    _
  %s12 = ssub.s32 1, %s10
  %s13 = scalar_select 0, %s12, %s10
  $region1: #{mlp_with_polyline_encoder.1} parent=0
    #allocation2 [shape = 'u8[524288]{0}', space=vmem, size = 0x80000, scoped, tag = 'input window, operand 0']
    #allocation3 [shape = 'u8[1048576]{0}', space=vmem, size = 0x100000, scoped, tag = 'input window, operand 1']
    loop: start=0, step=1, limit=4
    $region2: #{mlp_with_polyline_encoder.1} parent=1 // loop_pre_header
      _
    $region3: #{mlp_with_polyline_encoder.1} parent=1 // loop_header
      %s15 = sphi 0, %s19
      %p16 = scmp.ge.s32.totalorder %s15, 4
      %s25 = sphi 0, %s27
      %s28 = sphi 0, %s25
      %s29 = sphi 0, %s28
      %s45 = sphi 0, %s29
      %s51 = sphi 0, %s53
      %s54 = sphi 0, %s51
      %s55 = sphi 0, %s54
      %s71 = sphi 0, %s55
      %s75 = sphi 0, %s75
      %s77 = sphi 0, %s75
      %s78 = sphi 0, %s77
      %s92 = sphi 0, %s78
      %s96 = sphi 0, %s96
      %s98 = sphi 0, %s96
      %s99 = sphi 0, %s98
      %s113 = sphi 0, %s99
      %s117 = sphi 0, %s117
      %s119 = sphi 0, %s117
      %s120 = sphi 0, %s119
      %s134 = sphi 0, %s120
      %s138 = sphi 0, %s138
      %s140 = sphi 0, %s138
      %s141 = sphi 0, %s140
      %s155 = sphi 0, %s141
      %s159 = sphi 0, %s159
      %s161 = sphi 0, %s159
      %s162 = sphi 0, %s161
      %s176 = sphi 0, %s162
      %s180 = sphi 0, %s180
      %s182 = sphi 0, %s180
      %s183 = sphi 0, %s182
      %s197 = sphi 0, %s183
      %s201 = sphi 0, %s201
      %s203 = sphi 0, %s201
      %s204 = sphi 0, %s203
      %s218 = sphi 0, %s204
      %s224 = sphi 0, %s226
      %s227 = sphi 0, %s224
      %s228 = sphi 0, %s227
      %s244 = sphi 0, %s228
    $region4: #{mlp_with_polyline_encoder.1} parent=1 // loop_header_branch
      %18 = sbr.rel (%p16) target = $region8
    $region5: #{mlp_with_polyline_encoder.1} parent=1 // loop_body
      %s20 = ssub.s32 %s15, 1
      %s21 = ssub.s32 %s15, 2
      %s22 = sadd.s32 %s15, 1
      %s23 = ssub.s32 %s15, %s22
      %p24 = scmp.eq.s32.totalorder %s23, 0
      %s26 = sadd.s32 %s25, 1
      %s27 = scalar_select %p24, %s25, %s26
      %p30 = pneg %p24
      %p31 = scmp.eq.s32.totalorder %s15, 1
      %p32 = por %p30, %p31
      %p33 = scmp.ne.s32.totalorder %s25, %s28
      %p34 = scmp.eq.s32.totalorder %s15, 0
      %p35 = por %p33, %p34
      %p36 = scmp.ne.s32.totalorder %s25, %s28
      %p37 = scmp.eq.s32.totalorder %s20, 1
      %p38 = por %p36, %p37
      %p39 = scmp.ne.s32.totalorder %s28, %s29
      %p40 = scmp.eq.s32.totalorder %s20, 0
      %p41 = por %p39, %p40
      %p42 = scmp.ne.s32.totalorder %s28, %s29
      %p43 = scmp.eq.s32.totalorder %s21, 1
      %p44 = por %p42, %p43
      %p46 = scmp.ne.s32.totalorder %s29, %s45
      %p47 = scmp.eq.s32.totalorder %s21, 0
      %p48 = por %p46, %p47
      %s49 = ssub.s32 %s15, %s22
      %p50 = scmp.eq.s32.totalorder %s49, 0
      %s52 = sadd.s32 %s51, 1
      %s53 = scalar_select %p50, %s51, %s52
      %p56 = pneg %p50
      %p57 = scmp.eq.s32.totalorder %s15, 1
      %p58 = por %p56, %p57
      %p59 = scmp.ne.s32.totalorder %s51, %s54
      %p60 = scmp.eq.s32.totalorder %s15, 0
      %p61 = por %p59, %p60
      %p62 = scmp.ne.s32.totalorder %s51, %s54
      %p63 = scmp.eq.s32.totalorder %s20, 1
      %p64 = por %p62, %p63
      %p65 = scmp.ne.s32.totalorder %s54, %s55
      %p66 = scmp.eq.s32.totalorder %s20, 0
      %p67 = por %p65, %p66
      %p68 = scmp.ne.s32.totalorder %s54, %s55
      %p69 = scmp.eq.s32.totalorder %s21, 1
      %p70 = por %p68, %p69
      %p72 = scmp.ne.s32.totalorder %s55, %s71
      %p73 = scmp.eq.s32.totalorder %s21, 0
      %p74 = por %p72, %p73
      %s76 = sadd.s32 %s75, 1
      %p79 = scmp.eq.s32.totalorder %s15, 1
      %p80 = scmp.ne.s32.totalorder %s75, %s77
      %p81 = scmp.eq.s32.totalorder %s15, 0
      %p82 = por %p80, %p81
      %p83 = scmp.ne.s32.totalorder %s75, %s77
      %p84 = scmp.eq.s32.totalorder %s20, 1
      %p85 = por %p83, %p84
      %p86 = scmp.ne.s32.totalorder %s77, %s78
      %p87 = scmp.eq.s32.totalorder %s20, 0
      %p88 = por %p86, %p87
      %p89 = scmp.ne.s32.totalorder %s77, %s78
      %p90 = scmp.eq.s32.totalorder %s21, 1
      %p91 = por %p89, %p90
      %p93 = scmp.ne.s32.totalorder %s78, %s92
      %p94 = scmp.eq.s32.totalorder %s21, 0
      %p95 = por %p93, %p94
      %s97 = sadd.s32 %s96, 1
      %p100 = scmp.eq.s32.totalorder %s15, 1
      %p101 = scmp.ne.s32.totalorder %s96, %s98
      %p102 = scmp.eq.s32.totalorder %s15, 0
      %p103 = por %p101, %p102
      %p104 = scmp.ne.s32.totalorder %s96, %s98
      %p105 = scmp.eq.s32.totalorder %s20, 1
      %p106 = por %p104, %p105
      %p107 = scmp.ne.s32.totalorder %s98, %s99
      %p108 = scmp.eq.s32.totalorder %s20, 0
      %p109 = por %p107, %p108
      %p110 = scmp.ne.s32.totalorder %s98, %s99
      %p111 = scmp.eq.s32.totalorder %s21, 1
      %p112 = por %p110, %p111
      %p114 = scmp.ne.s32.totalorder %s99, %s113
      %p115 = scmp.eq.s32.totalorder %s21, 0
      %p116 = por %p114, %p115
      %s118 = sadd.s32 %s117, 1
      %p121 = scmp.eq.s32.totalorder %s15, 1
      %p122 = scmp.ne.s32.totalorder %s117, %s119
      %p123 = scmp.eq.s32.totalorder %s15, 0
      %p124 = por %p122, %p123
      %p125 = scmp.ne.s32.totalorder %s117, %s119
      %p126 = scmp.eq.s32.totalorder %s20, 1
      %p127 = por %p125, %p126
      %p128 = scmp.ne.s32.totalorder %s119, %s120
      %p129 = scmp.eq.s32.totalorder %s20, 0
      %p130 = por %p128, %p129
      %p131 = scmp.ne.s32.totalorder %s119, %s120
      %p132 = scmp.eq.s32.totalorder %s21, 1
      %p133 = por %p131, %p132
      %p135 = scmp.ne.s32.totalorder %s120, %s134
      %p136 = scmp.eq.s32.totalorder %s21, 0
      %p137 = por %p135, %p136
      %s139 = sadd.s32 %s138, 1
      %p142 = scmp.eq.s32.totalorder %s15, 1
      %p143 = scmp.ne.s32.totalorder %s138, %s140
      %p144 = scmp.eq.s32.totalorder %s15, 0
      %p145 = por %p143, %p144
      %p146 = scmp.ne.s32.totalorder %s138, %s140
      %p147 = scmp.eq.s32.totalorder %s20, 1
      %p148 = por %p146, %p147
      %p149 = scmp.ne.s32.totalorder %s140, %s141
      %p150 = scmp.eq.s32.totalorder %s20, 0
      %p151 = por %p149, %p150
      %p152 = scmp.ne.s32.totalorder %s140, %s141
      %p153 = scmp.eq.s32.totalorder %s21, 1
      %p154 = por %p152, %p153
      %p156 = scmp.ne.s32.totalorder %s141, %s155
      %p157 = scmp.eq.s32.totalorder %s21, 0
      %p158 = por %p156, %p157
      %s160 = sadd.s32 %s159, 1
      %p163 = scmp.eq.s32.totalorder %s15, 1
      %p164 = scmp.ne.s32.totalorder %s159, %s161
      %p165 = scmp.eq.s32.totalorder %s15, 0
      %p166 = por %p164, %p165
      %p167 = scmp.ne.s32.totalorder %s159, %s161
      %p168 = scmp.eq.s32.totalorder %s20, 1
      %p169 = por %p167, %p168
      %p170 = scmp.ne.s32.totalorder %s161, %s162
      %p171 = scmp.eq.s32.totalorder %s20, 0
      %p172 = por %p170, %p171
      %p173 = scmp.ne.s32.totalorder %s161, %s162
      %p174 = scmp.eq.s32.totalorder %s21, 1
      %p175 = por %p173, %p174
      %p177 = scmp.ne.s32.totalorder %s162, %s176
      %p178 = scmp.eq.s32.totalorder %s21, 0
      %p179 = por %p177, %p178
      %s181 = sadd.s32 %s180, 1
      %p184 = scmp.eq.s32.totalorder %s15, 1
      %p185 = scmp.ne.s32.totalorder %s180, %s182
      %p186 = scmp.eq.s32.totalorder %s15, 0
      %p187 = por %p185, %p186
      %p188 = scmp.ne.s32.totalorder %s180, %s182
      %p189 = scmp.eq.s32.totalorder %s20, 1
      %p190 = por %p188, %p189
      %p191 = scmp.ne.s32.totalorder %s182, %s183
      %p192 = scmp.eq.s32.totalorder %s20, 0
      %p193 = por %p191, %p192
      %p194 = scmp.ne.s32.totalorder %s182, %s183
      %p195 = scmp.eq.s32.totalorder %s21, 1
      %p196 = por %p194, %p195
      %p198 = scmp.ne.s32.totalorder %s183, %s197
      %p199 = scmp.eq.s32.totalorder %s21, 0
      %p200 = por %p198, %p199
      %s202 = sadd.s32 %s201, 1
      %p205 = scmp.eq.s32.totalorder %s15, 1
      %p206 = scmp.ne.s32.totalorder %s201, %s203
      %p207 = scmp.eq.s32.totalorder %s15, 0
      %p208 = por %p206, %p207
      %p209 = scmp.ne.s32.totalorder %s201, %s203
      %p210 = scmp.eq.s32.totalorder %s20, 1
      %p211 = por %p209, %p210
      %p212 = scmp.ne.s32.totalorder %s203, %s204
      %p213 = scmp.eq.s32.totalorder %s20, 0
      %p214 = por %p212, %p213
      %p215 = scmp.ne.s32.totalorder %s203, %s204
      %p216 = scmp.eq.s32.totalorder %s21, 1
      %p217 = por %p215, %p216
      %p219 = scmp.ne.s32.totalorder %s204, %s218
      %p220 = scmp.eq.s32.totalorder %s21, 0
      %p221 = por %p219, %p220
      %s222 = ssub.s32 %s15, %s22
      %p223 = scmp.eq.s32.totalorder %s222, 0
      %s225 = sadd.s32 %s224, 1
      %s226 = scalar_select %p223, %s224, %s225
      %p229 = pneg %p223
      %p230 = scmp.eq.s32.totalorder %s15, 1
      %p231 = por %p229, %p230
      %p232 = scmp.ne.s32.totalorder %s224, %s227
      %p233 = scmp.eq.s32.totalorder %s15, 0
      %p234 = por %p232, %p233
      %p235 = scmp.ne.s32.totalorder %s224, %s227
      %p236 = scmp.eq.s32.totalorder %s20, 1
      %p237 = por %p235, %p236
      %p238 = scmp.ne.s32.totalorder %s227, %s228
      %p239 = scmp.eq.s32.totalorder %s20, 0
      %p240 = por %p238, %p239
      %p241 = scmp.ne.s32.totalorder %s227, %s228
      %p242 = scmp.eq.s32.totalorder %s21, 1
      %p243 = por %p241, %p242
      %p245 = scmp.ne.s32.totalorder %s228, %s244
      %p246 = scmp.eq.s32.totalorder %s21, 0
      %p247 = por %p245, %p246
      %p248 = scmp.le.s32.totalorder 1, %s15
      %p249 = scmp.lt.s32.totalorder %s15, 3
      %p250 = pnand %p248, %p249
      %p251 = pneg %p250
      // Predicated region
      $region9: #{mlp_with_polyline_encoder.1} parent=5 // pred_check
        _
      $region10: #{mlp_with_polyline_encoder.1} parent=5 // pred_check_branch
        %253 = sbr.rel (%p250) target = $region12
      $region11: #{mlp_with_polyline_encoder.1} parent=5 // pred_region
        %s254 = ssub.s32 %s15, 1
        // Predicated region
        $region13: #{mlp_with_polyline_encoder.1} parent=11 // pred_check
          %p255 = pneg %p88
        $region14: #{mlp_with_polyline_encoder.1} parent=11 // pred_check_branch
          %257 = sbr.rel (%p255) target = $region16
        $region15: #{mlp_with_polyline_encoder.1} parent=11 // pred_region
          _
        $region16: #{mlp_with_polyline_encoder.1} parent=11 // pred_fallthru
          _
        // Predicated region
        $region17: #{mlp_with_polyline_encoder.1} parent=11 // pred_check
          %p258 = pneg %p109
        $region18: #{mlp_with_polyline_encoder.1} parent=11 // pred_check_branch
          %260 = sbr.rel (%p258) target = $region20
        $region19: #{mlp_with_polyline_encoder.1} parent=11 // pred_region
          _
        $region20: #{mlp_with_polyline_encoder.1} parent=11 // pred_fallthru
          _
        // Predicated region
        $region21: #{mlp_with_polyline_encoder.1} parent=11 // pred_check
          %p261 = pneg %p130
        $region22: #{mlp_with_polyline_encoder.1} parent=11 // pred_check_branch
          %263 = sbr.rel (%p261) target = $region24
        $region23: #{mlp_with_polyline_encoder.1} parent=11 // pred_region
          _
        $region24: #{mlp_with_polyline_encoder.1} parent=11 // pred_fallthru
          _
        // Predicated region
        $region25: #{mlp_with_polyline_encoder.1} parent=11 // pred_check
          %p264 = pneg %p151
        $region26: #{mlp_with_polyline_encoder.1} parent=11 // pred_check_branch
          %266 = sbr.rel (%p264) target = $region28
        $region27: #{mlp_with_polyline_encoder.1} parent=11 // pred_region
          _
        $region28: #{mlp_with_polyline_encoder.1} parent=11 // pred_fallthru
          _
        // Predicated region
        $region29: #{mlp_with_polyline_encoder.1} parent=11 // pred_check
          %p267 = pneg %p172
        $region30: #{mlp_with_polyline_encoder.1} parent=11 // pred_check_branch
          %269 = sbr.rel (%p267) target = $region32
        $region31: #{mlp_with_polyline_encoder.1} parent=11 // pred_region
          _
        $region32: #{mlp_with_polyline_encoder.1} parent=11 // pred_fallthru
          _
        // Predicated region
        $region33: #{mlp_with_polyline_encoder.1} parent=11 // pred_check
          %p270 = pneg %p193
        $region34: #{mlp_with_polyline_encoder.1} parent=11 // pred_check_branch
          %272 = sbr.rel (%p270) target = $region36
        $region35: #{mlp_with_polyline_encoder.1} parent=11 // pred_region
          _
        $region36: #{mlp_with_polyline_encoder.1} parent=11 // pred_fallthru
          _
        // Predicated region
        $region37: #{mlp_with_polyline_encoder.1} parent=11 // pred_check
          %p273 = pneg %p214
        $region38: #{mlp_with_polyline_encoder.1} parent=11 // pred_check_branch
          %275 = sbr.rel (%p273) target = $region40
        $region39: #{mlp_with_polyline_encoder.1} parent=11 // pred_region
          _
        $region40: #{mlp_with_polyline_encoder.1} parent=11 // pred_fallthru
          _
      $region12: #{mlp_with_polyline_encoder.1} parent=5 // pred_fallthru
        _
      %p276 = scmp.lt.s32.totalorder %s15, 2
      // Predicated region
      $region41: #{mlp_with_polyline_encoder.1} parent=5 // pred_check
        %p277 = pneg %p276
      $region42: #{mlp_with_polyline_encoder.1} parent=5 // pred_check_branch
        %279 = sbr.rel (%p277) target = $region44
      $region43: #{mlp_with_polyline_encoder.1} parent=5 // pred_region
        // Predicated region
        $region45: #{mlp_with_polyline_encoder.1} parent=43 // pred_check
          %p280 = pneg %p35
        $region46: #{mlp_with_polyline_encoder.1} parent=43 // pred_check_branch
          %282 = sbr.rel (%p280) target = $region48
        $region47: #{mlp_with_polyline_encoder.1} parent=43 // pred_region
          %s283 = sand.u32 %s25, 1
          %s284 = sand.u32 %s25, 1
          %s285 = smul.addr %s284, 512
          %s286 = scalar_lea.vmem [#allocation2], %s285
          %s287 = smul.u32 8, %s15
          %s288 = smul.addr %s287, 2
          %s289 = smul.addr %s288, 4
          %s290 = scalar_lea.vmem %s0, %s289
          // Predicated region
          $region49: #{mlp_with_polyline_encoder.1} parent=47 // pred_check
            _
          $region50: #{mlp_with_polyline_encoder.1} parent=47 // pred_check_branch
            %292 = sbr.rel (0) target = $region52
          $region51: #{mlp_with_polyline_encoder.1} parent=47 // pred_region
            // Predicated region
            $region53: #{mlp_with_polyline_encoder.1} parent=51 // pred_check
              _
            $region54: #{mlp_with_polyline_encoder.1} parent=51 // pred_check_branch
              %294 = sbr.rel target = $region56
            $region55: #{mlp_with_polyline_encoder.1} parent=51 // pred_region
              // Predicated region
              $region68: #{mlp_with_polyline_encoder.1} parent=55 // pred_check
                _
              $region69: #{mlp_with_polyline_encoder.1} parent=55 // pred_check_branch
                %563 = sbr.rel (0) target = $region71
              $region70: #{mlp_with_polyline_encoder.1} parent=55 // pred_region
                loop: start=0, step=1, limit=1
                $region72: #{mlp_with_polyline_encoder.1} parent=70 // loop_pre_header
                  _
                $region73: #{mlp_with_polyline_encoder.1} parent=70 // loop_header
                  %s565 = sphi 0, %s569
                  %p566 = scmp.ge.s32.totalorder %s565, 1
                  %s570 = sphi %s290, %s290
                  %s571 = sphi %s286, %s286
                $region74: #{mlp_with_polyline_encoder.1} parent=70 // loop_header_branch
                  %568 = sbr.rel (%p566) target = $region78
                $region75: #{mlp_with_polyline_encoder.1} parent=70 // loop_body
                  _
                $region76: #{mlp_with_polyline_encoder.1} parent=70 // loop_footer
                  %s569 = sadd.s32 1, %s565
                $region77: #{mlp_with_polyline_encoder.1} parent=70 // loop_footer_branch
                  %564 = sbr.rel target = $region73
                $region78: #{mlp_with_polyline_encoder.1} parent=70 // loop_exit
                  _
                loop: start=0, step=1, limit=1
                $region79: #{mlp_with_polyline_encoder.1} parent=70 // loop_pre_header
                  _
                $region80: #{mlp_with_polyline_encoder.1} parent=70 // loop_header
                  %s574 = sphi 0, %s578
                  %p575 = scmp.ge.s32.totalorder %s574, 1
                  %s579 = sphi %s290, %s290
                  %s580 = sphi %s286, %s286
                $region81: #{mlp_with_polyline_encoder.1} parent=70 // loop_header_branch
                  %577 = sbr.rel (%p575) target = $region85
                $region82: #{mlp_with_polyline_encoder.1} parent=70 // loop_body
                  %v581 = vld [vmem:[%s579] sm:$0xf]
                  %582 = vst [vmem:[%s580] sm:$0xf] %v581
                  %v583 = vld [vmem:[%s579 + $0x4] sm:$0xf]
                  %584 = vst [vmem:[%s580 + $0x4] sm:$0xf] %v583
                  %v585 = vld [vmem:[%s579 + $0x8] sm:$0xf]
                  %586 = vst [vmem:[%s580 + $0x8] sm:$0xf] %v585
                  %v587 = vld [vmem:[%s579 + $0xc] sm:$0xf]
                  %588 = vst [vmem:[%s580 + $0xc] sm:$0xf] %v587
                  %v589 = vld [vmem:[%s579 + $0x10] sm:$0xf]
                  %590 = vst [vmem:[%s580 + $0x10] sm:$0xf] %v589
                  %v591 = vld [vmem:[%s579 + $0x14] sm:$0xf]
                  %592 = vst [vmem:[%s580 + $0x14] sm:$0xf] %v591
                  %v593 = vld [vmem:[%s579 + $0x18] sm:$0xf]
                  %594 = vst [vmem:[%s580 + $0x18] sm:$0xf] %v593
                  %v595 = vld [vmem:[%s579 + $0x1c] sm:$0xf]
                  %596 = vst [vmem:[%s580 + $0x1c] sm:$0xf] %v595
                  %v597 = vld [vmem:[%s579 + $0x20] sm:$0xf]
                  %598 = vst [vmem:[%s580 + $0x20] sm:$0xf] %v597
                  %v599 = vld [vmem:[%s579 + $0x24] sm:$0xf]
                  %600 = vst [vmem:[%s580 + $0x24] sm:$0xf] %v599
                  %v601 = vld [vmem:[%s579 + $0x28] sm:$0xf]
                  %602 = vst [vmem:[%s580 + $0x28] sm:$0xf] %v601
                  %v603 = vld [vmem:[%s579 + $0x2c] sm:$0xf]
                  %604 = vst [vmem:[%s580 + $0x2c] sm:$0xf] %v603
                  %v605 = vld [vmem:[%s579 + $0x30] sm:$0xf]
                  %606 = vst [vmem:[%s580 + $0x30] sm:$0xf] %v605
                  %v607 = vld [vmem:[%s579 + $0x34] sm:$0xf]
                  %608 = vst [vmem:[%s580 + $0x34] sm:$0xf] %v607
                  %v609 = vld [vmem:[%s579 + $0x38] sm:$0xf]
                  %610 = vst [vmem:[%s580 + $0x38] sm:$0xf] %v609
                  %v611 = vld [vmem:[%s579 + $0x3c] sm:$0xf]
                  %612 = vst [vmem:[%s580 + $0x3c] sm:$0xf] %v611
                  %v613 = vld [vmem:[%s579 + $0x80] sm:$0xf]
                  %614 = vst [vmem:[%s580 + $0x40] sm:$0xf] %v613
                  %v615 = vld [vmem:[%s579 + $0x84] sm:$0xf]
                  %616 = vst [vmem:[%s580 + $0x44] sm:$0xf] %v615
                  %v617 = vld [vmem:[%s579 + $0x88] sm:$0xf]
                  %618 = vst [vmem:[%s580 + $0x48] sm:$0xf] %v617
                  %v619 = vld [vmem:[%s579 + $0x8c] sm:$0xf]
                  %620 = vst [vmem:[%s580 + $0x4c] sm:$0xf] %v619
                  %v621 = vld [vmem:[%s579 + $0x90] sm:$0xf]
                  %622 = vst [vmem:[%s580 + $0x50] sm:$0xf] %v621
                  %v623 = vld [vmem:[%s579 + $0x94] sm:$0xf]
                  %624 = vst [vmem:[%s580 + $0x54] sm:$0xf] %v623
                  %v625 = vld [vmem:[%s579 + $0x98] sm:$0xf]
                  %626 = vst [vmem:[%s580 + $0x58] sm:$0xf] %v625
                  %v627 = vld [vmem:[%s579 + $0x9c] sm:$0xf]
                  %628 = vst [vmem:[%s580 + $0x5c] sm:$0xf] %v627
                  %v629 = vld [vmem:[%s579 + $0xa0] sm:$0xf]
                  %630 = vst [vmem:[%s580 + $0x60] sm:$0xf] %v629
                  %v631 = vld [vmem:[%s579 + $0xa4] sm:$0xf]
                  %632 = vst [vmem:[%s580 + $0x64] sm:$0xf] %v631
                  %v633 = vld [vmem:[%s579 + $0xa8] sm:$0xf]
                  %634 = vst [vmem:[%s580 + $0x68] sm:$0xf] %v633
                  %v635 = vld [vmem:[%s579 + $0xac] sm:$0xf]
                  %636 = vst [vmem:[%s580 + $0x6c] sm:$0xf] %v635
                  %v637 = vld [vmem:[%s579 + $0xb0] sm:$0xf]
                  %638 = vst [vmem:[%s580 + $0x70] sm:$0xf] %v637
                  %v639 = vld [vmem:[%s579 + $0xb4] sm:$0xf]
                  %640 = vst [vmem:[%s580 + $0x74] sm:$0xf] %v639
                  %v641 = vld [vmem:[%s579 + $0xb8] sm:$0xf]
                  %642 = vst [vmem:[%s580 + $0x78] sm:$0xf] %v641
                  %v643 = vld [vmem:[%s579 + $0xbc] sm:$0xf]
                  %644 = vst [vmem:[%s580 + $0x7c] sm:$0xf] %v643
                  %v645 = vld [vmem:[%s579 + $0x100] sm:$0xf]
                  %646 = vst [vmem:[%s580 + $0x80] sm:$0xf] %v645
                  %v647 = vld [vmem:[%s579 + $0x104] sm:$0xf]
                  %648 = vst [vmem:[%s580 + $0x84] sm:$0xf] %v647
                  %v649 = vld [vmem:[%s579 + $0x108] sm:$0xf]
                  %650 = vst [vmem:[%s580 + $0x88] sm:$0xf] %v649
                  %v651 = vld [vmem:[%s579 + $0x10c] sm:$0xf]
                  %652 = vst [vmem:[%s580 + $0x8c] sm:$0xf] %v651
                  %v653 = vld [vmem:[%s579 + $0x110] sm:$0xf]
                  %654 = vst [vmem:[%s580 + $0x90] sm:$0xf] %v653
                  %v655 = vld [vmem:[%s579 + $0x114] sm:$0xf]
                  %656 = vst [vmem:[%s580 + $0x94] sm:$0xf] %v655
                  %v657 = vld [vmem:[%s579 + $0x118] sm:$0xf]
                  %658 = vst [vmem:[%s580 + $0x98] sm:$0xf] %v657
                  %v659 = vld [vmem:[%s579 + $0x11c] sm:$0xf]
                  %660 = vst [vmem:[%s580 + $0x9c] sm:$0xf] %v659
                  %v661 = vld [vmem:[%s579 + $0x120] sm:$0xf]
                  %662 = vst [vmem:[%s580 + $0xa0] sm:$0xf] %v661
                  %v663 = vld [vmem:[%s579 + $0x124] sm:$0xf]
                  %664 = vst [vmem:[%s580 + $0xa4] sm:$0xf] %v663
                  %v665 = vld [vmem:[%s579 + $0x128] sm:$0xf]
                  %666 = vst [vmem:[%s580 + $0xa8] sm:$0xf] %v665
                  %v667 = vld [vmem:[%s579 + $0x12c] sm:$0xf]
                  %668 = vst [vmem:[%s580 + $0xac] sm:$0xf] %v667
                  %v669 = vld [vmem:[%s579 + $0x130] sm:$0xf]
                  %670 = vst [vmem:[%s580 + $0xb0] sm:$0xf] %v669
                  %v671 = vld [vmem:[%s579 + $0x134] sm:$0xf]
                  %672 = vst [vmem:[%s580 + $0xb4] sm:$0xf] %v671
                  %v673 = vld [vmem:[%s579 + $0x138] sm:$0xf]
                  %674 = vst [vmem:[%s580 + $0xb8] sm:$0xf] %v673
                  %v675 = vld [vmem:[%s579 + $0x13c] sm:$0xf]
                  %676 = vst [vmem:[%s580 + $0xbc] sm:$0xf] %v675
                  %v677 = vld [vmem:[%s579 + $0x180] sm:$0xf]
                  %678 = vst [vmem:[%s580 + $0xc0] sm:$0xf] %v677
                  %v679 = vld [vmem:[%s579 + $0x184] sm:$0xf]
                  %680 = vst [vmem:[%s580 + $0xc4] sm:$0xf] %v679
                  %v681 = vld [vmem:[%s579 + $0x188] sm:$0xf]
                  %682 = vst [vmem:[%s580 + $0xc8] sm:$0xf] %v681
                  %v683 = vld [vmem:[%s579 + $0x18c] sm:$0xf]
                  %684 = vst [vmem:[%s580 + $0xcc] sm:$0xf] %v683
                  %v685 = vld [vmem:[%s579 + $0x190] sm:$0xf]
                  %686 = vst [vmem:[%s580 + $0xd0] sm:$0xf] %v685
                  %v687 = vld [vmem:[%s579 + $0x194] sm:$0xf]
                  %688 = vst [vmem:[%s580 + $0xd4] sm:$0xf] %v687
                  %v689 = vld [vmem:[%s579 + $0x198] sm:$0xf]
                  %690 = vst [vmem:[%s580 + $0xd8] sm:$0xf] %v689
                  %v691 = vld [vmem:[%s579 + $0x19c] sm:$0xf]
                  %692 = vst [vmem:[%s580 + $0xdc] sm:$0xf] %v691
                  %v693 = vld [vmem:[%s579 + $0x1a0] sm:$0xf]
                  %694 = vst [vmem:[%s580 + $0xe0] sm:$0xf] %v693
                  %v695 = vld [vmem:[%s579 + $0x1a4] sm:$0xf]
                  %696 = vst [vmem:[%s580 + $0xe4] sm:$0xf] %v695
                  %v697 = vld [vmem:[%s579 + $0x1a8] sm:$0xf]
                  %698 = vst [vmem:[%s580 + $0xe8] sm:$0xf] %v697
                  %v699 = vld [vmem:[%s579 + $0x1ac] sm:$0xf]
                  %700 = vst [vmem:[%s580 + $0xec] sm:$0xf] %v699
                  %v701 = vld [vmem:[%s579 + $0x1b0] sm:$0xf]
                  %702 = vst [vmem:[%s580 + $0xf0] sm:$0xf] %v701
                  %v703 = vld [vmem:[%s579 + $0x1b4] sm:$0xf]
                  %704 = vst [vmem:[%s580 + $0xf4] sm:$0xf] %v703
                  %v705 = vld [vmem:[%s579 + $0x1b8] sm:$0xf]
                  %706 = vst [vmem:[%s580 + $0xf8] sm:$0xf] %v705
                  %v707 = vld [vmem:[%s579 + $0x1bc] sm:$0xf]
                  %708 = vst [vmem:[%s580 + $0xfc] sm:$0xf] %v707
                  %v709 = vld [vmem:[%s579 + $0x200] sm:$0xf]
                  %710 = vst [vmem:[%s580 + $0x100] sm:$0xf] %v709
                  %v711 = vld [vmem:[%s579 + $0x204] sm:$0xf]
                  %712 = vst [vmem:[%s580 + $0x104] sm:$0xf] %v711
                  %v713 = vld [vmem:[%s579 + $0x208] sm:$0xf]
                  %714 = vst [vmem:[%s580 + $0x108] sm:$0xf] %v713
                  %v715 = vld [vmem:[%s579 + $0x20c] sm:$0xf]
                  %716 = vst [vmem:[%s580 + $0x10c] sm:$0xf] %v715
                  %v717 = vld [vmem:[%s579 + $0x210] sm:$0xf]
                  %718 = vst [vmem:[%s580 + $0x110] sm:$0xf] %v717
                  %v719 = vld [vmem:[%s579 + $0x214] sm:$0xf]
                  %720 = vst [vmem:[%s580 + $0x114] sm:$0xf] %v719
                  %v721 = vld [vmem:[%s579 + $0x218] sm:$0xf]
                  %722 = vst [vmem:[%s580 + $0x118] sm:$0xf] %v721
                  %v723 = vld [vmem:[%s579 + $0x21c] sm:$0xf]
                  %724 = vst [vmem:[%s580 + $0x11c] sm:$0xf] %v723
                  %v725 = vld [vmem:[%s579 + $0x220] sm:$0xf]
                  %726 = vst [vmem:[%s580 + $0x120] sm:$0xf] %v725
                  %v727 = vld [vmem:[%s579 + $0x224] sm:$0xf]
                  %728 = vst [vmem:[%s580 + $0x124] sm:$0xf] %v727
                  %v729 = vld [vmem:[%s579 + $0x228] sm:$0xf]
                  %730 = vst [vmem:[%s580 + $0x128] sm:$0xf] %v729
                  %v731 = vld [vmem:[%s579 + $0x22c] sm:$0xf]
                  %732 = vst [vmem:[%s580 + $0x12c] sm:$0xf] %v731
                  %v733 = vld [vmem:[%s579 + $0x230] sm:$0xf]
                  %734 = vst [vmem:[%s580 + $0x130] sm:$0xf] %v733
                  %v735 = vld [vmem:[%s579 + $0x234] sm:$0xf]
                  %736 = vst [vmem:[%s580 + $0x134] sm:$0xf] %v735
                  %v737 = vld [vmem:[%s579 + $0x238] sm:$0xf]
                  %738 = vst [vmem:[%s580 + $0x138] sm:$0xf] %v737
                  %v739 = vld [vmem:[%s579 + $0x23c] sm:$0xf]
                  %740 = vst [vmem:[%s580 + $0x13c] sm:$0xf] %v739
                  %v741 = vld [vmem:[%s579 + $0x280] sm:$0xf]
                  %742 = vst [vmem:[%s580 + $0x140] sm:$0xf] %v741
                  %v743 = vld [vmem:[%s579 + $0x284] sm:$0xf]
                  %744 = vst [vmem:[%s580 + $0x144] sm:$0xf] %v743
                  %v745 = vld [vmem:[%s579 + $0x288] sm:$0xf]
                  %746 = vst [vmem:[%s580 + $0x148] sm:$0xf] %v745
                  %v747 = vld [vmem:[%s579 + $0x28c] sm:$0xf]
                  %748 = vst [vmem:[%s580 + $0x14c] sm:$0xf] %v747
                  %v749 = vld [vmem:[%s579 + $0x290] sm:$0xf]
                  %750 = vst [vmem:[%s580 + $0x150] sm:$0xf] %v749
                  %v751 = vld [vmem:[%s579 + $0x294] sm:$0xf]
                  %752 = vst [vmem:[%s580 + $0x154] sm:$0xf] %v751
                  %v753 = vld [vmem:[%s579 + $0x298] sm:$0xf]
                  %754 = vst [vmem:[%s580 + $0x158] sm:$0xf] %v753
                  %v755 = vld [vmem:[%s579 + $0x29c] sm:$0xf]
                  %756 = vst [vmem:[%s580 + $0x15c] sm:$0xf] %v755
                  %v757 = vld [vmem:[%s579 + $0x2a0] sm:$0xf]
                  %758 = vst [vmem:[%s580 + $0x160] sm:$0xf] %v757
                  %v759 = vld [vmem:[%s579 + $0x2a4] sm:$0xf]
                  %760 = vst [vmem:[%s580 + $0x164] sm:$0xf] %v759
                  %v761 = vld [vmem:[%s579 + $0x2a8] sm:$0xf]
                  %762 = vst [vmem:[%s580 + $0x168] sm:$0xf] %v761
                  %v763 = vld [vmem:[%s579 + $0x2ac] sm:$0xf]
                  %764 = vst [vmem:[%s580 + $0x16c] sm:$0xf] %v763
                  %v765 = vld [vmem:[%s579 + $0x2b0] sm:$0xf]
                  %766 = vst [vmem:[%s580 + $0x170] sm:$0xf] %v765
                  %v767 = vld [vmem:[%s579 + $0x2b4] sm:$0xf]
                  %768 = vst [vmem:[%s580 + $0x174] sm:$0xf] %v767
                  %v769 = vld [vmem:[%s579 + $0x2b8] sm:$0xf]
                  %770 = vst [vmem:[%s580 + $0x178] sm:$0xf] %v769
                  %v771 = vld [vmem:[%s579 + $0x2bc] sm:$0xf]
                  %772 = vst [vmem:[%s580 + $0x17c] sm:$0xf] %v771
                  %v773 = vld [vmem:[%s579 + $0x300] sm:$0xf]
                  %774 = vst [vmem:[%s580 + $0x180] sm:$0xf] %v773
                  %v775 = vld [vmem:[%s579 + $0x304] sm:$0xf]
                  %776 = vst [vmem:[%s580 + $0x184] sm:$0xf] %v775
                  %v777 = vld [vmem:[%s579 + $0x308] sm:$0xf]
                  %778 = vst [vmem:[%s580 + $0x188] sm:$0xf] %v777
                  %v779 = vld [vmem:[%s579 + $0x30c] sm:$0xf]
                  %780 = vst [vmem:[%s580 + $0x18c] sm:$0xf] %v779
                  %v781 = vld [vmem:[%s579 + $0x310] sm:$0xf]
                  %782 = vst [vmem:[%s580 + $0x190] sm:$0xf] %v781
                  %v783 = vld [vmem:[%s579 + $0x314] sm:$0xf]
                  %784 = vst [vmem:[%s580 + $0x194] sm:$0xf] %v783
                  %v785 = vld [vmem:[%s579 + $0x318] sm:$0xf]
                  %786 = vst [vmem:[%s580 + $0x198] sm:$0xf] %v785
                  %v787 = vld [vmem:[%s579 + $0x31c] sm:$0xf]
                  %788 = vst [vmem:[%s580 + $0x19c] sm:$0xf] %v787
                  %v789 = vld [vmem:[%s579 + $0x320] sm:$0xf]
                  %790 = vst [vmem:[%s580 + $0x1a0] sm:$0xf] %v789
                  %v791 = vld [vmem:[%s579 + $0x324] sm:$0xf]
                  %792 = vst [vmem:[%s580 + $0x1a4] sm:$0xf] %v791
                  %v793 = vld [vmem:[%s579 + $0x328] sm:$0xf]
                  %794 = vst [vmem:[%s580 + $0x1a8] sm:$0xf] %v793
                  %v795 = vld [vmem:[%s579 + $0x32c] sm:$0xf]
                  %796 = vst [vmem:[%s580 + $0x1ac] sm:$0xf] %v795
                  %v797 = vld [vmem:[%s579 + $0x330] sm:$0xf]
                  %798 = vst [vmem:[%s580 + $0x1b0] sm:$0xf] %v797
                  %v799 = vld [vmem:[%s579 + $0x334] sm:$0xf]
                  %800 = vst [vmem:[%s580 + $0x1b4] sm:$0xf] %v799
                  %v801 = vld [vmem:[%s579 + $0x338] sm:$0xf]
                  %802 = vst [vmem:[%s580 + $0x1b8] sm:$0xf] %v801
                  %v803 = vld [vmem:[%s579 + $0x33c] sm:$0xf]
                  %804 = vst [vmem:[%s580 + $0x1bc] sm:$0xf] %v803
                  %v805 = vld [vmem:[%s579 + $0x380] sm:$0xf]
                  %806 = vst [vmem:[%s580 + $0x1c0] sm:$0xf] %v805
                  %v807 = vld [vmem:[%s579 + $0x384] sm:$0xf]
                  %808 = vst [vmem:[%s580 + $0x1c4] sm:$0xf] %v807
                  %v809 = vld [vmem:[%s579 + $0x388] sm:$0xf]
                  %810 = vst [vmem:[%s580 + $0x1c8] sm:$0xf] %v809
                  %v811 = vld [vmem:[%s579 + $0x38c] sm:$0xf]
                  %812 = vst [vmem:[%s580 + $0x1cc] sm:$0xf] %v811
                  %v813 = vld [vmem:[%s579 + $0x390] sm:$0xf]
                  %814 = vst [vmem:[%s580 + $0x1d0] sm:$0xf] %v813
                  %v815 = vld [vmem:[%s579 + $0x394] sm:$0xf]
                  %816 = vst [vmem:[%s580 + $0x1d4] sm:$0xf] %v815
                  %v817 = vld [vmem:[%s579 + $0x398] sm:$0xf]
                  %818 = vst [vmem:[%s580 + $0x1d8] sm:$0xf] %v817
                  %v819 = vld [vmem:[%s579 + $0x39c] sm:$0xf]
                  %820 = vst [vmem:[%s580 + $0x1dc] sm:$0xf] %v819
                  %v821 = vld [vmem:[%s579 + $0x3a0] sm:$0xf]
                  %822 = vst [vmem:[%s580 + $0x1e0] sm:$0xf] %v821
                  %v823 = vld [vmem:[%s579 + $0x3a4] sm:$0xf]
                  %824 = vst [vmem:[%s580 + $0x1e4] sm:$0xf] %v823
                  %v825 = vld [vmem:[%s579 + $0x3a8] sm:$0xf]
                  %826 = vst [vmem:[%s580 + $0x1e8] sm:$0xf] %v825
                  %v827 = vld [vmem:[%s579 + $0x3ac] sm:$0xf]
                  %828 = vst [vmem:[%s580 + $0x1ec] sm:$0xf] %v827
                  %v829 = vld [vmem:[%s579 + $0x3b0] sm:$0xf]
                  %830 = vst [vmem:[%s580 + $0x1f0] sm:$0xf] %v829
                  %v831 = vld [vmem:[%s579 + $0x3b4] sm:$0xf]
                  %832 = vst [vmem:[%s580 + $0x1f4] sm:$0xf] %v831
                  %v833 = vld [vmem:[%s579 + $0x3b8] sm:$0xf]
                  %834 = vst [vmem:[%s580 + $0x1f8] sm:$0xf] %v833
                  %v835 = vld [vmem:[%s579 + $0x3bc] sm:$0xf]
                  %836 = vst [vmem:[%s580 + $0x1fc] sm:$0xf] %v835
                $region83: #{mlp_with_polyline_encoder.1} parent=70 // loop_footer
                  %s578 = sadd.s32 1, %s574
                $region84: #{mlp_with_polyline_encoder.1} parent=70 // loop_footer_branch
                  %573 = sbr.rel target = $region80
                $region85: #{mlp_with_polyline_encoder.1} parent=70 // loop_exit
                  _
              $region71: #{mlp_with_polyline_encoder.1} parent=55 // pred_fallthru
                _
            $region56: #{mlp_with_polyline_encoder.1} parent=51 // pred_fallthru
              _
            // Predicated region
            $region57: #{mlp_with_polyline_encoder.1} parent=51 // pred_check
              _
            $region58: #{mlp_with_polyline_encoder.1} parent=51 // pred_check_branch
              %296 = sbr.rel (0) target = $region60
            $region59: #{mlp_with_polyline_encoder.1} parent=51 // pred_region
              loop: start=0, step=1, limit=1
              $region61: #{mlp_with_polyline_encoder.1} parent=59 // loop_pre_header
                _
              $region62: #{mlp_with_polyline_encoder.1} parent=59 // loop_header
                %s299 = sphi 0, %s303
                %p300 = scmp.ge.s32.totalorder %s299, 1
                %s304 = sphi %s290, %s290
                %s305 = sphi %s286, %s286
              $region63: #{mlp_with_polyline_encoder.1} parent=59 // loop_header_branch
                %302 = sbr.rel (%p300) target = $region67
              $region64: #{mlp_with_polyline_encoder.1} parent=59 // loop_body
                %v306 = vld [vmem:[%s304] sm:$0xf]
                %307 = vst [vmem:[%s305] sm:$0xf] %v306
                %v308 = vld [vmem:[%s304 + $0x4] sm:$0xf]
                %309 = vst [vmem:[%s305 + $0x4] sm:$0xf] %v308
                %v310 = vld [vmem:[%s304 + $0x8] sm:$0xf]
                %311 = vst [vmem:[%s305 + $0x8] sm:$0xf] %v310
                %v312 = vld [vmem:[%s304 + $0xc] sm:$0xf]
                %313 = vst [vmem:[%s305 + $0xc] sm:$0xf] %v312
                %v314 = vld [vmem:[%s304 + $0x10] sm:$0xf]
                %315 = vst [vmem:[%s305 + $0x10] sm:$0xf] %v314
                %v316 = vld [vmem:[%s304 + $0x14] sm:$0xf]
                %317 = vst [vmem:[%s305 + $0x14] sm:$0xf] %v316
                %v318 = vld [vmem:[%s304 + $0x18] sm:$0xf]
                %319 = vst [vmem:[%s305 + $0x18] sm:$0xf] %v318
                %v320 = vld [vmem:[%s304 + $0x1c] sm:$0xf]
                %321 = vst [vmem:[%s305 + $0x1c] sm:$0xf] %v320
                %v322 = vld [vmem:[%s304 + $0x20] sm:$0xf]
                %323 = vst [vmem:[%s305 + $0x20] sm:$0xf] %v322
                %v324 = vld [vmem:[%s304 + $0x24] sm:$0xf]
                %325 = vst [vmem:[%s305 + $0x24] sm:$0xf] %v324
                %v326 = vld [vmem:[%s304 + $0x28] sm:$0xf]
                %327 = vst [vmem:[%s305 + $0x28] sm:$0xf] %v326
                %v328 = vld [vmem:[%s304 + $0x2c] sm:$0xf]
                %329 = vst [vmem:[%s305 + $0x2c] sm:$0xf] %v328
                %v330 = vld [vmem:[%s304 + $0x30] sm:$0xf]
                %331 = vst [vmem:[%s305 + $0x30] sm:$0xf] %v330
                %v332 = vld [vmem:[%s304 + $0x34] sm:$0xf]
                %333 = vst [vmem:[%s305 + $0x34] sm:$0xf] %v332
                %v334 = vld [vmem:[%s304 + $0x38] sm:$0xf]
                %335 = vst [vmem:[%s305 + $0x38] sm:$0xf] %v334
                %v336 = vld [vmem:[%s304 + $0x3c] sm:$0xf]
                %337 = vst [vmem:[%s305 + $0x3c] sm:$0xf] %v336
                %v338 = vld [vmem:[%s304 + $0x80] sm:$0xf]
                %339 = vst [vmem:[%s305 + $0x40] sm:$0xf] %v338
                %v340 = vld [vmem:[%s304 + $0x84] sm:$0xf]
                %341 = vst [vmem:[%s305 + $0x44] sm:$0xf] %v340
                %v342 = vld [vmem:[%s304 + $0x88] sm:$0xf]
                %343 = vst [vmem:[%s305 + $0x48] sm:$0xf] %v342
                %v344 = vld [vmem:[%s304 + $0x8c] sm:$0xf]
                %345 = vst [vmem:[%s305 + $0x4c] sm:$0xf] %v344
                %v346 = vld [vmem:[%s304 + $0x90] sm:$0xf]
                %347 = vst [vmem:[%s305 + $0x50] sm:$0xf] %v346
                %v348 = vld [vmem:[%s304 + $0x94] sm:$0xf]
                %349 = vst [vmem:[%s305 + $0x54] sm:$0xf] %v348
                %v350 = vld [vmem:[%s304 + $0x98] sm:$0xf]
                %351 = vst [vmem:[%s305 + $0x58] sm:$0xf] %v350
                %v352 = vld [vmem:[%s304 + $0x9c] sm:$0xf]
                %353 = vst [vmem:[%s305 + $0x5c] sm:$0xf] %v352
                %v354 = vld [vmem:[%s304 + $0xa0] sm:$0xf]
                %355 = vst [vmem:[%s305 + $0x60] sm:$0xf] %v354
                %v356 = vld [vmem:[%s304 + $0xa4] sm:$0xf]
                %357 = vst [vmem:[%s305 + $0x64] sm:$0xf] %v356
                %v358 = vld [vmem:[%s304 + $0xa8] sm:$0xf]
                %359 = vst [vmem:[%s305 + $0x68] sm:$0xf] %v358
                %v360 = vld [vmem:[%s304 + $0xac] sm:$0xf]
                %361 = vst [vmem:[%s305 + $0x6c] sm:$0xf] %v360
                %v362 = vld [vmem:[%s304 + $0xb0] sm:$0xf]
                %363 = vst [vmem:[%s305 + $0x70] sm:$0xf] %v362
                %v364 = vld [vmem:[%s304 + $0xb4] sm:$0xf]
                %365 = vst [vmem:[%s305 + $0x74] sm:$0xf] %v364
                %v366 = vld [vmem:[%s304 + $0xb8] sm:$0xf]
                %367 = vst [vmem:[%s305 + $0x78] sm:$0xf] %v366
                %v368 = vld [vmem:[%s304 + $0xbc] sm:$0xf]
                %369 = vst [vmem:[%s305 + $0x7c] sm:$0xf] %v368
                %v370 = vld [vmem:[%s304 + $0x100] sm:$0xf]
                %371 = vst [vmem:[%s305 + $0x80] sm:$0xf] %v370
                %v372 = vld [vmem:[%s304 + $0x104] sm:$0xf]
                %373 = vst [vmem:[%s305 + $0x84] sm:$0xf] %v372
                %v374 = vld [vmem:[%s304 + $0x108] sm:$0xf]
                %375 = vst [vmem:[%s305 + $0x88] sm:$0xf] %v374
                %v376 = vld [vmem:[%s304 + $0x10c] sm:$0xf]
                %377 = vst [vmem:[%s305 + $0x8c] sm:$0xf] %v376
                %v378 = vld [vmem:[%s304 + $0x110] sm:$0xf]
                %379 = vst [vmem:[%s305 + $0x90] sm:$0xf] %v378
                %v380 = vld [vmem:[%s304 + $0x114] sm:$0xf]
                %381 = vst [vmem:[%s305 + $0x94] sm:$0xf] %v380
                %v382 = vld [vmem:[%s304 + $0x118] sm:$0xf]
                %383 = vst [vmem:[%s305 + $0x98] sm:$0xf] %v382
                %v384 = vld [vmem:[%s304 + $0x11c] sm:$0xf]
                %385 = vst [vmem:[%s305 + $0x9c] sm:$0xf] %v384
                %v386 = vld [vmem:[%s304 + $0x120] sm:$0xf]
                %387 = vst [vmem:[%s305 + $0xa0] sm:$0xf] %v386
                %v388 = vld [vmem:[%s304 + $0x124] sm:$0xf]
                %389 = vst [vmem:[%s305 + $0xa4] sm:$0xf] %v388
                %v390 = vld [vmem:[%s304 + $0x128] sm:$0xf]
                %391 = vst [vmem:[%s305 + $0xa8] sm:$0xf] %v390
                %v392 = vld [vmem:[%s304 + $0x12c] sm:$0xf]
                %393 = vst [vmem:[%s305 + $0xac] sm:$0xf] %v392
                %v394 = vld [vmem:[%s304 + $0x130] sm:$0xf]
                %395 = vst [vmem:[%s305 + $0xb0] sm:$0xf] %v394
                %v396 = vld [vmem:[%s304 + $0x134] sm:$0xf]
                %397 = vst [vmem:[%s305 + $0xb4] sm:$0xf] %v396
                %v398 = vld [vmem:[%s304 + $0x138] sm:$0xf]
                %399 = vst [vmem:[%s305 + $0xb8] sm:$0xf] %v398
                %v400 = vld [vmem:[%s304 + $0x13c] sm:$0xf]
                %401 = vst [vmem:[%s305 + $0xbc] sm:$0xf] %v400
                %v402 = vld [vmem:[%s304 + $0x180] sm:$0xf]
                %403 = vst [vmem:[%s305 + $0xc0] sm:$0xf] %v402
                %v404 = vld [vmem:[%s304 + $0x184] sm:$0xf]
                %405 = vst [vmem:[%s305 + $0xc4] sm:$0xf] %v404
                %v406 = vld [vmem:[%s304 + $0x188] sm:$0xf]
                %407 = vst [vmem:[%s305 + $0xc8] sm:$0xf] %v406
                %v408 = vld [vmem:[%s304 + $0x18c] sm:$0xf]
                %409 = vst [vmem:[%s305 + $0xcc] sm:$0xf] %v408
                %v410 = vld [vmem:[%s304 + $0x190] sm:$0xf]
                %411 = vst [vmem:[%s305 + $0xd0] sm:$0xf] %v410
                %v412 = vld [vmem:[%s304 + $0x194] sm:$0xf]
                %413 = vst [vmem:[%s305 + $0xd4] sm:$0xf] %v412
                %v414 = vld [vmem:[%s304 + $0x198] sm:$0xf]
                %415 = vst [vmem:[%s305 + $0xd8] sm:$0xf] %v414
                %v416 = vld [vmem:[%s304 + $0x19c] sm:$0xf]
                %417 = vst [vmem:[%s305 + $0xdc] sm:$0xf] %v416
                %v418 = vld [vmem:[%s304 + $0x1a0] sm:$0xf]
                %419 = vst [vmem:[%s305 + $0xe0] sm:$0xf] %v418
                %v420 = vld [vmem:[%s304 + $0x1a4] sm:$0xf]
                %421 = vst [vmem:[%s305 + $0xe4] sm:$0xf] %v420
                %v422 = vld [vmem:[%s304 + $0x1a8] sm:$0xf]
                %423 = vst [vmem:[%s305 + $0xe8] sm:$0xf] %v422
                %v424 = vld [vmem:[%s304 + $0x1ac] sm:$0xf]
                %425 = vst [vmem:[%s305 + $0xec] sm:$0xf] %v424
                %v426 = vld [vmem:[%s304 + $0x1b0] sm:$0xf]
                %427 = vst [vmem:[%s305 + $0xf0] sm:$0xf] %v426
                %v428 = vld [vmem:[%s304 + $0x1b4] sm:$0xf]
                %429 = vst [vmem:[%s305 + $0xf4] sm:$0xf] %v428
                %v430 = vld [vmem:[%s304 + $0x1b8] sm:$0xf]
                %431 = vst [vmem:[%s305 + $0xf8] sm:$0xf] %v430
                %v432 = vld [vmem:[%s304 + $0x1bc] sm:$0xf]
                %433 = vst [vmem:[%s305 + $0xfc] sm:$0xf] %v432
                %v434 = vld [vmem:[%s304 + $0x200] sm:$0xf]
                %435 = vst [vmem:[%s305 + $0x100] sm:$0xf] %v434
                %v436 = vld [vmem:[%s304 + $0x204] sm:$0xf]
                %437 = vst [vmem:[%s305 + $0x104] sm:$0xf] %v436
                %v438 = vld [vmem:[%s304 + $0x208] sm:$0xf]
                %439 = vst [vmem:[%s305 + $0x108] sm:$0xf] %v438
                %v440 = vld [vmem:[%s304 + $0x20c] sm:$0xf]
                %441 = vst [vmem:[%s305 + $0x10c] sm:$0xf] %v440
                %v442 = vld [vmem:[%s304 + $0x210] sm:$0xf]
                %443 = vst [vmem:[%s305 + $0x110] sm:$0xf] %v442
                %v444 = vld [vmem:[%s304 + $0x214] sm:$0xf]
                %445 = vst [vmem:[%s305 + $0x114] sm:$0xf] %v444
                %v446 = vld [vmem:[%s304 + $0x218] sm:$0xf]
                %447 = vst [vmem:[%s305 + $0x118] sm:$0xf] %v446
                %v448 = vld [vmem:[%s304 + $0x21c] sm:$0xf]
                %449 = vst [vmem:[%s305 + $0x11c] sm:$0xf] %v448
                %v450 = vld [vmem:[%s304 + $0x220] sm:$0xf]
                %451 = vst [vmem:[%s305 + $0x120] sm:$0xf] %v450
                %v452 = vld [vmem:[%s304 + $0x224] sm:$0xf]
                %453 = vst [vmem:[%s305 + $0x124] sm:$0xf] %v452
                %v454 = vld [vmem:[%s304 + $0x228] sm:$0xf]
                %455 = vst [vmem:[%s305 + $0x128] sm:$0xf] %v454
                %v456 = vld [vmem:[%s304 + $0x22c] sm:$0xf]
                %457 = vst [vmem:[%s305 + $0x12c] sm:$0xf] %v456
                %v458 = vld [vmem:[%s304 + $0x230] sm:$0xf]
                %459 = vst [vmem:[%s305 + $0x130] sm:$0xf] %v458
                %v460 = vld [vmem:[%s304 + $0x234] sm:$0xf]
                %461 = vst [vmem:[%s305 + $0x134] sm:$0xf] %v460
                %v462 = vld [vmem:[%s304 + $0x238] sm:$0xf]
                %463 = vst [vmem:[%s305 + $0x138] sm:$0xf] %v462
                %v464 = vld [vmem:[%s304 + $0x23c] sm:$0xf]
                %465 = vst [vmem:[%s305 + $0x13c] sm:$0xf] %v464
                %v466 = vld [vmem:[%s304 + $0x280] sm:$0xf]
                %467 = vst [vmem:[%s305 + $0x140] sm:$0xf] %v466
                %v468 = vld [vmem:[%s304 + $0x284] sm:$0xf]
                %469 = vst [vmem:[%s305 + $0x144] sm:$0xf] %v468
                %v470 = vld [vmem:[%s304 + $0x288] sm:$0xf]
                %471 = vst [vmem:[%s305 + $0x148] sm:$0xf] %v470
                %v472 = vld [vmem:[%s304 + $0x28c] sm:$0xf]
                %473 = vst [vmem:[%s305 + $0x14c] sm:$0xf] %v472
                %v474 = vld [vmem:[%s304 + $0x290] sm:$0xf]
                %475 = vst [vmem:[%s305 + $0x150] sm:$0xf] %v474
                %v476 = vld [vmem:[%s304 + $0x294] sm:$0xf]
                %477 = vst [vmem:[%s305 + $0x154] sm:$0xf] %v476
                %v478 = vld [vmem:[%s304 + $0x298] sm:$0xf]
                %479 = vst [vmem:[%s305 + $0x158] sm:$0xf] %v478
                %v480 = vld [vmem:[%s304 + $0x29c] sm:$0xf]
                %481 = vst [vmem:[%s305 + $0x15c] sm:$0xf] %v480
                %v482 = vld [vmem:[%s304 + $0x2a0] sm:$0xf]
                %483 = vst [vmem:[%s305 + $0x160] sm:$0xf] %v482
                %v484 = vld [vmem:[%s304 + $0x2a4] sm:$0xf]
                %485 = vst [vmem:[%s305 + $0x164] sm:$0xf] %v484
                %v486 = vld [vmem:[%s304 + $0x2a8] sm:$0xf]
                %487 = vst [vmem:[%s305 + $0x168] sm:$0xf] %v486
                %v488 = vld [vmem:[%s304 + $0x2ac] sm:$0xf]
                %489 = vst [vmem:[%s305 + $0x16c] sm:$0xf] %v488
                %v490 = vld [vmem:[%s304 + $0x2b0] sm:$0xf]
                %491 = vst [vmem:[%s305 + $0x170] sm:$0xf] %v490
                %v492 = vld [vmem:[%s304 + $0x2b4] sm:$0xf]
                %493 = vst [vmem:[%s305 + $0x174] sm:$0xf] %v492
                %v494 = vld [vmem:[%s304 + $0x2b8] sm:$0xf]
                %495 = vst [vmem:[%s305 + $0x178] sm:$0xf] %v494
                %v496 = vld [vmem:[%s304 + $0x2bc] sm:$0xf]
                %497 = vst [vmem:[%s305 + $0x17c] sm:$0xf] %v496
                %v498 = vld [vmem:[%s304 + $0x300] sm:$0xf]
                %499 = vst [vmem:[%s305 + $0x180] sm:$0xf] %v498
                %v500 = vld [vmem:[%s304 + $0x304] sm:$0xf]
                %501 = vst [vmem:[%s305 + $0x184] sm:$0xf] %v500
                %v502 = vld [vmem:[%s304 + $0x308] sm:$0xf]
                %503 = vst [vmem:[%s305 + $0x188] sm:$0xf] %v502
                %v504 = vld [vmem:[%s304 + $0x30c] sm:$0xf]
                %505 = vst [vmem:[%s305 + $0x18c] sm:$0xf] %v504
                %v506 = vld [vmem:[%s304 + $0x310] sm:$0xf]
                %507 = vst [vmem:[%s305 + $0x190] sm:$0xf] %v506
                %v508 = vld [vmem:[%s304 + $0x314] sm:$0xf]
                %509 = vst [vmem:[%s305 + $0x194] sm:$0xf] %v508
                %v510 = vld [vmem:[%s304 + $0x318] sm:$0xf]
                %511 = vst [vmem:[%s305 + $0x198] sm:$0xf] %v510
                %v512 = vld [vmem:[%s304 + $0x31c] sm:$0xf]
                %513 = vst [vmem:[%s305 + $0x19c] sm:$0xf] %v512
                %v514 = vld [vmem:[%s304 + $0x320] sm:$0xf]
                %515 = vst [vmem:[%s305 + $0x1a0] sm:$0xf] %v514
                %v516 = vld [vmem:[%s304 + $0x324] sm:$0xf]
                %517 = vst [vmem:[%s305 + $0x1a4] sm:$0xf] %v516
                %v518 = vld [vmem:[%s304 + $0x328] sm:$0xf]
                %519 = vst [vmem:[%s305 + $0x1a8] sm:$0xf] %v518
                %v520 = vld [vmem:[%s304 + $0x32c] sm:$0xf]
                %521 = vst [vmem:[%s305 + $0x1ac] sm:$0xf] %v520
                %v522 = vld [vmem:[%s304 + $0x330] sm:$0xf]
                %523 = vst [vmem:[%s305 + $0x1b0] sm:$0xf] %v522
                %v524 = vld [vmem:[%s304 + $0x334] sm:$0xf]
                %525 = vst [vmem:[%s305 + $0x1b4] sm:$0xf] %v524
                %v526 = vld [vmem:[%s304 + $0x338] sm:$0xf]
                %527 = vst [vmem:[%s305 + $0x1b8] sm:$0xf] %v526
                %v528 = vld [vmem:[%s304 + $0x33c] sm:$0xf]
                %529 = vst [vmem:[%s305 + $0x1bc] sm:$0xf] %v528
                %v530 = vld [vmem:[%s304 + $0x380] sm:$0xf]
                %531 = vst [vmem:[%s305 + $0x1c0] sm:$0xf] %v530
                %v532 = vld [vmem:[%s304 + $0x384] sm:$0xf]
                %533 = vst [vmem:[%s305 + $0x1c4] sm:$0xf] %v532
                %v534 = vld [vmem:[%s304 + $0x388] sm:$0xf]
                %535 = vst [vmem:[%s305 + $0x1c8] sm:$0xf] %v534
                %v536 = vld [vmem:[%s304 + $0x38c] sm:$0xf]
                %537 = vst [vmem:[%s305 + $0x1cc] sm:$0xf] %v536
                %v538 = vld [vmem:[%s304 + $0x390] sm:$0xf]
                %539 = vst [vmem:[%s305 + $0x1d0] sm:$0xf] %v538
                %v540 = vld [vmem:[%s304 + $0x394] sm:$0xf]
                %541 = vst [vmem:[%s305 + $0x1d4] sm:$0xf] %v540
                %v542 = vld [vmem:[%s304 + $0x398] sm:$0xf]
                %543 = vst [vmem:[%s305 + $0x1d8] sm:$0xf] %v542
                %v544 = vld [vmem:[%s304 + $0x39c] sm:$0xf]
                %545 = vst [vmem:[%s305 + $0x1dc] sm:$0xf] %v544
                %v546 = vld [vmem:[%s304 + $0x3a0] sm:$0xf]
                %547 = vst [vmem:[%s305 + $0x1e0] sm:$0xf] %v546
                %v548 = vld [vmem:[%s304 + $0x3a4] sm:$0xf]
                %549 = vst [vmem:[%s305 + $0x1e4] sm:$0xf] %v548
                %v550 = vld [vmem:[%s304 + $0x3a8] sm:$0xf]
                %551 = vst [vmem:[%s305 + $0x1e8] sm:$0xf] %v550
                %v552 = vld [vmem:[%s304 + $0x3ac] sm:$0xf]
                %553 = vst [vmem:[%s305 + $0x1ec] sm:$0xf] %v552
                %v554 = vld [vmem:[%s304 + $0x3b0] sm:$0xf]
                %555 = vst [vmem:[%s305 + $0x1f0] sm:$0xf] %v554
                %v556 = vld [vmem:[%s304 + $0x3b4] sm:$0xf]
                %557 = vst [vmem:[%s305 + $0x1f4] sm:$0xf] %v556
                %v558 = vld [vmem:[%s304 + $0x3b8] sm:$0xf]
                %559 = vst [vmem:[%s305 + $0x1f8] sm:$0xf] %v558
                %v560 = vld [vmem:[%s304 + $0x3bc] sm:$0xf]
                %561 = vst [vmem:[%s305 + $0x1fc] sm:$0xf] %v560
              $region65: #{mlp_with_polyline_encoder.1} parent=59 // loop_footer
                %s303 = sadd.s32 1, %s299
              $region66: #{mlp_with_polyline_encoder.1} parent=59 // loop_footer_branch
                %298 = sbr.rel target = $region62
              $region67: #{mlp_with_polyline_encoder.1} parent=59 // loop_exit
                _
            $region60: #{mlp_with_polyline_encoder.1} parent=51 // pred_fallthru
              _
          $region52: #{mlp_with_polyline_encoder.1} parent=47 // pred_fallthru
            _
          %837 = vnop
        $region48: #{mlp_with_polyline_encoder.1} parent=43 // pred_fallthru
          _
        // Predicated region
        $region86: #{mlp_with_polyline_encoder.1} parent=43 // pred_check
          %p838 = pneg %p61
        $region87: #{mlp_with_polyline_encoder.1} parent=43 // pred_check_branch
          %840 = sbr.rel (%p838) target = $region89
        $region88: #{mlp_with_polyline_encoder.1} parent=43 // pred_region
          %s841 = sand.u32 %s51, 1
          %s842 = sand.u32 %s51, 1
          %s843 = smul.addr %s842, 1024
          %s844 = scalar_lea.vmem [#allocation3], %s843
          %s845 = smul.u32 8, %s15
          %s846 = smul.addr %s845, 2
          %s847 = smul.addr %s846, 8
          %s848 = scalar_lea.vmem %s1, %s847
          // Predicated region
          $region90: #{mlp_with_polyline_encoder.1} parent=88 // pred_check
            _
          $region91: #{mlp_with_polyline_encoder.1} parent=88 // pred_check_branch
            %850 = sbr.rel (0) target = $region93
          $region92: #{mlp_with_polyline_encoder.1} parent=88 // pred_region
            // Predicated region
            $region94: #{mlp_with_polyline_encoder.1} parent=92 // pred_check
              _
            $region95: #{mlp_with_polyline_encoder.1} parent=92 // pred_check_branch
              %852 = sbr.rel (0) target = $region97
            $region96: #{mlp_with_polyline_encoder.1} parent=92 // pred_region
              // Predicated region
              $region109: #{mlp_with_polyline_encoder.1} parent=96 // pred_check
                _
              $region110: #{mlp_with_polyline_encoder.1} parent=96 // pred_check_branch
                %1121 = sbr.rel (0) target = $region112
              $region111: #{mlp_with_polyline_encoder.1} parent=96 // pred_region
                loop: start=0, step=1, limit=1
                $region113: #{mlp_with_polyline_encoder.1} parent=111 // loop_pre_header
                  _
                $region114: #{mlp_with_polyline_encoder.1} parent=111 // loop_header
                  %s1123 = sphi 0, %s1127
                  %p1124 = scmp.ge.s32.totalorder %s1123, 1
                  %s1128 = sphi %s848, %s848
                  %s1129 = sphi %s844, %s844
                $region115: #{mlp_with_polyline_encoder.1} parent=111 // loop_header_branch
                  %1126 = sbr.rel (%p1124) target = $region119
                $region116: #{mlp_with_polyline_encoder.1} parent=111 // loop_body
                  %v1130 = vld [vmem:[%s1128] sm:$0xff]
                  %1131 = vst [vmem:[%s1129] sm:$0xff] %v1130
                  %v1132 = vld [vmem:[%s1128 + $0x8] sm:$0xff]
                  %1133 = vst [vmem:[%s1129 + $0x8] sm:$0xff] %v1132
                  %v1134 = vld [vmem:[%s1128 + $0x10] sm:$0xff]
                  %1135 = vst [vmem:[%s1129 + $0x10] sm:$0xff] %v1134
                  %v1136 = vld [vmem:[%s1128 + $0x18] sm:$0xff]
                  %1137 = vst [vmem:[%s1129 + $0x18] sm:$0xff] %v1136
                  %v1138 = vld [vmem:[%s1128 + $0x20] sm:$0xff]
                  %1139 = vst [vmem:[%s1129 + $0x20] sm:$0xff] %v1138
                  %v1140 = vld [vmem:[%s1128 + $0x28] sm:$0xff]
                  %1141 = vst [vmem:[%s1129 + $0x28] sm:$0xff] %v1140
                  %v1142 = vld [vmem:[%s1128 + $0x30] sm:$0xff]
                  %1143 = vst [vmem:[%s1129 + $0x30] sm:$0xff] %v1142
                  %v1144 = vld [vmem:[%s1128 + $0x38] sm:$0xff]
                  %1145 = vst [vmem:[%s1129 + $0x38] sm:$0xff] %v1144
                  %v1146 = vld [vmem:[%s1128 + $0x40] sm:$0xff]
                  %1147 = vst [vmem:[%s1129 + $0x40] sm:$0xff] %v1146
                  %v1148 = vld [vmem:[%s1128 + $0x48] sm:$0xff]
                  %1149 = vst [vmem:[%s1129 + $0x48] sm:$0xff] %v1148
                  %v1150 = vld [vmem:[%s1128 + $0x50] sm:$0xff]
                  %1151 = vst [vmem:[%s1129 + $0x50] sm:$0xff] %v1150
                  %v1152 = vld [vmem:[%s1128 + $0x58] sm:$0xff]
                  %1153 = vst [vmem:[%s1129 + $0x58] sm:$0xff] %v1152
                  %v1154 = vld [vmem:[%s1128 + $0x60] sm:$0xff]
                  %1155 = vst [vmem:[%s1129 + $0x60] sm:$0xff] %v1154
                  %v1156 = vld [vmem:[%s1128 + $0x68] sm:$0xff]
                  %1157 = vst [vmem:[%s1129 + $0x68] sm:$0xff] %v1156
                  %v1158 = vld [vmem:[%s1128 + $0x70] sm:$0xff]
                  %1159 = vst [vmem:[%s1129 + $0x70] sm:$0xff] %v1158
                  %v1160 = vld [vmem:[%s1128 + $0x78] sm:$0xff]
                  %1161 = vst [vmem:[%s1129 + $0x78] sm:$0xff] %v1160
                  %v1162 = vld [vmem:[%s1128 + $0x100] sm:$0xff]
                  %1163 = vst [vmem:[%s1129 + $0x80] sm:$0xff] %v1162
                  %v1164 = vld [vmem:[%s1128 + $0x108] sm:$0xff]
                  %1165 = vst [vmem:[%s1129 + $0x88] sm:$0xff] %v1164
                  %v1166 = vld [vmem:[%s1128 + $0x110] sm:$0xff]
                  %1167 = vst [vmem:[%s1129 + $0x90] sm:$0xff] %v1166
                  %v1168 = vld [vmem:[%s1128 + $0x118] sm:$0xff]
                  %1169 = vst [vmem:[%s1129 + $0x98] sm:$0xff] %v1168
                  %v1170 = vld [vmem:[%s1128 + $0x120] sm:$0xff]
                  %1171 = vst [vmem:[%s1129 + $0xa0] sm:$0xff] %v1170
                  %v1172 = vld [vmem:[%s1128 + $0x128] sm:$0xff]
                  %1173 = vst [vmem:[%s1129 + $0xa8] sm:$0xff] %v1172
                  %v1174 = vld [vmem:[%s1128 + $0x130] sm:$0xff]
                  %1175 = vst [vmem:[%s1129 + $0xb0] sm:$0xff] %v1174
                  %v1176 = vld [vmem:[%s1128 + $0x138] sm:$0xff]
                  %1177 = vst [vmem:[%s1129 + $0xb8] sm:$0xff] %v1176
                  %v1178 = vld [vmem:[%s1128 + $0x140] sm:$0xff]
                  %1179 = vst [vmem:[%s1129 + $0xc0] sm:$0xff] %v1178
                  %v1180 = vld [vmem:[%s1128 + $0x148] sm:$0xff]
                  %1181 = vst [vmem:[%s1129 + $0xc8] sm:$0xff] %v1180
                  %v1182 = vld [vmem:[%s1128 + $0x150] sm:$0xff]
                  %1183 = vst [vmem:[%s1129 + $0xd0] sm:$0xff] %v1182
                  %v1184 = vld [vmem:[%s1128 + $0x158] sm:$0xff]
                  %1185 = vst [vmem:[%s1129 + $0xd8] sm:$0xff] %v1184
                  %v1186 = vld [vmem:[%s1128 + $0x160] sm:$0xff]
                  %1187 = vst [vmem:[%s1129 + $0xe0] sm:$0xff] %v1186
                  %v1188 = vld [vmem:[%s1128 + $0x168] sm:$0xff]
                  %1189 = vst [vmem:[%s1129 + $0xe8] sm:$0xff] %v1188
                  %v1190 = vld [vmem:[%s1128 + $0x170] sm:$0xff]
                  %1191 = vst [vmem:[%s1129 + $0xf0] sm:$0xff] %v1190
                  %v1192 = vld [vmem:[%s1128 + $0x178] sm:$0xff]
                  %1193 = vst [vmem:[%s1129 + $0xf8] sm:$0xff] %v1192
                  %v1194 = vld [vmem:[%s1128 + $0x200] sm:$0xff]
                  %1195 = vst [vmem:[%s1129 + $0x100] sm:$0xff] %v1194
                  %v1196 = vld [vmem:[%s1128 + $0x208] sm:$0xff]
                  %1197 = vst [vmem:[%s1129 + $0x108] sm:$0xff] %v1196
                  %v1198 = vld [vmem:[%s1128 + $0x210] sm:$0xff]
                  %1199 = vst [vmem:[%s1129 + $0x110] sm:$0xff] %v1198
                  %v1200 = vld [vmem:[%s1128 + $0x218] sm:$0xff]
                  %1201 = vst [vmem:[%s1129 + $0x118] sm:$0xff] %v1200
                  %v1202 = vld [vmem:[%s1128 + $0x220] sm:$0xff]
                  %1203 = vst [vmem:[%s1129 + $0x120] sm:$0xff] %v1202
                  %v1204 = vld [vmem:[%s1128 + $0x228] sm:$0xff]
                  %1205 = vst [vmem:[%s1129 + $0x128] sm:$0xff] %v1204
                  %v1206 = vld [vmem:[%s1128 + $0x230] sm:$0xff]
                  %1207 = vst [vmem:[%s1129 + $0x130] sm:$0xff] %v1206
                  %v1208 = vld [vmem:[%s1128 + $0x238] sm:$0xff]
                  %1209 = vst [vmem:[%s1129 + $0x138] sm:$0xff] %v1208
                  %v1210 = vld [vmem:[%s1128 + $0x240] sm:$0xff]
                  %1211 = vst [vmem:[%s1129 + $0x140] sm:$0xff] %v1210
                  %v1212 = vld [vmem:[%s1128 + $0x248] sm:$0xff]
                  %1213 = vst [vmem:[%s1129 + $0x148] sm:$0xff] %v1212
                  %v1214 = vld [vmem:[%s1128 + $0x250] sm:$0xff]
                  %1215 = vst [vmem:[%s1129 + $0x150] sm:$0xff] %v1214
                  %v1216 = vld [vmem:[%s1128 + $0x258] sm:$0xff]
                  %1217 = vst [vmem:[%s1129 + $0x158] sm:$0xff] %v1216
                  %v1218 = vld [vmem:[%s1128 + $0x260] sm:$0xff]
                  %1219 = vst [vmem:[%s1129 + $0x160] sm:$0xff] %v1218
                  %v1220 = vld [vmem:[%s1128 + $0x268] sm:$0xff]
                  %1221 = vst [vmem:[%s1129 + $0x168] sm:$0xff] %v1220
                  %v1222 = vld [vmem:[%s1128 + $0x270] sm:$0xff]
                  %1223 = vst [vmem:[%s1129 + $0x170] sm:$0xff] %v1222
                  %v1224 = vld [vmem:[%s1128 + $0x278] sm:$0xff]
                  %1225 = vst [vmem:[%s1129 + $0x178] sm:$0xff] %v1224
                  %v1226 = vld [vmem:[%s1128 + $0x300] sm:$0xff]
                  %1227 = vst [vmem:[%s1129 + $0x180] sm:$0xff] %v1226
                  %v1228 = vld [vmem:[%s1128 + $0x308] sm:$0xff]
                  %1229 = vst [vmem:[%s1129 + $0x188] sm:$0xff] %v1228
                  %v1230 = vld [vmem:[%s1128 + $0x310] sm:$0xff]
                  %1231 = vst [vmem:[%s1129 + $0x190] sm:$0xff] %v1230
                  %v1232 = vld [vmem:[%s1128 + $0x318] sm:$0xff]
                  %1233 = vst [vmem:[%s1129 + $0x198] sm:$0xff] %v1232
                  %v1234 = vld [vmem:[%s1128 + $0x320] sm:$0xff]
                  %1235 = vst [vmem:[%s1129 + $0x1a0] sm:$0xff] %v1234
                  %v1236 = vld [vmem:[%s1128 + $0x328] sm:$0xff]
                  %1237 = vst [vmem:[%s1129 + $0x1a8] sm:$0xff] %v1236
                  %v1238 = vld [vmem:[%s1128 + $0x330] sm:$0xff]
                  %1239 = vst [vmem:[%s1129 + $0x1b0] sm:$0xff] %v1238
                  %v1240 = vld [vmem:[%s1128 + $0x338] sm:$0xff]
                  %1241 = vst [vmem:[%s1129 + $0x1b8] sm:$0xff] %v1240
                  %v1242 = vld [vmem:[%s1128 + $0x340] sm:$0xff]
                  %1243 = vst [vmem:[%s1129 + $0x1c0] sm:$0xff] %v1242
                  %v1244 = vld [vmem:[%s1128 + $0x348] sm:$0xff]
                  %1245 = vst [vmem:[%s1129 + $0x1c8] sm:$0xff] %v1244
                  %v1246 = vld [vmem:[%s1128 + $0x350] sm:$0xff]
                  %1247 = vst [vmem:[%s1129 + $0x1d0] sm:$0xff] %v1246
                  %v1248 = vld [vmem:[%s1128 + $0x358] sm:$0xff]
                  %1249 = vst [vmem:[%s1129 + $0x1d8] sm:$0xff] %v1248
                  %v1250 = vld [vmem:[%s1128 + $0x360] sm:$0xff]
                  %1251 = vst [vmem:[%s1129 + $0x1e0] sm:$0xff] %v1250
                  %v1252 = vld [vmem:[%s1128 + $0x368] sm:$0xff]
                  %1253 = vst [vmem:[%s1129 + $0x1e8] sm:$0xff] %v1252
                  %v1254 = vld [vmem:[%s1128 + $0x370] sm:$0xff]
                  %1255 = vst [vmem:[%s1129 + $0x1f0] sm:$0xff] %v1254
                  %v1256 = vld [vmem:[%s1128 + $0x378] sm:$0xff]
                  %1257 = vst [vmem:[%s1129 + $0x1f8] sm:$0xff] %v1256
                  %v1258 = vld [vmem:[%s1128 + $0x400] sm:$0xff]
                  %1259 = vst [vmem:[%s1129 + $0x200] sm:$0xff] %v1258
                  %v1260 = vld [vmem:[%s1128 + $0x408] sm:$0xff]
                  %1261 = vst [vmem:[%s1129 + $0x208] sm:$0xff] %v1260
                  %v1262 = vld [vmem:[%s1128 + $0x410] sm:$0xff]
                  %1263 = vst [vmem:[%s1129 + $0x210] sm:$0xff] %v1262
                  %v1264 = vld [vmem:[%s1128 + $0x418] sm:$0xff]
                  %1265 = vst [vmem:[%s1129 + $0x218] sm:$0xff] %v1264
                  %v1266 = vld [vmem:[%s1128 + $0x420] sm:$0xff]
                  %1267 = vst [vmem:[%s1129 + $0x220] sm:$0xff] %v1266
                  %v1268 = vld [vmem:[%s1128 + $0x428] sm:$0xff]
                  %1269 = vst [vmem:[%s1129 + $0x228] sm:$0xff] %v1268
                  %v1270 = vld [vmem:[%s1128 + $0x430] sm:$0xff]
                  %1271 = vst [vmem:[%s1129 + $0x230] sm:$0xff] %v1270
                  %v1272 = vld [vmem:[%s1128 + $0x438] sm:$0xff]
                  %1273 = vst [vmem:[%s1129 + $0x238] sm:$0xff] %v1272
                  %v1274 = vld [vmem:[%s1128 + $0x440] sm:$0xff]
                  %1275 = vst [vmem:[%s1129 + $0x240] sm:$0xff] %v1274
                  %v1276 = vld [vmem:[%s1128 + $0x448] sm:$0xff]
                  %1277 = vst [vmem:[%s1129 + $0x248] sm:$0xff] %v1276
                  %v1278 = vld [vmem:[%s1128 + $0x450] sm:$0xff]
                  %1279 = vst [vmem:[%s1129 + $0x250] sm:$0xff] %v1278
                  %v1280 = vld [vmem:[%s1128 + $0x458] sm:$0xff]
                  %1281 = vst [vmem:[%s1129 + $0x258] sm:$0xff] %v1280
                  %v1282 = vld [vmem:[%s1128 + $0x460] sm:$0xff]
                  %1283 = vst [vmem:[%s1129 + $0x260] sm:$0xff] %v1282
                  %v1284 = vld [vmem:[%s1128 + $0x468] sm:$0xff]
                  %1285 = vst [vmem:[%s1129 + $0x268] sm:$0xff] %v1284
                  %v1286 = vld [vmem:[%s1128 + $0x470] sm:$0xff]
                  %1287 = vst [vmem:[%s1129 + $0x270] sm:$0xff] %v1286
                  %v1288 = vld [vmem:[%s1128 + $0x478] sm:$0xff]
                  %1289 = vst [vmem:[%s1129 + $0x278] sm:$0xff] %v1288
                  %v1290 = vld [vmem:[%s1128 + $0x500] sm:$0xff]
                  %1291 = vst [vmem:[%s1129 + $0x280] sm:$0xff] %v1290
                  %v1292 = vld [vmem:[%s1128 + $0x508] sm:$0xff]
                  %1293 = vst [vmem:[%s1129 + $0x288] sm:$0xff] %v1292
                  %v1294 = vld [vmem:[%s1128 + $0x510] sm:$0xff]
                  %1295 = vst [vmem:[%s1129 + $0x290] sm:$0xff] %v1294
                  %v1296 = vld [vmem:[%s1128 + $0x518] sm:$0xff]
                  %1297 = vst [vmem:[%s1129 + $0x298] sm:$0xff] %v1296
                  %v1298 = vld [vmem:[%s1128 + $0x520] sm:$0xff]
                  %1299 = vst [vmem:[%s1129 + $0x2a0] sm:$0xff] %v1298
                  %v1300 = vld [vmem:[%s1128 + $0x528] sm:$0xff]
                  %1301 = vst [vmem:[%s1129 + $0x2a8] sm:$0xff] %v1300
                  %v1302 = vld [vmem:[%s1128 + $0x530] sm:$0xff]
                  %1303 = vst [vmem:[%s1129 + $0x2b0] sm:$0xff] %v1302
                  %v1304 = vld [vmem:[%s1128 + $0x538] sm:$0xff]
                  %1305 = vst [vmem:[%s1129 + $0x2b8] sm:$0xff] %v1304
                  %v1306 = vld [vmem:[%s1128 + $0x540] sm:$0xff]
                  %1307 = vst [vmem:[%s1129 + $0x2c0] sm:$0xff] %v1306
                  %v1308 = vld [vmem:[%s1128 + $0x548] sm:$0xff]
                  %1309 = vst [vmem:[%s1129 + $0x2c8] sm:$0xff] %v1308
                  %v1310 = vld [vmem:[%s1128 + $0x550] sm:$0xff]
                  %1311 = vst [vmem:[%s1129 + $0x2d0] sm:$0xff] %v1310
                  %v1312 = vld [vmem:[%s1128 + $0x558] sm:$0xff]
                  %1313 = vst [vmem:[%s1129 + $0x2d8] sm:$0xff] %v1312
                  %v1314 = vld [vmem:[%s1128 + $0x560] sm:$0xff]
                  %1315 = vst [vmem:[%s1129 + $0x2e0] sm:$0xff] %v1314
                  %v1316 = vld [vmem:[%s1128 + $0x568] sm:$0xff]
                  %1317 = vst [vmem:[%s1129 + $0x2e8] sm:$0xff] %v1316
                  %v1318 = vld [vmem:[%s1128 + $0x570] sm:$0xff]
                  %1319 = vst [vmem:[%s1129 + $0x2f0] sm:$0xff] %v1318
                  %v1320 = vld [vmem:[%s1128 + $0x578] sm:$0xff]
                  %1321 = vst [vmem:[%s1129 + $0x2f8] sm:$0xff] %v1320
                  %v1322 = vld [vmem:[%s1128 + $0x600] sm:$0xff]
                  %1323 = vst [vmem:[%s1129 + $0x300] sm:$0xff] %v1322
                  %v1324 = vld [vmem:[%s1128 + $0x608] sm:$0xff]
                  %1325 = vst [vmem:[%s1129 + $0x308] sm:$0xff] %v1324
                  %v1326 = vld [vmem:[%s1128 + $0x610] sm:$0xff]
                  %1327 = vst [vmem:[%s1129 + $0x310] sm:$0xff] %v1326
                  %v1328 = vld [vmem:[%s1128 + $0x618] sm:$0xff]
                  %1329 = vst [vmem:[%s1129 + $0x318] sm:$0xff] %v1328
                  %v1330 = vld [vmem:[%s1128 + $0x620] sm:$0xff]
                  %1331 = vst [vmem:[%s1129 + $0x320] sm:$0xff] %v1330
                  %v1332 = vld [vmem:[%s1128 + $0x628] sm:$0xff]
                  %1333 = vst [vmem:[%s1129 + $0x328] sm:$0xff] %v1332
                  %v1334 = vld [vmem:[%s1128 + $0x630] sm:$0xff]
                  %1335 = vst [vmem:[%s1129 + $0x330] sm:$0xff] %v1334
                  %v1336 = vld [vmem:[%s1128 + $0x638] sm:$0xff]
                  %1337 = vst [vmem:[%s1129 + $0x338] sm:$0xff] %v1336
                  %v1338 = vld [vmem:[%s1128 + $0x640] sm:$0xff]
                  %1339 = vst [vmem:[%s1129 + $0x340] sm:$0xff] %v1338
                  %v1340 = vld [vmem:[%s1128 + $0x648] sm:$0xff]
                  %1341 = vst [vmem:[%s1129 + $0x348] sm:$0xff] %v1340
                  %v1342 = vld [vmem:[%s1128 + $0x650] sm:$0xff]
                  %1343 = vst [vmem:[%s1129 + $0x350] sm:$0xff] %v1342
                  %v1344 = vld [vmem:[%s1128 + $0x658] sm:$0xff]
                  %1345 = vst [vmem:[%s1129 + $0x358] sm:$0xff] %v1344
                  %v1346 = vld [vmem:[%s1128 + $0x660] sm:$0xff]
                  %1347 = vst [vmem:[%s1129 + $0x360] sm:$0xff] %v1346
                  %v1348 = vld [vmem:[%s1128 + $0x668] sm:$0xff]
                  %1349 = vst [vmem:[%s1129 + $0x368] sm:$0xff] %v1348
                  %v1350 = vld [vmem:[%s1128 + $0x670] sm:$0xff]
                  %1351 = vst [vmem:[%s1129 + $0x370] sm:$0xff] %v1350
                  %v1352 = vld [vmem:[%s1128 + $0x678] sm:$0xff]
                  %1353 = vst [vmem:[%s1129 + $0x378] sm:$0xff] %v1352
                  %v1354 = vld [vmem:[%s1128 + $0x700] sm:$0xff]
                  %1355 = vst [vmem:[%s1129 + $0x380] sm:$0xff] %v1354
                  %v1356 = vld [vmem:[%s1128 + $0x708] sm:$0xff]
                  %1357 = vst [vmem:[%s1129 + $0x388] sm:$0xff] %v1356
                  %v1358 = vld [vmem:[%s1128 + $0x710] sm:$0xff]
                  %1359 = vst [vmem:[%s1129 + $0x390] sm:$0xff] %v1358
                  %v1360 = vld [vmem:[%s1128 + $0x718] sm:$0xff]
                  %1361 = vst [vmem:[%s1129 + $0x398] sm:$0xff] %v1360
                  %v1362 = vld [vmem:[%s1128 + $0x720] sm:$0xff]
                  %1363 = vst [vmem:[%s1129 + $0x3a0] sm:$0xff] %v1362
                  %v1364 = vld [vmem:[%s1128 + $0x728] sm:$0xff]
                  %1365 = vst [vmem:[%s1129 + $0x3a8] sm:$0xff] %v1364
                  %v1366 = vld [vmem:[%s1128 + $0x730] sm:$0xff]
                  %1367 = vst [vmem:[%s1129 + $0x3b0] sm:$0xff] %v1366
                  %v1368 = vld [vmem:[%s1128 + $0x738] sm:$0xff]
                  %1369 = vst [vmem:[%s1129 + $0x3b8] sm:$0xff] %v1368
                  %v1370 = vld [vmem:[%s1128 + $0x740] sm:$0xff]
                  %1371 = vst [vmem:[%s1129 + $0x3c0] sm:$0xff] %v1370
                  %v1372 = vld [vmem:[%s1128 + $0x748] sm:$0xff]
                  %1373 = vst [vmem:[%s1129 + $0x3c8] sm:$0xff] %v1372
                  %v1374 = vld [vmem:[%s1128 + $0x750] sm:$0xff]
                  %1375 = vst [vmem:[%s1129 + $0x3d0] sm:$0xff] %v1374
                  %v1376 = vld [vmem:[%s1128 + $0x758] sm:$0xff]
                  %1377 = vst [vmem:[%s1129 + $0x3d8] sm:$0xff] %v1376
                  %v1378 = vld [vmem:[%s1128 + $0x760] sm:$0xff]
                  %1379 = vst [vmem:[%s1129 + $0x3e0] sm:$0xff] %v1378
                  %v1380 = vld [vmem:[%s1128 + $0x768] sm:$0xff]
                  %1381 = vst [vmem:[%s1129 + $0x3e8] sm:$0xff] %v1380
                  %v1382 = vld [vmem:[%s1128 + $0x770] sm:$0xff]
                  %1383 = vst [vmem:[%s1129 + $0x3f0] sm:$0xff] %v1382
                  %v1384 = vld [vmem:[%s1128 + $0x778] sm:$0xff]
                  %1385 = vst [vmem:[%s1129 + $0x3f8] sm:$0xff] %v1384
                $region117: #{mlp_with_polyline_encoder.1} parent=111 // loop_footer
                  %s1127 = sadd.s32 1, %s1123
                $region118: #{mlp_with_polyline_encoder.1} parent=111 // loop_footer_branch
                  %1122 = sbr.rel target = $region114
                $region119: #{mlp_with_polyline_encoder.1} parent=111 // loop_exit
                  _
              $region112: #{mlp_with_polyline_encoder.1} parent=96 // pred_fallthru
                _
              // Predicated region
              $region120: #{mlp_with_polyline_encoder.1} parent=96 // pred_check
                _
              $region121: #{mlp_with_polyline_encoder.1} parent=96 // pred_check_branch
                %1387 = sbr.rel target = $region123
              $region122: #{mlp_with_polyline_encoder.1} parent=96 // pred_region
                _
              $region123: #{mlp_with_polyline_encoder.1} parent=96 // pred_fallthru
                _
            $region97: #{mlp_with_polyline_encoder.1} parent=92 // pred_fallthru
              _
            // Predicated region
            $region98: #{mlp_with_polyline_encoder.1} parent=92 // pred_check
              _
            $region99: #{mlp_with_polyline_encoder.1} parent=92 // pred_check_branch
              %854 = sbr.rel target = $region101
            $region100: #{mlp_with_polyline_encoder.1} parent=92 // pred_region
              loop: start=0, step=1, limit=1
              $region102: #{mlp_with_polyline_encoder.1} parent=100 // loop_pre_header
                _
              $region103: #{mlp_with_polyline_encoder.1} parent=100 // loop_header
                %s857 = sphi 0, %s861
                %p858 = scmp.ge.s32.totalorder %s857, 1
                %s862 = sphi %s848, %s848
                %s863 = sphi %s844, %s844
              $region104: #{mlp_with_polyline_encoder.1} parent=100 // loop_header_branch
                %860 = sbr.rel (%p858) target = $region108
              $region105: #{mlp_with_polyline_encoder.1} parent=100 // loop_body
                %v864 = vld [vmem:[%s862] sm:$0xff]
                %865 = vst [vmem:[%s863] sm:$0xff] %v864
                %v866 = vld [vmem:[%s862 + $0x8] sm:$0xff]
                %867 = vst [vmem:[%s863 + $0x8] sm:$0xff] %v866
                %v868 = vld [vmem:[%s862 + $0x10] sm:$0xff]
                %869 = vst [vmem:[%s863 + $0x10] sm:$0xff] %v868
                %v870 = vld [vmem:[%s862 + $0x18] sm:$0xff]
                %871 = vst [vmem:[%s863 + $0x18] sm:$0xff] %v870
                %v872 = vld [vmem:[%s862 + $0x20] sm:$0xff]
                %873 = vst [vmem:[%s863 + $0x20] sm:$0xff] %v872
                %v874 = vld [vmem:[%s862 + $0x28] sm:$0xff]
                %875 = vst [vmem:[%s863 + $0x28] sm:$0xff] %v874
                %v876 = vld [vmem:[%s862 + $0x30] sm:$0xff]
                %877 = vst [vmem:[%s863 + $0x30] sm:$0xff] %v876
                %v878 = vld [vmem:[%s862 + $0x38] sm:$0xff]
                %879 = vst [vmem:[%s863 + $0x38] sm:$0xff] %v878
                %v880 = vld [vmem:[%s862 + $0x40] sm:$0xff]
                %881 = vst [vmem:[%s863 + $0x40] sm:$0xff] %v880
                %v882 = vld [vmem:[%s862 + $0x48] sm:$0xff]
                %883 = vst [vmem:[%s863 + $0x48] sm:$0xff] %v882
                %v884 = vld [vmem:[%s862 + $0x50] sm:$0xff]
                %885 = vst [vmem:[%s863 + $0x50] sm:$0xff] %v884
                %v886 = vld [vmem:[%s862 + $0x58] sm:$0xff]
                %887 = vst [vmem:[%s863 + $0x58] sm:$0xff] %v886
                %v888 = vld [vmem:[%s862 + $0x60] sm:$0xff]
                %889 = vst [vmem:[%s863 + $0x60] sm:$0xff] %v888
                %v890 = vld [vmem:[%s862 + $0x68] sm:$0xff]
                %891 = vst [vmem:[%s863 + $0x68] sm:$0xff] %v890
                %v892 = vld [vmem:[%s862 + $0x70] sm:$0xff]
                %893 = vst [vmem:[%s863 + $0x70] sm:$0xff] %v892
                %v894 = vld [vmem:[%s862 + $0x78] sm:$0xff]
                %895 = vst [vmem:[%s863 + $0x78] sm:$0xff] %v894
                %v896 = vld [vmem:[%s862 + $0x100] sm:$0xff]
                %897 = vst [vmem:[%s863 + $0x80] sm:$0xff] %v896
                %v898 = vld [vmem:[%s862 + $0x108] sm:$0xff]
                %899 = vst [vmem:[%s863 + $0x88] sm:$0xff] %v898
                %v900 = vld [vmem:[%s862 + $0x110] sm:$0xff]
                %901 = vst [vmem:[%s863 + $0x90] sm:$0xff] %v900
                %v902 = vld [vmem:[%s862 + $0x118] sm:$0xff]
                %903 = vst [vmem:[%s863 + $0x98] sm:$0xff] %v902
                %v904 = vld [vmem:[%s862 + $0x120] sm:$0xff]
                %905 = vst [vmem:[%s863 + $0xa0] sm:$0xff] %v904
                %v906 = vld [vmem:[%s862 + $0x128] sm:$0xff]
                %907 = vst [vmem:[%s863 + $0xa8] sm:$0xff] %v906
                %v908 = vld [vmem:[%s862 + $0x130] sm:$0xff]
                %909 = vst [vmem:[%s863 + $0xb0] sm:$0xff] %v908
                %v910 = vld [vmem:[%s862 + $0x138] sm:$0xff]
                %911 = vst [vmem:[%s863 + $0xb8] sm:$0xff] %v910
                %v912 = vld [vmem:[%s862 + $0x140] sm:$0xff]
                %913 = vst [vmem:[%s863 + $0xc0] sm:$0xff] %v912
                %v914 = vld [vmem:[%s862 + $0x148] sm:$0xff]
                %915 = vst [vmem:[%s863 + $0xc8] sm:$0xff] %v914
                %v916 = vld [vmem:[%s862 + $0x150] sm:$0xff]
                %917 = vst [vmem:[%s863 + $0xd0] sm:$0xff] %v916
                %v918 = vld [vmem:[%s862 + $0x158] sm:$0xff]
                %919 = vst [vmem:[%s863 + $0xd8] sm:$0xff] %v918
                %v920 = vld [vmem:[%s862 + $0x160] sm:$0xff]
                %921 = vst [vmem:[%s863 + $0xe0] sm:$0xff] %v920
                %v922 = vld [vmem:[%s862 + $0x168] sm:$0xff]
                %923 = vst [vmem:[%s863 + $0xe8] sm:$0xff] %v922
                %v924 = vld [vmem:[%s862 + $0x170] sm:$0xff]
                %925 = vst [vmem:[%s863 + $0xf0] sm:$0xff] %v924
                %v926 = vld [vmem:[%s862 + $0x178] sm:$0xff]
                %927 = vst [vmem:[%s863 + $0xf8] sm:$0xff] %v926
                %v928 = vld [vmem:[%s862 + $0x200] sm:$0xff]
                %929 = vst [vmem:[%s863 + $0x100] sm:$0xff] %v928
                %v930 = vld [vmem:[%s862 + $0x208] sm:$0xff]
                %931 = vst [vmem:[%s863 + $0x108] sm:$0xff] %v930
                %v932 = vld [vmem:[%s862 + $0x210] sm:$0xff]
                %933 = vst [vmem:[%s863 + $0x110] sm:$0xff] %v932
                %v934 = vld [vmem:[%s862 + $0x218] sm:$0xff]
                %935 = vst [vmem:[%s863 + $0x118] sm:$0xff] %v934
                %v936 = vld [vmem:[%s862 + $0x220] sm:$0xff]
                %937 = vst [vmem:[%s863 + $0x120] sm:$0xff] %v936
                %v938 = vld [vmem:[%s862 + $0x228] sm:$0xff]
                %939 = vst [vmem:[%s863 + $0x128] sm:$0xff] %v938
                %v940 = vld [vmem:[%s862 + $0x230] sm:$0xff]
                %941 = vst [vmem:[%s863 + $0x130] sm:$0xff] %v940
                %v942 = vld [vmem:[%s862 + $0x238] sm:$0xff]
                %943 = vst [vmem:[%s863 + $0x138] sm:$0xff] %v942
                %v944 = vld [vmem:[%s862 + $0x240] sm:$0xff]
                %945 = vst [vmem:[%s863 + $0x140] sm:$0xff] %v944
                %v946 = vld [vmem:[%s862 + $0x248] sm:$0xff]
                %947 = vst [vmem:[%s863 + $0x148] sm:$0xff] %v946
                %v948 = vld [vmem:[%s862 + $0x250] sm:$0xff]
                %949 = vst [vmem:[%s863 + $0x150] sm:$0xff] %v948
                %v950 = vld [vmem:[%s862 + $0x258] sm:$0xff]
                %951 = vst [vmem:[%s863 + $0x158] sm:$0xff] %v950
                %v952 = vld [vmem:[%s862 + $0x260] sm:$0xff]
                %953 = vst [vmem:[%s863 + $0x160] sm:$0xff] %v952
                %v954 = vld [vmem:[%s862 + $0x268] sm:$0xff]
                %955 = vst [vmem:[%s863 + $0x168] sm:$0xff] %v954
                %v956 = vld [vmem:[%s862 + $0x270] sm:$0xff]
                %957 = vst [vmem:[%s863 + $0x170] sm:$0xff] %v956
                %v958 = vld [vmem:[%s862 + $0x278] sm:$0xff]
                %959 = vst [vmem:[%s863 + $0x178] sm:$0xff] %v958
                %v960 = vld [vmem:[%s862 + $0x300] sm:$0xff]
                %961 = vst [vmem:[%s863 + $0x180] sm:$0xff] %v960
                %v962 = vld [vmem:[%s862 + $0x308] sm:$0xff]
                %963 = vst [vmem:[%s863 + $0x188] sm:$0xff] %v962
                %v964 = vld [vmem:[%s862 + $0x310] sm:$0xff]
                %965 = vst [vmem:[%s863 + $0x190] sm:$0xff] %v964
                %v966 = vld [vmem:[%s862 + $0x318] sm:$0xff]
                %967 = vst [vmem:[%s863 + $0x198] sm:$0xff] %v966
                %v968 = vld [vmem:[%s862 + $0x320] sm:$0xff]
                %969 = vst [vmem:[%s863 + $0x1a0] sm:$0xff] %v968
                %v970 = vld [vmem:[%s862 + $0x328] sm:$0xff]
                %971 = vst [vmem:[%s863 + $0x1a8] sm:$0xff] %v970
                %v972 = vld [vmem:[%s862 + $0x330] sm:$0xff]
                %973 = vst [vmem:[%s863 + $0x1b0] sm:$0xff] %v972
                %v974 = vld [vmem:[%s862 + $0x338] sm:$0xff]
                %975 = vst [vmem:[%s863 + $0x1b8] sm:$0xff] %v974
                %v976 = vld [vmem:[%s862 + $0x340] sm:$0xff]
                %977 = vst [vmem:[%s863 + $0x1c0] sm:$0xff] %v976
                %v978 = vld [vmem:[%s862 + $0x348] sm:$0xff]
                %979 = vst [vmem:[%s863 + $0x1c8] sm:$0xff] %v978
                %v980 = vld [vmem:[%s862 + $0x350] sm:$0xff]
                %981 = vst [vmem:[%s863 + $0x1d0] sm:$0xff] %v980
                %v982 = vld [vmem:[%s862 + $0x358] sm:$0xff]
                %983 = vst [vmem:[%s863 + $0x1d8] sm:$0xff] %v982
                %v984 = vld [vmem:[%s862 + $0x360] sm:$0xff]
                %985 = vst [vmem:[%s863 + $0x1e0] sm:$0xff] %v984
                %v986 = vld [vmem:[%s862 + $0x368] sm:$0xff]
                %987 = vst [vmem:[%s863 + $0x1e8] sm:$0xff] %v986
                %v988 = vld [vmem:[%s862 + $0x370] sm:$0xff]
                %989 = vst [vmem:[%s863 + $0x1f0] sm:$0xff] %v988
                %v990 = vld [vmem:[%s862 + $0x378] sm:$0xff]
                %991 = vst [vmem:[%s863 + $0x1f8] sm:$0xff] %v990
                %v992 = vld [vmem:[%s862 + $0x400] sm:$0xff]
                %993 = vst [vmem:[%s863 + $0x200] sm:$0xff] %v992
                %v994 = vld [vmem:[%s862 + $0x408] sm:$0xff]
                %995 = vst [vmem:[%s863 + $0x208] sm:$0xff] %v994
                %v996 = vld [vmem:[%s862 + $0x410] sm:$0xff]
                %997 = vst [vmem:[%s863 + $0x210] sm:$0xff] %v996
                %v998 = vld [vmem:[%s862 + $0x418] sm:$0xff]
                %999 = vst [vmem:[%s863 + $0x218] sm:$0xff] %v998
                %v1000 = vld [vmem:[%s862 + $0x420] sm:$0xff]
                %1001 = vst [vmem:[%s863 + $0x220] sm:$0xff] %v1000
                %v1002 = vld [vmem:[%s862 + $0x428] sm:$0xff]
                %1003 = vst [vmem:[%s863 + $0x228] sm:$0xff] %v1002
                %v1004 = vld [vmem:[%s862 + $0x430] sm:$0xff]
                %1005 = vst [vmem:[%s863 + $0x230] sm:$0xff] %v1004
                %v1006 = vld [vmem:[%s862 + $0x438] sm:$0xff]
                %1007 = vst [vmem:[%s863 + $0x238] sm:$0xff] %v1006
                %v1008 = vld [vmem:[%s862 + $0x440] sm:$0xff]
                %1009 = vst [vmem:[%s863 + $0x240] sm:$0xff] %v1008
                %v1010 = vld [vmem:[%s862 + $0x448] sm:$0xff]
                %1011 = vst [vmem:[%s863 + $0x248] sm:$0xff] %v1010
                %v1012 = vld [vmem:[%s862 + $0x450] sm:$0xff]
                %1013 = vst [vmem:[%s863 + $0x250] sm:$0xff] %v1012
                %v1014 = vld [vmem:[%s862 + $0x458] sm:$0xff]
                %1015 = vst [vmem:[%s863 + $0x258] sm:$0xff] %v1014
                %v1016 = vld [vmem:[%s862 + $0x460] sm:$0xff]
                %1017 = vst [vmem:[%s863 + $0x260] sm:$0xff] %v1016
                %v1018 = vld [vmem:[%s862 + $0x468] sm:$0xff]
                %1019 = vst [vmem:[%s863 + $0x268] sm:$0xff] %v1018
                %v1020 = vld [vmem:[%s862 + $0x470] sm:$0xff]
                %1021 = vst [vmem:[%s863 + $0x270] sm:$0xff] %v1020
                %v1022 = vld [vmem:[%s862 + $0x478] sm:$0xff]
                %1023 = vst [vmem:[%s863 + $0x278] sm:$0xff] %v1022
                %v1024 = vld [vmem:[%s862 + $0x500] sm:$0xff]
                %1025 = vst [vmem:[%s863 + $0x280] sm:$0xff] %v1024
                %v1026 = vld [vmem:[%s862 + $0x508] sm:$0xff]
                %1027 = vst [vmem:[%s863 + $0x288] sm:$0xff] %v1026
                %v1028 = vld [vmem:[%s862 + $0x510] sm:$0xff]
                %1029 = vst [vmem:[%s863 + $0x290] sm:$0xff] %v1028
                %v1030 = vld [vmem:[%s862 + $0x518] sm:$0xff]
                %1031 = vst [vmem:[%s863 + $0x298] sm:$0xff] %v1030
                %v1032 = vld [vmem:[%s862 + $0x520] sm:$0xff]
                %1033 = vst [vmem:[%s863 + $0x2a0] sm:$0xff] %v1032
                %v1034 = vld [vmem:[%s862 + $0x528] sm:$0xff]
                %1035 = vst [vmem:[%s863 + $0x2a8] sm:$0xff] %v1034
                %v1036 = vld [vmem:[%s862 + $0x530] sm:$0xff]
                %1037 = vst [vmem:[%s863 + $0x2b0] sm:$0xff] %v1036
                %v1038 = vld [vmem:[%s862 + $0x538] sm:$0xff]
                %1039 = vst [vmem:[%s863 + $0x2b8] sm:$0xff] %v1038
                %v1040 = vld [vmem:[%s862 + $0x540] sm:$0xff]
                %1041 = vst [vmem:[%s863 + $0x2c0] sm:$0xff] %v1040
                %v1042 = vld [vmem:[%s862 + $0x548] sm:$0xff]
                %1043 = vst [vmem:[%s863 + $0x2c8] sm:$0xff] %v1042
                %v1044 = vld [vmem:[%s862 + $0x550] sm:$0xff]
                %1045 = vst [vmem:[%s863 + $0x2d0] sm:$0xff] %v1044
                %v1046 = vld [vmem:[%s862 + $0x558] sm:$0xff]
                %1047 = vst [vmem:[%s863 + $0x2d8] sm:$0xff] %v1046
                %v1048 = vld [vmem:[%s862 + $0x560] sm:$0xff]
                %1049 = vst [vmem:[%s863 + $0x2e0] sm:$0xff] %v1048
                %v1050 = vld [vmem:[%s862 + $0x568] sm:$0xff]
                %1051 = vst [vmem:[%s863 + $0x2e8] sm:$0xff] %v1050
                %v1052 = vld [vmem:[%s862 + $0x570] sm:$0xff]
                %1053 = vst [vmem:[%s863 + $0x2f0] sm:$0xff] %v1052
                %v1054 = vld [vmem:[%s862 + $0x578] sm:$0xff]
                %1055 = vst [vmem:[%s863 + $0x2f8] sm:$0xff] %v1054
                %v1056 = vld [vmem:[%s862 + $0x600] sm:$0xff]
                %1057 = vst [vmem:[%s863 + $0x300] sm:$0xff] %v1056
                %v1058 = vld [vmem:[%s862 + $0x608] sm:$0xff]
                %1059 = vst [vmem:[%s863 + $0x308] sm:$0xff] %v1058
                %v1060 = vld [vmem:[%s862 + $0x610] sm:$0xff]
                %1061 = vst [vmem:[%s863 + $0x310] sm:$0xff] %v1060
                %v1062 = vld [vmem:[%s862 + $0x618] sm:$0xff]
                %1063 = vst [vmem:[%s863 + $0x318] sm:$0xff] %v1062
                %v1064 = vld [vmem:[%s862 + $0x620] sm:$0xff]
                %1065 = vst [vmem:[%s863 + $0x320] sm:$0xff] %v1064
                %v1066 = vld [vmem:[%s862 + $0x628] sm:$0xff]
                %1067 = vst [vmem:[%s863 + $0x328] sm:$0xff] %v1066
                %v1068 = vld [vmem:[%s862 + $0x630] sm:$0xff]
                %1069 = vst [vmem:[%s863 + $0x330] sm:$0xff] %v1068
                %v1070 = vld [vmem:[%s862 + $0x638] sm:$0xff]
                %1071 = vst [vmem:[%s863 + $0x338] sm:$0xff] %v1070
                %v1072 = vld [vmem:[%s862 + $0x640] sm:$0xff]
                %1073 = vst [vmem:[%s863 + $0x340] sm:$0xff] %v1072
                %v1074 = vld [vmem:[%s862 + $0x648] sm:$0xff]
                %1075 = vst [vmem:[%s863 + $0x348] sm:$0xff] %v1074
                %v1076 = vld [vmem:[%s862 + $0x650] sm:$0xff]
                %1077 = vst [vmem:[%s863 + $0x350] sm:$0xff] %v1076
                %v1078 = vld [vmem:[%s862 + $0x658] sm:$0xff]
                %1079 = vst [vmem:[%s863 + $0x358] sm:$0xff] %v1078
                %v1080 = vld [vmem:[%s862 + $0x660] sm:$0xff]
                %1081 = vst [vmem:[%s863 + $0x360] sm:$0xff] %v1080
                %v1082 = vld [vmem:[%s862 + $0x668] sm:$0xff]
                %1083 = vst [vmem:[%s863 + $0x368] sm:$0xff] %v1082
                %v1084 = vld [vmem:[%s862 + $0x670] sm:$0xff]
                %1085 = vst [vmem:[%s863 + $0x370] sm:$0xff] %v1084
                %v1086 = vld [vmem:[%s862 + $0x678] sm:$0xff]
                %1087 = vst [vmem:[%s863 + $0x378] sm:$0xff] %v1086
                %v1088 = vld [vmem:[%s862 + $0x700] sm:$0xff]
                %1089 = vst [vmem:[%s863 + $0x380] sm:$0xff] %v1088
                %v1090 = vld [vmem:[%s862 + $0x708] sm:$0xff]
                %1091 = vst [vmem:[%s863 + $0x388] sm:$0xff] %v1090
                %v1092 = vld [vmem:[%s862 + $0x710] sm:$0xff]
                %1093 = vst [vmem:[%s863 + $0x390] sm:$0xff] %v1092
                %v1094 = vld [vmem:[%s862 + $0x718] sm:$0xff]
                %1095 = vst [vmem:[%s863 + $0x398] sm:$0xff] %v1094
                %v1096 = vld [vmem:[%s862 + $0x720] sm:$0xff]
                %1097 = vst [vmem:[%s863 + $0x3a0] sm:$0xff] %v1096
                %v1098 = vld [vmem:[%s862 + $0x728] sm:$0xff]
                %1099 = vst [vmem:[%s863 + $0x3a8] sm:$0xff] %v1098
                %v1100 = vld [vmem:[%s862 + $0x730] sm:$0xff]
                %1101 = vst [vmem:[%s863 + $0x3b0] sm:$0xff] %v1100
                %v1102 = vld [vmem:[%s862 + $0x738] sm:$0xff]
                %1103 = vst [vmem:[%s863 + $0x3b8] sm:$0xff] %v1102
                %v1104 = vld [vmem:[%s862 + $0x740] sm:$0xff]
                %1105 = vst [vmem:[%s863 + $0x3c0] sm:$0xff] %v1104
                %v1106 = vld [vmem:[%s862 + $0x748] sm:$0xff]
                %1107 = vst [vmem:[%s863 + $0x3c8] sm:$0xff] %v1106
                %v1108 = vld [vmem:[%s862 + $0x750] sm:$0xff]
                %1109 = vst [vmem:[%s863 + $0x3d0] sm:$0xff] %v1108
                %v1110 = vld [vmem:[%s862 + $0x758] sm:$0xff]
                %1111 = vst [vmem:[%s863 + $0x3d8] sm:$0xff] %v1110
                %v1112 = vld [vmem:[%s862 + $0x760] sm:$0xff]
                %1113 = vst [vmem:[%s863 + $0x3e0] sm:$0xff] %v1112
                %v1114 = vld [vmem:[%s862 + $0x768] sm:$0xff]
                %1115 = vst [vmem:[%s863 + $0x3e8] sm:$0xff] %v1114
                %v1116 = vld [vmem:[%s862 + $0x770] sm:$0xff]
                %1117 = vst [vmem:[%s863 + $0x3f0] sm:$0xff] %v1116
                %v1118 = vld [vmem:[%s862 + $0x778] sm:$0xff]
                %1119 = vst [vmem:[%s863 + $0x3f8] sm:$0xff] %v1118
              $region106: #{mlp_with_polyline_encoder.1} parent=100 // loop_footer
                %s861 = sadd.s32 1, %s857
              $region107: #{mlp_with_polyline_encoder.1} parent=100 // loop_footer_branch
                %856 = sbr.rel target = $region103
              $region108: #{mlp_with_polyline_encoder.1} parent=100 // loop_exit
                _
            $region101: #{mlp_with_polyline_encoder.1} parent=92 // pred_fallthru
              _
          $region93: #{mlp_with_polyline_encoder.1} parent=88 // pred_fallthru
            _
          %1388 = vnop
        $region89: #{mlp_with_polyline_encoder.1} parent=43 // pred_fallthru
          _
      $region44: #{mlp_with_polyline_encoder.1} parent=5 // pred_fallthru
        _
      %p1389 = scmp.le.s32.totalorder 1, %s15
      %p1390 = scmp.lt.s32.totalorder %s15, 3
      %p1391 = pnand %p1389, %p1390
      %p1392 = pneg %p1391
      // Predicated region
      $region124: #{mlp_with_polyline_encoder.1} parent=5 // pred_check
        _
      $region125: #{mlp_with_polyline_encoder.1} parent=5 // pred_check_branch
        %1394 = sbr.rel (%p1391) target = $region127
      $region126: #{mlp_with_polyline_encoder.1} parent=5 // pred_region
        %s1395 = ssub.s32 %s15, 1
        %s1396 = sand.u32 %s28, 1
        %s1397 = sand.u32 %s28, 1
        %s1398 = smul.addr %s1397, 512
        %s1399 = scalar_lea.vmem [#allocation2], %s1398
        // Predicated region
        $region128: #{mlp_with_polyline_encoder.1} parent=126 // pred_check
          %p1400 = pneg %p41
        $region129: #{mlp_with_polyline_encoder.1} parent=126 // pred_check_branch
          %1402 = sbr.rel (%p1400) target = $region131
        $region130: #{mlp_with_polyline_encoder.1} parent=126 // pred_region
          _
        $region131: #{mlp_with_polyline_encoder.1} parent=126 // pred_fallthru
          _
        %s1403 = sand.u32 %s54, 1
        %s1404 = sand.u32 %s54, 1
        %s1405 = smul.addr %s1404, 1024
        %s1406 = scalar_lea.vmem [#allocation3], %s1405
        // Predicated region
        $region132: #{mlp_with_polyline_encoder.1} parent=126 // pred_check
          %p1407 = pneg %p67
        $region133: #{mlp_with_polyline_encoder.1} parent=126 // pred_check_branch
          %1409 = sbr.rel (%p1407) target = $region135
        $region134: #{mlp_with_polyline_encoder.1} parent=126 // pred_region
          _
        $region135: #{mlp_with_polyline_encoder.1} parent=126 // pred_fallthru
          _
        %s1410 = sand.u32 %s28, 1
        %s1411 = sand.u32 %s28, 1
        %s1412 = smul.addr %s1411, 512
        %s1413 = scalar_lea.vmem [#allocation2], %s1412
        %p1414 = pneg %p41
        %p1415 = pneg %p38
        %s1416 = sand.u32 %s54, 1
        %s1417 = sand.u32 %s54, 1
        %s1418 = smul.addr %s1417, 1024
        %s1419 = scalar_lea.vmem [#allocation3], %s1418
        %p1420 = pneg %p67
        %p1421 = pneg %p64
        %p1422 = pneg %p88
        %p1423 = pneg %p85
        %p1424 = pneg %p109
        %p1425 = pneg %p106
        %p1426 = pneg %p130
        %p1427 = pneg %p127
        %p1428 = pneg %p151
        %p1429 = pneg %p148
        %p1430 = pneg %p172
        %p1431 = pneg %p169
        %p1432 = pneg %p193
        %p1433 = pneg %p190
        %p1434 = pneg %p214
        %p1435 = pneg %p211
        %p1436 = pneg %p240
        %p1437 = pneg %p237
        %p1438 = scmp.lt.s32.totalorder %s20, 1
        %s1439 = scalar_select %p1438, %s20, 1
        %s1440 = smul.addr %s1439, 8
        %s1441 = scalar_lea.vmem %s9, %s1440
        %s1442 = smul.u32 8, %s20
        %s1443 = smul.u32 8, %s20
        %p1444 = scmp.lt.s32.totalorder %s20, 1
        %s1445 = scalar_select %p1444, %s20, 1
        %s1446 = smul.addr %s1445, 8
        %s1447 = scalar_lea.vmem %s9, %s1446
        %v1449 = vld [vmem:[%s1399] sm:$0xf]
        %v1450 = vld [vmem:[%s1399 + $0x4] sm:$0xf]
        %v1451 = vld [vmem:[%s1399 + $0x8] sm:$0xf]
        %v1452 = vld [vmem:[%s1399 + $0xc] sm:$0xf]
        %v1453 = vld [vmem:[%s1399 + $0x10] sm:$0xf]
        %v1454 = vld [vmem:[%s1399 + $0x14] sm:$0xf]
        %v1455 = vld [vmem:[%s1399 + $0x18] sm:$0xf]
        %v1456 = vld [vmem:[%s1399 + $0x1c] sm:$0xf]
        %v1457 = vld [vmem:[%s1399 + $0x20] sm:$0xf]
        %v1458 = vld [vmem:[%s1399 + $0x24] sm:$0xf]
        %v1459 = vld [vmem:[%s1399 + $0x28] sm:$0xf]
        %v1460 = vld [vmem:[%s1399 + $0x2c] sm:$0xf]
        %v1461 = vld [vmem:[%s1399 + $0x30] sm:$0xf]
        %v1462 = vld [vmem:[%s1399 + $0x34] sm:$0xf]
        %v1463 = vld [vmem:[%s1399 + $0x38] sm:$0xf]
        %v1464 = vld [vmem:[%s1399 + $0x3c] sm:$0xf]
        %v1465 = vld [vmem:[%s1399 + $0x40] sm:$0xf]
        %v1466 = vld [vmem:[%s1399 + $0x44] sm:$0xf]
        %v1467 = vld [vmem:[%s1399 + $0x48] sm:$0xf]
        %v1468 = vld [vmem:[%s1399 + $0x4c] sm:$0xf]
        %v1469 = vld [vmem:[%s1399 + $0x50] sm:$0xf]
        %v1470 = vld [vmem:[%s1399 + $0x54] sm:$0xf]
        %v1471 = vld [vmem:[%s1399 + $0x58] sm:$0xf]
        %v1472 = vld [vmem:[%s1399 + $0x5c] sm:$0xf]
        %v1473 = vld [vmem:[%s1399 + $0x60] sm:$0xf]
        %v1474 = vld [vmem:[%s1399 + $0x64] sm:$0xf]
        %v1475 = vld [vmem:[%s1399 + $0x68] sm:$0xf]
        %v1476 = vld [vmem:[%s1399 + $0x6c] sm:$0xf]
        %v1477 = vld [vmem:[%s1399 + $0x70] sm:$0xf]
        %v1478 = vld [vmem:[%s1399 + $0x74] sm:$0xf]
        %v1479 = vld [vmem:[%s1399 + $0x78] sm:$0xf]
        %v1480 = vld [vmem:[%s1399 + $0x7c] sm:$0xf]
        %v1481 = vld [vmem:[%s1399 + $0x80] sm:$0xf]
        %v1482 = vld [vmem:[%s1399 + $0x84] sm:$0xf]
        %v1483 = vld [vmem:[%s1399 + $0x88] sm:$0xf]
        %v1484 = vld [vmem:[%s1399 + $0x8c] sm:$0xf]
        %v1485 = vld [vmem:[%s1399 + $0x90] sm:$0xf]
        %v1486 = vld [vmem:[%s1399 + $0x94] sm:$0xf]
        %v1487 = vld [vmem:[%s1399 + $0x98] sm:$0xf]
        %v1488 = vld [vmem:[%s1399 + $0x9c] sm:$0xf]
        %v1489 = vld [vmem:[%s1399 + $0xa0] sm:$0xf]
        %v1490 = vld [vmem:[%s1399 + $0xa4] sm:$0xf]
        %v1491 = vld [vmem:[%s1399 + $0xa8] sm:$0xf]
        %v1492 = vld [vmem:[%s1399 + $0xac] sm:$0xf]
        %v1493 = vld [vmem:[%s1399 + $0xb0] sm:$0xf]
        %v1494 = vld [vmem:[%s1399 + $0xb4] sm:$0xf]
        %v1495 = vld [vmem:[%s1399 + $0xb8] sm:$0xf]
        %v1496 = vld [vmem:[%s1399 + $0xbc] sm:$0xf]
        %v1497 = vld [vmem:[%s1399 + $0xc0] sm:$0xf]
        %v1498 = vld [vmem:[%s1399 + $0xc4] sm:$0xf]
        %v1499 = vld [vmem:[%s1399 + $0xc8] sm:$0xf]
        %v1500 = vld [vmem:[%s1399 + $0xcc] sm:$0xf]
        %v1501 = vld [vmem:[%s1399 + $0xd0] sm:$0xf]
        %v1502 = vld [vmem:[%s1399 + $0xd4] sm:$0xf]
        %v1503 = vld [vmem:[%s1399 + $0xd8] sm:$0xf]
        %v1504 = vld [vmem:[%s1399 + $0xdc] sm:$0xf]
        %v1505 = vld [vmem:[%s1399 + $0xe0] sm:$0xf]
        %v1506 = vld [vmem:[%s1399 + $0xe4] sm:$0xf]
        %v1507 = vld [vmem:[%s1399 + $0xe8] sm:$0xf]
        %v1508 = vld [vmem:[%s1399 + $0xec] sm:$0xf]
        %v1509 = vld [vmem:[%s1399 + $0xf0] sm:$0xf]
        %v1510 = vld [vmem:[%s1399 + $0xf4] sm:$0xf]
        %v1511 = vld [vmem:[%s1399 + $0xf8] sm:$0xf]
        %v1512 = vld [vmem:[%s1399 + $0xfc] sm:$0xf]
        %v1513 = vld [vmem:[%s1399 + $0x100] sm:$0xf]
        %v1514 = vld [vmem:[%s1399 + $0x104] sm:$0xf]
        %v1515 = vld [vmem:[%s1399 + $0x108] sm:$0xf]
        %v1516 = vld [vmem:[%s1399 + $0x10c] sm:$0xf]
        %v1517 = vld [vmem:[%s1399 + $0x110] sm:$0xf]
        %v1518 = vld [vmem:[%s1399 + $0x114] sm:$0xf]
        %v1519 = vld [vmem:[%s1399 + $0x118] sm:$0xf]
        %v1520 = vld [vmem:[%s1399 + $0x11c] sm:$0xf]
        %v1521 = vld [vmem:[%s1399 + $0x120] sm:$0xf]
        %v1522 = vld [vmem:[%s1399 + $0x124] sm:$0xf]
        %v1523 = vld [vmem:[%s1399 + $0x128] sm:$0xf]
        %v1524 = vld [vmem:[%s1399 + $0x12c] sm:$0xf]
        %v1525 = vld [vmem:[%s1399 + $0x130] sm:$0xf]
        %v1526 = vld [vmem:[%s1399 + $0x134] sm:$0xf]
        %v1527 = vld [vmem:[%s1399 + $0x138] sm:$0xf]
        %v1528 = vld [vmem:[%s1399 + $0x13c] sm:$0xf]
        %v1529 = vld [vmem:[%s1399 + $0x140] sm:$0xf]
        %v1530 = vld [vmem:[%s1399 + $0x144] sm:$0xf]
        %v1531 = vld [vmem:[%s1399 + $0x148] sm:$0xf]
        %v1532 = vld [vmem:[%s1399 + $0x14c] sm:$0xf]
        %v1533 = vld [vmem:[%s1399 + $0x150] sm:$0xf]
        %v1534 = vld [vmem:[%s1399 + $0x154] sm:$0xf]
        %v1535 = vld [vmem:[%s1399 + $0x158] sm:$0xf]
        %v1536 = vld [vmem:[%s1399 + $0x15c] sm:$0xf]
        %v1537 = vld [vmem:[%s1399 + $0x160] sm:$0xf]
        %v1538 = vld [vmem:[%s1399 + $0x164] sm:$0xf]
        %v1539 = vld [vmem:[%s1399 + $0x168] sm:$0xf]
        %v1540 = vld [vmem:[%s1399 + $0x16c] sm:$0xf]
        %v1541 = vld [vmem:[%s1399 + $0x170] sm:$0xf]
        %v1542 = vld [vmem:[%s1399 + $0x174] sm:$0xf]
        %v1543 = vld [vmem:[%s1399 + $0x178] sm:$0xf]
        %v1544 = vld [vmem:[%s1399 + $0x17c] sm:$0xf]
        %v1545 = vld [vmem:[%s1399 + $0x180] sm:$0xf]
        %v1546 = vld [vmem:[%s1399 + $0x184] sm:$0xf]
        %v1547 = vld [vmem:[%s1399 + $0x188] sm:$0xf]
        %v1548 = vld [vmem:[%s1399 + $0x18c] sm:$0xf]
        %v1549 = vld [vmem:[%s1399 + $0x190] sm:$0xf]
        %v1550 = vld [vmem:[%s1399 + $0x194] sm:$0xf]
        %v1551 = vld [vmem:[%s1399 + $0x198] sm:$0xf]
        %v1552 = vld [vmem:[%s1399 + $0x19c] sm:$0xf]
        %v1553 = vld [vmem:[%s1399 + $0x1a0] sm:$0xf]
        %v1554 = vld [vmem:[%s1399 + $0x1a4] sm:$0xf]
        %v1555 = vld [vmem:[%s1399 + $0x1a8] sm:$0xf]
        %v1556 = vld [vmem:[%s1399 + $0x1ac] sm:$0xf]
        %v1557 = vld [vmem:[%s1399 + $0x1b0] sm:$0xf]
        %v1558 = vld [vmem:[%s1399 + $0x1b4] sm:$0xf]
        %v1559 = vld [vmem:[%s1399 + $0x1b8] sm:$0xf]
        %v1560 = vld [vmem:[%s1399 + $0x1bc] sm:$0xf]
        %v1561 = vld [vmem:[%s1399 + $0x1c0] sm:$0xf]
        %v1562 = vld [vmem:[%s1399 + $0x1c4] sm:$0xf]
        %v1563 = vld [vmem:[%s1399 + $0x1c8] sm:$0xf]
        %v1564 = vld [vmem:[%s1399 + $0x1cc] sm:$0xf]
        %v1565 = vld [vmem:[%s1399 + $0x1d0] sm:$0xf]
        %v1566 = vld [vmem:[%s1399 + $0x1d4] sm:$0xf]
        %v1567 = vld [vmem:[%s1399 + $0x1d8] sm:$0xf]
        %v1568 = vld [vmem:[%s1399 + $0x1dc] sm:$0xf]
        %v1569 = vld [vmem:[%s1399 + $0x1e0] sm:$0xf]
        %v1570 = vld [vmem:[%s1399 + $0x1e4] sm:$0xf]
        %v1571 = vld [vmem:[%s1399 + $0x1e8] sm:$0xf]
        %v1572 = vld [vmem:[%s1399 + $0x1ec] sm:$0xf]
        %v1573 = vld [vmem:[%s1399 + $0x1f0] sm:$0xf]
        %v1574 = vld [vmem:[%s1399 + $0x1f4] sm:$0xf]
        %v1575 = vld [vmem:[%s1399 + $0x1f8] sm:$0xf]
        %v1576 = vld [vmem:[%s1399 + $0x1fc] sm:$0xf]
        %v1577 = vld [vmem:[%s1406] sm:$0xff]
        %v1578 = vld [vmem:[%s1406 + $0x8] sm:$0xff]
        %v1579 = vld [vmem:[%s1406 + $0x10] sm:$0xff]
        %v1580 = vld [vmem:[%s1406 + $0x18] sm:$0xff]
        %v1581 = vld [vmem:[%s1406 + $0x20] sm:$0xff]
        %v1582 = vld [vmem:[%s1406 + $0x28] sm:$0xff]
        %v1583 = vld [vmem:[%s1406 + $0x30] sm:$0xff]
        %v1584 = vld [vmem:[%s1406 + $0x38] sm:$0xff]
        %v1585 = vld [vmem:[%s1406 + $0x40] sm:$0xff]
        %v1586 = vld [vmem:[%s1406 + $0x48] sm:$0xff]
        %v1587 = vld [vmem:[%s1406 + $0x50] sm:$0xff]
        %v1588 = vld [vmem:[%s1406 + $0x58] sm:$0xff]
        %v1589 = vld [vmem:[%s1406 + $0x60] sm:$0xff]
        %v1590 = vld [vmem:[%s1406 + $0x68] sm:$0xff]
        %v1591 = vld [vmem:[%s1406 + $0x70] sm:$0xff]
        %v1592 = vld [vmem:[%s1406 + $0x78] sm:$0xff]
        %v1593 = vld [vmem:[%s1406 + $0x80] sm:$0xff]
        %v1594 = vld [vmem:[%s1406 + $0x88] sm:$0xff]
        %v1595 = vld [vmem:[%s1406 + $0x90] sm:$0xff]
        %v1596 = vld [vmem:[%s1406 + $0x98] sm:$0xff]
        %v1597 = vld [vmem:[%s1406 + $0xa0] sm:$0xff]
        %v1598 = vld [vmem:[%s1406 + $0xa8] sm:$0xff]
        %v1599 = vld [vmem:[%s1406 + $0xb0] sm:$0xff]
        %v1600 = vld [vmem:[%s1406 + $0xb8] sm:$0xff]
        %v1601 = vld [vmem:[%s1406 + $0xc0] sm:$0xff]
        %v1602 = vld [vmem:[%s1406 + $0xc8] sm:$0xff]
        %v1603 = vld [vmem:[%s1406 + $0xd0] sm:$0xff]
        %v1604 = vld [vmem:[%s1406 + $0xd8] sm:$0xff]
        %v1605 = vld [vmem:[%s1406 + $0xe0] sm:$0xff]
        %v1606 = vld [vmem:[%s1406 + $0xe8] sm:$0xff]
        %v1607 = vld [vmem:[%s1406 + $0xf0] sm:$0xff]
        %v1608 = vld [vmem:[%s1406 + $0xf8] sm:$0xff]
        %v1609 = vld [vmem:[%s1406 + $0x100] sm:$0xff]
        %v1610 = vld [vmem:[%s1406 + $0x108] sm:$0xff]
        %v1611 = vld [vmem:[%s1406 + $0x110] sm:$0xff]
        %v1612 = vld [vmem:[%s1406 + $0x118] sm:$0xff]
        %v1613 = vld [vmem:[%s1406 + $0x120] sm:$0xff]
        %v1614 = vld [vmem:[%s1406 + $0x128] sm:$0xff]
        %v1615 = vld [vmem:[%s1406 + $0x130] sm:$0xff]
        %v1616 = vld [vmem:[%s1406 + $0x138] sm:$0xff]
        %v1617 = vld [vmem:[%s1406 + $0x140] sm:$0xff]
        %v1618 = vld [vmem:[%s1406 + $0x148] sm:$0xff]
        %v1619 = vld [vmem:[%s1406 + $0x150] sm:$0xff]
        %v1620 = vld [vmem:[%s1406 + $0x158] sm:$0xff]
        %v1621 = vld [vmem:[%s1406 + $0x160] sm:$0xff]
        %v1622 = vld [vmem:[%s1406 + $0x168] sm:$0xff]
        %v1623 = vld [vmem:[%s1406 + $0x170] sm:$0xff]
        %v1624 = vld [vmem:[%s1406 + $0x178] sm:$0xff]
        %v1625 = vld [vmem:[%s1406 + $0x180] sm:$0xff]
        %v1626 = vld [vmem:[%s1406 + $0x188] sm:$0xff]
        %v1627 = vld [vmem:[%s1406 + $0x190] sm:$0xff]
        %v1628 = vld [vmem:[%s1406 + $0x198] sm:$0xff]
        %v1629 = vld [vmem:[%s1406 + $0x1a0] sm:$0xff]
        %v1630 = vld [vmem:[%s1406 + $0x1a8] sm:$0xff]
        %v1631 = vld [vmem:[%s1406 + $0x1b0] sm:$0xff]
        %v1632 = vld [vmem:[%s1406 + $0x1b8] sm:$0xff]
        %v1633 = vld [vmem:[%s1406 + $0x1c0] sm:$0xff]
        %v1634 = vld [vmem:[%s1406 + $0x1c8] sm:$0xff]
        %v1635 = vld [vmem:[%s1406 + $0x1d0] sm:$0xff]
        %v1636 = vld [vmem:[%s1406 + $0x1d8] sm:$0xff]
        %v1637 = vld [vmem:[%s1406 + $0x1e0] sm:$0xff]
        %v1638 = vld [vmem:[%s1406 + $0x1e8] sm:$0xff]
        %v1639 = vld [vmem:[%s1406 + $0x1f0] sm:$0xff]
        %v1640 = vld [vmem:[%s1406 + $0x1f8] sm:$0xff]
        %v1641 = vld [vmem:[%s1406 + $0x200] sm:$0xff]
        %v1642 = vld [vmem:[%s1406 + $0x208] sm:$0xff]
        %v1643 = vld [vmem:[%s1406 + $0x210] sm:$0xff]
        %v1644 = vld [vmem:[%s1406 + $0x218] sm:$0xff]
        %v1645 = vld [vmem:[%s1406 + $0x220] sm:$0xff]
        %v1646 = vld [vmem:[%s1406 + $0x228] sm:$0xff]
        %v1647 = vld [vmem:[%s1406 + $0x230] sm:$0xff]
        %v1648 = vld [vmem:[%s1406 + $0x238] sm:$0xff]
        %v1649 = vld [vmem:[%s1406 + $0x240] sm:$0xff]
        %v1650 = vld [vmem:[%s1406 + $0x248] sm:$0xff]
        %v1651 = vld [vmem:[%s1406 + $0x250] sm:$0xff]
        %v1652 = vld [vmem:[%s1406 + $0x258] sm:$0xff]
        %v1653 = vld [vmem:[%s1406 + $0x260] sm:$0xff]
        %v1654 = vld [vmem:[%s1406 + $0x268] sm:$0xff]
        %v1655 = vld [vmem:[%s1406 + $0x270] sm:$0xff]
        %v1656 = vld [vmem:[%s1406 + $0x278] sm:$0xff]
        %v1657 = vld [vmem:[%s1406 + $0x280] sm:$0xff]
        %v1658 = vld [vmem:[%s1406 + $0x288] sm:$0xff]
        %v1659 = vld [vmem:[%s1406 + $0x290] sm:$0xff]
        %v1660 = vld [vmem:[%s1406 + $0x298] sm:$0xff]
        %v1661 = vld [vmem:[%s1406 + $0x2a0] sm:$0xff]
        %v1662 = vld [vmem:[%s1406 + $0x2a8] sm:$0xff]
        %v1663 = vld [vmem:[%s1406 + $0x2b0] sm:$0xff]
        %v1664 = vld [vmem:[%s1406 + $0x2b8] sm:$0xff]
        %v1665 = vld [vmem:[%s1406 + $0x2c0] sm:$0xff]
        %v1666 = vld [vmem:[%s1406 + $0x2c8] sm:$0xff]
        %v1667 = vld [vmem:[%s1406 + $0x2d0] sm:$0xff]
        %v1668 = vld [vmem:[%s1406 + $0x2d8] sm:$0xff]
        %v1669 = vld [vmem:[%s1406 + $0x2e0] sm:$0xff]
        %v1670 = vld [vmem:[%s1406 + $0x2e8] sm:$0xff]
        %v1671 = vld [vmem:[%s1406 + $0x2f0] sm:$0xff]
        %v1672 = vld [vmem:[%s1406 + $0x2f8] sm:$0xff]
        %v1673 = vld [vmem:[%s1406 + $0x300] sm:$0xff]
        %v1674 = vld [vmem:[%s1406 + $0x308] sm:$0xff]
        %v1675 = vld [vmem:[%s1406 + $0x310] sm:$0xff]
        %v1676 = vld [vmem:[%s1406 + $0x318] sm:$0xff]
        %v1677 = vld [vmem:[%s1406 + $0x320] sm:$0xff]
        %v1678 = vld [vmem:[%s1406 + $0x328] sm:$0xff]
        %v1679 = vld [vmem:[%s1406 + $0x330] sm:$0xff]
        %v1680 = vld [vmem:[%s1406 + $0x338] sm:$0xff]
        %v1681 = vld [vmem:[%s1406 + $0x340] sm:$0xff]
        %v1682 = vld [vmem:[%s1406 + $0x348] sm:$0xff]
        %v1683 = vld [vmem:[%s1406 + $0x350] sm:$0xff]
        %v1684 = vld [vmem:[%s1406 + $0x358] sm:$0xff]
        %v1685 = vld [vmem:[%s1406 + $0x360] sm:$0xff]
        %v1686 = vld [vmem:[%s1406 + $0x368] sm:$0xff]
        %v1687 = vld [vmem:[%s1406 + $0x370] sm:$0xff]
        %v1688 = vld [vmem:[%s1406 + $0x378] sm:$0xff]
        %v1689 = vld [vmem:[%s1406 + $0x380] sm:$0xff]
        %v1690 = vld [vmem:[%s1406 + $0x388] sm:$0xff]
        %v1691 = vld [vmem:[%s1406 + $0x390] sm:$0xff]
        %v1692 = vld [vmem:[%s1406 + $0x398] sm:$0xff]
        %v1693 = vld [vmem:[%s1406 + $0x3a0] sm:$0xff]
        %v1694 = vld [vmem:[%s1406 + $0x3a8] sm:$0xff]
        %v1695 = vld [vmem:[%s1406 + $0x3b0] sm:$0xff]
        %v1696 = vld [vmem:[%s1406 + $0x3b8] sm:$0xff]
        %v1697 = vld [vmem:[%s1406 + $0x3c0] sm:$0xff]
        %v1698 = vld [vmem:[%s1406 + $0x3c8] sm:$0xff]
        %v1699 = vld [vmem:[%s1406 + $0x3d0] sm:$0xff]
        %v1700 = vld [vmem:[%s1406 + $0x3d8] sm:$0xff]
        %v1701 = vld [vmem:[%s1406 + $0x3e0] sm:$0xff]
        %v1702 = vld [vmem:[%s1406 + $0x3e8] sm:$0xff]
        %v1703 = vld [vmem:[%s1406 + $0x3f0] sm:$0xff]
        %v1704 = vld [vmem:[%s1406 + $0x3f8] sm:$0xff]
        %v1705 = vld [vmem:[%s8] sm:$0x1]
        %v1706 = vld [vmem:[%s8 + $0x1] sm:$0x1]
        %v1707 = vld [vmem:[%s8 + $0x2] sm:$0x1]
        %v1708 = vld [vmem:[%s8 + $0x3] sm:$0x1]
        %v1709 = vld [vmem:[%s8 + $0x4] sm:$0x1]
        %v1710 = vld [vmem:[%s8 + $0x5] sm:$0x1]
        %v1711 = vld [vmem:[%s8 + $0x6] sm:$0x1]
        %v1712 = vld [vmem:[%s3] sm:$0xf]
        %v1713 = vld [vmem:[%s3 + $0x4] sm:$0xf]
        %v1714 = vld [vmem:[%s3 + $0x8] sm:$0xf]
        %v1715 = vld [vmem:[%s3 + $0xc] sm:$0xf]
        %s1716 = scalar_lea.vmem %s3, 16
        %v1717 = vld [vmem:[%s1716] sm:$0xf]
        %v1718 = vld [vmem:[%s1716 + $0x4] sm:$0xf]
        %v1719 = vld [vmem:[%s1716 + $0x8] sm:$0xf]
        %v1720 = vld [vmem:[%s1716 + $0xc] sm:$0xf]
        %s1721 = scalar_lea.vmem %s3, 32
        %v1722 = vld [vmem:[%s1721] sm:$0xf]
        %v1723 = vld [vmem:[%s1721 + $0x4] sm:$0xf]
        %v1724 = vld [vmem:[%s1721 + $0x8] sm:$0xf]
        %v1725 = vld [vmem:[%s1721 + $0xc] sm:$0xf]
        %v1726 = vld [vmem:[%s2] sm:$0x3]
        %v1727 = vlaneseq
        %v1728 = vshrl.u32 %v1727, 7
        %v1729 = vsub.s32 0, %v1728
        %v1730 = vrot.slane %v1705, %v1729
        %v1859 = vunpack.c.l.b16 %v1449
        %v1860 = vunpack.c.l.b16 %v1450
        %v1861 = vunpack.c.l.b16 %v1451
        %v1862 = vunpack.c.l.b16 %v1452
        %v1863 = vunpack.c.l.b16 %v1453
        %v1864 = vunpack.c.l.b16 %v1454
        %v1865 = vunpack.c.l.b16 %v1455
        %v1866 = vunpack.c.l.b16 %v1456
        %v1867 = vunpack.c.l.b16 %v1457
        %v1868 = vunpack.c.l.b16 %v1458
        %v1869 = vunpack.c.l.b16 %v1459
        %v1870 = vunpack.c.l.b16 %v1460
        %v1871 = vunpack.c.l.b16 %v1461
        %v1872 = vunpack.c.l.b16 %v1462
        %v1873 = vunpack.c.l.b16 %v1463
        %v1874 = vunpack.c.l.b16 %v1464
        %v1875 = vunpack.c.l.b16 %v1465
        %v1876 = vunpack.c.l.b16 %v1466
        %v1877 = vunpack.c.l.b16 %v1467
        %v1878 = vunpack.c.l.b16 %v1468
        %v1879 = vunpack.c.l.b16 %v1469
        %v1880 = vunpack.c.l.b16 %v1470
        %v1881 = vunpack.c.l.b16 %v1471
        %v1882 = vunpack.c.l.b16 %v1472
        %v1883 = vunpack.c.l.b16 %v1473
        %v1884 = vunpack.c.l.b16 %v1474
        %v1885 = vunpack.c.l.b16 %v1475
        %v1886 = vunpack.c.l.b16 %v1476
        %v1887 = vunpack.c.l.b16 %v1477
        %v1888 = vunpack.c.l.b16 %v1478
        %v1889 = vunpack.c.l.b16 %v1479
        %v1890 = vunpack.c.l.b16 %v1480
        %v1891 = vunpack.c.l.b16 %v1481
        %v1892 = vunpack.c.l.b16 %v1482
        %v1893 = vunpack.c.l.b16 %v1483
        %v1894 = vunpack.c.l.b16 %v1484
        %v1895 = vunpack.c.l.b16 %v1485
        %v1896 = vunpack.c.l.b16 %v1486
        %v1897 = vunpack.c.l.b16 %v1487
        %v1898 = vunpack.c.l.b16 %v1488
        %v1899 = vunpack.c.l.b16 %v1489
        %v1900 = vunpack.c.l.b16 %v1490
        %v1901 = vunpack.c.l.b16 %v1491
        %v1902 = vunpack.c.l.b16 %v1492
        %v1903 = vunpack.c.l.b16 %v1493
        %v1904 = vunpack.c.l.b16 %v1494
        %v1905 = vunpack.c.l.b16 %v1495
        %v1906 = vunpack.c.l.b16 %v1496
        %v1907 = vunpack.c.l.b16 %v1497
        %v1908 = vunpack.c.l.b16 %v1498
        %v1909 = vunpack.c.l.b16 %v1499
        %v1910 = vunpack.c.l.b16 %v1500
        %v1911 = vunpack.c.l.b16 %v1501
        %v1912 = vunpack.c.l.b16 %v1502
        %v1913 = vunpack.c.l.b16 %v1503
        %v1914 = vunpack.c.l.b16 %v1504
        %v1915 = vunpack.c.l.b16 %v1505
        %v1916 = vunpack.c.l.b16 %v1506
        %v1917 = vunpack.c.l.b16 %v1507
        %v1918 = vunpack.c.l.b16 %v1508
        %v1919 = vunpack.c.l.b16 %v1509
        %v1920 = vunpack.c.l.b16 %v1510
        %v1921 = vunpack.c.l.b16 %v1511
        %v1922 = vunpack.c.l.b16 %v1512
        %v1923 = vunpack.c.l.b16 %v1513
        %v1924 = vunpack.c.l.b16 %v1514
        %v1925 = vunpack.c.l.b16 %v1515
        %v1926 = vunpack.c.l.b16 %v1516
        %v1927 = vunpack.c.l.b16 %v1517
        %v1928 = vunpack.c.l.b16 %v1518
        %v1929 = vunpack.c.l.b16 %v1519
        %v1930 = vunpack.c.l.b16 %v1520
        %v1931 = vunpack.c.l.b16 %v1521
        %v1932 = vunpack.c.l.b16 %v1522
        %v1933 = vunpack.c.l.b16 %v1523
        %v1934 = vunpack.c.l.b16 %v1524
        %v1935 = vunpack.c.l.b16 %v1525
        %v1936 = vunpack.c.l.b16 %v1526
        %v1937 = vunpack.c.l.b16 %v1527
        %v1938 = vunpack.c.l.b16 %v1528
        %v1939 = vunpack.c.l.b16 %v1529
        %v1940 = vunpack.c.l.b16 %v1530
        %v1941 = vunpack.c.l.b16 %v1531
        %v1942 = vunpack.c.l.b16 %v1532
        %v1943 = vunpack.c.l.b16 %v1533
        %v1944 = vunpack.c.l.b16 %v1534
        %v1945 = vunpack.c.l.b16 %v1535
        %v1946 = vunpack.c.l.b16 %v1536
        %v1947 = vunpack.c.l.b16 %v1537
        %v1948 = vunpack.c.l.b16 %v1538
        %v1949 = vunpack.c.l.b16 %v1539
        %v1950 = vunpack.c.l.b16 %v1540
        %v1951 = vunpack.c.l.b16 %v1541
        %v1952 = vunpack.c.l.b16 %v1542
        %v1953 = vunpack.c.l.b16 %v1543
        %v1954 = vunpack.c.l.b16 %v1544
        %v1955 = vunpack.c.l.b16 %v1545
        %v1956 = vunpack.c.l.b16 %v1546
        %v1957 = vunpack.c.l.b16 %v1547
        %v1958 = vunpack.c.l.b16 %v1548
        %v1959 = vunpack.c.l.b16 %v1549
        %v1960 = vunpack.c.l.b16 %v1550
        %v1961 = vunpack.c.l.b16 %v1551
        %v1962 = vunpack.c.l.b16 %v1552
        %v1963 = vunpack.c.l.b16 %v1553
        %v1964 = vunpack.c.l.b16 %v1554
        %v1965 = vunpack.c.l.b16 %v1555
        %v1966 = vunpack.c.l.b16 %v1556
        %v1967 = vunpack.c.l.b16 %v1557
        %v1968 = vunpack.c.l.b16 %v1558
        %v1969 = vunpack.c.l.b16 %v1559
        %v1970 = vunpack.c.l.b16 %v1560
        %v1971 = vunpack.c.l.b16 %v1561
        %v1972 = vunpack.c.l.b16 %v1562
        %v1973 = vunpack.c.l.b16 %v1563
        %v1974 = vunpack.c.l.b16 %v1564
        %v1975 = vunpack.c.l.b16 %v1565
        %v1976 = vunpack.c.l.b16 %v1566
        %v1977 = vunpack.c.l.b16 %v1567
        %v1978 = vunpack.c.l.b16 %v1568
        %v1979 = vunpack.c.l.b16 %v1569
        %v1980 = vunpack.c.l.b16 %v1570
        %v1981 = vunpack.c.l.b16 %v1571
        %v1982 = vunpack.c.l.b16 %v1572
        %v1983 = vunpack.c.l.b16 %v1573
        %v1984 = vunpack.c.l.b16 %v1574
        %v1985 = vunpack.c.l.b16 %v1575
        %v1986 = vunpack.c.l.b16 %v1576
        %v1987 = vpack.c.b16 %v1860, %v1859
        %v1988 = vpack.c.b16 %v1862, %v1861
        %v1989 = vpack.c.b16 %v1864, %v1863
        %v1990 = vpack.c.b16 %v1866, %v1865
        %v1991 = vpack.c.b16 %v1868, %v1867
        %v1992 = vpack.c.b16 %v1870, %v1869
        %v1993 = vpack.c.b16 %v1872, %v1871
        %v1994 = vpack.c.b16 %v1874, %v1873
        %v1995 = vpack.c.b16 %v1876, %v1875
        %v1996 = vpack.c.b16 %v1878, %v1877
        %v1997 = vpack.c.b16 %v1880, %v1879
        %v1998 = vpack.c.b16 %v1882, %v1881
        %v1999 = vpack.c.b16 %v1884, %v1883
        %v2000 = vpack.c.b16 %v1886, %v1885
        %v2001 = vpack.c.b16 %v1888, %v1887
        %v2002 = vpack.c.b16 %v1890, %v1889
        %v2003 = vpack.c.b16 %v1892, %v1891
        %v2004 = vpack.c.b16 %v1894, %v1893
        %v2005 = vpack.c.b16 %v1896, %v1895
        %v2006 = vpack.c.b16 %v1898, %v1897
        %v2007 = vpack.c.b16 %v1900, %v1899
        %v2008 = vpack.c.b16 %v1902, %v1901
        %v2009 = vpack.c.b16 %v1904, %v1903
        %v2010 = vpack.c.b16 %v1906, %v1905
        %v2011 = vpack.c.b16 %v1908, %v1907
        %v2012 = vpack.c.b16 %v1910, %v1909
        %v2013 = vpack.c.b16 %v1912, %v1911
        %v2014 = vpack.c.b16 %v1914, %v1913
        %v2015 = vpack.c.b16 %v1916, %v1915
        %v2016 = vpack.c.b16 %v1918, %v1917
        %v2017 = vpack.c.b16 %v1920, %v1919
        %v2018 = vpack.c.b16 %v1922, %v1921
        %v2019 = vpack.c.b16 %v1924, %v1923
        %v2020 = vpack.c.b16 %v1926, %v1925
        %v2021 = vpack.c.b16 %v1928, %v1927
        %v2022 = vpack.c.b16 %v1930, %v1929
        %v2023 = vpack.c.b16 %v1932, %v1931
        %v2024 = vpack.c.b16 %v1934, %v1933
        %v2025 = vpack.c.b16 %v1936, %v1935
        %v2026 = vpack.c.b16 %v1938, %v1937
        %v2027 = vpack.c.b16 %v1940, %v1939
        %v2028 = vpack.c.b16 %v1942, %v1941
        %v2029 = vpack.c.b16 %v1944, %v1943
        %v2030 = vpack.c.b16 %v1946, %v1945
        %v2031 = vpack.c.b16 %v1948, %v1947
        %v2032 = vpack.c.b16 %v1950, %v1949
        %v2033 = vpack.c.b16 %v1952, %v1951
        %v2034 = vpack.c.b16 %v1954, %v1953
        %v2035 = vpack.c.b16 %v1956, %v1955
        %v2036 = vpack.c.b16 %v1958, %v1957
        %v2037 = vpack.c.b16 %v1960, %v1959
        %v2038 = vpack.c.b16 %v1962, %v1961
        %v2039 = vpack.c.b16 %v1964, %v1963
        %v2040 = vpack.c.b16 %v1966, %v1965
        %v2041 = vpack.c.b16 %v1968, %v1967
        %v2042 = vpack.c.b16 %v1970, %v1969
        %v2043 = vpack.c.b16 %v1972, %v1971
        %v2044 = vpack.c.b16 %v1974, %v1973
        %v2045 = vpack.c.b16 %v1976, %v1975
        %v2046 = vpack.c.b16 %v1978, %v1977
        %v2047 = vpack.c.b16 %v1980, %v1979
        %v2048 = vpack.c.b16 %v1982, %v1981
        %v2049 = vpack.c.b16 %v1984, %v1983
        %v2050 = vpack.c.b16 %v1986, %v1985
        %vm2051 = vcmask 31744
        %v2053 = vsel %vm2051, %v1987, 0
        %v2056 = vsel %vm2051, %v1988, 0
        %v2059 = vsel %vm2051, %v1989, 0
        %v2062 = vsel %vm2051, %v1990, 0
        %v2065 = vsel %vm2051, %v1991, 0
        %v2068 = vsel %vm2051, %v1992, 0
        %v2071 = vsel %vm2051, %v1993, 0
        %v2074 = vsel %vm2051, %v1994, 0
        %v2077 = vsel %vm2051, %v1995, 0
        %v2080 = vsel %vm2051, %v1996, 0
        %v2083 = vsel %vm2051, %v1997, 0
        %v2086 = vsel %vm2051, %v1998, 0
        %v2089 = vsel %vm2051, %v1999, 0
        %v2092 = vsel %vm2051, %v2000, 0
        %v2095 = vsel %vm2051, %v2001, 0
        %v2098 = vsel %vm2051, %v2002, 0
        %v2101 = vsel %vm2051, %v2003, 0
        %v2104 = vsel %vm2051, %v2004, 0
        %v2107 = vsel %vm2051, %v2005, 0
        %v2110 = vsel %vm2051, %v2006, 0
        %v2113 = vsel %vm2051, %v2007, 0
        %v2116 = vsel %vm2051, %v2008, 0
        %v2119 = vsel %vm2051, %v2009, 0
        %v2122 = vsel %vm2051, %v2010, 0
        %v2125 = vsel %vm2051, %v2011, 0
        %v2128 = vsel %vm2051, %v2012, 0
        %v2131 = vsel %vm2051, %v2013, 0
        %v2134 = vsel %vm2051, %v2014, 0
        %v2137 = vsel %vm2051, %v2015, 0
        %v2140 = vsel %vm2051, %v2016, 0
        %v2143 = vsel %vm2051, %v2017, 0
        %v2146 = vsel %vm2051, %v2018, 0
        %v2149 = vsel %vm2051, %v2019, 0
        %v2152 = vsel %vm2051, %v2020, 0
        %v2155 = vsel %vm2051, %v2021, 0
        %v2158 = vsel %vm2051, %v2022, 0
        %v2161 = vsel %vm2051, %v2023, 0
        %v2164 = vsel %vm2051, %v2024, 0
        %v2167 = vsel %vm2051, %v2025, 0
        %v2170 = vsel %vm2051, %v2026, 0
        %v2173 = vsel %vm2051, %v2027, 0
        %v2176 = vsel %vm2051, %v2028, 0
        %v2179 = vsel %vm2051, %v2029, 0
        %v2182 = vsel %vm2051, %v2030, 0
        %v2185 = vsel %vm2051, %v2031, 0
        %v2188 = vsel %vm2051, %v2032, 0
        %v2191 = vsel %vm2051, %v2033, 0
        %v2194 = vsel %vm2051, %v2034, 0
        %v2197 = vsel %vm2051, %v2035, 0
        %v2200 = vsel %vm2051, %v2036, 0
        %v2203 = vsel %vm2051, %v2037, 0
        %v2206 = vsel %vm2051, %v2038, 0
        %v2209 = vsel %vm2051, %v2039, 0
        %v2212 = vsel %vm2051, %v2040, 0
        %v2215 = vsel %vm2051, %v2041, 0
        %v2218 = vsel %vm2051, %v2042, 0
        %v2221 = vsel %vm2051, %v2043, 0
        %v2224 = vsel %vm2051, %v2044, 0
        %v2227 = vsel %vm2051, %v2045, 0
        %v2230 = vsel %vm2051, %v2046, 0
        %v2233 = vsel %vm2051, %v2047, 0
        %v2236 = vsel %vm2051, %v2048, 0
        %v2239 = vsel %vm2051, %v2049, 0
        %v2242 = vsel %vm2051, %v2050, 0
        %vm2244 = vcmask 1041408
        %v2246 = vsel %vm2244, %v1726, 0
        %2248 = vmatprep.subr.bf16.mxu0 0
        %2249 = vmatpush1.bf16.msra.mxu0 %v2246
        %2250 = vmatprep.subr.bf16.mxu0 0
        %2251 = vmatpush1.bf16.msra.mxu0 0
        %2252 = vmatprep.subr.bf16.mxu0 0
        %2253 = vmatpush1.bf16.msra.mxu0 0
        %2254 = vmatprep.subr.bf16.mxu0 0
        %2255 = vmatpush1.bf16.msra.mxu0 0
        %2256 = vmatprep.subr.bf16.mxu0 0
        %2257 = vmatpush1.bf16.msra.mxu0 0
        %2258 = vmatprep.subr.bf16.mxu0 0
        %2259 = vmatpush1.bf16.msra.mxu0 0
        %2260 = vmatprep.subr.bf16.mxu0 0
        %2261 = vmatpush1.bf16.msra.mxu0 0
        %2262 = vmatprep.subr.bf16.mxu0 0
        %2263 = vmatpush1.bf16.msra.mxu0 0
        %2264 = vmatprep.subr.bf16.mxu0 0
        %2265 = vmatpush1.bf16.msra.mxu0 0
        %2266 = vmatprep.subr.bf16.mxu0 0
        %2267 = vmatpush1.bf16.msra.mxu0 0
        %2268 = vmatprep.subr.bf16.mxu0 0
        %2269 = vmatpush1.bf16.msra.mxu0 0
        %2270 = vmatprep.subr.bf16.mxu0 0
        %2271 = vmatpush1.bf16.msra.mxu0 0
        %2272 = vmatprep.subr.bf16.mxu0 0
        %2273 = vmatpush1.bf16.msra.mxu0 0
        %2274 = vmatprep.subr.bf16.mxu0 0
        %2275 = vmatpush1.bf16.msra.mxu0 0
        %2276 = vmatprep.subr.bf16.mxu0 0
        %2277 = vmatpush1.bf16.msra.mxu0 0
        %2278 = vmatprep.subr.bf16.mxu0 0
        %2279 = vmatpush1.bf16.msra.mxu0 0
        %2280 = vmatprep.mubr.bf16.mxu0 0
        %2281 = vmatmul.mubr.bf16.gmra.mrb[0].mxu0 %v2053
        %v2282 = vpop.f32.mrb[0].mxu0
        %v2283 = vadd.f32 %v1730, %v2282
        %v2284 = vpop.f32.mrb[0].mxu0
        %v2285 = vpop.f32.mrb[0].mxu0
        %v2286 = vadd.f32 %v1730, %v2285
        %v2287 = vpop.f32.mrb[0].mxu0
        %2288 = vmatprep.mubr.bf16.mxu0 0
        %2289 = vmatmul.mubr.bf16.gmra.mrb[0].mxu0 %v2056
        %v2290 = vpop.f32.mrb[0].mxu0
        %v2291 = vadd.f32 %v1730, %v2290
        %v2292 = vpop.f32.mrb[0].mxu0
        %v2293 = vpop.f32.mrb[0].mxu0
        %v2294 = vadd.f32 %v1730, %v2293
        %v2295 = vpop.f32.mrb[0].mxu0
        %2296 = vmatprep.mubr.bf16.mxu0 0
        %2297 = vmatmul.mubr.bf16.gmra.mrb[0].mxu0 %v2059
        %v2298 = vpop.f32.mrb[0].mxu0
        %v2299 = vadd.f32 %v1730, %v2298
        %v2300 = vpop.f32.mrb[0].mxu0
        %v2301 = vpop.f32.mrb[0].mxu0
        %v2302 = vadd.f32 %v1730, %v2301
        %v2303 = vpop.f32.mrb[0].mxu0
        %2304 = vmatprep.mubr.bf16.mxu0 0
        %2305 = vmatmul.mubr.bf16.gmra.mrb[0].mxu0 %v2062
        %v2306 = vpop.f32.mrb[0].mxu0
        %v2307 = vadd.f32 %v1730, %v2306
        %v2308 = vpop.f32.mrb[0].mxu0
        %v2309 = vpop.f32.mrb[0].mxu0
        %v2310 = vadd.f32 %v1730, %v2309
        %v2311 = vpop.f32.mrb[0].mxu0
        %2312 = vmatprep.mubr.bf16.mxu0 0
        %2313 = vmatmul.mubr.bf16.gmra.mrb[0].mxu0 %v2065
        %v2314 = vpop.f32.mrb[0].mxu0
        %v2315 = vadd.f32 %v1730, %v2314
        %v2316 = vpop.f32.mrb[0].mxu0
        %v2317 = vpop.f32.mrb[0].mxu0
        %v2318 = vadd.f32 %v1730, %v2317
        %v2319 = vpop.f32.mrb[0].mxu0
        %2320 = vmatprep.mubr.bf16.mxu0 0
        %2321 = vmatmul.mubr.bf16.gmra.mrb[0].mxu0 %v2068
        %v2322 = vpop.f32.mrb[0].mxu0
        %v2323 = vadd.f32 %v1730, %v2322
        %v2324 = vpop.f32.mrb[0].mxu0
        %v2325 = vpop.f32.mrb[0].mxu0
        %v2326 = vadd.f32 %v1730, %v2325
        %v2327 = vpop.f32.mrb[0].mxu0
        %2328 = vmatprep.mubr.bf16.mxu0 0
        %2329 = vmatmul.mubr.bf16.gmra.mrb[0].mxu0 %v2071
        %v2330 = vpop.f32.mrb[0].mxu0
        %v2331 = vadd.f32 %v1730, %v2330
        %v2332 = vpop.f32.mrb[0].mxu0
        %v2333 = vpop.f32.mrb[0].mxu0
        %v2334 = vadd.f32 %v1730, %v2333
        %v2335 = vpop.f32.mrb[0].mxu0
        %2336 = vmatprep.mubr.bf16.mxu0 0
        %2337 = vmatmul.mubr.bf16.gmra.mrb[0].mxu0 %v2074
        %v2338 = vpop.f32.mrb[0].mxu0
        %v2339 = vadd.f32 %v1730, %v2338
        %v2340 = vpop.f32.mrb[0].mxu0
        %v2341 = vpop.f32.mrb[0].mxu0
        %v2342 = vadd.f32 %v1730, %v2341
        %v2343 = vpop.f32.mrb[0].mxu0
        %2344 = vmatprep.mubr.bf16.mxu0 0
        %2345 = vmatmul.mubr.bf16.gmra.mrb[0].mxu0 %v2077
        %v2346 = vpop.f32.mrb[0].mxu0
        %v2347 = vadd.f32 %v1730, %v2346
        %v2348 = vpop.f32.mrb[0].mxu0
        %v2349 = vpop.f32.mrb[0].mxu0
        %v2350 = vadd.f32 %v1730, %v2349
        %v2351 = vpop.f32.mrb[0].mxu0
        %2352 = vmatprep.mubr.bf16.mxu0 0
        %2353 = vmatmul.mubr.bf16.gmra.mrb[0].mxu0 %v2080
        %v2354 = vpop.f32.mrb[0].mxu0
        %v2355 = vadd.f32 %v1730, %v2354
        %v2356 = vpop.f32.mrb[0].mxu0
        %v2357 = vpop.f32.mrb[0].mxu0
        %v2358 = vadd.f32 %v1730, %v2357
        %v2359 = vpop.f32.mrb[0].mxu0
        %2360 = vmatprep.mubr.bf16.mxu0 0
        %2361 = vmatmul.mubr.bf16.gmra.mrb[0].mxu0 %v2083
        %v2362 = vpop.f32.mrb[0].mxu0
        %v2363 = vadd.f32 %v1730, %v2362
        %v2364 = vpop.f32.mrb[0].mxu0
        %v2365 = vpop.f32.mrb[0].mxu0
        %v2366 = vadd.f32 %v1730, %v2365
        %v2367 = vpop.f32.mrb[0].mxu0
        %2368 = vmatprep.mubr.bf16.mxu0 0
        %2369 = vmatmul.mubr.bf16.gmra.mrb[0].mxu0 %v2086
        %v2370 = vpop.f32.mrb[0].mxu0
        %v2371 = vadd.f32 %v1730, %v2370
        %v2372 = vpop.f32.mrb[0].mxu0
        %v2373 = vpop.f32.mrb[0].mxu0
        %v2374 = vadd.f32 %v1730, %v2373
        %v2375 = vpop.f32.mrb[0].mxu0
        %2376 = vmatprep.mubr.bf16.mxu0 0
        %2377 = vmatmul.mubr.bf16.gmra.mrb[0].mxu0 %v2089
        %v2378 = vpop.f32.mrb[0].mxu0
        %v2379 = vadd.f32 %v1730, %v2378
        %v2380 = vpop.f32.mrb[0].mxu0
        %v2381 = vpop.f32.mrb[0].mxu0
        %v2382 = vadd.f32 %v1730, %v2381
        %v2383 = vpop.f32.mrb[0].mxu0
        %2384 = vmatprep.mubr.bf16.mxu0 0
        %2385 = vmatmul.mubr.bf16.gmra.mrb[0].mxu0 %v2092
        %v2386 = vpop.f32.mrb[0].mxu0
        %v2387 = vadd.f32 %v1730, %v2386
        %v2388 = vpop.f32.mrb[0].mxu0
        %v2389 = vpop.f32.mrb[0].mxu0
        %v2390 = vadd.f32 %v1730, %v2389
        %v2391 = vpop.f32.mrb[0].mxu0
        %2392 = vmatprep.mubr.bf16.mxu0 0
        %2393 = vmatmul.mubr.bf16.gmra.mrb[0].mxu0 %v2095
        %v2394 = vpop.f32.mrb[0].mxu0
        %v2395 = vadd.f32 %v1730, %v2394
        %v2396 = vpop.f32.mrb[0].mxu0
        %v2397 = vpop.f32.mrb[0].mxu0
        %v2398 = vadd.f32 %v1730, %v2397
        %v2399 = vpop.f32.mrb[0].mxu0
        %2400 = vmatprep.mubr.bf16.mxu0 0
        %2401 = vmatmul.mubr.bf16.gmra.mrb[0].mxu0 %v2098
        %v2402 = vpop.f32.mrb[0].mxu0
        %v2403 = vadd.f32 %v1730, %v2402
        %v2404 = vpop.f32.mrb[0].mxu0
        %v2405 = vpop.f32.mrb[0].mxu0
        %v2406 = vadd.f32 %v1730, %v2405
        %v2407 = vpop.f32.mrb[0].mxu0
        %2408 = vmatprep.mubr.bf16.mxu0 0
        %2409 = vmatmul.mubr.bf16.gmra.mrb[0].mxu0 %v2101
        %v2410 = vpop.f32.mrb[0].mxu0
        %v2411 = vadd.f32 %v1730, %v2410
        %v2412 = vpop.f32.mrb[0].mxu0
        %v2413 = vpop.f32.mrb[0].mxu0
        %v2414 = vadd.f32 %v1730, %v2413
        %v2415 = vpop.f32.mrb[0].mxu0
        %2416 = vmatprep.mubr.bf16.mxu0 0
        %2417 = vmatmul.mubr.bf16.gmra.mrb[0].mxu0 %v2104
        %v2418 = vpop.f32.mrb[0].mxu0
        %v2419 = vadd.f32 %v1730, %v2418
        %v2420 = vpop.f32.mrb[0].mxu0
        %v2421 = vpop.f32.mrb[0].mxu0
        %v2422 = vadd.f32 %v1730, %v2421
        %v2423 = vpop.f32.mrb[0].mxu0
        %2424 = vmatprep.mubr.bf16.mxu0 0
        %2425 = vmatmul.mubr.bf16.gmra.mrb[0].mxu0 %v2107
        %v2426 = vpop.f32.mrb[0].mxu0
        %v2427 = vadd.f32 %v1730, %v2426
        %v2428 = vpop.f32.mrb[0].mxu0
        %v2429 = vpop.f32.mrb[0].mxu0
        %v2430 = vadd.f32 %v1730, %v2429
        %v2431 = vpop.f32.mrb[0].mxu0
        %2432 = vmatprep.mubr.bf16.mxu0 0
        %2433 = vmatmul.mubr.bf16.gmra.mrb[0].mxu0 %v2110
        %v2434 = vpop.f32.mrb[0].mxu0
        %v2435 = vadd.f32 %v1730, %v2434
        %v2436 = vpop.f32.mrb[0].mxu0
        %v2437 = vpop.f32.mrb[0].mxu0
        %v2438 = vadd.f32 %v1730, %v2437
        %v2439 = vpop.f32.mrb[0].mxu0
        %2440 = vmatprep.mubr.bf16.mxu0 0
        %2441 = vmatmul.mubr.bf16.gmra.mrb[0].mxu0 %v2113
        %v2442 = vpop.f32.mrb[0].mxu0
        %v2443 = vadd.f32 %v1730, %v2442
        %v2444 = vpop.f32.mrb[0].mxu0
        %v2445 = vpop.f32.mrb[0].mxu0
        %v2446 = vadd.f32 %v1730, %v2445
        %v2447 = vpop.f32.mrb[0].mxu0
        %2448 = vmatprep.mubr.bf16.mxu0 0
        %2449 = vmatmul.mubr.bf16.gmra.mrb[0].mxu0 %v2116
        %v2450 = vpop.f32.mrb[0].mxu0
        %v2451 = vadd.f32 %v1730, %v2450
        %v2452 = vpop.f32.mrb[0].mxu0
        %v2453 = vpop.f32.mrb[0].mxu0
        %v2454 = vadd.f32 %v1730, %v2453
        %v2455 = vpop.f32.mrb[0].mxu0
        %2456 = vmatprep.mubr.bf16.mxu0 0
        %2457 = vmatmul.mubr.bf16.gmra.mrb[0].mxu0 %v2119
        %v2458 = vpop.f32.mrb[0].mxu0
        %v2459 = vadd.f32 %v1730, %v2458
        %v2460 = vpop.f32.mrb[0].mxu0
        %v2461 = vpop.f32.mrb[0].mxu0
        %v2462 = vadd.f32 %v1730, %v2461
        %v2463 = vpop.f32.mrb[0].mxu0
        %2464 = vmatprep.mubr.bf16.mxu0 0
        %2465 = vmatmul.mubr.bf16.gmra.mrb[0].mxu0 %v2122
        %v2466 = vpop.f32.mrb[0].mxu0
        %v2467 = vadd.f32 %v1730, %v2466
        %v2468 = vpop.f32.mrb[0].mxu0
        %v2469 = vpop.f32.mrb[0].mxu0
        %v2470 = vadd.f32 %v1730, %v2469
        %v2471 = vpop.f32.mrb[0].mxu0
        %2472 = vmatprep.mubr.bf16.mxu0 0
        %2473 = vmatmul.mubr.bf16.gmra.mrb[0].mxu0 %v2125
        %v2474 = vpop.f32.mrb[0].mxu0
        %v2475 = vadd.f32 %v1730, %v2474
        %v2476 = vpop.f32.mrb[0].mxu0
        %v2477 = vpop.f32.mrb[0].mxu0
        %v2478 = vadd.f32 %v1730, %v2477
        %v2479 = vpop.f32.mrb[0].mxu0
        %2480 = vmatprep.mubr.bf16.mxu0 0
        %2481 = vmatmul.mubr.bf16.gmra.mrb[0].mxu0 %v2128
        %v2482 = vpop.f32.mrb[0].mxu0
        %v2483 = vadd.f32 %v1730, %v2482
        %v2484 = vpop.f32.mrb[0].mxu0
        %v2485 = vpop.f32.mrb[0].mxu0
        %v2486 = vadd.f32 %v1730, %v2485
        %v2487 = vpop.f32.mrb[0].mxu0
        %2488 = vmatprep.mubr.bf16.mxu0 0
        %2489 = vmatmul.mubr.bf16.gmra.mrb[0].mxu0 %v2131
        %v2490 = vpop.f32.mrb[0].mxu0
        %v2491 = vadd.f32 %v1730, %v2490
        %v2492 = vpop.f32.mrb[0].mxu0
        %v2493 = vpop.f32.mrb[0].mxu0
        %v2494 = vadd.f32 %v1730, %v2493
        %v2495 = vpop.f32.mrb[0].mxu0
        %2496 = vmatprep.mubr.bf16.mxu0 0
        %2497 = vmatmul.mubr.bf16.gmra.mrb[0].mxu0 %v2134
        %v2498 = vpop.f32.mrb[0].mxu0
        %v2499 = vadd.f32 %v1730, %v2498
        %v2500 = vpop.f32.mrb[0].mxu0
        %v2501 = vpop.f32.mrb[0].mxu0
        %v2502 = vadd.f32 %v1730, %v2501
        %v2503 = vpop.f32.mrb[0].mxu0
        %2504 = vmatprep.mubr.bf16.mxu0 0
        %2505 = vmatmul.mubr.bf16.gmra.mrb[0].mxu0 %v2137
        %v2506 = vpop.f32.mrb[0].mxu0
        %v2507 = vadd.f32 %v1730, %v2506
        %v2508 = vpop.f32.mrb[0].mxu0
        %v2509 = vpop.f32.mrb[0].mxu0
        %v2510 = vadd.f32 %v1730, %v2509
        %v2511 = vpop.f32.mrb[0].mxu0
        %2512 = vmatprep.mubr.bf16.mxu0 0
        %2513 = vmatmul.mubr.bf16.gmra.mrb[0].mxu0 %v2140
        %v2514 = vpop.f32.mrb[0].mxu0
        %v2515 = vadd.f32 %v1730, %v2514
        %v2516 = vpop.f32.mrb[0].mxu0
        %v2517 = vpop.f32.mrb[0].mxu0
        %v2518 = vadd.f32 %v1730, %v2517
        %v2519 = vpop.f32.mrb[0].mxu0
        %2520 = vmatprep.mubr.bf16.mxu0 0
        %2521 = vmatmul.mubr.bf16.gmra.mrb[0].mxu0 %v2143
        %v2522 = vpop.f32.mrb[0].mxu0
        %v2523 = vadd.f32 %v1730, %v2522
        %v2524 = vpop.f32.mrb[0].mxu0
        %v2525 = vpop.f32.mrb[0].mxu0
        %v2526 = vadd.f32 %v1730, %v2525
        %v2527 = vpop.f32.mrb[0].mxu0
        %2528 = vmatprep.mubr.bf16.mxu0 0
        %2529 = vmatmul.mubr.bf16.gmra.mrb[0].mxu0 %v2146
        %v2530 = vpop.f32.mrb[0].mxu0
        %v2531 = vadd.f32 %v1730, %v2530
        %v2532 = vpop.f32.mrb[0].mxu0
        %v2533 = vpop.f32.mrb[0].mxu0
        %v2534 = vadd.f32 %v1730, %v2533
        %v2535 = vpop.f32.mrb[0].mxu0
        %2536 = vmatprep.mubr.bf16.mxu0 0
        %2537 = vmatmul.mubr.bf16.gmra.mrb[0].mxu0 %v2149
        %v2538 = vpop.f32.mrb[0].mxu0
        %v2539 = vadd.f32 %v1730, %v2538
        %v2540 = vpop.f32.mrb[0].mxu0
        %v2541 = vpop.f32.mrb[0].mxu0
        %v2542 = vadd.f32 %v1730, %v2541
        %v2543 = vpop.f32.mrb[0].mxu0
        %2544 = vmatprep.mubr.bf16.mxu0 0
        %2545 = vmatmul.mubr.bf16.gmra.mrb[0].mxu0 %v2152
        %v2546 = vpop.f32.mrb[0].mxu0
        %v2547 = vadd.f32 %v1730, %v2546
        %v2548 = vpop.f32.mrb[0].mxu0
        %v2549 = vpop.f32.mrb[0].mxu0
        %v2550 = vadd.f32 %v1730, %v2549
        %v2551 = vpop.f32.mrb[0].mxu0
        %2552 = vmatprep.mubr.bf16.mxu0 0
        %2553 = vmatmul.mubr.bf16.gmra.mrb[0].mxu0 %v2155
        %v2554 = vpop.f32.mrb[0].mxu0
        %v2555 = vadd.f32 %v1730, %v2554
        %v2556 = vpop.f32.mrb[0].mxu0
        %v2557 = vpop.f32.mrb[0].mxu0
        %v2558 = vadd.f32 %v1730, %v2557
        %v2559 = vpop.f32.mrb[0].mxu0
        %2560 = vmatprep.mubr.bf16.mxu0 0
        %2561 = vmatmul.mubr.bf16.gmra.mrb[0].mxu0 %v2158
        %v2562 = vpop.f32.mrb[0].mxu0
        %v2563 = vadd.f32 %v1730, %v2562
        %v2564 = vpop.f32.mrb[0].mxu0
        %v2565 = vpop.f32.mrb[0].mxu0
        %v2566 = vadd.f32 %v1730, %v2565
        %v2567 = vpop.f32.mrb[0].mxu0
        %2568 = vmatprep.mubr.bf16.mxu0 0
        %2569 = vmatmul.mubr.bf16.gmra.mrb[0].mxu0 %v2161
        %v2570 = vpop.f32.mrb[0].mxu0
        %v2571 = vadd.f32 %v1730, %v2570
        %v2572 = vpop.f32.mrb[0].mxu0
        %v2573 = vpop.f32.mrb[0].mxu0
        %v2574 = vadd.f32 %v1730, %v2573
        %v2575 = vpop.f32.mrb[0].mxu0
        %2576 = vmatprep.mubr.bf16.mxu0 0
        %2577 = vmatmul.mubr.bf16.gmra.mrb[0].mxu0 %v2164
        %v2578 = vpop.f32.mrb[0].mxu0
        %v2579 = vadd.f32 %v1730, %v2578
        %v2580 = vpop.f32.mrb[0].mxu0
        %v2581 = vpop.f32.mrb[0].mxu0
        %v2582 = vadd.f32 %v1730, %v2581
        %v2583 = vpop.f32.mrb[0].mxu0
        %2584 = vmatprep.mubr.bf16.mxu0 0
        %2585 = vmatmul.mubr.bf16.gmra.mrb[0].mxu0 %v2167
        %v2586 = vpop.f32.mrb[0].mxu0
        %v2587 = vadd.f32 %v1730, %v2586
        %v2588 = vpop.f32.mrb[0].mxu0
        %v2589 = vpop.f32.mrb[0].mxu0
        %v2590 = vadd.f32 %v1730, %v2589
        %v2591 = vpop.f32.mrb[0].mxu0
        %2592 = vmatprep.mubr.bf16.mxu0 0
        %2593 = vmatmul.mubr.bf16.gmra.mrb[0].mxu0 %v2170
        %v2594 = vpop.f32.mrb[0].mxu0
        %v2595 = vadd.f32 %v1730, %v2594
        %v2596 = vpop.f32.mrb[0].mxu0
        %v2597 = vpop.f32.mrb[0].mxu0
        %v2598 = vadd.f32 %v1730, %v2597
        %v2599 = vpop.f32.mrb[0].mxu0
        %2600 = vmatprep.mubr.bf16.mxu0 0
        %2601 = vmatmul.mubr.bf16.gmra.mrb[0].mxu0 %v2173
        %v2602 = vpop.f32.mrb[0].mxu0
        %v2603 = vadd.f32 %v1730, %v2602
        %v2604 = vpop.f32.mrb[0].mxu0
        %v2605 = vpop.f32.mrb[0].mxu0
        %v2606 = vadd.f32 %v1730, %v2605
        %v2607 = vpop.f32.mrb[0].mxu0
        %2608 = vmatprep.mubr.bf16.mxu0 0
        %2609 = vmatmul.mubr.bf16.gmra.mrb[0].mxu0 %v2176
        %v2610 = vpop.f32.mrb[0].mxu0
        %v2611 = vadd.f32 %v1730, %v2610
        %v2612 = vpop.f32.mrb[0].mxu0
        %v2613 = vpop.f32.mrb[0].mxu0
        %v2614 = vadd.f32 %v1730, %v2613
        %v2615 = vpop.f32.mrb[0].mxu0
        %2616 = vmatprep.mubr.bf16.mxu0 0
        %2617 = vmatmul.mubr.bf16.gmra.mrb[0].mxu0 %v2179
        %v2618 = vpop.f32.mrb[0].mxu0
        %v2619 = vadd.f32 %v1730, %v2618
        %v2620 = vpop.f32.mrb[0].mxu0
        %v2621 = vpop.f32.mrb[0].mxu0
        %v2622 = vadd.f32 %v1730, %v2621
        %v2623 = vpop.f32.mrb[0].mxu0
        %2624 = vmatprep.mubr.bf16.mxu0 0
        %2625 = vmatmul.mubr.bf16.gmra.mrb[0].mxu0 %v2182
        %v2626 = vpop.f32.mrb[0].mxu0
        %v2627 = vadd.f32 %v1730, %v2626
        %v2628 = vpop.f32.mrb[0].mxu0
        %v2629 = vpop.f32.mrb[0].mxu0
        %v2630 = vadd.f32 %v1730, %v2629
        %v2631 = vpop.f32.mrb[0].mxu0
        %2632 = vmatprep.mubr.bf16.mxu0 0
        %2633 = vmatmul.mubr.bf16.gmra.mrb[0].mxu0 %v2185
        %v2634 = vpop.f32.mrb[0].mxu0
        %v2635 = vadd.f32 %v1730, %v2634
        %v2636 = vpop.f32.mrb[0].mxu0
        %v2637 = vpop.f32.mrb[0].mxu0
        %v2638 = vadd.f32 %v1730, %v2637
        %v2639 = vpop.f32.mrb[0].mxu0
        %2640 = vmatprep.mubr.bf16.mxu0 0
        %2641 = vmatmul.mubr.bf16.gmra.mrb[0].mxu0 %v2188
        %v2642 = vpop.f32.mrb[0].mxu0
        %v2643 = vadd.f32 %v1730, %v2642
        %v2644 = vpop.f32.mrb[0].mxu0
        %v2645 = vpop.f32.mrb[0].mxu0
        %v2646 = vadd.f32 %v1730, %v2645
        %v2647 = vpop.f32.mrb[0].mxu0
        %2648 = vmatprep.mubr.bf16.mxu0 0
        %2649 = vmatmul.mubr.bf16.gmra.mrb[0].mxu0 %v2191
        %v2650 = vpop.f32.mrb[0].mxu0
        %v2651 = vadd.f32 %v1730, %v2650
        %v2652 = vpop.f32.mrb[0].mxu0
        %v2653 = vpop.f32.mrb[0].mxu0
        %v2654 = vadd.f32 %v1730, %v2653
        %v2655 = vpop.f32.mrb[0].mxu0
        %2656 = vmatprep.mubr.bf16.mxu0 0
        %2657 = vmatmul.mubr.bf16.gmra.mrb[0].mxu0 %v2194
        %v2658 = vpop.f32.mrb[0].mxu0
        %v2659 = vadd.f32 %v1730, %v2658
        %v2660 = vpop.f32.mrb[0].mxu0
        %v2661 = vpop.f32.mrb[0].mxu0
        %v2662 = vadd.f32 %v1730, %v2661
        %v2663 = vpop.f32.mrb[0].mxu0
        %2664 = vmatprep.mubr.bf16.mxu0 0
        %2665 = vmatmul.mubr.bf16.gmra.mrb[0].mxu0 %v2197
        %v2666 = vpop.f32.mrb[0].mxu0
        %v2667 = vadd.f32 %v1730, %v2666
        %v2668 = vpop.f32.mrb[0].mxu0
        %v2669 = vpop.f32.mrb[0].mxu0
        %v2670 = vadd.f32 %v1730, %v2669
        %v2671 = vpop.f32.mrb[0].mxu0
        %2672 = vmatprep.mubr.bf16.mxu0 0
        %2673 = vmatmul.mubr.bf16.gmra.mrb[0].mxu0 %v2200
        %v2674 = vpop.f32.mrb[0].mxu0
        %v2675 = vadd.f32 %v1730, %v2674
        %v2676 = vpop.f32.mrb[0].mxu0
        %v2677 = vpop.f32.mrb[0].mxu0
        %v2678 = vadd.f32 %v1730, %v2677
        %v2679 = vpop.f32.mrb[0].mxu0
        %2680 = vmatprep.mubr.bf16.mxu0 0
        %2681 = vmatmul.mubr.bf16.gmra.mrb[0].mxu0 %v2203
        %v2682 = vpop.f32.mrb[0].mxu0
        %v2683 = vadd.f32 %v1730, %v2682
        %v2684 = vpop.f32.mrb[0].mxu0
        %v2685 = vpop.f32.mrb[0].mxu0
        %v2686 = vadd.f32 %v1730, %v2685
        %v2687 = vpop.f32.mrb[0].mxu0
        %2688 = vmatprep.mubr.bf16.mxu0 0
        %2689 = vmatmul.mubr.bf16.gmra.mrb[0].mxu0 %v2206
        %v2690 = vpop.f32.mrb[0].mxu0
        %v2691 = vadd.f32 %v1730, %v2690
        %v2692 = vpop.f32.mrb[0].mxu0
        %v2693 = vpop.f32.mrb[0].mxu0
        %v2694 = vadd.f32 %v1730, %v2693
        %v2695 = vpop.f32.mrb[0].mxu0
        %2696 = vmatprep.mubr.bf16.mxu0 0
        %2697 = vmatmul.mubr.bf16.gmra.mrb[0].mxu0 %v2209
        %v2698 = vpop.f32.mrb[0].mxu0
        %v2699 = vadd.f32 %v1730, %v2698
        %v2700 = vpop.f32.mrb[0].mxu0
        %v2701 = vpop.f32.mrb[0].mxu0
        %v2702 = vadd.f32 %v1730, %v2701
        %v2703 = vpop.f32.mrb[0].mxu0
        %2704 = vmatprep.mubr.bf16.mxu0 0
        %2705 = vmatmul.mubr.bf16.gmra.mrb[0].mxu0 %v2212
        %v2706 = vpop.f32.mrb[0].mxu0
        %v2707 = vadd.f32 %v1730, %v2706
        %v2708 = vpop.f32.mrb[0].mxu0
        %v2709 = vpop.f32.mrb[0].mxu0
        %v2710 = vadd.f32 %v1730, %v2709
        %v2711 = vpop.f32.mrb[0].mxu0
        %2712 = vmatprep.mubr.bf16.mxu0 0
        %2713 = vmatmul.mubr.bf16.gmra.mrb[0].mxu0 %v2215
        %v2714 = vpop.f32.mrb[0].mxu0
        %v2715 = vadd.f32 %v1730, %v2714
        %v2716 = vpop.f32.mrb[0].mxu0
        %v2717 = vpop.f32.mrb[0].mxu0
        %v2718 = vadd.f32 %v1730, %v2717
        %v2719 = vpop.f32.mrb[0].mxu0
        %2720 = vmatprep.mubr.bf16.mxu0 0
        %2721 = vmatmul.mubr.bf16.gmra.mrb[0].mxu0 %v2218
        %v2722 = vpop.f32.mrb[0].mxu0
        %v2723 = vadd.f32 %v1730, %v2722
        %v2724 = vpop.f32.mrb[0].mxu0
        %v2725 = vpop.f32.mrb[0].mxu0
        %v2726 = vadd.f32 %v1730, %v2725
        %v2727 = vpop.f32.mrb[0].mxu0
        %2728 = vmatprep.mubr.bf16.mxu0 0
        %2729 = vmatmul.mubr.bf16.gmra.mrb[0].mxu0 %v2221
        %v2730 = vpop.f32.mrb[0].mxu0
        %v2731 = vadd.f32 %v1730, %v2730
        %v2732 = vpop.f32.mrb[0].mxu0
        %v2733 = vpop.f32.mrb[0].mxu0
        %v2734 = vadd.f32 %v1730, %v2733
        %v2735 = vpop.f32.mrb[0].mxu0
        %2736 = vmatprep.mubr.bf16.mxu0 0
        %2737 = vmatmul.mubr.bf16.gmra.mrb[0].mxu0 %v2224
        %v2738 = vpop.f32.mrb[0].mxu0
        %v2739 = vadd.f32 %v1730, %v2738
        %v2740 = vpop.f32.mrb[0].mxu0
        %v2741 = vpop.f32.mrb[0].mxu0
        %v2742 = vadd.f32 %v1730, %v2741
        %v2743 = vpop.f32.mrb[0].mxu0
        %2744 = vmatprep.mubr.bf16.mxu0 0
        %2745 = vmatmul.mubr.bf16.gmra.mrb[0].mxu0 %v2227
        %v2746 = vpop.f32.mrb[0].mxu0
        %v2747 = vadd.f32 %v1730, %v2746
        %v2748 = vpop.f32.mrb[0].mxu0
        %v2749 = vpop.f32.mrb[0].mxu0
        %v2750 = vadd.f32 %v1730, %v2749
        %v2751 = vpop.f32.mrb[0].mxu0
        %2752 = vmatprep.mubr.bf16.mxu0 0
        %2753 = vmatmul.mubr.bf16.gmra.mrb[0].mxu0 %v2230
        %v2754 = vpop.f32.mrb[0].mxu0
        %v2755 = vadd.f32 %v1730, %v2754
        %v2756 = vpop.f32.mrb[0].mxu0
        %v2757 = vpop.f32.mrb[0].mxu0
        %v2758 = vadd.f32 %v1730, %v2757
        %v2759 = vpop.f32.mrb[0].mxu0
        %2760 = vmatprep.mubr.bf16.mxu0 0
        %2761 = vmatmul.mubr.bf16.gmra.mrb[0].mxu0 %v2233
        %v2762 = vpop.f32.mrb[0].mxu0
        %v2763 = vadd.f32 %v1730, %v2762
        %v2764 = vpop.f32.mrb[0].mxu0
        %v2765 = vpop.f32.mrb[0].mxu0
        %v2766 = vadd.f32 %v1730, %v2765
        %v2767 = vpop.f32.mrb[0].mxu0
        %2768 = vmatprep.mubr.bf16.mxu0 0
        %2769 = vmatmul.mubr.bf16.gmra.mrb[0].mxu0 %v2236
        %v2770 = vpop.f32.mrb[0].mxu0
        %v2771 = vadd.f32 %v1730, %v2770
        %v2772 = vpop.f32.mrb[0].mxu0
        %v2773 = vpop.f32.mrb[0].mxu0
        %v2774 = vadd.f32 %v1730, %v2773
        %v2775 = vpop.f32.mrb[0].mxu0
        %2776 = vmatprep.mubr.bf16.mxu0 0
        %2777 = vmatmul.mubr.bf16.gmra.mrb[0].mxu0 %v2239
        %v2778 = vpop.f32.mrb[0].mxu0
        %v2779 = vadd.f32 %v1730, %v2778
        %v2780 = vpop.f32.mrb[0].mxu0
        %v2781 = vpop.f32.mrb[0].mxu0
        %v2782 = vadd.f32 %v1730, %v2781
        %v2783 = vpop.f32.mrb[0].mxu0
        %2784 = vmatprep.mubr.bf16.mxu0 0
        %2785 = vmatmul.mubr.bf16.gmra.mrb[0].mxu0 %v2242
        %v2786 = vpop.f32.mrb[0].mxu0
        %v2787 = vadd.f32 %v1730, %v2786
        %v2788 = vpop.f32.mrb[0].mxu0
        %v2789 = vpop.f32.mrb[0].mxu0
        %v2790 = vadd.f32 %v1730, %v2789
        %v2791 = vpop.f32.mrb[0].mxu0
        %2792 = vdwg.mxu0
        %v2793 = vmax.f32 %v2283, 0.0
        %v2794 = vmax.f32 %v2286, 0.0
        %v2795 = vmax.f32 %v2291, 0.0
        %v2796 = vmax.f32 %v2294, 0.0
        %v2797 = vmax.f32 %v2299, 0.0
        %v2798 = vmax.f32 %v2302, 0.0
        %v2799 = vmax.f32 %v2307, 0.0
        %v2800 = vmax.f32 %v2310, 0.0
        %v2801 = vmax.f32 %v2315, 0.0
        %v2802 = vmax.f32 %v2318, 0.0
        %v2803 = vmax.f32 %v2323, 0.0
        %v2804 = vmax.f32 %v2326, 0.0
        %v2805 = vmax.f32 %v2331, 0.0
        %v2806 = vmax.f32 %v2334, 0.0
        %v2807 = vmax.f32 %v2339, 0.0
        %v2808 = vmax.f32 %v2342, 0.0
        %v2809 = vmax.f32 %v2347, 0.0
        %v2810 = vmax.f32 %v2350, 0.0
        %v2811 = vmax.f32 %v2355, 0.0
        %v2812 = vmax.f32 %v2358, 0.0
        %v2813 = vmax.f32 %v2363, 0.0
        %v2814 = vmax.f32 %v2366, 0.0
        %v2815 = vmax.f32 %v2371, 0.0
        %v2816 = vmax.f32 %v2374, 0.0
        %v2817 = vmax.f32 %v2379, 0.0
        %v2818 = vmax.f32 %v2382, 0.0
        %v2819 = vmax.f32 %v2387, 0.0
        %v2820 = vmax.f32 %v2390, 0.0
        %v2821 = vmax.f32 %v2395, 0.0
        %v2822 = vmax.f32 %v2398, 0.0
        %v2823 = vmax.f32 %v2403, 0.0
        %v2824 = vmax.f32 %v2406, 0.0
        %v2825 = vmax.f32 %v2411, 0.0
        %v2826 = vmax.f32 %v2414, 0.0
        %v2827 = vmax.f32 %v2419, 0.0
        %v2828 = vmax.f32 %v2422, 0.0
        %v2829 = vmax.f32 %v2427, 0.0
        %v2830 = vmax.f32 %v2430, 0.0
        %v2831 = vmax.f32 %v2435, 0.0
        %v2832 = vmax.f32 %v2438, 0.0
        %v2833 = vmax.f32 %v2443, 0.0
        %v2834 = vmax.f32 %v2446, 0.0
        %v2835 = vmax.f32 %v2451, 0.0
        %v2836 = vmax.f32 %v2454, 0.0
        %v2837 = vmax.f32 %v2459, 0.0
        %v2838 = vmax.f32 %v2462, 0.0
        %v2839 = vmax.f32 %v2467, 0.0
        %v2840 = vmax.f32 %v2470, 0.0
        %v2841 = vmax.f32 %v2475, 0.0
        %v2842 = vmax.f32 %v2478, 0.0
        %v2843 = vmax.f32 %v2483, 0.0
        %v2844 = vmax.f32 %v2486, 0.0
        %v2845 = vmax.f32 %v2491, 0.0
        %v2846 = vmax.f32 %v2494, 0.0
        %v2847 = vmax.f32 %v2499, 0.0
        %v2848 = vmax.f32 %v2502, 0.0
        %v2849 = vmax.f32 %v2507, 0.0
        %v2850 = vmax.f32 %v2510, 0.0
        %v2851 = vmax.f32 %v2515, 0.0
        %v2852 = vmax.f32 %v2518, 0.0
        %v2853 = vmax.f32 %v2523, 0.0
        %v2854 = vmax.f32 %v2526, 0.0
        %v2855 = vmax.f32 %v2531, 0.0
        %v2856 = vmax.f32 %v2534, 0.0
        %v2857 = vmax.f32 %v2539, 0.0
        %v2858 = vmax.f32 %v2542, 0.0
        %v2859 = vmax.f32 %v2547, 0.0
        %v2860 = vmax.f32 %v2550, 0.0
        %v2861 = vmax.f32 %v2555, 0.0
        %v2862 = vmax.f32 %v2558, 0.0
        %v2863 = vmax.f32 %v2563, 0.0
        %v2864 = vmax.f32 %v2566, 0.0
        %v2865 = vmax.f32 %v2571, 0.0
        %v2866 = vmax.f32 %v2574, 0.0
        %v2867 = vmax.f32 %v2579, 0.0
        %v2868 = vmax.f32 %v2582, 0.0
        %v2869 = vmax.f32 %v2587, 0.0
        %v2870 = vmax.f32 %v2590, 0.0
        %v2871 = vmax.f32 %v2595, 0.0
        %v2872 = vmax.f32 %v2598, 0.0
        %v2873 = vmax.f32 %v2603, 0.0
        %v2874 = vmax.f32 %v2606, 0.0
        %v2875 = vmax.f32 %v2611, 0.0
        %v2876 = vmax.f32 %v2614, 0.0
        %v2877 = vmax.f32 %v2619, 0.0
        %v2878 = vmax.f32 %v2622, 0.0
        %v2879 = vmax.f32 %v2627, 0.0
        %v2880 = vmax.f32 %v2630, 0.0
        %v2881 = vmax.f32 %v2635, 0.0
        %v2882 = vmax.f32 %v2638, 0.0
        %v2883 = vmax.f32 %v2643, 0.0
        %v2884 = vmax.f32 %v2646, 0.0
        %v2885 = vmax.f32 %v2651, 0.0
        %v2886 = vmax.f32 %v2654, 0.0
        %v2887 = vmax.f32 %v2659, 0.0
        %v2888 = vmax.f32 %v2662, 0.0
        %v2889 = vmax.f32 %v2667, 0.0
        %v2890 = vmax.f32 %v2670, 0.0
        %v2891 = vmax.f32 %v2675, 0.0
        %v2892 = vmax.f32 %v2678, 0.0
        %v2893 = vmax.f32 %v2683, 0.0
        %v2894 = vmax.f32 %v2686, 0.0
        %v2895 = vmax.f32 %v2691, 0.0
        %v2896 = vmax.f32 %v2694, 0.0
        %v2897 = vmax.f32 %v2699, 0.0
        %v2898 = vmax.f32 %v2702, 0.0
        %v2899 = vmax.f32 %v2707, 0.0
        %v2900 = vmax.f32 %v2710, 0.0
        %v2901 = vmax.f32 %v2715, 0.0
        %v2902 = vmax.f32 %v2718, 0.0
        %v2903 = vmax.f32 %v2723, 0.0
        %v2904 = vmax.f32 %v2726, 0.0
        %v2905 = vmax.f32 %v2731, 0.0
        %v2906 = vmax.f32 %v2734, 0.0
        %v2907 = vmax.f32 %v2739, 0.0
        %v2908 = vmax.f32 %v2742, 0.0
        %v2909 = vmax.f32 %v2747, 0.0
        %v2910 = vmax.f32 %v2750, 0.0
        %v2911 = vmax.f32 %v2755, 0.0
        %v2912 = vmax.f32 %v2758, 0.0
        %v2913 = vmax.f32 %v2763, 0.0
        %v2914 = vmax.f32 %v2766, 0.0
        %v2915 = vmax.f32 %v2771, 0.0
        %v2916 = vmax.f32 %v2774, 0.0
        %v2917 = vmax.f32 %v2779, 0.0
        %v2918 = vmax.f32 %v2782, 0.0
        %v2919 = vmax.f32 %v2787, 0.0
        %v2920 = vmax.f32 %v2790, 0.0
        %2922 = vset.pattern.permute.xlu0 0
        %2923 = vperm.xlu0 %2922, %v1577
        %v2924 = vpop.permute.xlu0 %2923
        %2927 = vset.pattern.permute.xlu0 0
        %2928 = vperm.xlu0 %2927, %v1578
        %v2929 = vpop.permute.xlu0 %2928
        %2932 = vset.pattern.permute.xlu0 0
        %2933 = vperm.xlu0 %2932, %v1579
        %v2934 = vpop.permute.xlu0 %2933
        %2937 = vset.pattern.permute.xlu0 0
        %2938 = vperm.xlu0 %2937, %v1580
        %v2939 = vpop.permute.xlu0 %2938
        %2942 = vset.pattern.permute.xlu0 0
        %2943 = vperm.xlu0 %2942, %v1581
        %v2944 = vpop.permute.xlu0 %2943
        %2947 = vset.pattern.permute.xlu0 0
        %2948 = vperm.xlu0 %2947, %v1582
        %v2949 = vpop.permute.xlu0 %2948
        %2952 = vset.pattern.permute.xlu0 0
        %2953 = vperm.xlu0 %2952, %v1583
        %v2954 = vpop.permute.xlu0 %2953
        %2957 = vset.pattern.permute.xlu0 0
        %2958 = vperm.xlu0 %2957, %v1584
        %v2959 = vpop.permute.xlu0 %2958
        %2962 = vset.pattern.permute.xlu0 0
        %2963 = vperm.xlu0 %2962, %v1585
        %v2964 = vpop.permute.xlu0 %2963
        %2967 = vset.pattern.permute.xlu0 0
        %2968 = vperm.xlu0 %2967, %v1586
        %v2969 = vpop.permute.xlu0 %2968
        %2972 = vset.pattern.permute.xlu0 0
        %2973 = vperm.xlu0 %2972, %v1587
        %v2974 = vpop.permute.xlu0 %2973
        %2977 = vset.pattern.permute.xlu0 0
        %2978 = vperm.xlu0 %2977, %v1588
        %v2979 = vpop.permute.xlu0 %2978
        %2982 = vset.pattern.permute.xlu0 0
        %2983 = vperm.xlu0 %2982, %v1589
        %v2984 = vpop.permute.xlu0 %2983
        %2987 = vset.pattern.permute.xlu0 0
        %2988 = vperm.xlu0 %2987, %v1590
        %v2989 = vpop.permute.xlu0 %2988
        %2992 = vset.pattern.permute.xlu0 0
        %2993 = vperm.xlu0 %2992, %v1591
        %v2994 = vpop.permute.xlu0 %2993
        %2997 = vset.pattern.permute.xlu0 0
        %2998 = vperm.xlu0 %2997, %v1592
        %v2999 = vpop.permute.xlu0 %2998
        %3002 = vset.pattern.permute.xlu0 0
        %3003 = vperm.xlu0 %3002, %v1593
        %v3004 = vpop.permute.xlu0 %3003
        %3007 = vset.pattern.permute.xlu0 0
        %3008 = vperm.xlu0 %3007, %v1594
        %v3009 = vpop.permute.xlu0 %3008
        %3012 = vset.pattern.permute.xlu0 0
        %3013 = vperm.xlu0 %3012, %v1595
        %v3014 = vpop.permute.xlu0 %3013
        %3017 = vset.pattern.permute.xlu0 0
        %3018 = vperm.xlu0 %3017, %v1596
        %v3019 = vpop.permute.xlu0 %3018
        %3022 = vset.pattern.permute.xlu0 0
        %3023 = vperm.xlu0 %3022, %v1597
        %v3024 = vpop.permute.xlu0 %3023
        %3027 = vset.pattern.permute.xlu0 0
        %3028 = vperm.xlu0 %3027, %v1598
        %v3029 = vpop.permute.xlu0 %3028
        %3032 = vset.pattern.permute.xlu0 0
        %3033 = vperm.xlu0 %3032, %v1599
        %v3034 = vpop.permute.xlu0 %3033
        %3037 = vset.pattern.permute.xlu0 0
        %3038 = vperm.xlu0 %3037, %v1600
        %v3039 = vpop.permute.xlu0 %3038
        %3042 = vset.pattern.permute.xlu0 0
        %3043 = vperm.xlu0 %3042, %v1601
        %v3044 = vpop.permute.xlu0 %3043
        %3047 = vset.pattern.permute.xlu0 0
        %3048 = vperm.xlu0 %3047, %v1602
        %v3049 = vpop.permute.xlu0 %3048
        %3052 = vset.pattern.permute.xlu0 0
        %3053 = vperm.xlu0 %3052, %v1603
        %v3054 = vpop.permute.xlu0 %3053
        %3057 = vset.pattern.permute.xlu0 0
        %3058 = vperm.xlu0 %3057, %v1604
        %v3059 = vpop.permute.xlu0 %3058
        %3062 = vset.pattern.permute.xlu0 0
        %3063 = vperm.xlu0 %3062, %v1605
        %v3064 = vpop.permute.xlu0 %3063
        %3067 = vset.pattern.permute.xlu0 0
        %3068 = vperm.xlu0 %3067, %v1606
        %v3069 = vpop.permute.xlu0 %3068
        %3072 = vset.pattern.permute.xlu0 0
        %3073 = vperm.xlu0 %3072, %v1607
        %v3074 = vpop.permute.xlu0 %3073
        %3077 = vset.pattern.permute.xlu0 0
        %3078 = vperm.xlu0 %3077, %v1608
        %v3079 = vpop.permute.xlu0 %3078
        %3082 = vset.pattern.permute.xlu0 0
        %3083 = vperm.xlu0 %3082, %v1609
        %v3084 = vpop.permute.xlu0 %3083
        %3087 = vset.pattern.permute.xlu0 0
        %3088 = vperm.xlu0 %3087, %v1610
        %v3089 = vpop.permute.xlu0 %3088
        %3092 = vset.pattern.permute.xlu0 0
        %3093 = vperm.xlu0 %3092, %v1611
        %v3094 = vpop.permute.xlu0 %3093
        %3097 = vset.pattern.permute.xlu0 0
        %3098 = vperm.xlu0 %3097, %v1612
        %v3099 = vpop.permute.xlu0 %3098
        %3102 = vset.pattern.permute.xlu0 0
        %3103 = vperm.xlu0 %3102, %v1613
        %v3104 = vpop.permute.xlu0 %3103
        %3107 = vset.pattern.permute.xlu0 0
        %3108 = vperm.xlu0 %3107, %v1614
        %v3109 = vpop.permute.xlu0 %3108
        %3112 = vset.pattern.permute.xlu0 0
        %3113 = vperm.xlu0 %3112, %v1615
        %v3114 = vpop.permute.xlu0 %3113
        %3117 = vset.pattern.permute.xlu0 0
        %3118 = vperm.xlu0 %3117, %v1616
        %v3119 = vpop.permute.xlu0 %3118
        %3122 = vset.pattern.permute.xlu0 0
        %3123 = vperm.xlu0 %3122, %v1617
        %v3124 = vpop.permute.xlu0 %3123
        %3127 = vset.pattern.permute.xlu0 0
        %3128 = vperm.xlu0 %3127, %v1618
        %v3129 = vpop.permute.xlu0 %3128
        %3132 = vset.pattern.permute.xlu0 0
        %3133 = vperm.xlu0 %3132, %v1619
        %v3134 = vpop.permute.xlu0 %3133
        %3137 = vset.pattern.permute.xlu0 0
        %3138 = vperm.xlu0 %3137, %v1620
        %v3139 = vpop.permute.xlu0 %3138
        %3142 = vset.pattern.permute.xlu0 0
        %3143 = vperm.xlu0 %3142, %v1621
        %v3144 = vpop.permute.xlu0 %3143
        %3147 = vset.pattern.permute.xlu0 0
        %3148 = vperm.xlu0 %3147, %v1622
        %v3149 = vpop.permute.xlu0 %3148
        %3152 = vset.pattern.permute.xlu0 0
        %3153 = vperm.xlu0 %3152, %v1623
        %v3154 = vpop.permute.xlu0 %3153
        %3157 = vset.pattern.permute.xlu0 0
        %3158 = vperm.xlu0 %3157, %v1624
        %v3159 = vpop.permute.xlu0 %3158
        %3162 = vset.pattern.permute.xlu0 0
        %3163 = vperm.xlu0 %3162, %v1625
        %v3164 = vpop.permute.xlu0 %3163
        %3167 = vset.pattern.permute.xlu0 0
        %3168 = vperm.xlu0 %3167, %v1626
        %v3169 = vpop.permute.xlu0 %3168
        %3172 = vset.pattern.permute.xlu0 0
        %3173 = vperm.xlu0 %3172, %v1627
        %v3174 = vpop.permute.xlu0 %3173
        %3177 = vset.pattern.permute.xlu0 0
        %3178 = vperm.xlu0 %3177, %v1628
        %v3179 = vpop.permute.xlu0 %3178
        %3182 = vset.pattern.permute.xlu0 0
        %3183 = vperm.xlu0 %3182, %v1629
        %v3184 = vpop.permute.xlu0 %3183
        %3187 = vset.pattern.permute.xlu0 0
        %3188 = vperm.xlu0 %3187, %v1630
        %v3189 = vpop.permute.xlu0 %3188
        %3192 = vset.pattern.permute.xlu0 0
        %3193 = vperm.xlu0 %3192, %v1631
        %v3194 = vpop.permute.xlu0 %3193
        %3197 = vset.pattern.permute.xlu0 0
        %3198 = vperm.xlu0 %3197, %v1632
        %v3199 = vpop.permute.xlu0 %3198
        %3202 = vset.pattern.permute.xlu0 0
        %3203 = vperm.xlu0 %3202, %v1633
        %v3204 = vpop.permute.xlu0 %3203
        %3207 = vset.pattern.permute.xlu0 0
        %3208 = vperm.xlu0 %3207, %v1634
        %v3209 = vpop.permute.xlu0 %3208
        %3212 = vset.pattern.permute.xlu0 0
        %3213 = vperm.xlu0 %3212, %v1635
        %v3214 = vpop.permute.xlu0 %3213
        %3217 = vset.pattern.permute.xlu0 0
        %3218 = vperm.xlu0 %3217, %v1636
        %v3219 = vpop.permute.xlu0 %3218
        %3222 = vset.pattern.permute.xlu0 0
        %3223 = vperm.xlu0 %3222, %v1637
        %v3224 = vpop.permute.xlu0 %3223
        %3227 = vset.pattern.permute.xlu0 0
        %3228 = vperm.xlu0 %3227, %v1638
        %v3229 = vpop.permute.xlu0 %3228
        %3232 = vset.pattern.permute.xlu0 0
        %3233 = vperm.xlu0 %3232, %v1639
        %v3234 = vpop.permute.xlu0 %3233
        %3237 = vset.pattern.permute.xlu0 0
        %3238 = vperm.xlu0 %3237, %v1640
        %v3239 = vpop.permute.xlu0 %3238
        %3242 = vset.pattern.permute.xlu0 0
        %3243 = vperm.xlu0 %3242, %v1641
        %v3244 = vpop.permute.xlu0 %3243
        %3247 = vset.pattern.permute.xlu0 0
        %3248 = vperm.xlu0 %3247, %v1642
        %v3249 = vpop.permute.xlu0 %3248
        %3252 = vset.pattern.permute.xlu0 0
        %3253 = vperm.xlu0 %3252, %v1643
        %v3254 = vpop.permute.xlu0 %3253
        %3257 = vset.pattern.permute.xlu0 0
        %3258 = vperm.xlu0 %3257, %v1644
        %v3259 = vpop.permute.xlu0 %3258
        %3262 = vset.pattern.permute.xlu0 0
        %3263 = vperm.xlu0 %3262, %v1645
        %v3264 = vpop.permute.xlu0 %3263
        %3267 = vset.pattern.permute.xlu0 0
        %3268 = vperm.xlu0 %3267, %v1646
        %v3269 = vpop.permute.xlu0 %3268
        %3272 = vset.pattern.permute.xlu0 0
        %3273 = vperm.xlu0 %3272, %v1647
        %v3274 = vpop.permute.xlu0 %3273
        %3277 = vset.pattern.permute.xlu0 0
        %3278 = vperm.xlu0 %3277, %v1648
        %v3279 = vpop.permute.xlu0 %3278
        %3282 = vset.pattern.permute.xlu0 0
        %3283 = vperm.xlu0 %3282, %v1649
        %v3284 = vpop.permute.xlu0 %3283
        %3287 = vset.pattern.permute.xlu0 0
        %3288 = vperm.xlu0 %3287, %v1650
        %v3289 = vpop.permute.xlu0 %3288
        %3292 = vset.pattern.permute.xlu0 0
        %3293 = vperm.xlu0 %3292, %v1651
        %v3294 = vpop.permute.xlu0 %3293
        %3297 = vset.pattern.permute.xlu0 0
        %3298 = vperm.xlu0 %3297, %v1652
        %v3299 = vpop.permute.xlu0 %3298
        %3302 = vset.pattern.permute.xlu0 0
        %3303 = vperm.xlu0 %3302, %v1653
        %v3304 = vpop.permute.xlu0 %3303
        %3307 = vset.pattern.permute.xlu0 0
        %3308 = vperm.xlu0 %3307, %v1654
        %v3309 = vpop.permute.xlu0 %3308
        %3312 = vset.pattern.permute.xlu0 0
        %3313 = vperm.xlu0 %3312, %v1655
        %v3314 = vpop.permute.xlu0 %3313
        %3317 = vset.pattern.permute.xlu0 0
        %3318 = vperm.xlu0 %3317, %v1656
        %v3319 = vpop.permute.xlu0 %3318
        %3322 = vset.pattern.permute.xlu0 0
        %3323 = vperm.xlu0 %3322, %v1657
        %v3324 = vpop.permute.xlu0 %3323
        %3327 = vset.pattern.permute.xlu0 0
        %3328 = vperm.xlu0 %3327, %v1658
        %v3329 = vpop.permute.xlu0 %3328
        %3332 = vset.pattern.permute.xlu0 0
        %3333 = vperm.xlu0 %3332, %v1659
        %v3334 = vpop.permute.xlu0 %3333
        %3337 = vset.pattern.permute.xlu0 0
        %3338 = vperm.xlu0 %3337, %v1660
        %v3339 = vpop.permute.xlu0 %3338
        %3342 = vset.pattern.permute.xlu0 0
        %3343 = vperm.xlu0 %3342, %v1661
        %v3344 = vpop.permute.xlu0 %3343
        %3347 = vset.pattern.permute.xlu0 0
        %3348 = vperm.xlu0 %3347, %v1662
        %v3349 = vpop.permute.xlu0 %3348
        %3352 = vset.pattern.permute.xlu0 0
        %3353 = vperm.xlu0 %3352, %v1663
        %v3354 = vpop.permute.xlu0 %3353
        %3357 = vset.pattern.permute.xlu0 0
        %3358 = vperm.xlu0 %3357, %v1664
        %v3359 = vpop.permute.xlu0 %3358
        %3362 = vset.pattern.permute.xlu0 0
        %3363 = vperm.xlu0 %3362, %v1665
        %v3364 = vpop.permute.xlu0 %3363
        %3367 = vset.pattern.permute.xlu0 0
        %3368 = vperm.xlu0 %3367, %v1666
        %v3369 = vpop.permute.xlu0 %3368
        %3372 = vset.pattern.permute.xlu0 0
        %3373 = vperm.xlu0 %3372, %v1667
        %v3374 = vpop.permute.xlu0 %3373
        %3377 = vset.pattern.permute.xlu0 0
        %3378 = vperm.xlu0 %3377, %v1668
        %v3379 = vpop.permute.xlu0 %3378
        %3382 = vset.pattern.permute.xlu0 0
        %3383 = vperm.xlu0 %3382, %v1669
        %v3384 = vpop.permute.xlu0 %3383
        %3387 = vset.pattern.permute.xlu0 0
        %3388 = vperm.xlu0 %3387, %v1670
        %v3389 = vpop.permute.xlu0 %3388
        %3392 = vset.pattern.permute.xlu0 0
        %3393 = vperm.xlu0 %3392, %v1671
        %v3394 = vpop.permute.xlu0 %3393
        %3397 = vset.pattern.permute.xlu0 0
        %3398 = vperm.xlu0 %3397, %v1672
        %v3399 = vpop.permute.xlu0 %3398
        %3402 = vset.pattern.permute.xlu0 0
        %3403 = vperm.xlu0 %3402, %v1673
        %v3404 = vpop.permute.xlu0 %3403
        %3407 = vset.pattern.permute.xlu0 0
        %3408 = vperm.xlu0 %3407, %v1674
        %v3409 = vpop.permute.xlu0 %3408
        %3412 = vset.pattern.permute.xlu0 0
        %3413 = vperm.xlu0 %3412, %v1675
        %v3414 = vpop.permute.xlu0 %3413
        %3417 = vset.pattern.permute.xlu0 0
        %3418 = vperm.xlu0 %3417, %v1676
        %v3419 = vpop.permute.xlu0 %3418
        %3422 = vset.pattern.permute.xlu0 0
        %3423 = vperm.xlu0 %3422, %v1677
        %v3424 = vpop.permute.xlu0 %3423
        %3427 = vset.pattern.permute.xlu0 0
        %3428 = vperm.xlu0 %3427, %v1678
        %v3429 = vpop.permute.xlu0 %3428
        %3432 = vset.pattern.permute.xlu0 0
        %3433 = vperm.xlu0 %3432, %v1679
        %v3434 = vpop.permute.xlu0 %3433
        %3437 = vset.pattern.permute.xlu0 0
        %3438 = vperm.xlu0 %3437, %v1680
        %v3439 = vpop.permute.xlu0 %3438
        %3442 = vset.pattern.permute.xlu0 0
        %3443 = vperm.xlu0 %3442, %v1681
        %v3444 = vpop.permute.xlu0 %3443
        %3447 = vset.pattern.permute.xlu0 0
        %3448 = vperm.xlu0 %3447, %v1682
        %v3449 = vpop.permute.xlu0 %3448
        %3452 = vset.pattern.permute.xlu0 0
        %3453 = vperm.xlu0 %3452, %v1683
        %v3454 = vpop.permute.xlu0 %3453
        %3457 = vset.pattern.permute.xlu0 0
        %3458 = vperm.xlu0 %3457, %v1684
        %v3459 = vpop.permute.xlu0 %3458
        %3462 = vset.pattern.permute.xlu0 0
        %3463 = vperm.xlu0 %3462, %v1685
        %v3464 = vpop.permute.xlu0 %3463
        %3467 = vset.pattern.permute.xlu0 0
        %3468 = vperm.xlu0 %3467, %v1686
        %v3469 = vpop.permute.xlu0 %3468
        %3472 = vset.pattern.permute.xlu0 0
        %3473 = vperm.xlu0 %3472, %v1687
        %v3474 = vpop.permute.xlu0 %3473
        %3477 = vset.pattern.permute.xlu0 0
        %3478 = vperm.xlu0 %3477, %v1688
        %v3479 = vpop.permute.xlu0 %3478
        %3482 = vset.pattern.permute.xlu0 0
        %3483 = vperm.xlu0 %3482, %v1689
        %v3484 = vpop.permute.xlu0 %3483
        %3487 = vset.pattern.permute.xlu0 0
        %3488 = vperm.xlu0 %3487, %v1690
        %v3489 = vpop.permute.xlu0 %3488
        %3492 = vset.pattern.permute.xlu0 0
        %3493 = vperm.xlu0 %3492, %v1691
        %v3494 = vpop.permute.xlu0 %3493
        %3497 = vset.pattern.permute.xlu0 0
        %3498 = vperm.xlu0 %3497, %v1692
        %v3499 = vpop.permute.xlu0 %3498
        %3502 = vset.pattern.permute.xlu0 0
        %3503 = vperm.xlu0 %3502, %v1693
        %v3504 = vpop.permute.xlu0 %3503
        %3507 = vset.pattern.permute.xlu0 0
        %3508 = vperm.xlu0 %3507, %v1694
        %v3509 = vpop.permute.xlu0 %3508
        %3512 = vset.pattern.permute.xlu0 0
        %3513 = vperm.xlu0 %3512, %v1695
        %v3514 = vpop.permute.xlu0 %3513
        %3517 = vset.pattern.permute.xlu0 0
        %3518 = vperm.xlu0 %3517, %v1696
        %v3519 = vpop.permute.xlu0 %3518
        %3522 = vset.pattern.permute.xlu0 0
        %3523 = vperm.xlu0 %3522, %v1697
        %v3524 = vpop.permute.xlu0 %3523
        %3527 = vset.pattern.permute.xlu0 0
        %3528 = vperm.xlu0 %3527, %v1698
        %v3529 = vpop.permute.xlu0 %3528
        %3532 = vset.pattern.permute.xlu0 0
        %3533 = vperm.xlu0 %3532, %v1699
        %v3534 = vpop.permute.xlu0 %3533
        %3537 = vset.pattern.permute.xlu0 0
        %3538 = vperm.xlu0 %3537, %v1700
        %v3539 = vpop.permute.xlu0 %3538
        %3542 = vset.pattern.permute.xlu0 0
        %3543 = vperm.xlu0 %3542, %v1701
        %v3544 = vpop.permute.xlu0 %3543
        %3547 = vset.pattern.permute.xlu0 0
        %3548 = vperm.xlu0 %3547, %v1702
        %v3549 = vpop.permute.xlu0 %3548
        %3552 = vset.pattern.permute.xlu0 0
        %3553 = vperm.xlu0 %3552, %v1703
        %v3554 = vpop.permute.xlu0 %3553
        %3557 = vset.pattern.permute.xlu0 0
        %3558 = vperm.xlu0 %3557, %v1704
        %v3559 = vpop.permute.xlu0 %3558
        %v3561 = vmul.f32 %v2793, %v2924
        %v3562 = vmul.f32 %v2794, %v2929
        %v3563 = vmul.f32 %v2795, %v2934
        %v3564 = vmul.f32 %v2796, %v2939
        %v3565 = vmul.f32 %v2797, %v2944
        %v3566 = vmul.f32 %v2798, %v2949
        %v3567 = vmul.f32 %v2799, %v2954
        %v3568 = vmul.f32 %v2800, %v2959
        %v3569 = vmul.f32 %v2801, %v2964
        %v3570 = vmul.f32 %v2802, %v2969
        %v3571 = vmul.f32 %v2803, %v2974
        %v3572 = vmul.f32 %v2804, %v2979
        %v3573 = vmul.f32 %v2805, %v2984
        %v3574 = vmul.f32 %v2806, %v2989
        %v3575 = vmul.f32 %v2807, %v2994
        %v3576 = vmul.f32 %v2808, %v2999
        %v3577 = vmul.f32 %v2809, %v3004
        %v3578 = vmul.f32 %v2810, %v3009
        %v3579 = vmul.f32 %v2811, %v3014
        %v3580 = vmul.f32 %v2812, %v3019
        %v3581 = vmul.f32 %v2813, %v3024
        %v3582 = vmul.f32 %v2814, %v3029
        %v3583 = vmul.f32 %v2815, %v3034
        %v3584 = vmul.f32 %v2816, %v3039
        %v3585 = vmul.f32 %v2817, %v3044
        %v3586 = vmul.f32 %v2818, %v3049
        %v3587 = vmul.f32 %v2819, %v3054
        %v3588 = vmul.f32 %v2820, %v3059
        %v3589 = vmul.f32 %v2821, %v3064
        %v3590 = vmul.f32 %v2822, %v3069
        %v3591 = vmul.f32 %v2823, %v3074
        %v3592 = vmul.f32 %v2824, %v3079
        %v3593 = vmul.f32 %v2825, %v3084
        %v3594 = vmul.f32 %v2826, %v3089
        %v3595 = vmul.f32 %v2827, %v3094
        %v3596 = vmul.f32 %v2828, %v3099
        %v3597 = vmul.f32 %v2829, %v3104
        %v3598 = vmul.f32 %v2830, %v3109
        %v3599 = vmul.f32 %v2831, %v3114
        %v3600 = vmul.f32 %v2832, %v3119
        %v3601 = vmul.f32 %v2833, %v3124
        %v3602 = vmul.f32 %v2834, %v3129
        %v3603 = vmul.f32 %v2835, %v3134
        %v3604 = vmul.f32 %v2836, %v3139
        %v3605 = vmul.f32 %v2837, %v3144
        %v3606 = vmul.f32 %v2838, %v3149
        %v3607 = vmul.f32 %v2839, %v3154
        %v3608 = vmul.f32 %v2840, %v3159
        %v3609 = vmul.f32 %v2841, %v3164
        %v3610 = vmul.f32 %v2842, %v3169
        %v3611 = vmul.f32 %v2843, %v3174
        %v3612 = vmul.f32 %v2844, %v3179
        %v3613 = vmul.f32 %v2845, %v3184
        %v3614 = vmul.f32 %v2846, %v3189
        %v3615 = vmul.f32 %v2847, %v3194
        %v3616 = vmul.f32 %v2848, %v3199
        %v3617 = vmul.f32 %v2849, %v3204
        %v3618 = vmul.f32 %v2850, %v3209
        %v3619 = vmul.f32 %v2851, %v3214
        %v3620 = vmul.f32 %v2852, %v3219
        %v3621 = vmul.f32 %v2853, %v3224
        %v3622 = vmul.f32 %v2854, %v3229
        %v3623 = vmul.f32 %v2855, %v3234
        %v3624 = vmul.f32 %v2856, %v3239
        %v3625 = vmul.f32 %v2857, %v3244
        %v3626 = vmul.f32 %v2858, %v3249
        %v3627 = vmul.f32 %v2859, %v3254
        %v3628 = vmul.f32 %v2860, %v3259
        %v3629 = vmul.f32 %v2861, %v3264
        %v3630 = vmul.f32 %v2862, %v3269
        %v3631 = vmul.f32 %v2863, %v3274
        %v3632 = vmul.f32 %v2864, %v3279
        %v3633 = vmul.f32 %v2865, %v3284
        %v3634 = vmul.f32 %v2866, %v3289
        %v3635 = vmul.f32 %v2867, %v3294
        %v3636 = vmul.f32 %v2868, %v3299
        %v3637 = vmul.f32 %v2869, %v3304
        %v3638 = vmul.f32 %v2870, %v3309
        %v3639 = vmul.f32 %v2871, %v3314
        %v3640 = vmul.f32 %v2872, %v3319
        %v3641 = vmul.f32 %v2873, %v3324
        %v3642 = vmul.f32 %v2874, %v3329
        %v3643 = vmul.f32 %v2875, %v3334
        %v3644 = vmul.f32 %v2876, %v3339
        %v3645 = vmul.f32 %v2877, %v3344
        %v3646 = vmul.f32 %v2878, %v3349
        %v3647 = vmul.f32 %v2879, %v3354
        %v3648 = vmul.f32 %v2880, %v3359
        %v3649 = vmul.f32 %v2881, %v3364
        %v3650 = vmul.f32 %v2882, %v3369
        %v3651 = vmul.f32 %v2883, %v3374
        %v3652 = vmul.f32 %v2884, %v3379
        %v3653 = vmul.f32 %v2885, %v3384
        %v3654 = vmul.f32 %v2886, %v3389
        %v3655 = vmul.f32 %v2887, %v3394
        %v3656 = vmul.f32 %v2888, %v3399
        %v3657 = vmul.f32 %v2889, %v3404
        %v3658 = vmul.f32 %v2890, %v3409
        %v3659 = vmul.f32 %v2891, %v3414
        %v3660 = vmul.f32 %v2892, %v3419
        %v3661 = vmul.f32 %v2893, %v3424
        %v3662 = vmul.f32 %v2894, %v3429
        %v3663 = vmul.f32 %v2895, %v3434
        %v3664 = vmul.f32 %v2896, %v3439
        %v3665 = vmul.f32 %v2897, %v3444
        %v3666 = vmul.f32 %v2898, %v3449
        %v3667 = vmul.f32 %v2899, %v3454
        %v3668 = vmul.f32 %v2900, %v3459
        %v3669 = vmul.f32 %v2901, %v3464
        %v3670 = vmul.f32 %v2902, %v3469
        %v3671 = vmul.f32 %v2903, %v3474
        %v3672 = vmul.f32 %v2904, %v3479
        %v3673 = vmul.f32 %v2905, %v3484
        %v3674 = vmul.f32 %v2906, %v3489
        %v3675 = vmul.f32 %v2907, %v3494
        %v3676 = vmul.f32 %v2908, %v3499
        %v3677 = vmul.f32 %v2909, %v3504
        %v3678 = vmul.f32 %v2910, %v3509
        %v3679 = vmul.f32 %v2911, %v3514
        %v3680 = vmul.f32 %v2912, %v3519
        %v3681 = vmul.f32 %v2913, %v3524
        %v3682 = vmul.f32 %v2914, %v3529
        %v3683 = vmul.f32 %v2915, %v3534
        %v3684 = vmul.f32 %v2916, %v3539
        %v3685 = vmul.f32 %v2917, %v3544
        %v3686 = vmul.f32 %v2918, %v3549
        %v3687 = vmul.f32 %v2919, %v3554
        %v3688 = vmul.f32 %v2920, %v3559
        %vm3689 = vcmask 261120
        %v3690 = vsel %vm3689, %v3561, -inf
        %v3691 = vsel %vm3689, %v3562, -inf
        %v3692 = vmax.f32 %v3690, %v3691
        %v3693 = vrot.slane %v3692, 4
        %v3694 = vmax.f32 %v3692, %v3693
        %v3695 = vrot.slane %v3694, 2
        %v3696 = vmax.f32 %v3694, %v3695
        %v3697 = vrot.slane %v3696, 1
        %v3698 = vmax.f32 %v3696, %v3697
        %v3699 = vsel %vm3689, %v3563, -inf
        %v3700 = vsel %vm3689, %v3564, -inf
        %v3701 = vmax.f32 %v3699, %v3700
        %v3702 = vrot.slane %v3701, 4
        %v3703 = vmax.f32 %v3701, %v3702
        %v3704 = vrot.slane %v3703, 2
        %v3705 = vmax.f32 %v3703, %v3704
        %v3706 = vrot.slane %v3705, 1
        %v3707 = vmax.f32 %v3705, %v3706
        %v3708 = vsel %vm3689, %v3565, -inf
        %v3709 = vsel %vm3689, %v3566, -inf
        %v3710 = vmax.f32 %v3708, %v3709
        %v3711 = vrot.slane %v3710, 4
        %v3712 = vmax.f32 %v3710, %v3711
        %v3713 = vrot.slane %v3712, 2
        %v3714 = vmax.f32 %v3712, %v3713
        %v3715 = vrot.slane %v3714, 1
        %v3716 = vmax.f32 %v3714, %v3715
        %v3717 = vsel %vm3689, %v3567, -inf
        %v3718 = vsel %vm3689, %v3568, -inf
        %v3719 = vmax.f32 %v3717, %v3718
        %v3720 = vrot.slane %v3719, 4
        %v3721 = vmax.f32 %v3719, %v3720
        %v3722 = vrot.slane %v3721, 2
        %v3723 = vmax.f32 %v3721, %v3722
        %v3724 = vrot.slane %v3723, 1
        %v3725 = vmax.f32 %v3723, %v3724
        %v3726 = vsel %vm3689, %v3569, -inf
        %v3727 = vsel %vm3689, %v3570, -inf
        %v3728 = vmax.f32 %v3726, %v3727
        %v3729 = vrot.slane %v3728, 4
        %v3730 = vmax.f32 %v3728, %v3729
        %v3731 = vrot.slane %v3730, 2
        %v3732 = vmax.f32 %v3730, %v3731
        %v3733 = vrot.slane %v3732, 1
        %v3734 = vmax.f32 %v3732, %v3733
        %v3735 = vsel %vm3689, %v3571, -inf
        %v3736 = vsel %vm3689, %v3572, -inf
        %v3737 = vmax.f32 %v3735, %v3736
        %v3738 = vrot.slane %v3737, 4
        %v3739 = vmax.f32 %v3737, %v3738
        %v3740 = vrot.slane %v3739, 2
        %v3741 = vmax.f32 %v3739, %v3740
        %v3742 = vrot.slane %v3741, 1
        %v3743 = vmax.f32 %v3741, %v3742
        %v3744 = vsel %vm3689, %v3573, -inf
        %v3745 = vsel %vm3689, %v3574, -inf
        %v3746 = vmax.f32 %v3744, %v3745
        %v3747 = vrot.slane %v3746, 4
        %v3748 = vmax.f32 %v3746, %v3747
        %v3749 = vrot.slane %v3748, 2
        %v3750 = vmax.f32 %v3748, %v3749
        %v3751 = vrot.slane %v3750, 1
        %v3752 = vmax.f32 %v3750, %v3751
        %v3753 = vsel %vm3689, %v3575, -inf
        %v3754 = vsel %vm3689, %v3576, -inf
        %v3755 = vmax.f32 %v3753, %v3754
        %v3756 = vrot.slane %v3755, 4
        %v3757 = vmax.f32 %v3755, %v3756
        %v3758 = vrot.slane %v3757, 2
        %v3759 = vmax.f32 %v3757, %v3758
        %v3760 = vrot.slane %v3759, 1
        %v3761 = vmax.f32 %v3759, %v3760
        %v3762 = vsel %vm3689, %v3577, -inf
        %v3763 = vsel %vm3689, %v3578, -inf
        %v3764 = vmax.f32 %v3762, %v3763
        %v3765 = vrot.slane %v3764, 4
        %v3766 = vmax.f32 %v3764, %v3765
        %v3767 = vrot.slane %v3766, 2
        %v3768 = vmax.f32 %v3766, %v3767
        %v3769 = vrot.slane %v3768, 1
        %v3770 = vmax.f32 %v3768, %v3769
        %v3771 = vsel %vm3689, %v3579, -inf
        %v3772 = vsel %vm3689, %v3580, -inf
        %v3773 = vmax.f32 %v3771, %v3772
        %v3774 = vrot.slane %v3773, 4
        %v3775 = vmax.f32 %v3773, %v3774
        %v3776 = vrot.slane %v3775, 2
        %v3777 = vmax.f32 %v3775, %v3776
        %v3778 = vrot.slane %v3777, 1
        %v3779 = vmax.f32 %v3777, %v3778
        %v3780 = vsel %vm3689, %v3581, -inf
        %v3781 = vsel %vm3689, %v3582, -inf
        %v3782 = vmax.f32 %v3780, %v3781
        %v3783 = vrot.slane %v3782, 4
        %v3784 = vmax.f32 %v3782, %v3783
        %v3785 = vrot.slane %v3784, 2
        %v3786 = vmax.f32 %v3784, %v3785
        %v3787 = vrot.slane %v3786, 1
        %v3788 = vmax.f32 %v3786, %v3787
        %v3789 = vsel %vm3689, %v3583, -inf
        %v3790 = vsel %vm3689, %v3584, -inf
        %v3791 = vmax.f32 %v3789, %v3790
        %v3792 = vrot.slane %v3791, 4
        %v3793 = vmax.f32 %v3791, %v3792
        %v3794 = vrot.slane %v3793, 2
        %v3795 = vmax.f32 %v3793, %v3794
        %v3796 = vrot.slane %v3795, 1
        %v3797 = vmax.f32 %v3795, %v3796
        %v3798 = vsel %vm3689, %v3585, -inf
        %v3799 = vsel %vm3689, %v3586, -inf
        %v3800 = vmax.f32 %v3798, %v3799
        %v3801 = vrot.slane %v3800, 4
        %v3802 = vmax.f32 %v3800, %v3801
        %v3803 = vrot.slane %v3802, 2
        %v3804 = vmax.f32 %v3802, %v3803
        %v3805 = vrot.slane %v3804, 1
        %v3806 = vmax.f32 %v3804, %v3805
        %v3807 = vsel %vm3689, %v3587, -inf
        %v3808 = vsel %vm3689, %v3588, -inf
        %v3809 = vmax.f32 %v3807, %v3808
        %v3810 = vrot.slane %v3809, 4
        %v3811 = vmax.f32 %v3809, %v3810
        %v3812 = vrot.slane %v3811, 2
        %v3813 = vmax.f32 %v3811, %v3812
        %v3814 = vrot.slane %v3813, 1
        %v3815 = vmax.f32 %v3813, %v3814
        %v3816 = vsel %vm3689, %v3589, -inf
        %v3817 = vsel %vm3689, %v3590, -inf
        %v3818 = vmax.f32 %v3816, %v3817
        %v3819 = vrot.slane %v3818, 4
        %v3820 = vmax.f32 %v3818, %v3819
        %v3821 = vrot.slane %v3820, 2
        %v3822 = vmax.f32 %v3820, %v3821
        %v3823 = vrot.slane %v3822, 1
        %v3824 = vmax.f32 %v3822, %v3823
        %v3825 = vsel %vm3689, %v3591, -inf
        %v3826 = vsel %vm3689, %v3592, -inf
        %v3827 = vmax.f32 %v3825, %v3826
        %v3828 = vrot.slane %v3827, 4
        %v3829 = vmax.f32 %v3827, %v3828
        %v3830 = vrot.slane %v3829, 2
        %v3831 = vmax.f32 %v3829, %v3830
        %v3832 = vrot.slane %v3831, 1
        %v3833 = vmax.f32 %v3831, %v3832
        %v3834 = vsel %vm3689, %v3593, -inf
        %v3835 = vsel %vm3689, %v3594, -inf
        %v3836 = vmax.f32 %v3834, %v3835
        %v3837 = vrot.slane %v3836, 4
        %v3838 = vmax.f32 %v3836, %v3837
        %v3839 = vrot.slane %v3838, 2
        %v3840 = vmax.f32 %v3838, %v3839
        %v3841 = vrot.slane %v3840, 1
        %v3842 = vmax.f32 %v3840, %v3841
        %v3843 = vsel %vm3689, %v3595, -inf
        %v3844 = vsel %vm3689, %v3596, -inf
        %v3845 = vmax.f32 %v3843, %v3844
        %v3846 = vrot.slane %v3845, 4
        %v3847 = vmax.f32 %v3845, %v3846
        %v3848 = vrot.slane %v3847, 2
        %v3849 = vmax.f32 %v3847, %v3848
        %v3850 = vrot.slane %v3849, 1
        %v3851 = vmax.f32 %v3849, %v3850
        %v3852 = vsel %vm3689, %v3597, -inf
        %v3853 = vsel %vm3689, %v3598, -inf
        %v3854 = vmax.f32 %v3852, %v3853
        %v3855 = vrot.slane %v3854, 4
        %v3856 = vmax.f32 %v3854, %v3855
        %v3857 = vrot.slane %v3856, 2
        %v3858 = vmax.f32 %v3856, %v3857
        %v3859 = vrot.slane %v3858, 1
        %v3860 = vmax.f32 %v3858, %v3859
        %v3861 = vsel %vm3689, %v3599, -inf
        %v3862 = vsel %vm3689, %v3600, -inf
        %v3863 = vmax.f32 %v3861, %v3862
        %v3864 = vrot.slane %v3863, 4
        %v3865 = vmax.f32 %v3863, %v3864
        %v3866 = vrot.slane %v3865, 2
        %v3867 = vmax.f32 %v3865, %v3866
        %v3868 = vrot.slane %v3867, 1
        %v3869 = vmax.f32 %v3867, %v3868
        %v3870 = vsel %vm3689, %v3601, -inf
        %v3871 = vsel %vm3689, %v3602, -inf
        %v3872 = vmax.f32 %v3870, %v3871
        %v3873 = vrot.slane %v3872, 4
        %v3874 = vmax.f32 %v3872, %v3873
        %v3875 = vrot.slane %v3874, 2
        %v3876 = vmax.f32 %v3874, %v3875
        %v3877 = vrot.slane %v3876, 1
        %v3878 = vmax.f32 %v3876, %v3877
        %v3879 = vsel %vm3689, %v3603, -inf
        %v3880 = vsel %vm3689, %v3604, -inf
        %v3881 = vmax.f32 %v3879, %v3880
        %v3882 = vrot.slane %v3881, 4
        %v3883 = vmax.f32 %v3881, %v3882
        %v3884 = vrot.slane %v3883, 2
        %v3885 = vmax.f32 %v3883, %v3884
        %v3886 = vrot.slane %v3885, 1
        %v3887 = vmax.f32 %v3885, %v3886
        %v3888 = vsel %vm3689, %v3605, -inf
        %v3889 = vsel %vm3689, %v3606, -inf
        %v3890 = vmax.f32 %v3888, %v3889
        %v3891 = vrot.slane %v3890, 4
        %v3892 = vmax.f32 %v3890, %v3891
        %v3893 = vrot.slane %v3892, 2
        %v3894 = vmax.f32 %v3892, %v3893
        %v3895 = vrot.slane %v3894, 1
        %v3896 = vmax.f32 %v3894, %v3895
        %v3897 = vsel %vm3689, %v3607, -inf
        %v3898 = vsel %vm3689, %v3608, -inf
        %v3899 = vmax.f32 %v3897, %v3898
        %v3900 = vrot.slane %v3899, 4
        %v3901 = vmax.f32 %v3899, %v3900
        %v3902 = vrot.slane %v3901, 2
        %v3903 = vmax.f32 %v3901, %v3902
        %v3904 = vrot.slane %v3903, 1
        %v3905 = vmax.f32 %v3903, %v3904
        %v3906 = vsel %vm3689, %v3609, -inf
        %v3907 = vsel %vm3689, %v3610, -inf
        %v3908 = vmax.f32 %v3906, %v3907
        %v3909 = vrot.slane %v3908, 4
        %v3910 = vmax.f32 %v3908, %v3909
        %v3911 = vrot.slane %v3910, 2
        %v3912 = vmax.f32 %v3910, %v3911
        %v3913 = vrot.slane %v3912, 1
        %v3914 = vmax.f32 %v3912, %v3913
        %v3915 = vsel %vm3689, %v3611, -inf
        %v3916 = vsel %vm3689, %v3612, -inf
        %v3917 = vmax.f32 %v3915, %v3916
        %v3918 = vrot.slane %v3917, 4
        %v3919 = vmax.f32 %v3917, %v3918
        %v3920 = vrot.slane %v3919, 2
        %v3921 = vmax.f32 %v3919, %v3920
        %v3922 = vrot.slane %v3921, 1
        %v3923 = vmax.f32 %v3921, %v3922
        %v3924 = vsel %vm3689, %v3613, -inf
        %v3925 = vsel %vm3689, %v3614, -inf
        %v3926 = vmax.f32 %v3924, %v3925
        %v3927 = vrot.slane %v3926, 4
        %v3928 = vmax.f32 %v3926, %v3927
        %v3929 = vrot.slane %v3928, 2
        %v3930 = vmax.f32 %v3928, %v3929
        %v3931 = vrot.slane %v3930, 1
        %v3932 = vmax.f32 %v3930, %v3931
        %v3933 = vsel %vm3689, %v3615, -inf
        %v3934 = vsel %vm3689, %v3616, -inf
        %v3935 = vmax.f32 %v3933, %v3934
        %v3936 = vrot.slane %v3935, 4
        %v3937 = vmax.f32 %v3935, %v3936
        %v3938 = vrot.slane %v3937, 2
        %v3939 = vmax.f32 %v3937, %v3938
        %v3940 = vrot.slane %v3939, 1
        %v3941 = vmax.f32 %v3939, %v3940
        %v3942 = vsel %vm3689, %v3617, -inf
        %v3943 = vsel %vm3689, %v3618, -inf
        %v3944 = vmax.f32 %v3942, %v3943
        %v3945 = vrot.slane %v3944, 4
        %v3946 = vmax.f32 %v3944, %v3945
        %v3947 = vrot.slane %v3946, 2
        %v3948 = vmax.f32 %v3946, %v3947
        %v3949 = vrot.slane %v3948, 1
        %v3950 = vmax.f32 %v3948, %v3949
        %v3951 = vsel %vm3689, %v3619, -inf
        %v3952 = vsel %vm3689, %v3620, -inf
        %v3953 = vmax.f32 %v3951, %v3952
        %v3954 = vrot.slane %v3953, 4
        %v3955 = vmax.f32 %v3953, %v3954
        %v3956 = vrot.slane %v3955, 2
        %v3957 = vmax.f32 %v3955, %v3956
        %v3958 = vrot.slane %v3957, 1
        %v3959 = vmax.f32 %v3957, %v3958
        %v3960 = vsel %vm3689, %v3621, -inf
        %v3961 = vsel %vm3689, %v3622, -inf
        %v3962 = vmax.f32 %v3960, %v3961
        %v3963 = vrot.slane %v3962, 4
        %v3964 = vmax.f32 %v3962, %v3963
        %v3965 = vrot.slane %v3964, 2
        %v3966 = vmax.f32 %v3964, %v3965
        %v3967 = vrot.slane %v3966, 1
        %v3968 = vmax.f32 %v3966, %v3967
        %v3969 = vsel %vm3689, %v3623, -inf
        %v3970 = vsel %vm3689, %v3624, -inf
        %v3971 = vmax.f32 %v3969, %v3970
        %v3972 = vrot.slane %v3971, 4
        %v3973 = vmax.f32 %v3971, %v3972
        %v3974 = vrot.slane %v3973, 2
        %v3975 = vmax.f32 %v3973, %v3974
        %v3976 = vrot.slane %v3975, 1
        %v3977 = vmax.f32 %v3975, %v3976
        %v3978 = vsel %vm3689, %v3625, -inf
        %v3979 = vsel %vm3689, %v3626, -inf
        %v3980 = vmax.f32 %v3978, %v3979
        %v3981 = vrot.slane %v3980, 4
        %v3982 = vmax.f32 %v3980, %v3981
        %v3983 = vrot.slane %v3982, 2
        %v3984 = vmax.f32 %v3982, %v3983
        %v3985 = vrot.slane %v3984, 1
        %v3986 = vmax.f32 %v3984, %v3985
        %v3987 = vsel %vm3689, %v3627, -inf
        %v3988 = vsel %vm3689, %v3628, -inf
        %v3989 = vmax.f32 %v3987, %v3988
        %v3990 = vrot.slane %v3989, 4
        %v3991 = vmax.f32 %v3989, %v3990
        %v3992 = vrot.slane %v3991, 2
        %v3993 = vmax.f32 %v3991, %v3992
        %v3994 = vrot.slane %v3993, 1
        %v3995 = vmax.f32 %v3993, %v3994
        %v3996 = vsel %vm3689, %v3629, -inf
        %v3997 = vsel %vm3689, %v3630, -inf
        %v3998 = vmax.f32 %v3996, %v3997
        %v3999 = vrot.slane %v3998, 4
        %v4000 = vmax.f32 %v3998, %v3999
        %v4001 = vrot.slane %v4000, 2
        %v4002 = vmax.f32 %v4000, %v4001
        %v4003 = vrot.slane %v4002, 1
        %v4004 = vmax.f32 %v4002, %v4003
        %v4005 = vsel %vm3689, %v3631, -inf
        %v4006 = vsel %vm3689, %v3632, -inf
        %v4007 = vmax.f32 %v4005, %v4006
        %v4008 = vrot.slane %v4007, 4
        %v4009 = vmax.f32 %v4007, %v4008
        %v4010 = vrot.slane %v4009, 2
        %v4011 = vmax.f32 %v4009, %v4010
        %v4012 = vrot.slane %v4011, 1
        %v4013 = vmax.f32 %v4011, %v4012
        %v4014 = vsel %vm3689, %v3633, -inf
        %v4015 = vsel %vm3689, %v3634, -inf
        %v4016 = vmax.f32 %v4014, %v4015
        %v4017 = vrot.slane %v4016, 4
        %v4018 = vmax.f32 %v4016, %v4017
        %v4019 = vrot.slane %v4018, 2
        %v4020 = vmax.f32 %v4018, %v4019
        %v4021 = vrot.slane %v4020, 1
        %v4022 = vmax.f32 %v4020, %v4021
        %v4023 = vsel %vm3689, %v3635, -inf
        %v4024 = vsel %vm3689, %v3636, -inf
        %v4025 = vmax.f32 %v4023, %v4024
        %v4026 = vrot.slane %v4025, 4
        %v4027 = vmax.f32 %v4025, %v4026
        %v4028 = vrot.slane %v4027, 2
        %v4029 = vmax.f32 %v4027, %v4028
        %v4030 = vrot.slane %v4029, 1
        %v4031 = vmax.f32 %v4029, %v4030
        %v4032 = vsel %vm3689, %v3637, -inf
        %v4033 = vsel %vm3689, %v3638, -inf
        %v4034 = vmax.f32 %v4032, %v4033
        %v4035 = vrot.slane %v4034, 4
        %v4036 = vmax.f32 %v4034, %v4035
        %v4037 = vrot.slane %v4036, 2
        %v4038 = vmax.f32 %v4036, %v4037
        %v4039 = vrot.slane %v4038, 1
        %v4040 = vmax.f32 %v4038, %v4039
        %v4041 = vsel %vm3689, %v3639, -inf
        %v4042 = vsel %vm3689, %v3640, -inf
        %v4043 = vmax.f32 %v4041, %v4042
        %v4044 = vrot.slane %v4043, 4
        %v4045 = vmax.f32 %v4043, %v4044
        %v4046 = vrot.slane %v4045, 2
        %v4047 = vmax.f32 %v4045, %v4046
        %v4048 = vrot.slane %v4047, 1
        %v4049 = vmax.f32 %v4047, %v4048
        %v4050 = vsel %vm3689, %v3641, -inf
        %v4051 = vsel %vm3689, %v3642, -inf
        %v4052 = vmax.f32 %v4050, %v4051
        %v4053 = vrot.slane %v4052, 4
        %v4054 = vmax.f32 %v4052, %v4053
        %v4055 = vrot.slane %v4054, 2
        %v4056 = vmax.f32 %v4054, %v4055
        %v4057 = vrot.slane %v4056, 1
        %v4058 = vmax.f32 %v4056, %v4057
        %v4059 = vsel %vm3689, %v3643, -inf
        %v4060 = vsel %vm3689, %v3644, -inf
        %v4061 = vmax.f32 %v4059, %v4060
        %v4062 = vrot.slane %v4061, 4
        %v4063 = vmax.f32 %v4061, %v4062
        %v4064 = vrot.slane %v4063, 2
        %v4065 = vmax.f32 %v4063, %v4064
        %v4066 = vrot.slane %v4065, 1
        %v4067 = vmax.f32 %v4065, %v4066
        %v4068 = vsel %vm3689, %v3645, -inf
        %v4069 = vsel %vm3689, %v3646, -inf
        %v4070 = vmax.f32 %v4068, %v4069
        %v4071 = vrot.slane %v4070, 4
        %v4072 = vmax.f32 %v4070, %v4071
        %v4073 = vrot.slane %v4072, 2
        %v4074 = vmax.f32 %v4072, %v4073
        %v4075 = vrot.slane %v4074, 1
        %v4076 = vmax.f32 %v4074, %v4075
        %v4077 = vsel %vm3689, %v3647, -inf
        %v4078 = vsel %vm3689, %v3648, -inf
        %v4079 = vmax.f32 %v4077, %v4078
        %v4080 = vrot.slane %v4079, 4
        %v4081 = vmax.f32 %v4079, %v4080
        %v4082 = vrot.slane %v4081, 2
        %v4083 = vmax.f32 %v4081, %v4082
        %v4084 = vrot.slane %v4083, 1
        %v4085 = vmax.f32 %v4083, %v4084
        %v4086 = vsel %vm3689, %v3649, -inf
        %v4087 = vsel %vm3689, %v3650, -inf
        %v4088 = vmax.f32 %v4086, %v4087
        %v4089 = vrot.slane %v4088, 4
        %v4090 = vmax.f32 %v4088, %v4089
        %v4091 = vrot.slane %v4090, 2
        %v4092 = vmax.f32 %v4090, %v4091
        %v4093 = vrot.slane %v4092, 1
        %v4094 = vmax.f32 %v4092, %v4093
        %v4095 = vsel %vm3689, %v3651, -inf
        %v4096 = vsel %vm3689, %v3652, -inf
        %v4097 = vmax.f32 %v4095, %v4096
        %v4098 = vrot.slane %v4097, 4
        %v4099 = vmax.f32 %v4097, %v4098
        %v4100 = vrot.slane %v4099, 2
        %v4101 = vmax.f32 %v4099, %v4100
        %v4102 = vrot.slane %v4101, 1
        %v4103 = vmax.f32 %v4101, %v4102
        %v4104 = vsel %vm3689, %v3653, -inf
        %v4105 = vsel %vm3689, %v3654, -inf
        %v4106 = vmax.f32 %v4104, %v4105
        %v4107 = vrot.slane %v4106, 4
        %v4108 = vmax.f32 %v4106, %v4107
        %v4109 = vrot.slane %v4108, 2
        %v4110 = vmax.f32 %v4108, %v4109
        %v4111 = vrot.slane %v4110, 1
        %v4112 = vmax.f32 %v4110, %v4111
        %v4113 = vsel %vm3689, %v3655, -inf
        %v4114 = vsel %vm3689, %v3656, -inf
        %v4115 = vmax.f32 %v4113, %v4114
        %v4116 = vrot.slane %v4115, 4
        %v4117 = vmax.f32 %v4115, %v4116
        %v4118 = vrot.slane %v4117, 2
        %v4119 = vmax.f32 %v4117, %v4118
        %v4120 = vrot.slane %v4119, 1
        %v4121 = vmax.f32 %v4119, %v4120
        %v4122 = vsel %vm3689, %v3657, -inf
        %v4123 = vsel %vm3689, %v3658, -inf
        %v4124 = vmax.f32 %v4122, %v4123
        %v4125 = vrot.slane %v4124, 4
        %v4126 = vmax.f32 %v4124, %v4125
        %v4127 = vrot.slane %v4126, 2
        %v4128 = vmax.f32 %v4126, %v4127
        %v4129 = vrot.slane %v4128, 1
        %v4130 = vmax.f32 %v4128, %v4129
        %v4131 = vsel %vm3689, %v3659, -inf
        %v4132 = vsel %vm3689, %v3660, -inf
        %v4133 = vmax.f32 %v4131, %v4132
        %v4134 = vrot.slane %v4133, 4
        %v4135 = vmax.f32 %v4133, %v4134
        %v4136 = vrot.slane %v4135, 2
        %v4137 = vmax.f32 %v4135, %v4136
        %v4138 = vrot.slane %v4137, 1
        %v4139 = vmax.f32 %v4137, %v4138
        %v4140 = vsel %vm3689, %v3661, -inf
        %v4141 = vsel %vm3689, %v3662, -inf
        %v4142 = vmax.f32 %v4140, %v4141
        %v4143 = vrot.slane %v4142, 4
        %v4144 = vmax.f32 %v4142, %v4143
        %v4145 = vrot.slane %v4144, 2
        %v4146 = vmax.f32 %v4144, %v4145
        %v4147 = vrot.slane %v4146, 1
        %v4148 = vmax.f32 %v4146, %v4147
        %v4149 = vsel %vm3689, %v3663, -inf
        %v4150 = vsel %vm3689, %v3664, -inf
        %v4151 = vmax.f32 %v4149, %v4150
        %v4152 = vrot.slane %v4151, 4
        %v4153 = vmax.f32 %v4151, %v4152
        %v4154 = vrot.slane %v4153, 2
        %v4155 = vmax.f32 %v4153, %v4154
        %v4156 = vrot.slane %v4155, 1
        %v4157 = vmax.f32 %v4155, %v4156
        %v4158 = vsel %vm3689, %v3665, -inf
        %v4159 = vsel %vm3689, %v3666, -inf
        %v4160 = vmax.f32 %v4158, %v4159
        %v4161 = vrot.slane %v4160, 4
        %v4162 = vmax.f32 %v4160, %v4161
        %v4163 = vrot.slane %v4162, 2
        %v4164 = vmax.f32 %v4162, %v4163
        %v4165 = vrot.slane %v4164, 1
        %v4166 = vmax.f32 %v4164, %v4165
        %v4167 = vsel %vm3689, %v3667, -inf
        %v4168 = vsel %vm3689, %v3668, -inf
        %v4169 = vmax.f32 %v4167, %v4168
        %v4170 = vrot.slane %v4169, 4
        %v4171 = vmax.f32 %v4169, %v4170
        %v4172 = vrot.slane %v4171, 2
        %v4173 = vmax.f32 %v4171, %v4172
        %v4174 = vrot.slane %v4173, 1
        %v4175 = vmax.f32 %v4173, %v4174
        %v4176 = vsel %vm3689, %v3669, -inf
        %v4177 = vsel %vm3689, %v3670, -inf
        %v4178 = vmax.f32 %v4176, %v4177
        %v4179 = vrot.slane %v4178, 4
        %v4180 = vmax.f32 %v4178, %v4179
        %v4181 = vrot.slane %v4180, 2
        %v4182 = vmax.f32 %v4180, %v4181
        %v4183 = vrot.slane %v4182, 1
        %v4184 = vmax.f32 %v4182, %v4183
        %v4185 = vsel %vm3689, %v3671, -inf
        %v4186 = vsel %vm3689, %v3672, -inf
        %v4187 = vmax.f32 %v4185, %v4186
        %v4188 = vrot.slane %v4187, 4
        %v4189 = vmax.f32 %v4187, %v4188
        %v4190 = vrot.slane %v4189, 2
        %v4191 = vmax.f32 %v4189, %v4190
        %v4192 = vrot.slane %v4191, 1
        %v4193 = vmax.f32 %v4191, %v4192
        %v4194 = vsel %vm3689, %v3673, -inf
        %v4195 = vsel %vm3689, %v3674, -inf
        %v4196 = vmax.f32 %v4194, %v4195
        %v4197 = vrot.slane %v4196, 4
        %v4198 = vmax.f32 %v4196, %v4197
        %v4199 = vrot.slane %v4198, 2
        %v4200 = vmax.f32 %v4198, %v4199
        %v4201 = vrot.slane %v4200, 1
        %v4202 = vmax.f32 %v4200, %v4201
        %v4203 = vsel %vm3689, %v3675, -inf
        %v4204 = vsel %vm3689, %v3676, -inf
        %v4205 = vmax.f32 %v4203, %v4204
        %v4206 = vrot.slane %v4205, 4
        %v4207 = vmax.f32 %v4205, %v4206
        %v4208 = vrot.slane %v4207, 2
        %v4209 = vmax.f32 %v4207, %v4208
        %v4210 = vrot.slane %v4209, 1
        %v4211 = vmax.f32 %v4209, %v4210
        %v4212 = vsel %vm3689, %v3677, -inf
        %v4213 = vsel %vm3689, %v3678, -inf
        %v4214 = vmax.f32 %v4212, %v4213
        %v4215 = vrot.slane %v4214, 4
        %v4216 = vmax.f32 %v4214, %v4215
        %v4217 = vrot.slane %v4216, 2
        %v4218 = vmax.f32 %v4216, %v4217
        %v4219 = vrot.slane %v4218, 1
        %v4220 = vmax.f32 %v4218, %v4219
        %v4221 = vsel %vm3689, %v3679, -inf
        %v4222 = vsel %vm3689, %v3680, -inf
        %v4223 = vmax.f32 %v4221, %v4222
        %v4224 = vrot.slane %v4223, 4
        %v4225 = vmax.f32 %v4223, %v4224
        %v4226 = vrot.slane %v4225, 2
        %v4227 = vmax.f32 %v4225, %v4226
        %v4228 = vrot.slane %v4227, 1
        %v4229 = vmax.f32 %v4227, %v4228
        %v4230 = vsel %vm3689, %v3681, -inf
        %v4231 = vsel %vm3689, %v3682, -inf
        %v4232 = vmax.f32 %v4230, %v4231
        %v4233 = vrot.slane %v4232, 4
        %v4234 = vmax.f32 %v4232, %v4233
        %v4235 = vrot.slane %v4234, 2
        %v4236 = vmax.f32 %v4234, %v4235
        %v4237 = vrot.slane %v4236, 1
        %v4238 = vmax.f32 %v4236, %v4237
        %v4239 = vsel %vm3689, %v3683, -inf
        %v4240 = vsel %vm3689, %v3684, -inf
        %v4241 = vmax.f32 %v4239, %v4240
        %v4242 = vrot.slane %v4241, 4
        %v4243 = vmax.f32 %v4241, %v4242
        %v4244 = vrot.slane %v4243, 2
        %v4245 = vmax.f32 %v4243, %v4244
        %v4246 = vrot.slane %v4245, 1
        %v4247 = vmax.f32 %v4245, %v4246
        %v4248 = vsel %vm3689, %v3685, -inf
        %v4249 = vsel %vm3689, %v3686, -inf
        %v4250 = vmax.f32 %v4248, %v4249
        %v4251 = vrot.slane %v4250, 4
        %v4252 = vmax.f32 %v4250, %v4251
        %v4253 = vrot.slane %v4252, 2
        %v4254 = vmax.f32 %v4252, %v4253
        %v4255 = vrot.slane %v4254, 1
        %v4256 = vmax.f32 %v4254, %v4255
        %v4257 = vsel %vm3689, %v3687, -inf
        %v4258 = vsel %vm3689, %v3688, -inf
        %v4259 = vmax.f32 %v4257, %v4258
        %v4260 = vrot.slane %v4259, 4
        %v4261 = vmax.f32 %v4259, %v4260
        %v4262 = vrot.slane %v4261, 2
        %v4263 = vmax.f32 %v4261, %v4262
        %v4264 = vrot.slane %v4263, 1
        %v4265 = vmax.f32 %v4263, %v4264
        %v4266 = vpack.c.bf16 %v3562, %v3561
        %v4267 = vpack.c.bf16 %v3564, %v3563
        %v4268 = vpack.c.bf16 %v3566, %v3565
        %v4269 = vpack.c.bf16 %v3568, %v3567
        %v4270 = vpack.c.bf16 %v3570, %v3569
        %v4271 = vpack.c.bf16 %v3572, %v3571
        %v4272 = vpack.c.bf16 %v3574, %v3573
        %v4273 = vpack.c.bf16 %v3576, %v3575
        %v4274 = vpack.c.bf16 %v3578, %v3577
        %v4275 = vpack.c.bf16 %v3580, %v3579
        %v4276 = vpack.c.bf16 %v3582, %v3581
        %v4277 = vpack.c.bf16 %v3584, %v3583
        %v4278 = vpack.c.bf16 %v3586, %v3585
        %v4279 = vpack.c.bf16 %v3588, %v3587
        %v4280 = vpack.c.bf16 %v3590, %v3589
        %v4281 = vpack.c.bf16 %v3592, %v3591
        %v4282 = vpack.c.bf16 %v3594, %v3593
        %v4283 = vpack.c.bf16 %v3596, %v3595
        %v4284 = vpack.c.bf16 %v3598, %v3597
        %v4285 = vpack.c.bf16 %v3600, %v3599
        %v4286 = vpack.c.bf16 %v3602, %v3601
        %v4287 = vpack.c.bf16 %v3604, %v3603
        %v4288 = vpack.c.bf16 %v3606, %v3605
        %v4289 = vpack.c.bf16 %v3608, %v3607
        %v4290 = vpack.c.bf16 %v3610, %v3609
        %v4291 = vpack.c.bf16 %v3612, %v3611
        %v4292 = vpack.c.bf16 %v3614, %v3613
        %v4293 = vpack.c.bf16 %v3616, %v3615
        %v4294 = vpack.c.bf16 %v3618, %v3617
        %v4295 = vpack.c.bf16 %v3620, %v3619
        %v4296 = vpack.c.bf16 %v3622, %v3621
        %v4297 = vpack.c.bf16 %v3624, %v3623
        %v4298 = vpack.c.bf16 %v3626, %v3625
        %v4299 = vpack.c.bf16 %v3628, %v3627
        %v4300 = vpack.c.bf16 %v3630, %v3629
        %v4301 = vpack.c.bf16 %v3632, %v3631
        %v4302 = vpack.c.bf16 %v3634, %v3633
        %v4303 = vpack.c.bf16 %v3636, %v3635
        %v4304 = vpack.c.bf16 %v3638, %v3637
        %v4305 = vpack.c.bf16 %v3640, %v3639
        %v4306 = vpack.c.bf16 %v3642, %v3641
        %v4307 = vpack.c.bf16 %v3644, %v3643
        %v4308 = vpack.c.bf16 %v3646, %v3645
        %v4309 = vpack.c.bf16 %v3648, %v3647
        %v4310 = vpack.c.bf16 %v3650, %v3649
        %v4311 = vpack.c.bf16 %v3652, %v3651
        %v4312 = vpack.c.bf16 %v3654, %v3653
        %v4313 = vpack.c.bf16 %v3656, %v3655
        %v4314 = vpack.c.bf16 %v3658, %v3657
        %v4315 = vpack.c.bf16 %v3660, %v3659
        %v4316 = vpack.c.bf16 %v3662, %v3661
        %v4317 = vpack.c.bf16 %v3664, %v3663
        %v4318 = vpack.c.bf16 %v3666, %v3665
        %v4319 = vpack.c.bf16 %v3668, %v3667
        %v4320 = vpack.c.bf16 %v3670, %v3669
        %v4321 = vpack.c.bf16 %v3672, %v3671
        %v4322 = vpack.c.bf16 %v3674, %v3673
        %v4323 = vpack.c.bf16 %v3676, %v3675
        %v4324 = vpack.c.bf16 %v3678, %v3677
        %v4325 = vpack.c.bf16 %v3680, %v3679
        %v4326 = vpack.c.bf16 %v3682, %v3681
        %v4327 = vpack.c.bf16 %v3684, %v3683
        %v4328 = vpack.c.bf16 %v3686, %v3685
        %v4329 = vpack.c.bf16 %v3688, %v3687
        %v4330 = vpack.c.bf16 %v3698, %v3698
        %v4331 = vpack.c.bf16 %v3707, %v3707
        %v4332 = vpack.c.bf16 %v3716, %v3716
        %v4333 = vpack.c.bf16 %v3725, %v3725
        %v4334 = vpack.c.bf16 %v3734, %v3734
        %v4335 = vpack.c.bf16 %v3743, %v3743
        %v4336 = vpack.c.bf16 %v3752, %v3752
        %v4337 = vpack.c.bf16 %v3761, %v3761
        %v4338 = vpack.c.bf16 %v3770, %v3770
        %v4339 = vpack.c.bf16 %v3779, %v3779
        %v4340 = vpack.c.bf16 %v3788, %v3788
        %v4341 = vpack.c.bf16 %v3797, %v3797
        %v4342 = vpack.c.bf16 %v3806, %v3806
        %v4343 = vpack.c.bf16 %v3815, %v3815
        %v4344 = vpack.c.bf16 %v3824, %v3824
        %v4345 = vpack.c.bf16 %v3833, %v3833
        %v4346 = vpack.c.bf16 %v3842, %v3842
        %v4347 = vpack.c.bf16 %v3851, %v3851
        %v4348 = vpack.c.bf16 %v3860, %v3860
        %v4349 = vpack.c.bf16 %v3869, %v3869
        %v4350 = vpack.c.bf16 %v3878, %v3878
        %v4351 = vpack.c.bf16 %v3887, %v3887
        %v4352 = vpack.c.bf16 %v3896, %v3896
        %v4353 = vpack.c.bf16 %v3905, %v3905
        %v4354 = vpack.c.bf16 %v3914, %v3914
        %v4355 = vpack.c.bf16 %v3923, %v3923
        %v4356 = vpack.c.bf16 %v3932, %v3932
        %v4357 = vpack.c.bf16 %v3941, %v3941
        %v4358 = vpack.c.bf16 %v3950, %v3950
        %v4359 = vpack.c.bf16 %v3959, %v3959
        %v4360 = vpack.c.bf16 %v3968, %v3968
        %v4361 = vpack.c.bf16 %v3977, %v3977
        %v4362 = vpack.c.bf16 %v3986, %v3986
        %v4363 = vpack.c.bf16 %v3995, %v3995
        %v4364 = vpack.c.bf16 %v4004, %v4004
        %v4365 = vpack.c.bf16 %v4013, %v4013
        %v4366 = vpack.c.bf16 %v4022, %v4022
        %v4367 = vpack.c.bf16 %v4031, %v4031
        %v4368 = vpack.c.bf16 %v4040, %v4040
        %v4369 = vpack.c.bf16 %v4049, %v4049
        %v4370 = vpack.c.bf16 %v4058, %v4058
        %v4371 = vpack.c.bf16 %v4067, %v4067
        %v4372 = vpack.c.bf16 %v4076, %v4076
        %v4373 = vpack.c.bf16 %v4085, %v4085
        %v4374 = vpack.c.bf16 %v4094, %v4094
        %v4375 = vpack.c.bf16 %v4103, %v4103
        %v4376 = vpack.c.bf16 %v4112, %v4112
        %v4377 = vpack.c.bf16 %v4121, %v4121
        %v4378 = vpack.c.bf16 %v4130, %v4130
        %v4379 = vpack.c.bf16 %v4139, %v4139
        %v4380 = vpack.c.bf16 %v4148, %v4148
        %v4381 = vpack.c.bf16 %v4157, %v4157
        %v4382 = vpack.c.bf16 %v4166, %v4166
        %v4383 = vpack.c.bf16 %v4175, %v4175
        %v4384 = vpack.c.bf16 %v4184, %v4184
        %v4385 = vpack.c.bf16 %v4193, %v4193
        %v4386 = vpack.c.bf16 %v4202, %v4202
        %v4387 = vpack.c.bf16 %v4211, %v4211
        %v4388 = vpack.c.bf16 %v4220, %v4220
        %v4389 = vpack.c.bf16 %v4229, %v4229
        %v4390 = vpack.c.bf16 %v4238, %v4238
        %v4391 = vpack.c.bf16 %v4247, %v4247
        %v4392 = vpack.c.bf16 %v4256, %v4256
        %v4393 = vpack.c.bf16 %v4265, %v4265
        %v4458 = vunpack.c.l.b16 %v4330
        %v4459 = vunpack.c.l.b16 %v4331
        %v4460 = vunpack.c.l.b16 %v4332
        %v4461 = vunpack.c.l.b16 %v4333
        %v4462 = vunpack.c.l.b16 %v4334
        %v4463 = vunpack.c.l.b16 %v4335
        %v4464 = vunpack.c.l.b16 %v4336
        %v4465 = vunpack.c.l.b16 %v4337
        %v4466 = vunpack.c.l.b16 %v4338
        %v4467 = vunpack.c.l.b16 %v4339
        %v4468 = vunpack.c.l.b16 %v4340
        %v4469 = vunpack.c.l.b16 %v4341
        %v4470 = vunpack.c.l.b16 %v4342
        %v4471 = vunpack.c.l.b16 %v4343
        %v4472 = vunpack.c.l.b16 %v4344
        %v4473 = vunpack.c.l.b16 %v4345
        %v4474 = vunpack.c.l.b16 %v4346
        %v4475 = vunpack.c.l.b16 %v4347
        %v4476 = vunpack.c.l.b16 %v4348
        %v4477 = vunpack.c.l.b16 %v4349
        %v4478 = vunpack.c.l.b16 %v4350
        %v4479 = vunpack.c.l.b16 %v4351
        %v4480 = vunpack.c.l.b16 %v4352
        %v4481 = vunpack.c.l.b16 %v4353
        %v4482 = vunpack.c.l.b16 %v4354
        %v4483 = vunpack.c.l.b16 %v4355
        %v4484 = vunpack.c.l.b16 %v4356
        %v4485 = vunpack.c.l.b16 %v4357
        %v4486 = vunpack.c.l.b16 %v4358
        %v4487 = vunpack.c.l.b16 %v4359
        %v4488 = vunpack.c.l.b16 %v4360
        %v4489 = vunpack.c.l.b16 %v4361
        %v4490 = vunpack.c.l.b16 %v4362
        %v4491 = vunpack.c.l.b16 %v4363
        %v4492 = vunpack.c.l.b16 %v4364
        %v4493 = vunpack.c.l.b16 %v4365
        %v4494 = vunpack.c.l.b16 %v4366
        %v4495 = vunpack.c.l.b16 %v4367
        %v4496 = vunpack.c.l.b16 %v4368
        %v4497 = vunpack.c.l.b16 %v4369
        %v4498 = vunpack.c.l.b16 %v4370
        %v4499 = vunpack.c.l.b16 %v4371
        %v4500 = vunpack.c.l.b16 %v4372
        %v4501 = vunpack.c.l.b16 %v4373
        %v4502 = vunpack.c.l.b16 %v4374
        %v4503 = vunpack.c.l.b16 %v4375
        %v4504 = vunpack.c.l.b16 %v4376
        %v4505 = vunpack.c.l.b16 %v4377
        %v4506 = vunpack.c.l.b16 %v4378
        %v4507 = vunpack.c.l.b16 %v4379
        %v4508 = vunpack.c.l.b16 %v4380
        %v4509 = vunpack.c.l.b16 %v4381
        %v4510 = vunpack.c.l.b16 %v4382
        %v4511 = vunpack.c.l.b16 %v4383
        %v4512 = vunpack.c.l.b16 %v4384
        %v4513 = vunpack.c.l.b16 %v4385
        %v4514 = vunpack.c.l.b16 %v4386
        %v4515 = vunpack.c.l.b16 %v4387
        %v4516 = vunpack.c.l.b16 %v4388
        %v4517 = vunpack.c.l.b16 %v4389
        %v4518 = vunpack.c.l.b16 %v4390
        %v4519 = vunpack.c.l.b16 %v4391
        %v4520 = vunpack.c.l.b16 %v4392
        %v4521 = vunpack.c.l.b16 %v4393
        %vm4522 = vcmask 1041409
        %v4523 = vsel %vm4522, %v4459, %v4458
        %vm4524 = vcmask 1042434
        %v4525 = vsel %vm4524, %v4460, %v4523
        %vm4526 = vcmask 1043459
        %v4527 = vsel %vm4526, %v4461, %v4525
        %vm4528 = vcmask 1044484
        %v4529 = vsel %vm4528, %v4462, %v4527
        %vm4530 = vcmask 1045509
        %v4531 = vsel %vm4530, %v4463, %v4529
        %vm4532 = vcmask 1046534
        %v4533 = vsel %vm4532, %v4464, %v4531
        %vm4534 = vcmask 1047559
        %v4535 = vsel %vm4534, %v4465, %v4533
        %v4536 = vsel %vm4522, %v4467, %v4466
        %v4537 = vsel %vm4524, %v4468, %v4536
        %v4538 = vsel %vm4526, %v4469, %v4537
        %v4539 = vsel %vm4528, %v4470, %v4538
        %v4540 = vsel %vm4530, %v4471, %v4539
        %v4541 = vsel %vm4532, %v4472, %v4540
        %v4542 = vsel %vm4534, %v4473, %v4541
        %v4543 = vsel %vm4522, %v4475, %v4474
        %v4544 = vsel %vm4524, %v4476, %v4543
        %v4545 = vsel %vm4526, %v4477, %v4544
        %v4546 = vsel %vm4528, %v4478, %v4545
        %v4547 = vsel %vm4530, %v4479, %v4546
        %v4548 = vsel %vm4532, %v4480, %v4547
        %v4549 = vsel %vm4534, %v4481, %v4548
        %v4550 = vsel %vm4522, %v4483, %v4482
        %v4551 = vsel %vm4524, %v4484, %v4550
        %v4552 = vsel %vm4526, %v4485, %v4551
        %v4553 = vsel %vm4528, %v4486, %v4552
        %v4554 = vsel %vm4530, %v4487, %v4553
        %v4555 = vsel %vm4532, %v4488, %v4554
        %v4556 = vsel %vm4534, %v4489, %v4555
        %v4557 = vsel %vm4522, %v4491, %v4490
        %v4558 = vsel %vm4524, %v4492, %v4557
        %v4559 = vsel %vm4526, %v4493, %v4558
        %v4560 = vsel %vm4528, %v4494, %v4559
        %v4561 = vsel %vm4530, %v4495, %v4560
        %v4562 = vsel %vm4532, %v4496, %v4561
        %v4563 = vsel %vm4534, %v4497, %v4562
        %v4564 = vsel %vm4522, %v4499, %v4498
        %v4565 = vsel %vm4524, %v4500, %v4564
        %v4566 = vsel %vm4526, %v4501, %v4565
        %v4567 = vsel %vm4528, %v4502, %v4566
        %v4568 = vsel %vm4530, %v4503, %v4567
        %v4569 = vsel %vm4532, %v4504, %v4568
        %v4570 = vsel %vm4534, %v4505, %v4569
        %v4571 = vsel %vm4522, %v4507, %v4506
        %v4572 = vsel %vm4524, %v4508, %v4571
        %v4573 = vsel %vm4526, %v4509, %v4572
        %v4574 = vsel %vm4528, %v4510, %v4573
        %v4575 = vsel %vm4530, %v4511, %v4574
        %v4576 = vsel %vm4532, %v4512, %v4575
        %v4577 = vsel %vm4534, %v4513, %v4576
        %v4578 = vsel %vm4522, %v4515, %v4514
        %v4579 = vsel %vm4524, %v4516, %v4578
        %v4580 = vsel %vm4526, %v4517, %v4579
        %v4581 = vsel %vm4528, %v4518, %v4580
        %v4582 = vsel %vm4530, %v4519, %v4581
        %v4583 = vsel %vm4532, %v4520, %v4582
        %v4584 = vsel %vm4534, %v4521, %v4583
        %v4585 = vpack.c.b16 %v4542, %v4535
        %v4586 = vpack.c.b16 %v4556, %v4549
        %v4587 = vpack.c.b16 %v4570, %v4563
        %v4588 = vpack.c.b16 %v4584, %v4577
        %v4593 = vunpack.c.l.b16 %v1717
        %v4594 = vunpack.c.l.b16 %v1718
        %v4595 = vunpack.c.l.b16 %v1719
        %v4596 = vunpack.c.l.b16 %v1720
        %v4597 = vpack.c.b16 %v4594, %v4593
        %v4598 = vpack.c.b16 %v4596, %v4595
        %v4602 = vsel %vm3689, %v4585, 0
        %v4605 = vsel %vm3689, %v4586, 0
        %v4608 = vsel %vm3689, %v4587, 0
        %v4611 = vsel %vm3689, %v4588, 0
        %4613 = vmatprep.subr.bf16.mxu0 0
        %4614 = vmatpush1.bf16.msra.mxu0 %v4597
        %4615 = vmatprep.subr.bf16.mxu0 0
        %4616 = vmatpush1.bf16.msra.mxu0 %v4598
        %4617 = vmatprep.subr.bf16.mxu0 0
        %4618 = vmatpush1.bf16.msra.mxu0 0
        %4619 = vmatprep.subr.bf16.mxu0 0
        %4620 = vmatpush1.bf16.msra.mxu0 0
        %4621 = vmatprep.subr.bf16.mxu0 0
        %4622 = vmatpush1.bf16.msra.mxu0 0
        %4623 = vmatprep.subr.bf16.mxu0 0
        %4624 = vmatpush1.bf16.msra.mxu0 0
        %4625 = vmatprep.subr.bf16.mxu0 0
        %4626 = vmatpush1.bf16.msra.mxu0 0
        %4627 = vmatprep.subr.bf16.mxu0 0
        %4628 = vmatpush1.bf16.msra.mxu0 0
        %4629 = vmatprep.subr.bf16.mxu0 0
        %4630 = vmatpush1.bf16.msra.mxu0 0
        %4631 = vmatprep.subr.bf16.mxu0 0
        %4632 = vmatpush1.bf16.msra.mxu0 0
        %4633 = vmatprep.subr.bf16.mxu0 0
        %4634 = vmatpush1.bf16.msra.mxu0 0
        %4635 = vmatprep.subr.bf16.mxu0 0
        %4636 = vmatpush1.bf16.msra.mxu0 0
        %4637 = vmatprep.subr.bf16.mxu0 0
        %4638 = vmatpush1.bf16.msra.mxu0 0
        %4639 = vmatprep.subr.bf16.mxu0 0
        %4640 = vmatpush1.bf16.msra.mxu0 0
        %4641 = vmatprep.subr.bf16.mxu0 0
        %4642 = vmatpush1.bf16.msra.mxu0 0
        %4643 = vmatprep.subr.bf16.mxu0 0
        %4644 = vmatpush1.bf16.msra.mxu0 0
        %4645 = vmatprep.mubr.bf16.mxu0 0
        %4646 = vmatmul.mubr.bf16.gmra.mrb[0].mxu0 %v4602
        %v4647 = vpop.f32.mrb[0].mxu0
        %v4648 = vadd.f32 0.0, %v4647
        %v4649 = vpop.f32.mrb[0].mxu0
        %v4650 = vpop.f32.mrb[0].mxu0
        %v4651 = vadd.f32 0.0, %v4650
        %v4652 = vpop.f32.mrb[0].mxu0
        %4653 = vmatprep.mubr.bf16.mxu0 0
        %4654 = vmatmul.mubr.bf16.gmra.mrb[0].mxu0 %v4605
        %v4655 = vpop.f32.mrb[0].mxu0
        %v4656 = vadd.f32 0.0, %v4655
        %v4657 = vpop.f32.mrb[0].mxu0
        %v4658 = vpop.f32.mrb[0].mxu0
        %v4659 = vadd.f32 0.0, %v4658
        %v4660 = vpop.f32.mrb[0].mxu0
        %4661 = vmatprep.mubr.bf16.mxu0 0
        %4662 = vmatmul.mubr.bf16.gmra.mrb[0].mxu0 %v4608
        %v4663 = vpop.f32.mrb[0].mxu0
        %v4664 = vadd.f32 0.0, %v4663
        %v4665 = vpop.f32.mrb[0].mxu0
        %v4666 = vpop.f32.mrb[0].mxu0
        %v4667 = vadd.f32 0.0, %v4666
        %v4668 = vpop.f32.mrb[0].mxu0
        %4669 = vmatprep.mubr.bf16.mxu0 0
        %4670 = vmatmul.mubr.bf16.gmra.mrb[0].mxu0 %v4611
        %v4671 = vpop.f32.mrb[0].mxu0
        %v4672 = vadd.f32 0.0, %v4671
        %v4673 = vpop.f32.mrb[0].mxu0
        %v4674 = vpop.f32.mrb[0].mxu0
        %v4675 = vadd.f32 0.0, %v4674
        %v4676 = vpop.f32.mrb[0].mxu0
        %4677 = vdwg.mxu0
        %v4678 = vlaneseq
        %v4679 = vshrl.u32 %v4678, 7
        %v4680 = vsub.s32 0, %v4679
        %v4681 = vrot.slane %v1706, %v4680
        %v4686 = vunpack.c.l.b16 %v1712
        %v4687 = vunpack.c.l.b16 %v1713
        %v4688 = vunpack.c.l.b16 %v1714
        %v4689 = vunpack.c.l.b16 %v1715
        %v4690 = vpack.c.b16 %v4687, %v4686
        %v4691 = vpack.c.b16 %v4689, %v4688
        %v4695 = vsel %vm3689, %v4266, 0
        %v4698 = vsel %vm3689, %v4267, 0
        %v4701 = vsel %vm3689, %v4268, 0
        %v4704 = vsel %vm3689, %v4269, 0
        %v4707 = vsel %vm3689, %v4270, 0
        %v4710 = vsel %vm3689, %v4271, 0
        %v4713 = vsel %vm3689, %v4272, 0
        %v4716 = vsel %vm3689, %v4273, 0
        %v4719 = vsel %vm3689, %v4274, 0
        %v4722 = vsel %vm3689, %v4275, 0
        %v4725 = vsel %vm3689, %v4276, 0
        %v4728 = vsel %vm3689, %v4277, 0
        %v4731 = vsel %vm3689, %v4278, 0
        %v4734 = vsel %vm3689, %v4279, 0
        %v4737 = vsel %vm3689, %v4280, 0
        %v4740 = vsel %vm3689, %v4281, 0
        %v4743 = vsel %vm3689, %v4282, 0
        %v4746 = vsel %vm3689, %v4283, 0
        %v4749 = vsel %vm3689, %v4284, 0
        %v4752 = vsel %vm3689, %v4285, 0
        %v4755 = vsel %vm3689, %v4286, 0
        %v4758 = vsel %vm3689, %v4287, 0
        %v4761 = vsel %vm3689, %v4288, 0
        %v4764 = vsel %vm3689, %v4289, 0
        %v4767 = vsel %vm3689, %v4290, 0
        %v4770 = vsel %vm3689, %v4291, 0
        %v4773 = vsel %vm3689, %v4292, 0
        %v4776 = vsel %vm3689, %v4293, 0
        %v4779 = vsel %vm3689, %v4294, 0
        %v4782 = vsel %vm3689, %v4295, 0
        %v4785 = vsel %vm3689, %v4296, 0
        %v4788 = vsel %vm3689, %v4297, 0
        %v4791 = vsel %vm3689, %v4298, 0
        %v4794 = vsel %vm3689, %v4299, 0
        %v4797 = vsel %vm3689, %v4300, 0
        %v4800 = vsel %vm3689, %v4301, 0
        %v4803 = vsel %vm3689, %v4302, 0
        %v4806 = vsel %vm3689, %v4303, 0
        %v4809 = vsel %vm3689, %v4304, 0
        %v4812 = vsel %vm3689, %v4305, 0
        %v4815 = vsel %vm3689, %v4306, 0
        %v4818 = vsel %vm3689, %v4307, 0
        %v4821 = vsel %vm3689, %v4308, 0
        %v4824 = vsel %vm3689, %v4309, 0
        %v4827 = vsel %vm3689, %v4310, 0
        %v4830 = vsel %vm3689, %v4311, 0
        %v4833 = vsel %vm3689, %v4312, 0
        %v4836 = vsel %vm3689, %v4313, 0
        %v4839 = vsel %vm3689, %v4314, 0
        %v4842 = vsel %vm3689, %v4315, 0
        %v4845 = vsel %vm3689, %v4316, 0
        %v4848 = vsel %vm3689, %v4317, 0
        %v4851 = vsel %vm3689, %v4318, 0
        %v4854 = vsel %vm3689, %v4319, 0
        %v4857 = vsel %vm3689, %v4320, 0
        %v4860 = vsel %vm3689, %v4321, 0
        %v4863 = vsel %vm3689, %v4322, 0
        %v4866 = vsel %vm3689, %v4323, 0
        %v4869 = vsel %vm3689, %v4324, 0
        %v4872 = vsel %vm3689, %v4325, 0
        %v4875 = vsel %vm3689, %v4326, 0
        %v4878 = vsel %vm3689, %v4327, 0
        %v4881 = vsel %vm3689, %v4328, 0
        %v4884 = vsel %vm3689, %v4329, 0
        %4886 = vmatprep.subr.bf16.mxu0 0
        %4887 = vmatpush1.bf16.msra.mxu0 %v4690
        %4888 = vmatprep.subr.bf16.mxu0 0
        %4889 = vmatpush1.bf16.msra.mxu0 %v4691
        %4890 = vmatprep.subr.bf16.mxu0 0
        %4891 = vmatpush1.bf16.msra.mxu0 0
        %4892 = vmatprep.subr.bf16.mxu0 0
        %4893 = vmatpush1.bf16.msra.mxu0 0
        %4894 = vmatprep.subr.bf16.mxu0 0
        %4895 = vmatpush1.bf16.msra.mxu0 0
        %4896 = vmatprep.subr.bf16.mxu0 0
        %4897 = vmatpush1.bf16.msra.mxu0 0
        %4898 = vmatprep.subr.bf16.mxu0 0
        %4899 = vmatpush1.bf16.msra.mxu0 0
        %4900 = vmatprep.subr.bf16.mxu0 0
        %4901 = vmatpush1.bf16.msra.mxu0 0
        %4902 = vmatprep.subr.bf16.mxu0 0
        %4903 = vmatpush1.bf16.msra.mxu0 0
        %4904 = vmatprep.subr.bf16.mxu0 0
        %4905 = vmatpush1.bf16.msra.mxu0 0
        %4906 = vmatprep.subr.bf16.mxu0 0
        %4907 = vmatpush1.bf16.msra.mxu0 0
        %4908 = vmatprep.subr.bf16.mxu0 0
        %4909 = vmatpush1.bf16.msra.mxu0 0
        %4910 = vmatprep.subr.bf16.mxu0 0
        %4911 = vmatpush1.bf16.msra.mxu0 0
        %4912 = vmatprep.subr.bf16.mxu0 0
        %4913 = vmatpush1.bf16.msra.mxu0 0
        %4914 = vmatprep.subr.bf16.mxu0 0
        %4915 = vmatpush1.bf16.msra.mxu0 0
        %4916 = vmatprep.subr.bf16.mxu0 0
        %4917 = vmatpush1.bf16.msra.mxu0 0
        %4918 = vmatprep.mubr.bf16.mxu0 0
        %4919 = vmatmul.mubr.bf16.gmra.mrb[0].mxu0 %v4695
        %v4920 = vpop.f32.mrb[0].mxu0
        %v4921 = vadd.f32 %v4681, %v4920
        %v4922 = vpop.f32.mrb[0].mxu0
        %v4923 = vpop.f32.mrb[0].mxu0
        %v4924 = vadd.f32 %v4681, %v4923
        %v4925 = vpop.f32.mrb[0].mxu0
        %4926 = vmatprep.mubr.bf16.mxu0 0
        %4927 = vmatmul.mubr.bf16.gmra.mrb[0].mxu0 %v4698
        %v4928 = vpop.f32.mrb[0].mxu0
        %v4929 = vadd.f32 %v4681, %v4928
        %v4930 = vpop.f32.mrb[0].mxu0
        %v4931 = vpop.f32.mrb[0].mxu0
        %v4932 = vadd.f32 %v4681, %v4931
        %v4933 = vpop.f32.mrb[0].mxu0
        %4934 = vmatprep.mubr.bf16.mxu0 0
        %4935 = vmatmul.mubr.bf16.gmra.mrb[0].mxu0 %v4701
        %v4936 = vpop.f32.mrb[0].mxu0
        %v4937 = vadd.f32 %v4681, %v4936
        %v4938 = vpop.f32.mrb[0].mxu0
        %v4939 = vpop.f32.mrb[0].mxu0
        %v4940 = vadd.f32 %v4681, %v4939
        %v4941 = vpop.f32.mrb[0].mxu0
        %4942 = vmatprep.mubr.bf16.mxu0 0
        %4943 = vmatmul.mubr.bf16.gmra.mrb[0].mxu0 %v4704
        %v4944 = vpop.f32.mrb[0].mxu0
        %v4945 = vadd.f32 %v4681, %v4944
        %v4946 = vpop.f32.mrb[0].mxu0
        %v4947 = vpop.f32.mrb[0].mxu0
        %v4948 = vadd.f32 %v4681, %v4947
        %v4949 = vpop.f32.mrb[0].mxu0
        %4950 = vmatprep.mubr.bf16.mxu0 0
        %4951 = vmatmul.mubr.bf16.gmra.mrb[0].mxu0 %v4707
        %v4952 = vpop.f32.mrb[0].mxu0
        %v4953 = vadd.f32 %v4681, %v4952
        %v4954 = vpop.f32.mrb[0].mxu0
        %v4955 = vpop.f32.mrb[0].mxu0
        %v4956 = vadd.f32 %v4681, %v4955
        %v4957 = vpop.f32.mrb[0].mxu0
        %4958 = vmatprep.mubr.bf16.mxu0 0
        %4959 = vmatmul.mubr.bf16.gmra.mrb[0].mxu0 %v4710
        %v4960 = vpop.f32.mrb[0].mxu0
        %v4961 = vadd.f32 %v4681, %v4960
        %v4962 = vpop.f32.mrb[0].mxu0
        %v4963 = vpop.f32.mrb[0].mxu0
        %v4964 = vadd.f32 %v4681, %v4963
        %v4965 = vpop.f32.mrb[0].mxu0
        %4966 = vmatprep.mubr.bf16.mxu0 0
        %4967 = vmatmul.mubr.bf16.gmra.mrb[0].mxu0 %v4713
        %v4968 = vpop.f32.mrb[0].mxu0
        %v4969 = vadd.f32 %v4681, %v4968
        %v4970 = vpop.f32.mrb[0].mxu0
        %v4971 = vpop.f32.mrb[0].mxu0
        %v4972 = vadd.f32 %v4681, %v4971
        %v4973 = vpop.f32.mrb[0].mxu0
        %4974 = vmatprep.mubr.bf16.mxu0 0
        %4975 = vmatmul.mubr.bf16.gmra.mrb[0].mxu0 %v4716
        %v4976 = vpop.f32.mrb[0].mxu0
        %v4977 = vadd.f32 %v4681, %v4976
        %v4978 = vpop.f32.mrb[0].mxu0
        %v4979 = vpop.f32.mrb[0].mxu0
        %v4980 = vadd.f32 %v4681, %v4979
        %v4981 = vpop.f32.mrb[0].mxu0
        %4982 = vmatprep.mubr.bf16.mxu0 0
        %4983 = vmatmul.mubr.bf16.gmra.mrb[0].mxu0 %v4719
        %v4984 = vpop.f32.mrb[0].mxu0
        %v4985 = vadd.f32 %v4681, %v4984
        %v4986 = vpop.f32.mrb[0].mxu0
        %v4987 = vpop.f32.mrb[0].mxu0
        %v4988 = vadd.f32 %v4681, %v4987
        %v4989 = vpop.f32.mrb[0].mxu0
        %4990 = vmatprep.mubr.bf16.mxu0 0
        %4991 = vmatmul.mubr.bf16.gmra.mrb[0].mxu0 %v4722
        %v4992 = vpop.f32.mrb[0].mxu0
        %v4993 = vadd.f32 %v4681, %v4992
        %v4994 = vpop.f32.mrb[0].mxu0
        %v4995 = vpop.f32.mrb[0].mxu0
        %v4996 = vadd.f32 %v4681, %v4995
        %v4997 = vpop.f32.mrb[0].mxu0
        %4998 = vmatprep.mubr.bf16.mxu0 0
        %4999 = vmatmul.mubr.bf16.gmra.mrb[0].mxu0 %v4725
        %v5000 = vpop.f32.mrb[0].mxu0
        %v5001 = vadd.f32 %v4681, %v5000
        %v5002 = vpop.f32.mrb[0].mxu0
        %v5003 = vpop.f32.mrb[0].mxu0
        %v5004 = vadd.f32 %v4681, %v5003
        %v5005 = vpop.f32.mrb[0].mxu0
        %5006 = vmatprep.mubr.bf16.mxu0 0
        %5007 = vmatmul.mubr.bf16.gmra.mrb[0].mxu0 %v4728
        %v5008 = vpop.f32.mrb[0].mxu0
        %v5009 = vadd.f32 %v4681, %v5008
        %v5010 = vpop.f32.mrb[0].mxu0
        %v5011 = vpop.f32.mrb[0].mxu0
        %v5012 = vadd.f32 %v4681, %v5011
        %v5013 = vpop.f32.mrb[0].mxu0
        %5014 = vmatprep.mubr.bf16.mxu0 0
        %5015 = vmatmul.mubr.bf16.gmra.mrb[0].mxu0 %v4731
        %v5016 = vpop.f32.mrb[0].mxu0
        %v5017 = vadd.f32 %v4681, %v5016
        %v5018 = vpop.f32.mrb[0].mxu0
        %v5019 = vpop.f32.mrb[0].mxu0
        %v5020 = vadd.f32 %v4681, %v5019
        %v5021 = vpop.f32.mrb[0].mxu0
        %5022 = vmatprep.mubr.bf16.mxu0 0
        %5023 = vmatmul.mubr.bf16.gmra.mrb[0].mxu0 %v4734
        %v5024 = vpop.f32.mrb[0].mxu0
        %v5025 = vadd.f32 %v4681, %v5024
        %v5026 = vpop.f32.mrb[0].mxu0
        %v5027 = vpop.f32.mrb[0].mxu0
        %v5028 = vadd.f32 %v4681, %v5027
        %v5029 = vpop.f32.mrb[0].mxu0
        %5030 = vmatprep.mubr.bf16.mxu0 0
        %5031 = vmatmul.mubr.bf16.gmra.mrb[0].mxu0 %v4737
        %v5032 = vpop.f32.mrb[0].mxu0
        %v5033 = vadd.f32 %v4681, %v5032
        %v5034 = vpop.f32.mrb[0].mxu0
        %v5035 = vpop.f32.mrb[0].mxu0
        %v5036 = vadd.f32 %v4681, %v5035
        %v5037 = vpop.f32.mrb[0].mxu0
        %5038 = vmatprep.mubr.bf16.mxu0 0
        %5039 = vmatmul.mubr.bf16.gmra.mrb[0].mxu0 %v4740
        %v5040 = vpop.f32.mrb[0].mxu0
        %v5041 = vadd.f32 %v4681, %v5040
        %v5042 = vpop.f32.mrb[0].mxu0
        %v5043 = vpop.f32.mrb[0].mxu0
        %v5044 = vadd.f32 %v4681, %v5043
        %v5045 = vpop.f32.mrb[0].mxu0
        %5046 = vmatprep.mubr.bf16.mxu0 0
        %5047 = vmatmul.mubr.bf16.gmra.mrb[0].mxu0 %v4743
        %v5048 = vpop.f32.mrb[0].mxu0
        %v5049 = vadd.f32 %v4681, %v5048
        %v5050 = vpop.f32.mrb[0].mxu0
        %v5051 = vpop.f32.mrb[0].mxu0
        %v5052 = vadd.f32 %v4681, %v5051
        %v5053 = vpop.f32.mrb[0].mxu0
        %5054 = vmatprep.mubr.bf16.mxu0 0
        %5055 = vmatmul.mubr.bf16.gmra.mrb[0].mxu0 %v4746
        %v5056 = vpop.f32.mrb[0].mxu0
        %v5057 = vadd.f32 %v4681, %v5056
        %v5058 = vpop.f32.mrb[0].mxu0
        %v5059 = vpop.f32.mrb[0].mxu0
        %v5060 = vadd.f32 %v4681, %v5059
        %v5061 = vpop.f32.mrb[0].mxu0
        %5062 = vmatprep.mubr.bf16.mxu0 0
        %5063 = vmatmul.mubr.bf16.gmra.mrb[0].mxu0 %v4749
        %v5064 = vpop.f32.mrb[0].mxu0
        %v5065 = vadd.f32 %v4681, %v5064
        %v5066 = vpop.f32.mrb[0].mxu0
        %v5067 = vpop.f32.mrb[0].mxu0
        %v5068 = vadd.f32 %v4681, %v5067
        %v5069 = vpop.f32.mrb[0].mxu0
        %5070 = vmatprep.mubr.bf16.mxu0 0
        %5071 = vmatmul.mubr.bf16.gmra.mrb[0].mxu0 %v4752
        %v5072 = vpop.f32.mrb[0].mxu0
        %v5073 = vadd.f32 %v4681, %v5072
        %v5074 = vpop.f32.mrb[0].mxu0
        %v5075 = vpop.f32.mrb[0].mxu0
        %v5076 = vadd.f32 %v4681, %v5075
        %v5077 = vpop.f32.mrb[0].mxu0
        %5078 = vmatprep.mubr.bf16.mxu0 0
        %5079 = vmatmul.mubr.bf16.gmra.mrb[0].mxu0 %v4755
        %v5080 = vpop.f32.mrb[0].mxu0
        %v5081 = vadd.f32 %v4681, %v5080
        %v5082 = vpop.f32.mrb[0].mxu0
        %v5083 = vpop.f32.mrb[0].mxu0
        %v5084 = vadd.f32 %v4681, %v5083
        %v5085 = vpop.f32.mrb[0].mxu0
        %5086 = vmatprep.mubr.bf16.mxu0 0
        %5087 = vmatmul.mubr.bf16.gmra.mrb[0].mxu0 %v4758
        %v5088 = vpop.f32.mrb[0].mxu0
        %v5089 = vadd.f32 %v4681, %v5088
        %v5090 = vpop.f32.mrb[0].mxu0
        %v5091 = vpop.f32.mrb[0].mxu0
        %v5092 = vadd.f32 %v4681, %v5091
        %v5093 = vpop.f32.mrb[0].mxu0
        %5094 = vmatprep.mubr.bf16.mxu0 0
        %5095 = vmatmul.mubr.bf16.gmra.mrb[0].mxu0 %v4761
        %v5096 = vpop.f32.mrb[0].mxu0
        %v5097 = vadd.f32 %v4681, %v5096
        %v5098 = vpop.f32.mrb[0].mxu0
        %v5099 = vpop.f32.mrb[0].mxu0
        %v5100 = vadd.f32 %v4681, %v5099
        %v5101 = vpop.f32.mrb[0].mxu0
        %5102 = vmatprep.mubr.bf16.mxu0 0
        %5103 = vmatmul.mubr.bf16.gmra.mrb[0].mxu0 %v4764
        %v5104 = vpop.f32.mrb[0].mxu0
        %v5105 = vadd.f32 %v4681, %v5104
        %v5106 = vpop.f32.mrb[0].mxu0
        %v5107 = vpop.f32.mrb[0].mxu0
        %v5108 = vadd.f32 %v4681, %v5107
        %v5109 = vpop.f32.mrb[0].mxu0
        %5110 = vmatprep.mubr.bf16.mxu0 0
        %5111 = vmatmul.mubr.bf16.gmra.mrb[0].mxu0 %v4767
        %v5112 = vpop.f32.mrb[0].mxu0
        %v5113 = vadd.f32 %v4681, %v5112
        %v5114 = vpop.f32.mrb[0].mxu0
        %v5115 = vpop.f32.mrb[0].mxu0
        %v5116 = vadd.f32 %v4681, %v5115
        %v5117 = vpop.f32.mrb[0].mxu0
        %5118 = vmatprep.mubr.bf16.mxu0 0
        %5119 = vmatmul.mubr.bf16.gmra.mrb[0].mxu0 %v4770
        %v5120 = vpop.f32.mrb[0].mxu0
        %v5121 = vadd.f32 %v4681, %v5120
        %v5122 = vpop.f32.mrb[0].mxu0
        %v5123 = vpop.f32.mrb[0].mxu0
        %v5124 = vadd.f32 %v4681, %v5123
        %v5125 = vpop.f32.mrb[0].mxu0
        %5126 = vmatprep.mubr.bf16.mxu0 0
        %5127 = vmatmul.mubr.bf16.gmra.mrb[0].mxu0 %v4773
        %v5128 = vpop.f32.mrb[0].mxu0
        %v5129 = vadd.f32 %v4681, %v5128
        %v5130 = vpop.f32.mrb[0].mxu0
        %v5131 = vpop.f32.mrb[0].mxu0
        %v5132 = vadd.f32 %v4681, %v5131
        %v5133 = vpop.f32.mrb[0].mxu0
        %5134 = vmatprep.mubr.bf16.mxu0 0
        %5135 = vmatmul.mubr.bf16.gmra.mrb[0].mxu0 %v4776
        %v5136 = vpop.f32.mrb[0].mxu0
        %v5137 = vadd.f32 %v4681, %v5136
        %v5138 = vpop.f32.mrb[0].mxu0
        %v5139 = vpop.f32.mrb[0].mxu0
        %v5140 = vadd.f32 %v4681, %v5139
        %v5141 = vpop.f32.mrb[0].mxu0
        %5142 = vmatprep.mubr.bf16.mxu0 0
        %5143 = vmatmul.mubr.bf16.gmra.mrb[0].mxu0 %v4779
        %v5144 = vpop.f32.mrb[0].mxu0
        %v5145 = vadd.f32 %v4681, %v5144
        %v5146 = vpop.f32.mrb[0].mxu0
        %v5147 = vpop.f32.mrb[0].mxu0
        %v5148 = vadd.f32 %v4681, %v5147
        %v5149 = vpop.f32.mrb[0].mxu0
        %5150 = vmatprep.mubr.bf16.mxu0 0
        %5151 = vmatmul.mubr.bf16.gmra.mrb[0].mxu0 %v4782
        %v5152 = vpop.f32.mrb[0].mxu0
        %v5153 = vadd.f32 %v4681, %v5152
        %v5154 = vpop.f32.mrb[0].mxu0
        %v5155 = vpop.f32.mrb[0].mxu0
        %v5156 = vadd.f32 %v4681, %v5155
        %v5157 = vpop.f32.mrb[0].mxu0
        %5158 = vmatprep.mubr.bf16.mxu0 0
        %5159 = vmatmul.mubr.bf16.gmra.mrb[0].mxu0 %v4785
        %v5160 = vpop.f32.mrb[0].mxu0
        %v5161 = vadd.f32 %v4681, %v5160
        %v5162 = vpop.f32.mrb[0].mxu0
        %v5163 = vpop.f32.mrb[0].mxu0
        %v5164 = vadd.f32 %v4681, %v5163
        %v5165 = vpop.f32.mrb[0].mxu0
        %5166 = vmatprep.mubr.bf16.mxu0 0
        %5167 = vmatmul.mubr.bf16.gmra.mrb[0].mxu0 %v4788
        %v5168 = vpop.f32.mrb[0].mxu0
        %v5169 = vadd.f32 %v4681, %v5168
        %v5170 = vpop.f32.mrb[0].mxu0
        %v5171 = vpop.f32.mrb[0].mxu0
        %v5172 = vadd.f32 %v4681, %v5171
        %v5173 = vpop.f32.mrb[0].mxu0
        %5174 = vmatprep.mubr.bf16.mxu0 0
        %5175 = vmatmul.mubr.bf16.gmra.mrb[0].mxu0 %v4791
        %v5176 = vpop.f32.mrb[0].mxu0
        %v5177 = vadd.f32 %v4681, %v5176
        %v5178 = vpop.f32.mrb[0].mxu0
        %v5179 = vpop.f32.mrb[0].mxu0
        %v5180 = vadd.f32 %v4681, %v5179
        %v5181 = vpop.f32.mrb[0].mxu0
        %5182 = vmatprep.mubr.bf16.mxu0 0
        %5183 = vmatmul.mubr.bf16.gmra.mrb[0].mxu0 %v4794
        %v5184 = vpop.f32.mrb[0].mxu0
        %v5185 = vadd.f32 %v4681, %v5184
        %v5186 = vpop.f32.mrb[0].mxu0
        %v5187 = vpop.f32.mrb[0].mxu0
        %v5188 = vadd.f32 %v4681, %v5187
        %v5189 = vpop.f32.mrb[0].mxu0
        %5190 = vmatprep.mubr.bf16.mxu0 0
        %5191 = vmatmul.mubr.bf16.gmra.mrb[0].mxu0 %v4797
        %v5192 = vpop.f32.mrb[0].mxu0
        %v5193 = vadd.f32 %v4681, %v5192
        %v5194 = vpop.f32.mrb[0].mxu0
        %v5195 = vpop.f32.mrb[0].mxu0
        %v5196 = vadd.f32 %v4681, %v5195
        %v5197 = vpop.f32.mrb[0].mxu0
        %5198 = vmatprep.mubr.bf16.mxu0 0
        %5199 = vmatmul.mubr.bf16.gmra.mrb[0].mxu0 %v4800
        %v5200 = vpop.f32.mrb[0].mxu0
        %v5201 = vadd.f32 %v4681, %v5200
        %v5202 = vpop.f32.mrb[0].mxu0
        %v5203 = vpop.f32.mrb[0].mxu0
        %v5204 = vadd.f32 %v4681, %v5203
        %v5205 = vpop.f32.mrb[0].mxu0
        %5206 = vmatprep.mubr.bf16.mxu0 0
        %5207 = vmatmul.mubr.bf16.gmra.mrb[0].mxu0 %v4803
        %v5208 = vpop.f32.mrb[0].mxu0
        %v5209 = vadd.f32 %v4681, %v5208
        %v5210 = vpop.f32.mrb[0].mxu0
        %v5211 = vpop.f32.mrb[0].mxu0
        %v5212 = vadd.f32 %v4681, %v5211
        %v5213 = vpop.f32.mrb[0].mxu0
        %5214 = vmatprep.mubr.bf16.mxu0 0
        %5215 = vmatmul.mubr.bf16.gmra.mrb[0].mxu0 %v4806
        %v5216 = vpop.f32.mrb[0].mxu0
        %v5217 = vadd.f32 %v4681, %v5216
        %v5218 = vpop.f32.mrb[0].mxu0
        %v5219 = vpop.f32.mrb[0].mxu0
        %v5220 = vadd.f32 %v4681, %v5219
        %v5221 = vpop.f32.mrb[0].mxu0
        %5222 = vmatprep.mubr.bf16.mxu0 0
        %5223 = vmatmul.mubr.bf16.gmra.mrb[0].mxu0 %v4809
        %v5224 = vpop.f32.mrb[0].mxu0
        %v5225 = vadd.f32 %v4681, %v5224
        %v5226 = vpop.f32.mrb[0].mxu0
        %v5227 = vpop.f32.mrb[0].mxu0
        %v5228 = vadd.f32 %v4681, %v5227
        %v5229 = vpop.f32.mrb[0].mxu0
        %5230 = vmatprep.mubr.bf16.mxu0 0
        %5231 = vmatmul.mubr.bf16.gmra.mrb[0].mxu0 %v4812
        %v5232 = vpop.f32.mrb[0].mxu0
        %v5233 = vadd.f32 %v4681, %v5232
        %v5234 = vpop.f32.mrb[0].mxu0
        %v5235 = vpop.f32.mrb[0].mxu0
        %v5236 = vadd.f32 %v4681, %v5235
        %v5237 = vpop.f32.mrb[0].mxu0
        %5238 = vmatprep.mubr.bf16.mxu0 0
        %5239 = vmatmul.mubr.bf16.gmra.mrb[0].mxu0 %v4815
        %v5240 = vpop.f32.mrb[0].mxu0
        %v5241 = vadd.f32 %v4681, %v5240
        %v5242 = vpop.f32.mrb[0].mxu0
        %v5243 = vpop.f32.mrb[0].mxu0
        %v5244 = vadd.f32 %v4681, %v5243
        %v5245 = vpop.f32.mrb[0].mxu0
        %5246 = vmatprep.mubr.bf16.mxu0 0
        %5247 = vmatmul.mubr.bf16.gmra.mrb[0].mxu0 %v4818
        %v5248 = vpop.f32.mrb[0].mxu0
        %v5249 = vadd.f32 %v4681, %v5248
        %v5250 = vpop.f32.mrb[0].mxu0
        %v5251 = vpop.f32.mrb[0].mxu0
        %v5252 = vadd.f32 %v4681, %v5251
        %v5253 = vpop.f32.mrb[0].mxu0
        %5254 = vmatprep.mubr.bf16.mxu0 0
        %5255 = vmatmul.mubr.bf16.gmra.mrb[0].mxu0 %v4821
        %v5256 = vpop.f32.mrb[0].mxu0
        %v5257 = vadd.f32 %v4681, %v5256
        %v5258 = vpop.f32.mrb[0].mxu0
        %v5259 = vpop.f32.mrb[0].mxu0
        %v5260 = vadd.f32 %v4681, %v5259
        %v5261 = vpop.f32.mrb[0].mxu0
        %5262 = vmatprep.mubr.bf16.mxu0 0
        %5263 = vmatmul.mubr.bf16.gmra.mrb[0].mxu0 %v4824
        %v5264 = vpop.f32.mrb[0].mxu0
        %v5265 = vadd.f32 %v4681, %v5264
        %v5266 = vpop.f32.mrb[0].mxu0
        %v5267 = vpop.f32.mrb[0].mxu0
        %v5268 = vadd.f32 %v4681, %v5267
        %v5269 = vpop.f32.mrb[0].mxu0
        %5270 = vmatprep.mubr.bf16.mxu0 0
        %5271 = vmatmul.mubr.bf16.gmra.mrb[0].mxu0 %v4827
        %v5272 = vpop.f32.mrb[0].mxu0
        %v5273 = vadd.f32 %v4681, %v5272
        %v5274 = vpop.f32.mrb[0].mxu0
        %v5275 = vpop.f32.mrb[0].mxu0
        %v5276 = vadd.f32 %v4681, %v5275
        %v5277 = vpop.f32.mrb[0].mxu0
        %5278 = vmatprep.mubr.bf16.mxu0 0
        %5279 = vmatmul.mubr.bf16.gmra.mrb[0].mxu0 %v4830
        %v5280 = vpop.f32.mrb[0].mxu0
        %v5281 = vadd.f32 %v4681, %v5280
        %v5282 = vpop.f32.mrb[0].mxu0
        %v5283 = vpop.f32.mrb[0].mxu0
        %v5284 = vadd.f32 %v4681, %v5283
        %v5285 = vpop.f32.mrb[0].mxu0
        %5286 = vmatprep.mubr.bf16.mxu0 0
        %5287 = vmatmul.mubr.bf16.gmra.mrb[0].mxu0 %v4833
        %v5288 = vpop.f32.mrb[0].mxu0
        %v5289 = vadd.f32 %v4681, %v5288
        %v5290 = vpop.f32.mrb[0].mxu0
        %v5291 = vpop.f32.mrb[0].mxu0
        %v5292 = vadd.f32 %v4681, %v5291
        %v5293 = vpop.f32.mrb[0].mxu0
        %5294 = vmatprep.mubr.bf16.mxu0 0
        %5295 = vmatmul.mubr.bf16.gmra.mrb[0].mxu0 %v4836
        %v5296 = vpop.f32.mrb[0].mxu0
        %v5297 = vadd.f32 %v4681, %v5296
        %v5298 = vpop.f32.mrb[0].mxu0
        %v5299 = vpop.f32.mrb[0].mxu0
        %v5300 = vadd.f32 %v4681, %v5299
        %v5301 = vpop.f32.mrb[0].mxu0
        %5302 = vmatprep.mubr.bf16.mxu0 0
        %5303 = vmatmul.mubr.bf16.gmra.mrb[0].mxu0 %v4839
        %v5304 = vpop.f32.mrb[0].mxu0
        %v5305 = vadd.f32 %v4681, %v5304
        %v5306 = vpop.f32.mrb[0].mxu0
        %v5307 = vpop.f32.mrb[0].mxu0
        %v5308 = vadd.f32 %v4681, %v5307
        %v5309 = vpop.f32.mrb[0].mxu0
        %5310 = vmatprep.mubr.bf16.mxu0 0
        %5311 = vmatmul.mubr.bf16.gmra.mrb[0].mxu0 %v4842
        %v5312 = vpop.f32.mrb[0].mxu0
        %v5313 = vadd.f32 %v4681, %v5312
        %v5314 = vpop.f32.mrb[0].mxu0
        %v5315 = vpop.f32.mrb[0].mxu0
        %v5316 = vadd.f32 %v4681, %v5315
        %v5317 = vpop.f32.mrb[0].mxu0
        %5318 = vmatprep.mubr.bf16.mxu0 0
        %5319 = vmatmul.mubr.bf16.gmra.mrb[0].mxu0 %v4845
        %v5320 = vpop.f32.mrb[0].mxu0
        %v5321 = vadd.f32 %v4681, %v5320
        %v5322 = vpop.f32.mrb[0].mxu0
        %v5323 = vpop.f32.mrb[0].mxu0
        %v5324 = vadd.f32 %v4681, %v5323
        %v5325 = vpop.f32.mrb[0].mxu0
        %5326 = vmatprep.mubr.bf16.mxu0 0
        %5327 = vmatmul.mubr.bf16.gmra.mrb[0].mxu0 %v4848
        %v5328 = vpop.f32.mrb[0].mxu0
        %v5329 = vadd.f32 %v4681, %v5328
        %v5330 = vpop.f32.mrb[0].mxu0
        %v5331 = vpop.f32.mrb[0].mxu0
        %v5332 = vadd.f32 %v4681, %v5331
        %v5333 = vpop.f32.mrb[0].mxu0
        %5334 = vmatprep.mubr.bf16.mxu0 0
        %5335 = vmatmul.mubr.bf16.gmra.mrb[0].mxu0 %v4851
        %v5336 = vpop.f32.mrb[0].mxu0
        %v5337 = vadd.f32 %v4681, %v5336
        %v5338 = vpop.f32.mrb[0].mxu0
        %v5339 = vpop.f32.mrb[0].mxu0
        %v5340 = vadd.f32 %v4681, %v5339
        %v5341 = vpop.f32.mrb[0].mxu0
        %5342 = vmatprep.mubr.bf16.mxu0 0
        %5343 = vmatmul.mubr.bf16.gmra.mrb[0].mxu0 %v4854
        %v5344 = vpop.f32.mrb[0].mxu0
        %v5345 = vadd.f32 %v4681, %v5344
        %v5346 = vpop.f32.mrb[0].mxu0
        %v5347 = vpop.f32.mrb[0].mxu0
        %v5348 = vadd.f32 %v4681, %v5347
        %v5349 = vpop.f32.mrb[0].mxu0
        %5350 = vmatprep.mubr.bf16.mxu0 0
        %5351 = vmatmul.mubr.bf16.gmra.mrb[0].mxu0 %v4857
        %v5352 = vpop.f32.mrb[0].mxu0
        %v5353 = vadd.f32 %v4681, %v5352
        %v5354 = vpop.f32.mrb[0].mxu0
        %v5355 = vpop.f32.mrb[0].mxu0
        %v5356 = vadd.f32 %v4681, %v5355
        %v5357 = vpop.f32.mrb[0].mxu0
        %5358 = vmatprep.mubr.bf16.mxu0 0
        %5359 = vmatmul.mubr.bf16.gmra.mrb[0].mxu0 %v4860
        %v5360 = vpop.f32.mrb[0].mxu0
        %v5361 = vadd.f32 %v4681, %v5360
        %v5362 = vpop.f32.mrb[0].mxu0
        %v5363 = vpop.f32.mrb[0].mxu0
        %v5364 = vadd.f32 %v4681, %v5363
        %v5365 = vpop.f32.mrb[0].mxu0
        %5366 = vmatprep.mubr.bf16.mxu0 0
        %5367 = vmatmul.mubr.bf16.gmra.mrb[0].mxu0 %v4863
        %v5368 = vpop.f32.mrb[0].mxu0
        %v5369 = vadd.f32 %v4681, %v5368
        %v5370 = vpop.f32.mrb[0].mxu0
        %v5371 = vpop.f32.mrb[0].mxu0
        %v5372 = vadd.f32 %v4681, %v5371
        %v5373 = vpop.f32.mrb[0].mxu0
        %5374 = vmatprep.mubr.bf16.mxu0 0
        %5375 = vmatmul.mubr.bf16.gmra.mrb[0].mxu0 %v4866
        %v5376 = vpop.f32.mrb[0].mxu0
        %v5377 = vadd.f32 %v4681, %v5376
        %v5378 = vpop.f32.mrb[0].mxu0
        %v5379 = vpop.f32.mrb[0].mxu0
        %v5380 = vadd.f32 %v4681, %v5379
        %v5381 = vpop.f32.mrb[0].mxu0
        %5382 = vmatprep.mubr.bf16.mxu0 0
        %5383 = vmatmul.mubr.bf16.gmra.mrb[0].mxu0 %v4869
        %v5384 = vpop.f32.mrb[0].mxu0
        %v5385 = vadd.f32 %v4681, %v5384
        %v5386 = vpop.f32.mrb[0].mxu0
        %v5387 = vpop.f32.mrb[0].mxu0
        %v5388 = vadd.f32 %v4681, %v5387
        %v5389 = vpop.f32.mrb[0].mxu0
        %5390 = vmatprep.mubr.bf16.mxu0 0
        %5391 = vmatmul.mubr.bf16.gmra.mrb[0].mxu0 %v4872
        %v5392 = vpop.f32.mrb[0].mxu0
        %v5393 = vadd.f32 %v4681, %v5392
        %v5394 = vpop.f32.mrb[0].mxu0
        %v5395 = vpop.f32.mrb[0].mxu0
        %v5396 = vadd.f32 %v4681, %v5395
        %v5397 = vpop.f32.mrb[0].mxu0
        %5398 = vmatprep.mubr.bf16.mxu0 0
        %5399 = vmatmul.mubr.bf16.gmra.mrb[0].mxu0 %v4875
        %v5400 = vpop.f32.mrb[0].mxu0
        %v5401 = vadd.f32 %v4681, %v5400
        %v5402 = vpop.f32.mrb[0].mxu0
        %v5403 = vpop.f32.mrb[0].mxu0
        %v5404 = vadd.f32 %v4681, %v5403
        %v5405 = vpop.f32.mrb[0].mxu0
        %5406 = vmatprep.mubr.bf16.mxu0 0
        %5407 = vmatmul.mubr.bf16.gmra.mrb[0].mxu0 %v4878
        %v5408 = vpop.f32.mrb[0].mxu0
        %v5409 = vadd.f32 %v4681, %v5408
        %v5410 = vpop.f32.mrb[0].mxu0
        %v5411 = vpop.f32.mrb[0].mxu0
        %v5412 = vadd.f32 %v4681, %v5411
        %v5413 = vpop.f32.mrb[0].mxu0
        %5414 = vmatprep.mubr.bf16.mxu0 0
        %5415 = vmatmul.mubr.bf16.gmra.mrb[0].mxu0 %v4881
        %v5416 = vpop.f32.mrb[0].mxu0
        %v5417 = vadd.f32 %v4681, %v5416
        %v5418 = vpop.f32.mrb[0].mxu0
        %v5419 = vpop.f32.mrb[0].mxu0
        %v5420 = vadd.f32 %v4681, %v5419
        %v5421 = vpop.f32.mrb[0].mxu0
        %5422 = vmatprep.mubr.bf16.mxu0 0
        %5423 = vmatmul.mubr.bf16.gmra.mrb[0].mxu0 %v4884
        %v5424 = vpop.f32.mrb[0].mxu0
        %v5425 = vadd.f32 %v4681, %v5424
        %v5426 = vpop.f32.mrb[0].mxu0
        %v5427 = vpop.f32.mrb[0].mxu0
        %v5428 = vadd.f32 %v4681, %v5427
        %v5429 = vpop.f32.mrb[0].mxu0
        %5430 = vdwg.mxu0
        %v5439 = vcombine.high %v4648, %v4648
        %v5441 = vunpack.c.l.s4 1966171168
        %v5442 = vunpack.c.0.s8 %v5441
        %v5443 = vlaneseq
        %v5444 = vshrl.u32 %v5443, 7
        %v5445 = vsub.s32 %v5442, %v5444
        %v5446 = vrot.slane %v4648, %v5445
        %v5448 = vunpack.c.l.s4 1966171168
        %v5449 = vunpack.c.0.s8 %v5448
        %v5450 = vlaneseq
        %v5451 = vshrl.u32 %v5450, 7
        %v5452 = vsub.s32 %v5449, %v5451
        %v5453 = vrot.slane %v5439, %v5452
        %v5454 = vcombine.high %v5446, %v5446
        %v5455 = vcombine.high %v5453, %v5453
        %v5457 = vunpack.c.l.s4 1966171168
        %v5458 = vunpack.c.0.s8 %v5457
        %v5459 = vlaneseq
        %v5460 = vshrl.u32 %v5459, 7
        %v5461 = vsub.s32 %v5458, %v5460
        %v5462 = vrot.slane %v5446, %v5461
        %v5464 = vunpack.c.l.s4 1966171168
        %v5465 = vunpack.c.0.s8 %v5464
        %v5466 = vlaneseq
        %v5467 = vshrl.u32 %v5466, 7
        %v5468 = vsub.s32 %v5465, %v5467
        %v5469 = vrot.slane %v5453, %v5468
        %v5471 = vunpack.c.l.s4 1966171168
        %v5472 = vunpack.c.0.s8 %v5471
        %v5473 = vlaneseq
        %v5474 = vshrl.u32 %v5473, 7
        %v5475 = vsub.s32 %v5472, %v5474
        %v5476 = vrot.slane %v5454, %v5475
        %v5478 = vunpack.c.l.s4 1966171168
        %v5479 = vunpack.c.0.s8 %v5478
        %v5480 = vlaneseq
        %v5481 = vshrl.u32 %v5480, 7
        %v5482 = vsub.s32 %v5479, %v5481
        %v5483 = vrot.slane %v5455, %v5482
        %v5484 = vcombine.high %v5462, %v5462
        %v5485 = vcombine.high %v5469, %v5469
        %v5486 = vcombine.high %v5476, %v5476
        %v5487 = vcombine.high %v5483, %v5483
        %v5488 = vcombine.high %v4651, %v4651
        %v5490 = vunpack.c.l.s4 1966171168
        %v5491 = vunpack.c.0.s8 %v5490
        %v5492 = vlaneseq
        %v5493 = vshrl.u32 %v5492, 7
        %v5494 = vsub.s32 %v5491, %v5493
        %v5495 = vrot.slane %v4651, %v5494
        %v5497 = vunpack.c.l.s4 1966171168
        %v5498 = vunpack.c.0.s8 %v5497
        %v5499 = vlaneseq
        %v5500 = vshrl.u32 %v5499, 7
        %v5501 = vsub.s32 %v5498, %v5500
        %v5502 = vrot.slane %v5488, %v5501
        %v5503 = vcombine.high %v5495, %v5495
        %v5504 = vcombine.high %v5502, %v5502
        %v5506 = vunpack.c.l.s4 1966171168
        %v5507 = vunpack.c.0.s8 %v5506
        %v5508 = vlaneseq
        %v5509 = vshrl.u32 %v5508, 7
        %v5510 = vsub.s32 %v5507, %v5509
        %v5511 = vrot.slane %v5495, %v5510
        %v5513 = vunpack.c.l.s4 1966171168
        %v5514 = vunpack.c.0.s8 %v5513
        %v5515 = vlaneseq
        %v5516 = vshrl.u32 %v5515, 7
        %v5517 = vsub.s32 %v5514, %v5516
        %v5518 = vrot.slane %v5502, %v5517
        %v5520 = vunpack.c.l.s4 1966171168
        %v5521 = vunpack.c.0.s8 %v5520
        %v5522 = vlaneseq
        %v5523 = vshrl.u32 %v5522, 7
        %v5524 = vsub.s32 %v5521, %v5523
        %v5525 = vrot.slane %v5503, %v5524
        %v5527 = vunpack.c.l.s4 1966171168
        %v5528 = vunpack.c.0.s8 %v5527
        %v5529 = vlaneseq
        %v5530 = vshrl.u32 %v5529, 7
        %v5531 = vsub.s32 %v5528, %v5530
        %v5532 = vrot.slane %v5504, %v5531
        %v5533 = vcombine.high %v5511, %v5511
        %v5534 = vcombine.high %v5518, %v5518
        %v5535 = vcombine.high %v5525, %v5525
        %v5536 = vcombine.high %v5532, %v5532
        %v5537 = vcombine.high %v4656, %v4656
        %v5539 = vunpack.c.l.s4 1966171168
        %v5540 = vunpack.c.0.s8 %v5539
        %v5541 = vlaneseq
        %v5542 = vshrl.u32 %v5541, 7
        %v5543 = vsub.s32 %v5540, %v5542
        %v5544 = vrot.slane %v4656, %v5543
        %v5546 = vunpack.c.l.s4 1966171168
        %v5547 = vunpack.c.0.s8 %v5546
        %v5548 = vlaneseq
        %v5549 = vshrl.u32 %v5548, 7
        %v5550 = vsub.s32 %v5547, %v5549
        %v5551 = vrot.slane %v5537, %v5550
        %v5552 = vcombine.high %v5544, %v5544
        %v5553 = vcombine.high %v5551, %v5551
        %v5555 = vunpack.c.l.s4 1966171168
        %v5556 = vunpack.c.0.s8 %v5555
        %v5557 = vlaneseq
        %v5558 = vshrl.u32 %v5557, 7
        %v5559 = vsub.s32 %v5556, %v5558
        %v5560 = vrot.slane %v5544, %v5559
        %v5562 = vunpack.c.l.s4 1966171168
        %v5563 = vunpack.c.0.s8 %v5562
        %v5564 = vlaneseq
        %v5565 = vshrl.u32 %v5564, 7
        %v5566 = vsub.s32 %v5563, %v5565
        %v5567 = vrot.slane %v5551, %v5566
        %v5569 = vunpack.c.l.s4 1966171168
        %v5570 = vunpack.c.0.s8 %v5569
        %v5571 = vlaneseq
        %v5572 = vshrl.u32 %v5571, 7
        %v5573 = vsub.s32 %v5570, %v5572
        %v5574 = vrot.slane %v5552, %v5573
        %v5576 = vunpack.c.l.s4 1966171168
        %v5577 = vunpack.c.0.s8 %v5576
        %v5578 = vlaneseq
        %v5579 = vshrl.u32 %v5578, 7
        %v5580 = vsub.s32 %v5577, %v5579
        %v5581 = vrot.slane %v5553, %v5580
        %v5582 = vcombine.high %v5560, %v5560
        %v5583 = vcombine.high %v5567, %v5567
        %v5584 = vcombine.high %v5574, %v5574
        %v5585 = vcombine.high %v5581, %v5581
        %v5586 = vcombine.high %v4659, %v4659
        %v5588 = vunpack.c.l.s4 1966171168
        %v5589 = vunpack.c.0.s8 %v5588
        %v5590 = vlaneseq
        %v5591 = vshrl.u32 %v5590, 7
        %v5592 = vsub.s32 %v5589, %v5591
        %v5593 = vrot.slane %v4659, %v5592
        %v5595 = vunpack.c.l.s4 1966171168
        %v5596 = vunpack.c.0.s8 %v5595
        %v5597 = vlaneseq
        %v5598 = vshrl.u32 %v5597, 7
        %v5599 = vsub.s32 %v5596, %v5598
        %v5600 = vrot.slane %v5586, %v5599
        %v5601 = vcombine.high %v5593, %v5593
        %v5602 = vcombine.high %v5600, %v5600
        %v5604 = vunpack.c.l.s4 1966171168
        %v5605 = vunpack.c.0.s8 %v5604
        %v5606 = vlaneseq
        %v5607 = vshrl.u32 %v5606, 7
        %v5608 = vsub.s32 %v5605, %v5607
        %v5609 = vrot.slane %v5593, %v5608
        %v5611 = vunpack.c.l.s4 1966171168
        %v5612 = vunpack.c.0.s8 %v5611
        %v5613 = vlaneseq
        %v5614 = vshrl.u32 %v5613, 7
        %v5615 = vsub.s32 %v5612, %v5614
        %v5616 = vrot.slane %v5600, %v5615
        %v5618 = vunpack.c.l.s4 1966171168
        %v5619 = vunpack.c.0.s8 %v5618
        %v5620 = vlaneseq
        %v5621 = vshrl.u32 %v5620, 7
        %v5622 = vsub.s32 %v5619, %v5621
        %v5623 = vrot.slane %v5601, %v5622
        %v5625 = vunpack.c.l.s4 1966171168
        %v5626 = vunpack.c.0.s8 %v5625
        %v5627 = vlaneseq
        %v5628 = vshrl.u32 %v5627, 7
        %v5629 = vsub.s32 %v5626, %v5628
        %v5630 = vrot.slane %v5602, %v5629
        %v5631 = vcombine.high %v5609, %v5609
        %v5632 = vcombine.high %v5616, %v5616
        %v5633 = vcombine.high %v5623, %v5623
        %v5634 = vcombine.high %v5630, %v5630
        %v5635 = vcombine.high %v4664, %v4664
        %v5637 = vunpack.c.l.s4 1966171168
        %v5638 = vunpack.c.0.s8 %v5637
        %v5639 = vlaneseq
        %v5640 = vshrl.u32 %v5639, 7
        %v5641 = vsub.s32 %v5638, %v5640
        %v5642 = vrot.slane %v4664, %v5641
        %v5644 = vunpack.c.l.s4 1966171168
        %v5645 = vunpack.c.0.s8 %v5644
        %v5646 = vlaneseq
        %v5647 = vshrl.u32 %v5646, 7
        %v5648 = vsub.s32 %v5645, %v5647
        %v5649 = vrot.slane %v5635, %v5648
        %v5650 = vcombine.high %v5642, %v5642
        %v5651 = vcombine.high %v5649, %v5649
        %v5653 = vunpack.c.l.s4 1966171168
        %v5654 = vunpack.c.0.s8 %v5653
        %v5655 = vlaneseq
        %v5656 = vshrl.u32 %v5655, 7
        %v5657 = vsub.s32 %v5654, %v5656
        %v5658 = vrot.slane %v5642, %v5657
        %v5660 = vunpack.c.l.s4 1966171168
        %v5661 = vunpack.c.0.s8 %v5660
        %v5662 = vlaneseq
        %v5663 = vshrl.u32 %v5662, 7
        %v5664 = vsub.s32 %v5661, %v5663
        %v5665 = vrot.slane %v5649, %v5664
        %v5667 = vunpack.c.l.s4 1966171168
        %v5668 = vunpack.c.0.s8 %v5667
        %v5669 = vlaneseq
        %v5670 = vshrl.u32 %v5669, 7
        %v5671 = vsub.s32 %v5668, %v5670
        %v5672 = vrot.slane %v5650, %v5671
        %v5674 = vunpack.c.l.s4 1966171168
        %v5675 = vunpack.c.0.s8 %v5674
        %v5676 = vlaneseq
        %v5677 = vshrl.u32 %v5676, 7
        %v5678 = vsub.s32 %v5675, %v5677
        %v5679 = vrot.slane %v5651, %v5678
        %v5680 = vcombine.high %v5658, %v5658
        %v5681 = vcombine.high %v5665, %v5665
        %v5682 = vcombine.high %v5672, %v5672
        %v5683 = vcombine.high %v5679, %v5679
        %v5684 = vcombine.high %v4667, %v4667
        %v5686 = vunpack.c.l.s4 1966171168
        %v5687 = vunpack.c.0.s8 %v5686
        %v5688 = vlaneseq
        %v5689 = vshrl.u32 %v5688, 7
        %v5690 = vsub.s32 %v5687, %v5689
        %v5691 = vrot.slane %v4667, %v5690
        %v5693 = vunpack.c.l.s4 1966171168
        %v5694 = vunpack.c.0.s8 %v5693
        %v5695 = vlaneseq
        %v5696 = vshrl.u32 %v5695, 7
        %v5697 = vsub.s32 %v5694, %v5696
        %v5698 = vrot.slane %v5684, %v5697
        %v5699 = vcombine.high %v5691, %v5691
        %v5700 = vcombine.high %v5698, %v5698
        %v5702 = vunpack.c.l.s4 1966171168
        %v5703 = vunpack.c.0.s8 %v5702
        %v5704 = vlaneseq
        %v5705 = vshrl.u32 %v5704, 7
        %v5706 = vsub.s32 %v5703, %v5705
        %v5707 = vrot.slane %v5691, %v5706
        %v5709 = vunpack.c.l.s4 1966171168
        %v5710 = vunpack.c.0.s8 %v5709
        %v5711 = vlaneseq
        %v5712 = vshrl.u32 %v5711, 7
        %v5713 = vsub.s32 %v5710, %v5712
        %v5714 = vrot.slane %v5698, %v5713
        %v5716 = vunpack.c.l.s4 1966171168
        %v5717 = vunpack.c.0.s8 %v5716
        %v5718 = vlaneseq
        %v5719 = vshrl.u32 %v5718, 7
        %v5720 = vsub.s32 %v5717, %v5719
        %v5721 = vrot.slane %v5699, %v5720
        %v5723 = vunpack.c.l.s4 1966171168
        %v5724 = vunpack.c.0.s8 %v5723
        %v5725 = vlaneseq
        %v5726 = vshrl.u32 %v5725, 7
        %v5727 = vsub.s32 %v5724, %v5726
        %v5728 = vrot.slane %v5700, %v5727
        %v5729 = vcombine.high %v5707, %v5707
        %v5730 = vcombine.high %v5714, %v5714
        %v5731 = vcombine.high %v5721, %v5721
        %v5732 = vcombine.high %v5728, %v5728
        %v5733 = vcombine.high %v4672, %v4672
        %v5735 = vunpack.c.l.s4 1966171168
        %v5736 = vunpack.c.0.s8 %v5735
        %v5737 = vlaneseq
        %v5738 = vshrl.u32 %v5737, 7
        %v5739 = vsub.s32 %v5736, %v5738
        %v5740 = vrot.slane %v4672, %v5739
        %v5742 = vunpack.c.l.s4 1966171168
        %v5743 = vunpack.c.0.s8 %v5742
        %v5744 = vlaneseq
        %v5745 = vshrl.u32 %v5744, 7
        %v5746 = vsub.s32 %v5743, %v5745
        %v5747 = vrot.slane %v5733, %v5746
        %v5748 = vcombine.high %v5740, %v5740
        %v5749 = vcombine.high %v5747, %v5747
        %v5751 = vunpack.c.l.s4 1966171168
        %v5752 = vunpack.c.0.s8 %v5751
        %v5753 = vlaneseq
        %v5754 = vshrl.u32 %v5753, 7
        %v5755 = vsub.s32 %v5752, %v5754
        %v5756 = vrot.slane %v5740, %v5755
        %v5758 = vunpack.c.l.s4 1966171168
        %v5759 = vunpack.c.0.s8 %v5758
        %v5760 = vlaneseq
        %v5761 = vshrl.u32 %v5760, 7
        %v5762 = vsub.s32 %v5759, %v5761
        %v5763 = vrot.slane %v5747, %v5762
        %v5765 = vunpack.c.l.s4 1966171168
        %v5766 = vunpack.c.0.s8 %v5765
        %v5767 = vlaneseq
        %v5768 = vshrl.u32 %v5767, 7
        %v5769 = vsub.s32 %v5766, %v5768
        %v5770 = vrot.slane %v5748, %v5769
        %v5772 = vunpack.c.l.s4 1966171168
        %v5773 = vunpack.c.0.s8 %v5772
        %v5774 = vlaneseq
        %v5775 = vshrl.u32 %v5774, 7
        %v5776 = vsub.s32 %v5773, %v5775
        %v5777 = vrot.slane %v5749, %v5776
        %v5778 = vcombine.high %v5756, %v5756
        %v5779 = vcombine.high %v5763, %v5763
        %v5780 = vcombine.high %v5770, %v5770
        %v5781 = vcombine.high %v5777, %v5777
        %v5782 = vcombine.high %v4675, %v4675
        %v5784 = vunpack.c.l.s4 1966171168
        %v5785 = vunpack.c.0.s8 %v5784
        %v5786 = vlaneseq
        %v5787 = vshrl.u32 %v5786, 7
        %v5788 = vsub.s32 %v5785, %v5787
        %v5789 = vrot.slane %v4675, %v5788
        %v5791 = vunpack.c.l.s4 1966171168
        %v5792 = vunpack.c.0.s8 %v5791
        %v5793 = vlaneseq
        %v5794 = vshrl.u32 %v5793, 7
        %v5795 = vsub.s32 %v5792, %v5794
        %v5796 = vrot.slane %v5782, %v5795
        %v5797 = vcombine.high %v5789, %v5789
        %v5798 = vcombine.high %v5796, %v5796
        %v5800 = vunpack.c.l.s4 1966171168
        %v5801 = vunpack.c.0.s8 %v5800
        %v5802 = vlaneseq
        %v5803 = vshrl.u32 %v5802, 7
        %v5804 = vsub.s32 %v5801, %v5803
        %v5805 = vrot.slane %v5789, %v5804
        %v5807 = vunpack.c.l.s4 1966171168
        %v5808 = vunpack.c.0.s8 %v5807
        %v5809 = vlaneseq
        %v5810 = vshrl.u32 %v5809, 7
        %v5811 = vsub.s32 %v5808, %v5810
        %v5812 = vrot.slane %v5796, %v5811
        %v5814 = vunpack.c.l.s4 1966171168
        %v5815 = vunpack.c.0.s8 %v5814
        %v5816 = vlaneseq
        %v5817 = vshrl.u32 %v5816, 7
        %v5818 = vsub.s32 %v5815, %v5817
        %v5819 = vrot.slane %v5797, %v5818
        %v5821 = vunpack.c.l.s4 1966171168
        %v5822 = vunpack.c.0.s8 %v5821
        %v5823 = vlaneseq
        %v5824 = vshrl.u32 %v5823, 7
        %v5825 = vsub.s32 %v5822, %v5824
        %v5826 = vrot.slane %v5798, %v5825
        %v5827 = vcombine.high %v5805, %v5805
        %v5828 = vcombine.high %v5812, %v5812
        %v5829 = vcombine.high %v5819, %v5819
        %v5830 = vcombine.high %v5826, %v5826
        %v5831 = vlaneseq
        %v5832 = vshrl.u32 %v5831, 7
        %v5833 = vsub.s32 0, %v5832
        %v5834 = vrot.slane %v5462, %v5833
        %v5835 = vlaneseq
        %v5836 = vshrl.u32 %v5835, 7
        %v5837 = vsub.s32 0, %v5836
        %v5838 = vrot.slane %v5476, %v5837
        %v5839 = vlaneseq
        %v5840 = vshrl.u32 %v5839, 7
        %v5841 = vsub.s32 0, %v5840
        %v5842 = vrot.slane %v5484, %v5841
        %v5843 = vlaneseq
        %v5844 = vshrl.u32 %v5843, 7
        %v5845 = vsub.s32 0, %v5844
        %v5846 = vrot.slane %v5486, %v5845
        %v5847 = vlaneseq
        %v5848 = vshrl.u32 %v5847, 7
        %v5849 = vsub.s32 0, %v5848
        %v5850 = vrot.slane %v5469, %v5849
        %v5851 = vlaneseq
        %v5852 = vshrl.u32 %v5851, 7
        %v5853 = vsub.s32 0, %v5852
        %v5854 = vrot.slane %v5483, %v5853
        %v5855 = vlaneseq
        %v5856 = vshrl.u32 %v5855, 7
        %v5857 = vsub.s32 0, %v5856
        %v5858 = vrot.slane %v5485, %v5857
        %v5859 = vlaneseq
        %v5860 = vshrl.u32 %v5859, 7
        %v5861 = vsub.s32 0, %v5860
        %v5862 = vrot.slane %v5487, %v5861
        %v5863 = vlaneseq
        %v5864 = vshrl.u32 %v5863, 7
        %v5865 = vsub.s32 0, %v5864
        %v5866 = vrot.slane %v5511, %v5865
        %v5867 = vlaneseq
        %v5868 = vshrl.u32 %v5867, 7
        %v5869 = vsub.s32 0, %v5868
        %v5870 = vrot.slane %v5525, %v5869
        %v5871 = vlaneseq
        %v5872 = vshrl.u32 %v5871, 7
        %v5873 = vsub.s32 0, %v5872
        %v5874 = vrot.slane %v5533, %v5873
        %v5875 = vlaneseq
        %v5876 = vshrl.u32 %v5875, 7
        %v5877 = vsub.s32 0, %v5876
        %v5878 = vrot.slane %v5535, %v5877
        %v5879 = vlaneseq
        %v5880 = vshrl.u32 %v5879, 7
        %v5881 = vsub.s32 0, %v5880
        %v5882 = vrot.slane %v5518, %v5881
        %v5883 = vlaneseq
        %v5884 = vshrl.u32 %v5883, 7
        %v5885 = vsub.s32 0, %v5884
        %v5886 = vrot.slane %v5532, %v5885
        %v5887 = vlaneseq
        %v5888 = vshrl.u32 %v5887, 7
        %v5889 = vsub.s32 0, %v5888
        %v5890 = vrot.slane %v5534, %v5889
        %v5891 = vlaneseq
        %v5892 = vshrl.u32 %v5891, 7
        %v5893 = vsub.s32 0, %v5892
        %v5894 = vrot.slane %v5536, %v5893
        %v5895 = vlaneseq
        %v5896 = vshrl.u32 %v5895, 7
        %v5897 = vsub.s32 0, %v5896
        %v5898 = vrot.slane %v5560, %v5897
        %v5899 = vlaneseq
        %v5900 = vshrl.u32 %v5899, 7
        %v5901 = vsub.s32 0, %v5900
        %v5902 = vrot.slane %v5574, %v5901
        %v5903 = vlaneseq
        %v5904 = vshrl.u32 %v5903, 7
        %v5905 = vsub.s32 0, %v5904
        %v5906 = vrot.slane %v5582, %v5905
        %v5907 = vlaneseq
        %v5908 = vshrl.u32 %v5907, 7
        %v5909 = vsub.s32 0, %v5908
        %v5910 = vrot.slane %v5584, %v5909
        %v5911 = vlaneseq
        %v5912 = vshrl.u32 %v5911, 7
        %v5913 = vsub.s32 0, %v5912
        %v5914 = vrot.slane %v5567, %v5913
        %v5915 = vlaneseq
        %v5916 = vshrl.u32 %v5915, 7
        %v5917 = vsub.s32 0, %v5916
        %v5918 = vrot.slane %v5581, %v5917
        %v5919 = vlaneseq
        %v5920 = vshrl.u32 %v5919, 7
        %v5921 = vsub.s32 0, %v5920
        %v5922 = vrot.slane %v5583, %v5921
        %v5923 = vlaneseq
        %v5924 = vshrl.u32 %v5923, 7
        %v5925 = vsub.s32 0, %v5924
        %v5926 = vrot.slane %v5585, %v5925
        %v5927 = vlaneseq
        %v5928 = vshrl.u32 %v5927, 7
        %v5929 = vsub.s32 0, %v5928
        %v5930 = vrot.slane %v5609, %v5929
        %v5931 = vlaneseq
        %v5932 = vshrl.u32 %v5931, 7
        %v5933 = vsub.s32 0, %v5932
        %v5934 = vrot.slane %v5623, %v5933
        %v5935 = vlaneseq
        %v5936 = vshrl.u32 %v5935, 7
        %v5937 = vsub.s32 0, %v5936
        %v5938 = vrot.slane %v5631, %v5937
        %v5939 = vlaneseq
        %v5940 = vshrl.u32 %v5939, 7
        %v5941 = vsub.s32 0, %v5940
        %v5942 = vrot.slane %v5633, %v5941
        %v5943 = vlaneseq
        %v5944 = vshrl.u32 %v5943, 7
        %v5945 = vsub.s32 0, %v5944
        %v5946 = vrot.slane %v5616, %v5945
        %v5947 = vlaneseq
        %v5948 = vshrl.u32 %v5947, 7
        %v5949 = vsub.s32 0, %v5948
        %v5950 = vrot.slane %v5630, %v5949
        %v5951 = vlaneseq
        %v5952 = vshrl.u32 %v5951, 7
        %v5953 = vsub.s32 0, %v5952
        %v5954 = vrot.slane %v5632, %v5953
        %v5955 = vlaneseq
        %v5956 = vshrl.u32 %v5955, 7
        %v5957 = vsub.s32 0, %v5956
        %v5958 = vrot.slane %v5634, %v5957
        %v5959 = vlaneseq
        %v5960 = vshrl.u32 %v5959, 7
        %v5961 = vsub.s32 0, %v5960
        %v5962 = vrot.slane %v5658, %v5961
        %v5963 = vlaneseq
        %v5964 = vshrl.u32 %v5963, 7
        %v5965 = vsub.s32 0, %v5964
        %v5966 = vrot.slane %v5672, %v5965
        %v5967 = vlaneseq
        %v5968 = vshrl.u32 %v5967, 7
        %v5969 = vsub.s32 0, %v5968
        %v5970 = vrot.slane %v5680, %v5969
        %v5971 = vlaneseq
        %v5972 = vshrl.u32 %v5971, 7
        %v5973 = vsub.s32 0, %v5972
        %v5974 = vrot.slane %v5682, %v5973
        %v5975 = vlaneseq
        %v5976 = vshrl.u32 %v5975, 7
        %v5977 = vsub.s32 0, %v5976
        %v5978 = vrot.slane %v5665, %v5977
        %v5979 = vlaneseq
        %v5980 = vshrl.u32 %v5979, 7
        %v5981 = vsub.s32 0, %v5980
        %v5982 = vrot.slane %v5679, %v5981
        %v5983 = vlaneseq
        %v5984 = vshrl.u32 %v5983, 7
        %v5985 = vsub.s32 0, %v5984
        %v5986 = vrot.slane %v5681, %v5985
        %v5987 = vlaneseq
        %v5988 = vshrl.u32 %v5987, 7
        %v5989 = vsub.s32 0, %v5988
        %v5990 = vrot.slane %v5683, %v5989
        %v5991 = vlaneseq
        %v5992 = vshrl.u32 %v5991, 7
        %v5993 = vsub.s32 0, %v5992
        %v5994 = vrot.slane %v5707, %v5993
        %v5995 = vlaneseq
        %v5996 = vshrl.u32 %v5995, 7
        %v5997 = vsub.s32 0, %v5996
        %v5998 = vrot.slane %v5721, %v5997
        %v5999 = vlaneseq
        %v6000 = vshrl.u32 %v5999, 7
        %v6001 = vsub.s32 0, %v6000
        %v6002 = vrot.slane %v5729, %v6001
        %v6003 = vlaneseq
        %v6004 = vshrl.u32 %v6003, 7
        %v6005 = vsub.s32 0, %v6004
        %v6006 = vrot.slane %v5731, %v6005
        %v6007 = vlaneseq
        %v6008 = vshrl.u32 %v6007, 7
        %v6009 = vsub.s32 0, %v6008
        %v6010 = vrot.slane %v5714, %v6009
        %v6011 = vlaneseq
        %v6012 = vshrl.u32 %v6011, 7
        %v6013 = vsub.s32 0, %v6012
        %v6014 = vrot.slane %v5728, %v6013
        %v6015 = vlaneseq
        %v6016 = vshrl.u32 %v6015, 7
        %v6017 = vsub.s32 0, %v6016
        %v6018 = vrot.slane %v5730, %v6017
        %v6019 = vlaneseq
        %v6020 = vshrl.u32 %v6019, 7
        %v6021 = vsub.s32 0, %v6020
        %v6022 = vrot.slane %v5732, %v6021
        %v6023 = vlaneseq
        %v6024 = vshrl.u32 %v6023, 7
        %v6025 = vsub.s32 0, %v6024
        %v6026 = vrot.slane %v5756, %v6025
        %v6027 = vlaneseq
        %v6028 = vshrl.u32 %v6027, 7
        %v6029 = vsub.s32 0, %v6028
        %v6030 = vrot.slane %v5770, %v6029
        %v6031 = vlaneseq
        %v6032 = vshrl.u32 %v6031, 7
        %v6033 = vsub.s32 0, %v6032
        %v6034 = vrot.slane %v5778, %v6033
        %v6035 = vlaneseq
        %v6036 = vshrl.u32 %v6035, 7
        %v6037 = vsub.s32 0, %v6036
        %v6038 = vrot.slane %v5780, %v6037
        %v6039 = vlaneseq
        %v6040 = vshrl.u32 %v6039, 7
        %v6041 = vsub.s32 0, %v6040
        %v6042 = vrot.slane %v5763, %v6041
        %v6043 = vlaneseq
        %v6044 = vshrl.u32 %v6043, 7
        %v6045 = vsub.s32 0, %v6044
        %v6046 = vrot.slane %v5777, %v6045
        %v6047 = vlaneseq
        %v6048 = vshrl.u32 %v6047, 7
        %v6049 = vsub.s32 0, %v6048
        %v6050 = vrot.slane %v5779, %v6049
        %v6051 = vlaneseq
        %v6052 = vshrl.u32 %v6051, 7
        %v6053 = vsub.s32 0, %v6052
        %v6054 = vrot.slane %v5781, %v6053
        %v6055 = vlaneseq
        %v6056 = vshrl.u32 %v6055, 7
        %v6057 = vsub.s32 0, %v6056
        %v6058 = vrot.slane %v5805, %v6057
        %v6059 = vlaneseq
        %v6060 = vshrl.u32 %v6059, 7
        %v6061 = vsub.s32 0, %v6060
        %v6062 = vrot.slane %v5819, %v6061
        %v6063 = vlaneseq
        %v6064 = vshrl.u32 %v6063, 7
        %v6065 = vsub.s32 0, %v6064
        %v6066 = vrot.slane %v5827, %v6065
        %v6067 = vlaneseq
        %v6068 = vshrl.u32 %v6067, 7
        %v6069 = vsub.s32 0, %v6068
        %v6070 = vrot.slane %v5829, %v6069
        %v6071 = vlaneseq
        %v6072 = vshrl.u32 %v6071, 7
        %v6073 = vsub.s32 0, %v6072
        %v6074 = vrot.slane %v5812, %v6073
        %v6075 = vlaneseq
        %v6076 = vshrl.u32 %v6075, 7
        %v6077 = vsub.s32 0, %v6076
        %v6078 = vrot.slane %v5826, %v6077
        %v6079 = vlaneseq
        %v6080 = vshrl.u32 %v6079, 7
        %v6081 = vsub.s32 0, %v6080
        %v6082 = vrot.slane %v5828, %v6081
        %v6083 = vlaneseq
        %v6084 = vshrl.u32 %v6083, 7
        %v6085 = vsub.s32 0, %v6084
        %v6086 = vrot.slane %v5830, %v6085
        %v6151 = vadd.f32 %v4921, %v5834
        %v6152 = vadd.f32 %v4924, %v5834
        %v6153 = vadd.f32 %v4929, %v5838
        %v6154 = vadd.f32 %v4932, %v5838
        %v6155 = vadd.f32 %v4937, %v5842
        %v6156 = vadd.f32 %v4940, %v5842
        %v6157 = vadd.f32 %v4945, %v5846
        %v6158 = vadd.f32 %v4948, %v5846
        %v6159 = vadd.f32 %v4953, %v5850
        %v6160 = vadd.f32 %v4956, %v5850
        %v6161 = vadd.f32 %v4961, %v5854
        %v6162 = vadd.f32 %v4964, %v5854
        %v6163 = vadd.f32 %v4969, %v5858
        %v6164 = vadd.f32 %v4972, %v5858
        %v6165 = vadd.f32 %v4977, %v5862
        %v6166 = vadd.f32 %v4980, %v5862
        %v6167 = vadd.f32 %v4985, %v5866
        %v6168 = vadd.f32 %v4988, %v5866
        %v6169 = vadd.f32 %v4993, %v5870
        %v6170 = vadd.f32 %v4996, %v5870
        %v6171 = vadd.f32 %v5001, %v5874
        %v6172 = vadd.f32 %v5004, %v5874
        %v6173 = vadd.f32 %v5009, %v5878
        %v6174 = vadd.f32 %v5012, %v5878
        %v6175 = vadd.f32 %v5017, %v5882
        %v6176 = vadd.f32 %v5020, %v5882
        %v6177 = vadd.f32 %v5025, %v5886
        %v6178 = vadd.f32 %v5028, %v5886
        %v6179 = vadd.f32 %v5033, %v5890
        %v6180 = vadd.f32 %v5036, %v5890
        %v6181 = vadd.f32 %v5041, %v5894
        %v6182 = vadd.f32 %v5044, %v5894
        %v6183 = vadd.f32 %v5049, %v5898
        %v6184 = vadd.f32 %v5052, %v5898
        %v6185 = vadd.f32 %v5057, %v5902
        %v6186 = vadd.f32 %v5060, %v5902
        %v6187 = vadd.f32 %v5065, %v5906
        %v6188 = vadd.f32 %v5068, %v5906
        %v6189 = vadd.f32 %v5073, %v5910
        %v6190 = vadd.f32 %v5076, %v5910
        %v6191 = vadd.f32 %v5081, %v5914
        %v6192 = vadd.f32 %v5084, %v5914
        %v6193 = vadd.f32 %v5089, %v5918
        %v6194 = vadd.f32 %v5092, %v5918
        %v6195 = vadd.f32 %v5097, %v5922
        %v6196 = vadd.f32 %v5100, %v5922
        %v6197 = vadd.f32 %v5105, %v5926
        %v6198 = vadd.f32 %v5108, %v5926
        %v6199 = vadd.f32 %v5113, %v5930
        %v6200 = vadd.f32 %v5116, %v5930
        %v6201 = vadd.f32 %v5121, %v5934
        %v6202 = vadd.f32 %v5124, %v5934
        %v6203 = vadd.f32 %v5129, %v5938
        %v6204 = vadd.f32 %v5132, %v5938
        %v6205 = vadd.f32 %v5137, %v5942
        %v6206 = vadd.f32 %v5140, %v5942
        %v6207 = vadd.f32 %v5145, %v5946
        %v6208 = vadd.f32 %v5148, %v5946
        %v6209 = vadd.f32 %v5153, %v5950
        %v6210 = vadd.f32 %v5156, %v5950
        %v6211 = vadd.f32 %v5161, %v5954
        %v6212 = vadd.f32 %v5164, %v5954
        %v6213 = vadd.f32 %v5169, %v5958
        %v6214 = vadd.f32 %v5172, %v5958
        %v6215 = vadd.f32 %v5177, %v5962
        %v6216 = vadd.f32 %v5180, %v5962
        %v6217 = vadd.f32 %v5185, %v5966
        %v6218 = vadd.f32 %v5188, %v5966
        %v6219 = vadd.f32 %v5193, %v5970
        %v6220 = vadd.f32 %v5196, %v5970
        %v6221 = vadd.f32 %v5201, %v5974
        %v6222 = vadd.f32 %v5204, %v5974
        %v6223 = vadd.f32 %v5209, %v5978
        %v6224 = vadd.f32 %v5212, %v5978
        %v6225 = vadd.f32 %v5217, %v5982
        %v6226 = vadd.f32 %v5220, %v5982
        %v6227 = vadd.f32 %v5225, %v5986
        %v6228 = vadd.f32 %v5228, %v5986
        %v6229 = vadd.f32 %v5233, %v5990
        %v6230 = vadd.f32 %v5236, %v5990
        %v6231 = vadd.f32 %v5241, %v5994
        %v6232 = vadd.f32 %v5244, %v5994
        %v6233 = vadd.f32 %v5249, %v5998
        %v6234 = vadd.f32 %v5252, %v5998
        %v6235 = vadd.f32 %v5257, %v6002
        %v6236 = vadd.f32 %v5260, %v6002
        %v6237 = vadd.f32 %v5265, %v6006
        %v6238 = vadd.f32 %v5268, %v6006
        %v6239 = vadd.f32 %v5273, %v6010
        %v6240 = vadd.f32 %v5276, %v6010
        %v6241 = vadd.f32 %v5281, %v6014
        %v6242 = vadd.f32 %v5284, %v6014
        %v6243 = vadd.f32 %v5289, %v6018
        %v6244 = vadd.f32 %v5292, %v6018
        %v6245 = vadd.f32 %v5297, %v6022
        %v6246 = vadd.f32 %v5300, %v6022
        %v6247 = vadd.f32 %v5305, %v6026
        %v6248 = vadd.f32 %v5308, %v6026
        %v6249 = vadd.f32 %v5313, %v6030
        %v6250 = vadd.f32 %v5316, %v6030
        %v6251 = vadd.f32 %v5321, %v6034
        %v6252 = vadd.f32 %v5324, %v6034
        %v6253 = vadd.f32 %v5329, %v6038
        %v6254 = vadd.f32 %v5332, %v6038
        %v6255 = vadd.f32 %v5337, %v6042
        %v6256 = vadd.f32 %v5340, %v6042
        %v6257 = vadd.f32 %v5345, %v6046
        %v6258 = vadd.f32 %v5348, %v6046
        %v6259 = vadd.f32 %v5353, %v6050
        %v6260 = vadd.f32 %v5356, %v6050
        %v6261 = vadd.f32 %v5361, %v6054
        %v6262 = vadd.f32 %v5364, %v6054
        %v6263 = vadd.f32 %v5369, %v6058
        %v6264 = vadd.f32 %v5372, %v6058
        %v6265 = vadd.f32 %v5377, %v6062
        %v6266 = vadd.f32 %v5380, %v6062
        %v6267 = vadd.f32 %v5385, %v6066
        %v6268 = vadd.f32 %v5388, %v6066
        %v6269 = vadd.f32 %v5393, %v6070
        %v6270 = vadd.f32 %v5396, %v6070
        %v6271 = vadd.f32 %v5401, %v6074
        %v6272 = vadd.f32 %v5404, %v6074
        %v6273 = vadd.f32 %v5409, %v6078
        %v6274 = vadd.f32 %v5412, %v6078
        %v6275 = vadd.f32 %v5417, %v6082
        %v6276 = vadd.f32 %v5420, %v6082
        %v6277 = vadd.f32 %v5425, %v6086
        %v6278 = vadd.f32 %v5428, %v6086
        %v6279 = vmax.f32 %v6151, 0.0
        %v6280 = vmax.f32 %v6152, 0.0
        %v6281 = vmax.f32 %v6153, 0.0
        %v6282 = vmax.f32 %v6154, 0.0
        %v6283 = vmax.f32 %v6155, 0.0
        %v6284 = vmax.f32 %v6156, 0.0
        %v6285 = vmax.f32 %v6157, 0.0
        %v6286 = vmax.f32 %v6158, 0.0
        %v6287 = vmax.f32 %v6159, 0.0
        %v6288 = vmax.f32 %v6160, 0.0
        %v6289 = vmax.f32 %v6161, 0.0
        %v6290 = vmax.f32 %v6162, 0.0
        %v6291 = vmax.f32 %v6163, 0.0
        %v6292 = vmax.f32 %v6164, 0.0
        %v6293 = vmax.f32 %v6165, 0.0
        %v6294 = vmax.f32 %v6166, 0.0
        %v6295 = vmax.f32 %v6167, 0.0
        %v6296 = vmax.f32 %v6168, 0.0
        %v6297 = vmax.f32 %v6169, 0.0
        %v6298 = vmax.f32 %v6170, 0.0
        %v6299 = vmax.f32 %v6171, 0.0
        %v6300 = vmax.f32 %v6172, 0.0
        %v6301 = vmax.f32 %v6173, 0.0
        %v6302 = vmax.f32 %v6174, 0.0
        %v6303 = vmax.f32 %v6175, 0.0
        %v6304 = vmax.f32 %v6176, 0.0
        %v6305 = vmax.f32 %v6177, 0.0
        %v6306 = vmax.f32 %v6178, 0.0
        %v6307 = vmax.f32 %v6179, 0.0
        %v6308 = vmax.f32 %v6180, 0.0
        %v6309 = vmax.f32 %v6181, 0.0
        %v6310 = vmax.f32 %v6182, 0.0
        %v6311 = vmax.f32 %v6183, 0.0
        %v6312 = vmax.f32 %v6184, 0.0
        %v6313 = vmax.f32 %v6185, 0.0
        %v6314 = vmax.f32 %v6186, 0.0
        %v6315 = vmax.f32 %v6187, 0.0
        %v6316 = vmax.f32 %v6188, 0.0
        %v6317 = vmax.f32 %v6189, 0.0
        %v6318 = vmax.f32 %v6190, 0.0
        %v6319 = vmax.f32 %v6191, 0.0
        %v6320 = vmax.f32 %v6192, 0.0
        %v6321 = vmax.f32 %v6193, 0.0
        %v6322 = vmax.f32 %v6194, 0.0
        %v6323 = vmax.f32 %v6195, 0.0
        %v6324 = vmax.f32 %v6196, 0.0
        %v6325 = vmax.f32 %v6197, 0.0
        %v6326 = vmax.f32 %v6198, 0.0
        %v6327 = vmax.f32 %v6199, 0.0
        %v6328 = vmax.f32 %v6200, 0.0
        %v6329 = vmax.f32 %v6201, 0.0
        %v6330 = vmax.f32 %v6202, 0.0
        %v6331 = vmax.f32 %v6203, 0.0
        %v6332 = vmax.f32 %v6204, 0.0
        %v6333 = vmax.f32 %v6205, 0.0
        %v6334 = vmax.f32 %v6206, 0.0
        %v6335 = vmax.f32 %v6207, 0.0
        %v6336 = vmax.f32 %v6208, 0.0
        %v6337 = vmax.f32 %v6209, 0.0
        %v6338 = vmax.f32 %v6210, 0.0
        %v6339 = vmax.f32 %v6211, 0.0
        %v6340 = vmax.f32 %v6212, 0.0
        %v6341 = vmax.f32 %v6213, 0.0
        %v6342 = vmax.f32 %v6214, 0.0
        %v6343 = vmax.f32 %v6215, 0.0
        %v6344 = vmax.f32 %v6216, 0.0
        %v6345 = vmax.f32 %v6217, 0.0
        %v6346 = vmax.f32 %v6218, 0.0
        %v6347 = vmax.f32 %v6219, 0.0
        %v6348 = vmax.f32 %v6220, 0.0
        %v6349 = vmax.f32 %v6221, 0.0
        %v6350 = vmax.f32 %v6222, 0.0
        %v6351 = vmax.f32 %v6223, 0.0
        %v6352 = vmax.f32 %v6224, 0.0
        %v6353 = vmax.f32 %v6225, 0.0
        %v6354 = vmax.f32 %v6226, 0.0
        %v6355 = vmax.f32 %v6227, 0.0
        %v6356 = vmax.f32 %v6228, 0.0
        %v6357 = vmax.f32 %v6229, 0.0
        %v6358 = vmax.f32 %v6230, 0.0
        %v6359 = vmax.f32 %v6231, 0.0
        %v6360 = vmax.f32 %v6232, 0.0
        %v6361 = vmax.f32 %v6233, 0.0
        %v6362 = vmax.f32 %v6234, 0.0
        %v6363 = vmax.f32 %v6235, 0.0
        %v6364 = vmax.f32 %v6236, 0.0
        %v6365 = vmax.f32 %v6237, 0.0
        %v6366 = vmax.f32 %v6238, 0.0
        %v6367 = vmax.f32 %v6239, 0.0
        %v6368 = vmax.f32 %v6240, 0.0
        %v6369 = vmax.f32 %v6241, 0.0
        %v6370 = vmax.f32 %v6242, 0.0
        %v6371 = vmax.f32 %v6243, 0.0
        %v6372 = vmax.f32 %v6244, 0.0
        %v6373 = vmax.f32 %v6245, 0.0
        %v6374 = vmax.f32 %v6246, 0.0
        %v6375 = vmax.f32 %v6247, 0.0
        %v6376 = vmax.f32 %v6248, 0.0
        %v6377 = vmax.f32 %v6249, 0.0
        %v6378 = vmax.f32 %v6250, 0.0
        %v6379 = vmax.f32 %v6251, 0.0
        %v6380 = vmax.f32 %v6252, 0.0
        %v6381 = vmax.f32 %v6253, 0.0
        %v6382 = vmax.f32 %v6254, 0.0
        %v6383 = vmax.f32 %v6255, 0.0
        %v6384 = vmax.f32 %v6256, 0.0
        %v6385 = vmax.f32 %v6257, 0.0
        %v6386 = vmax.f32 %v6258, 0.0
        %v6387 = vmax.f32 %v6259, 0.0
        %v6388 = vmax.f32 %v6260, 0.0
        %v6389 = vmax.f32 %v6261, 0.0
        %v6390 = vmax.f32 %v6262, 0.0
        %v6391 = vmax.f32 %v6263, 0.0
        %v6392 = vmax.f32 %v6264, 0.0
        %v6393 = vmax.f32 %v6265, 0.0
        %v6394 = vmax.f32 %v6266, 0.0
        %v6395 = vmax.f32 %v6267, 0.0
        %v6396 = vmax.f32 %v6268, 0.0
        %v6397 = vmax.f32 %v6269, 0.0
        %v6398 = vmax.f32 %v6270, 0.0
        %v6399 = vmax.f32 %v6271, 0.0
        %v6400 = vmax.f32 %v6272, 0.0
        %v6401 = vmax.f32 %v6273, 0.0
        %v6402 = vmax.f32 %v6274, 0.0
        %v6403 = vmax.f32 %v6275, 0.0
        %v6404 = vmax.f32 %v6276, 0.0
        %v6405 = vmax.f32 %v6277, 0.0
        %v6406 = vmax.f32 %v6278, 0.0
        %v6407 = vpack.c.bf16 %v6280, %v6279
        %v6408 = vpack.c.bf16 %v6282, %v6281
        %v6409 = vpack.c.bf16 %v6284, %v6283
        %v6410 = vpack.c.bf16 %v6286, %v6285
        %v6411 = vpack.c.bf16 %v6288, %v6287
        %v6412 = vpack.c.bf16 %v6290, %v6289
        %v6413 = vpack.c.bf16 %v6292, %v6291
        %v6414 = vpack.c.bf16 %v6294, %v6293
        %v6415 = vpack.c.bf16 %v6296, %v6295
        %v6416 = vpack.c.bf16 %v6298, %v6297
        %v6417 = vpack.c.bf16 %v6300, %v6299
        %v6418 = vpack.c.bf16 %v6302, %v6301
        %v6419 = vpack.c.bf16 %v6304, %v6303
        %v6420 = vpack.c.bf16 %v6306, %v6305
        %v6421 = vpack.c.bf16 %v6308, %v6307
        %v6422 = vpack.c.bf16 %v6310, %v6309
        %v6423 = vpack.c.bf16 %v6312, %v6311
        %v6424 = vpack.c.bf16 %v6314, %v6313
        %v6425 = vpack.c.bf16 %v6316, %v6315
        %v6426 = vpack.c.bf16 %v6318, %v6317
        %v6427 = vpack.c.bf16 %v6320, %v6319
        %v6428 = vpack.c.bf16 %v6322, %v6321
        %v6429 = vpack.c.bf16 %v6324, %v6323
        %v6430 = vpack.c.bf16 %v6326, %v6325
        %v6431 = vpack.c.bf16 %v6328, %v6327
        %v6432 = vpack.c.bf16 %v6330, %v6329
        %v6433 = vpack.c.bf16 %v6332, %v6331
        %v6434 = vpack.c.bf16 %v6334, %v6333
        %v6435 = vpack.c.bf16 %v6336, %v6335
        %v6436 = vpack.c.bf16 %v6338, %v6337
        %v6437 = vpack.c.bf16 %v6340, %v6339
        %v6438 = vpack.c.bf16 %v6342, %v6341
        %v6439 = vpack.c.bf16 %v6344, %v6343
        %v6440 = vpack.c.bf16 %v6346, %v6345
        %v6441 = vpack.c.bf16 %v6348, %v6347
        %v6442 = vpack.c.bf16 %v6350, %v6349
        %v6443 = vpack.c.bf16 %v6352, %v6351
        %v6444 = vpack.c.bf16 %v6354, %v6353
        %v6445 = vpack.c.bf16 %v6356, %v6355
        %v6446 = vpack.c.bf16 %v6358, %v6357
        %v6447 = vpack.c.bf16 %v6360, %v6359
        %v6448 = vpack.c.bf16 %v6362, %v6361
        %v6449 = vpack.c.bf16 %v6364, %v6363
        %v6450 = vpack.c.bf16 %v6366, %v6365
        %v6451 = vpack.c.bf16 %v6368, %v6367
        %v6452 = vpack.c.bf16 %v6370, %v6369
        %v6453 = vpack.c.bf16 %v6372, %v6371
        %v6454 = vpack.c.bf16 %v6374, %v6373
        %v6455 = vpack.c.bf16 %v6376, %v6375
        %v6456 = vpack.c.bf16 %v6378, %v6377
        %v6457 = vpack.c.bf16 %v6380, %v6379
        %v6458 = vpack.c.bf16 %v6382, %v6381
        %v6459 = vpack.c.bf16 %v6384, %v6383
        %v6460 = vpack.c.bf16 %v6386, %v6385
        %v6461 = vpack.c.bf16 %v6388, %v6387
        %v6462 = vpack.c.bf16 %v6390, %v6389
        %v6463 = vpack.c.bf16 %v6392, %v6391
        %v6464 = vpack.c.bf16 %v6394, %v6393
        %v6465 = vpack.c.bf16 %v6396, %v6395
        %v6466 = vpack.c.bf16 %v6398, %v6397
        %v6467 = vpack.c.bf16 %v6400, %v6399
        %v6468 = vpack.c.bf16 %v6402, %v6401
        %v6469 = vpack.c.bf16 %v6404, %v6403
        %v6470 = vpack.c.bf16 %v6406, %v6405
        %v6471 = vlaneseq
        %v6472 = vshrl.u32 %v6471, 7
        %v6473 = vsub.s32 0, %v6472
        %v6474 = vrot.slane %v1707, %v6473
        %v6479 = vunpack.c.l.b16 %v1722
        %v6480 = vunpack.c.l.b16 %v1723
        %v6481 = vunpack.c.l.b16 %v1724
        %v6482 = vunpack.c.l.b16 %v1725
        %v6483 = vpack.c.b16 %v6480, %v6479
        %v6484 = vpack.c.b16 %v6482, %v6481
        %v6488 = vsel %vm3689, %v6407, 0
        %v6491 = vsel %vm3689, %v6408, 0
        %v6494 = vsel %vm3689, %v6409, 0
        %v6497 = vsel %vm3689, %v6410, 0
        %v6500 = vsel %vm3689, %v6411, 0
        %v6503 = vsel %vm3689, %v6412, 0
        %v6506 = vsel %vm3689, %v6413, 0
        %v6509 = vsel %vm3689, %v6414, 0
        %v6512 = vsel %vm3689, %v6415, 0
        %v6515 = vsel %vm3689, %v6416, 0
        %v6518 = vsel %vm3689, %v6417, 0
        %v6521 = vsel %vm3689, %v6418, 0
        %v6524 = vsel %vm3689, %v6419, 0
        %v6527 = vsel %vm3689, %v6420, 0
        %v6530 = vsel %vm3689, %v6421, 0
        %v6533 = vsel %vm3689, %v6422, 0
        %v6536 = vsel %vm3689, %v6423, 0
        %v6539 = vsel %vm3689, %v6424, 0
        %v6542 = vsel %vm3689, %v6425, 0
        %v6545 = vsel %vm3689, %v6426, 0
        %v6548 = vsel %vm3689, %v6427, 0
        %v6551 = vsel %vm3689, %v6428, 0
        %v6554 = vsel %vm3689, %v6429, 0
        %v6557 = vsel %vm3689, %v6430, 0
        %v6560 = vsel %vm3689, %v6431, 0
        %v6563 = vsel %vm3689, %v6432, 0
        %v6566 = vsel %vm3689, %v6433, 0
        %v6569 = vsel %vm3689, %v6434, 0
        %v6572 = vsel %vm3689, %v6435, 0
        %v6575 = vsel %vm3689, %v6436, 0
        %v6578 = vsel %vm3689, %v6437, 0
        %v6581 = vsel %vm3689, %v6438, 0
        %v6584 = vsel %vm3689, %v6439, 0
        %v6587 = vsel %vm3689, %v6440, 0
        %v6590 = vsel %vm3689, %v6441, 0
        %v6593 = vsel %vm3689, %v6442, 0
        %v6596 = vsel %vm3689, %v6443, 0
        %v6599 = vsel %vm3689, %v6444, 0
        %v6602 = vsel %vm3689, %v6445, 0
        %v6605 = vsel %vm3689, %v6446, 0
        %v6608 = vsel %vm3689, %v6447, 0
        %v6611 = vsel %vm3689, %v6448, 0
        %v6614 = vsel %vm3689, %v6449, 0
        %v6617 = vsel %vm3689, %v6450, 0
        %v6620 = vsel %vm3689, %v6451, 0
        %v6623 = vsel %vm3689, %v6452, 0
        %v6626 = vsel %vm3689, %v6453, 0
        %v6629 = vsel %vm3689, %v6454, 0
        %v6632 = vsel %vm3689, %v6455, 0
        %v6635 = vsel %vm3689, %v6456, 0
        %v6638 = vsel %vm3689, %v6457, 0
        %v6641 = vsel %vm3689, %v6458, 0
        %v6644 = vsel %vm3689, %v6459, 0
        %v6647 = vsel %vm3689, %v6460, 0
        %v6650 = vsel %vm3689, %v6461, 0
        %v6653 = vsel %vm3689, %v6462, 0
        %v6656 = vsel %vm3689, %v6463, 0
        %v6659 = vsel %vm3689, %v6464, 0
        %v6662 = vsel %vm3689, %v6465, 0
        %v6665 = vsel %vm3689, %v6466, 0
        %v6668 = vsel %vm3689, %v6467, 0
        %v6671 = vsel %vm3689, %v6468, 0
        %v6674 = vsel %vm3689, %v6469, 0
        %v6677 = vsel %vm3689, %v6470, 0
        %6679 = vmatprep.subr.bf16.mxu0 0
        %6680 = vmatpush1.bf16.msra.mxu0 %v6483
        %6681 = vmatprep.subr.bf16.mxu0 0
        %6682 = vmatpush1.bf16.msra.mxu0 %v6484
        %6683 = vmatprep.subr.bf16.mxu0 0
        %6684 = vmatpush1.bf16.msra.mxu0 0
        %6685 = vmatprep.subr.bf16.mxu0 0
        %6686 = vmatpush1.bf16.msra.mxu0 0
        %6687 = vmatprep.subr.bf16.mxu0 0
        %6688 = vmatpush1.bf16.msra.mxu0 0
        %6689 = vmatprep.subr.bf16.mxu0 0
        %6690 = vmatpush1.bf16.msra.mxu0 0
        %6691 = vmatprep.subr.bf16.mxu0 0
        %6692 = vmatpush1.bf16.msra.mxu0 0
        %6693 = vmatprep.subr.bf16.mxu0 0
        %6694 = vmatpush1.bf16.msra.mxu0 0
        %6695 = vmatprep.subr.bf16.mxu0 0
        %6696 = vmatpush1.bf16.msra.mxu0 0
        %6697 = vmatprep.subr.bf16.mxu0 0
        %6698 = vmatpush1.bf16.msra.mxu0 0
        %6699 = vmatprep.subr.bf16.mxu0 0
        %6700 = vmatpush1.bf16.msra.mxu0 0
        %6701 = vmatprep.subr.bf16.mxu0 0
        %6702 = vmatpush1.bf16.msra.mxu0 0
        %6703 = vmatprep.subr.bf16.mxu0 0
        %6704 = vmatpush1.bf16.msra.mxu0 0
        %6705 = vmatprep.subr.bf16.mxu0 0
        %6706 = vmatpush1.bf16.msra.mxu0 0
        %6707 = vmatprep.subr.bf16.mxu0 0
        %6708 = vmatpush1.bf16.msra.mxu0 0
        %6709 = vmatprep.subr.bf16.mxu0 0
        %6710 = vmatpush1.bf16.msra.mxu0 0
        %6711 = vmatprep.mubr.bf16.mxu0 0
        %6712 = vmatmul.mubr.bf16.gmra.mrb[0].mxu0 %v6488
        %v6713 = vpop.f32.mrb[0].mxu0
        %v6714 = vadd.f32 %v6474, %v6713
        %v6715 = vpop.f32.mrb[0].mxu0
        %v6716 = vpop.f32.mrb[0].mxu0
        %v6717 = vadd.f32 %v6474, %v6716
        %v6718 = vpop.f32.mrb[0].mxu0
        %6719 = vmatprep.mubr.bf16.mxu0 0
        %6720 = vmatmul.mubr.bf16.gmra.mrb[0].mxu0 %v6491
        %v6721 = vpop.f32.mrb[0].mxu0
        %v6722 = vadd.f32 %v6474, %v6721
        %v6723 = vpop.f32.mrb[0].mxu0
        %v6724 = vpop.f32.mrb[0].mxu0
        %v6725 = vadd.f32 %v6474, %v6724
        %v6726 = vpop.f32.mrb[0].mxu0
        %6727 = vmatprep.mubr.bf16.mxu0 0
        %6728 = vmatmul.mubr.bf16.gmra.mrb[0].mxu0 %v6494
        %v6729 = vpop.f32.mrb[0].mxu0
        %v6730 = vadd.f32 %v6474, %v6729
        %v6731 = vpop.f32.mrb[0].mxu0
        %v6732 = vpop.f32.mrb[0].mxu0
        %v6733 = vadd.f32 %v6474, %v6732
        %v6734 = vpop.f32.mrb[0].mxu0
        %6735 = vmatprep.mubr.bf16.mxu0 0
        %6736 = vmatmul.mubr.bf16.gmra.mrb[0].mxu0 %v6497
        %v6737 = vpop.f32.mrb[0].mxu0
        %v6738 = vadd.f32 %v6474, %v6737
        %v6739 = vpop.f32.mrb[0].mxu0
        %v6740 = vpop.f32.mrb[0].mxu0
        %v6741 = vadd.f32 %v6474, %v6740
        %v6742 = vpop.f32.mrb[0].mxu0
        %6743 = vmatprep.mubr.bf16.mxu0 0
        %6744 = vmatmul.mubr.bf16.gmra.mrb[0].mxu0 %v6500
        %v6745 = vpop.f32.mrb[0].mxu0
        %v6746 = vadd.f32 %v6474, %v6745
        %v6747 = vpop.f32.mrb[0].mxu0
        %v6748 = vpop.f32.mrb[0].mxu0
        %v6749 = vadd.f32 %v6474, %v6748
        %v6750 = vpop.f32.mrb[0].mxu0
        %6751 = vmatprep.mubr.bf16.mxu0 0
        %6752 = vmatmul.mubr.bf16.gmra.mrb[0].mxu0 %v6503
        %v6753 = vpop.f32.mrb[0].mxu0
        %v6754 = vadd.f32 %v6474, %v6753
        %v6755 = vpop.f32.mrb[0].mxu0
        %v6756 = vpop.f32.mrb[0].mxu0
        %v6757 = vadd.f32 %v6474, %v6756
        %v6758 = vpop.f32.mrb[0].mxu0
        %6759 = vmatprep.mubr.bf16.mxu0 0
        %6760 = vmatmul.mubr.bf16.gmra.mrb[0].mxu0 %v6506
        %v6761 = vpop.f32.mrb[0].mxu0
        %v6762 = vadd.f32 %v6474, %v6761
        %v6763 = vpop.f32.mrb[0].mxu0
        %v6764 = vpop.f32.mrb[0].mxu0
        %v6765 = vadd.f32 %v6474, %v6764
        %v6766 = vpop.f32.mrb[0].mxu0
        %6767 = vmatprep.mubr.bf16.mxu0 0
        %6768 = vmatmul.mubr.bf16.gmra.mrb[0].mxu0 %v6509
        %v6769 = vpop.f32.mrb[0].mxu0
        %v6770 = vadd.f32 %v6474, %v6769
        %v6771 = vpop.f32.mrb[0].mxu0
        %v6772 = vpop.f32.mrb[0].mxu0
        %v6773 = vadd.f32 %v6474, %v6772
        %v6774 = vpop.f32.mrb[0].mxu0
        %6775 = vmatprep.mubr.bf16.mxu0 0
        %6776 = vmatmul.mubr.bf16.gmra.mrb[0].mxu0 %v6512
        %v6777 = vpop.f32.mrb[0].mxu0
        %v6778 = vadd.f32 %v6474, %v6777
        %v6779 = vpop.f32.mrb[0].mxu0
        %v6780 = vpop.f32.mrb[0].mxu0
        %v6781 = vadd.f32 %v6474, %v6780
        %v6782 = vpop.f32.mrb[0].mxu0
        %6783 = vmatprep.mubr.bf16.mxu0 0
        %6784 = vmatmul.mubr.bf16.gmra.mrb[0].mxu0 %v6515
        %v6785 = vpop.f32.mrb[0].mxu0
        %v6786 = vadd.f32 %v6474, %v6785
        %v6787 = vpop.f32.mrb[0].mxu0
        %v6788 = vpop.f32.mrb[0].mxu0
        %v6789 = vadd.f32 %v6474, %v6788
        %v6790 = vpop.f32.mrb[0].mxu0
        %6791 = vmatprep.mubr.bf16.mxu0 0
        %6792 = vmatmul.mubr.bf16.gmra.mrb[0].mxu0 %v6518
        %v6793 = vpop.f32.mrb[0].mxu0
        %v6794 = vadd.f32 %v6474, %v6793
        %v6795 = vpop.f32.mrb[0].mxu0
        %v6796 = vpop.f32.mrb[0].mxu0
        %v6797 = vadd.f32 %v6474, %v6796
        %v6798 = vpop.f32.mrb[0].mxu0
        %6799 = vmatprep.mubr.bf16.mxu0 0
        %6800 = vmatmul.mubr.bf16.gmra.mrb[0].mxu0 %v6521
        %v6801 = vpop.f32.mrb[0].mxu0
        %v6802 = vadd.f32 %v6474, %v6801
        %v6803 = vpop.f32.mrb[0].mxu0
        %v6804 = vpop.f32.mrb[0].mxu0
        %v6805 = vadd.f32 %v6474, %v6804
        %v6806 = vpop.f32.mrb[0].mxu0
        %6807 = vmatprep.mubr.bf16.mxu0 0
        %6808 = vmatmul.mubr.bf16.gmra.mrb[0].mxu0 %v6524
        %v6809 = vpop.f32.mrb[0].mxu0
        %v6810 = vadd.f32 %v6474, %v6809
        %v6811 = vpop.f32.mrb[0].mxu0
        %v6812 = vpop.f32.mrb[0].mxu0
        %v6813 = vadd.f32 %v6474, %v6812
        %v6814 = vpop.f32.mrb[0].mxu0
        %6815 = vmatprep.mubr.bf16.mxu0 0
        %6816 = vmatmul.mubr.bf16.gmra.mrb[0].mxu0 %v6527
        %v6817 = vpop.f32.mrb[0].mxu0
        %v6818 = vadd.f32 %v6474, %v6817
        %v6819 = vpop.f32.mrb[0].mxu0
        %v6820 = vpop.f32.mrb[0].mxu0
        %v6821 = vadd.f32 %v6474, %v6820
        %v6822 = vpop.f32.mrb[0].mxu0
        %6823 = vmatprep.mubr.bf16.mxu0 0
        %6824 = vmatmul.mubr.bf16.gmra.mrb[0].mxu0 %v6530
        %v6825 = vpop.f32.mrb[0].mxu0
        %v6826 = vadd.f32 %v6474, %v6825
        %v6827 = vpop.f32.mrb[0].mxu0
        %v6828 = vpop.f32.mrb[0].mxu0
        %v6829 = vadd.f32 %v6474, %v6828
        %v6830 = vpop.f32.mrb[0].mxu0
        %6831 = vmatprep.mubr.bf16.mxu0 0
        %6832 = vmatmul.mubr.bf16.gmra.mrb[0].mxu0 %v6533
        %v6833 = vpop.f32.mrb[0].mxu0
        %v6834 = vadd.f32 %v6474, %v6833
        %v6835 = vpop.f32.mrb[0].mxu0
        %v6836 = vpop.f32.mrb[0].mxu0
        %v6837 = vadd.f32 %v6474, %v6836
        %v6838 = vpop.f32.mrb[0].mxu0
        %6839 = vmatprep.mubr.bf16.mxu0 0
        %6840 = vmatmul.mubr.bf16.gmra.mrb[0].mxu0 %v6536
        %v6841 = vpop.f32.mrb[0].mxu0
        %v6842 = vadd.f32 %v6474, %v6841
        %v6843 = vpop.f32.mrb[0].mxu0
        %v6844 = vpop.f32.mrb[0].mxu0
        %v6845 = vadd.f32 %v6474, %v6844
        %v6846 = vpop.f32.mrb[0].mxu0
        %6847 = vmatprep.mubr.bf16.mxu0 0
        %6848 = vmatmul.mubr.bf16.gmra.mrb[0].mxu0 %v6539
        %v6849 = vpop.f32.mrb[0].mxu0
        %v6850 = vadd.f32 %v6474, %v6849
        %v6851 = vpop.f32.mrb[0].mxu0
        %v6852 = vpop.f32.mrb[0].mxu0
        %v6853 = vadd.f32 %v6474, %v6852
        %v6854 = vpop.f32.mrb[0].mxu0
        %6855 = vmatprep.mubr.bf16.mxu0 0
        %6856 = vmatmul.mubr.bf16.gmra.mrb[0].mxu0 %v6542
        %v6857 = vpop.f32.mrb[0].mxu0
        %v6858 = vadd.f32 %v6474, %v6857
        %v6859 = vpop.f32.mrb[0].mxu0
        %v6860 = vpop.f32.mrb[0].mxu0
        %v6861 = vadd.f32 %v6474, %v6860
        %v6862 = vpop.f32.mrb[0].mxu0
        %6863 = vmatprep.mubr.bf16.mxu0 0
        %6864 = vmatmul.mubr.bf16.gmra.mrb[0].mxu0 %v6545
        %v6865 = vpop.f32.mrb[0].mxu0
        %v6866 = vadd.f32 %v6474, %v6865
        %v6867 = vpop.f32.mrb[0].mxu0
        %v6868 = vpop.f32.mrb[0].mxu0
        %v6869 = vadd.f32 %v6474, %v6868
        %v6870 = vpop.f32.mrb[0].mxu0
        %6871 = vmatprep.mubr.bf16.mxu0 0
        %6872 = vmatmul.mubr.bf16.gmra.mrb[0].mxu0 %v6548
        %v6873 = vpop.f32.mrb[0].mxu0
        %v6874 = vadd.f32 %v6474, %v6873
        %v6875 = vpop.f32.mrb[0].mxu0
        %v6876 = vpop.f32.mrb[0].mxu0
        %v6877 = vadd.f32 %v6474, %v6876
        %v6878 = vpop.f32.mrb[0].mxu0
        %6879 = vmatprep.mubr.bf16.mxu0 0
        %6880 = vmatmul.mubr.bf16.gmra.mrb[0].mxu0 %v6551
        %v6881 = vpop.f32.mrb[0].mxu0
        %v6882 = vadd.f32 %v6474, %v6881
        %v6883 = vpop.f32.mrb[0].mxu0
        %v6884 = vpop.f32.mrb[0].mxu0
        %v6885 = vadd.f32 %v6474, %v6884
        %v6886 = vpop.f32.mrb[0].mxu0
        %6887 = vmatprep.mubr.bf16.mxu0 0
        %6888 = vmatmul.mubr.bf16.gmra.mrb[0].mxu0 %v6554
        %v6889 = vpop.f32.mrb[0].mxu0
        %v6890 = vadd.f32 %v6474, %v6889
        %v6891 = vpop.f32.mrb[0].mxu0
        %v6892 = vpop.f32.mrb[0].mxu0
        %v6893 = vadd.f32 %v6474, %v6892
        %v6894 = vpop.f32.mrb[0].mxu0
        %6895 = vmatprep.mubr.bf16.mxu0 0
        %6896 = vmatmul.mubr.bf16.gmra.mrb[0].mxu0 %v6557
        %v6897 = vpop.f32.mrb[0].mxu0
        %v6898 = vadd.f32 %v6474, %v6897
        %v6899 = vpop.f32.mrb[0].mxu0
        %v6900 = vpop.f32.mrb[0].mxu0
        %v6901 = vadd.f32 %v6474, %v6900
        %v6902 = vpop.f32.mrb[0].mxu0
        %6903 = vmatprep.mubr.bf16.mxu0 0
        %6904 = vmatmul.mubr.bf16.gmra.mrb[0].mxu0 %v6560
        %v6905 = vpop.f32.mrb[0].mxu0
        %v6906 = vadd.f32 %v6474, %v6905
        %v6907 = vpop.f32.mrb[0].mxu0
        %v6908 = vpop.f32.mrb[0].mxu0
        %v6909 = vadd.f32 %v6474, %v6908
        %v6910 = vpop.f32.mrb[0].mxu0
        %6911 = vmatprep.mubr.bf16.mxu0 0
        %6912 = vmatmul.mubr.bf16.gmra.mrb[0].mxu0 %v6563
        %v6913 = vpop.f32.mrb[0].mxu0
        %v6914 = vadd.f32 %v6474, %v6913
        %v6915 = vpop.f32.mrb[0].mxu0
        %v6916 = vpop.f32.mrb[0].mxu0
        %v6917 = vadd.f32 %v6474, %v6916
        %v6918 = vpop.f32.mrb[0].mxu0
        %6919 = vmatprep.mubr.bf16.mxu0 0
        %6920 = vmatmul.mubr.bf16.gmra.mrb[0].mxu0 %v6566
        %v6921 = vpop.f32.mrb[0].mxu0
        %v6922 = vadd.f32 %v6474, %v6921
        %v6923 = vpop.f32.mrb[0].mxu0
        %v6924 = vpop.f32.mrb[0].mxu0
        %v6925 = vadd.f32 %v6474, %v6924
        %v6926 = vpop.f32.mrb[0].mxu0
        %6927 = vmatprep.mubr.bf16.mxu0 0
        %6928 = vmatmul.mubr.bf16.gmra.mrb[0].mxu0 %v6569
        %v6929 = vpop.f32.mrb[0].mxu0
        %v6930 = vadd.f32 %v6474, %v6929
        %v6931 = vpop.f32.mrb[0].mxu0
        %v6932 = vpop.f32.mrb[0].mxu0
        %v6933 = vadd.f32 %v6474, %v6932
        %v6934 = vpop.f32.mrb[0].mxu0
        %6935 = vmatprep.mubr.bf16.mxu0 0
        %6936 = vmatmul.mubr.bf16.gmra.mrb[0].mxu0 %v6572
        %v6937 = vpop.f32.mrb[0].mxu0
        %v6938 = vadd.f32 %v6474, %v6937
        %v6939 = vpop.f32.mrb[0].mxu0
        %v6940 = vpop.f32.mrb[0].mxu0
        %v6941 = vadd.f32 %v6474, %v6940
        %v6942 = vpop.f32.mrb[0].mxu0
        %6943 = vmatprep.mubr.bf16.mxu0 0
        %6944 = vmatmul.mubr.bf16.gmra.mrb[0].mxu0 %v6575
        %v6945 = vpop.f32.mrb[0].mxu0
        %v6946 = vadd.f32 %v6474, %v6945
        %v6947 = vpop.f32.mrb[0].mxu0
        %v6948 = vpop.f32.mrb[0].mxu0
        %v6949 = vadd.f32 %v6474, %v6948
        %v6950 = vpop.f32.mrb[0].mxu0
        %6951 = vmatprep.mubr.bf16.mxu0 0
        %6952 = vmatmul.mubr.bf16.gmra.mrb[0].mxu0 %v6578
        %v6953 = vpop.f32.mrb[0].mxu0
        %v6954 = vadd.f32 %v6474, %v6953
        %v6955 = vpop.f32.mrb[0].mxu0
        %v6956 = vpop.f32.mrb[0].mxu0
        %v6957 = vadd.f32 %v6474, %v6956
        %v6958 = vpop.f32.mrb[0].mxu0
        %6959 = vmatprep.mubr.bf16.mxu0 0
        %6960 = vmatmul.mubr.bf16.gmra.mrb[0].mxu0 %v6581
        %v6961 = vpop.f32.mrb[0].mxu0
        %v6962 = vadd.f32 %v6474, %v6961
        %v6963 = vpop.f32.mrb[0].mxu0
        %v6964 = vpop.f32.mrb[0].mxu0
        %v6965 = vadd.f32 %v6474, %v6964
        %v6966 = vpop.f32.mrb[0].mxu0
        %6967 = vmatprep.mubr.bf16.mxu0 0
        %6968 = vmatmul.mubr.bf16.gmra.mrb[0].mxu0 %v6584
        %v6969 = vpop.f32.mrb[0].mxu0
        %v6970 = vadd.f32 %v6474, %v6969
        %v6971 = vpop.f32.mrb[0].mxu0
        %v6972 = vpop.f32.mrb[0].mxu0
        %v6973 = vadd.f32 %v6474, %v6972
        %v6974 = vpop.f32.mrb[0].mxu0
        %6975 = vmatprep.mubr.bf16.mxu0 0
        %6976 = vmatmul.mubr.bf16.gmra.mrb[0].mxu0 %v6587
        %v6977 = vpop.f32.mrb[0].mxu0
        %v6978 = vadd.f32 %v6474, %v6977
        %v6979 = vpop.f32.mrb[0].mxu0
        %v6980 = vpop.f32.mrb[0].mxu0
        %v6981 = vadd.f32 %v6474, %v6980
        %v6982 = vpop.f32.mrb[0].mxu0
        %6983 = vmatprep.mubr.bf16.mxu0 0
        %6984 = vmatmul.mubr.bf16.gmra.mrb[0].mxu0 %v6590
        %v6985 = vpop.f32.mrb[0].mxu0
        %v6986 = vadd.f32 %v6474, %v6985
        %v6987 = vpop.f32.mrb[0].mxu0
        %v6988 = vpop.f32.mrb[0].mxu0
        %v6989 = vadd.f32 %v6474, %v6988
        %v6990 = vpop.f32.mrb[0].mxu0
        %6991 = vmatprep.mubr.bf16.mxu0 0
        %6992 = vmatmul.mubr.bf16.gmra.mrb[0].mxu0 %v6593
        %v6993 = vpop.f32.mrb[0].mxu0
        %v6994 = vadd.f32 %v6474, %v6993
        %v6995 = vpop.f32.mrb[0].mxu0
        %v6996 = vpop.f32.mrb[0].mxu0
        %v6997 = vadd.f32 %v6474, %v6996
        %v6998 = vpop.f32.mrb[0].mxu0
        %6999 = vmatprep.mubr.bf16.mxu0 0
        %7000 = vmatmul.mubr.bf16.gmra.mrb[0].mxu0 %v6596
        %v7001 = vpop.f32.mrb[0].mxu0
        %v7002 = vadd.f32 %v6474, %v7001
        %v7003 = vpop.f32.mrb[0].mxu0
        %v7004 = vpop.f32.mrb[0].mxu0
        %v7005 = vadd.f32 %v6474, %v7004
        %v7006 = vpop.f32.mrb[0].mxu0
        %7007 = vmatprep.mubr.bf16.mxu0 0
        %7008 = vmatmul.mubr.bf16.gmra.mrb[0].mxu0 %v6599
        %v7009 = vpop.f32.mrb[0].mxu0
        %v7010 = vadd.f32 %v6474, %v7009
        %v7011 = vpop.f32.mrb[0].mxu0
        %v7012 = vpop.f32.mrb[0].mxu0
        %v7013 = vadd.f32 %v6474, %v7012
        %v7014 = vpop.f32.mrb[0].mxu0
        %7015 = vmatprep.mubr.bf16.mxu0 0
        %7016 = vmatmul.mubr.bf16.gmra.mrb[0].mxu0 %v6602
        %v7017 = vpop.f32.mrb[0].mxu0
        %v7018 = vadd.f32 %v6474, %v7017
        %v7019 = vpop.f32.mrb[0].mxu0
        %v7020 = vpop.f32.mrb[0].mxu0
        %v7021 = vadd.f32 %v6474, %v7020
        %v7022 = vpop.f32.mrb[0].mxu0
        %7023 = vmatprep.mubr.bf16.mxu0 0
        %7024 = vmatmul.mubr.bf16.gmra.mrb[0].mxu0 %v6605
        %v7025 = vpop.f32.mrb[0].mxu0
        %v7026 = vadd.f32 %v6474, %v7025
        %v7027 = vpop.f32.mrb[0].mxu0
        %v7028 = vpop.f32.mrb[0].mxu0
        %v7029 = vadd.f32 %v6474, %v7028
        %v7030 = vpop.f32.mrb[0].mxu0
        %7031 = vmatprep.mubr.bf16.mxu0 0
        %7032 = vmatmul.mubr.bf16.gmra.mrb[0].mxu0 %v6608
        %v7033 = vpop.f32.mrb[0].mxu0
        %v7034 = vadd.f32 %v6474, %v7033
        %v7035 = vpop.f32.mrb[0].mxu0
        %v7036 = vpop.f32.mrb[0].mxu0
        %v7037 = vadd.f32 %v6474, %v7036
        %v7038 = vpop.f32.mrb[0].mxu0
        %7039 = vmatprep.mubr.bf16.mxu0 0
        %7040 = vmatmul.mubr.bf16.gmra.mrb[0].mxu0 %v6611
        %v7041 = vpop.f32.mrb[0].mxu0
        %v7042 = vadd.f32 %v6474, %v7041
        %v7043 = vpop.f32.mrb[0].mxu0
        %v7044 = vpop.f32.mrb[0].mxu0
        %v7045 = vadd.f32 %v6474, %v7044
        %v7046 = vpop.f32.mrb[0].mxu0
        %7047 = vmatprep.mubr.bf16.mxu0 0
        %7048 = vmatmul.mubr.bf16.gmra.mrb[0].mxu0 %v6614
        %v7049 = vpop.f32.mrb[0].mxu0
        %v7050 = vadd.f32 %v6474, %v7049
        %v7051 = vpop.f32.mrb[0].mxu0
        %v7052 = vpop.f32.mrb[0].mxu0
        %v7053 = vadd.f32 %v6474, %v7052
        %v7054 = vpop.f32.mrb[0].mxu0
        %7055 = vmatprep.mubr.bf16.mxu0 0
        %7056 = vmatmul.mubr.bf16.gmra.mrb[0].mxu0 %v6617
        %v7057 = vpop.f32.mrb[0].mxu0
        %v7058 = vadd.f32 %v6474, %v7057
        %v7059 = vpop.f32.mrb[0].mxu0
        %v7060 = vpop.f32.mrb[0].mxu0
        %v7061 = vadd.f32 %v6474, %v7060
        %v7062 = vpop.f32.mrb[0].mxu0
        %7063 = vmatprep.mubr.bf16.mxu0 0
        %7064 = vmatmul.mubr.bf16.gmra.mrb[0].mxu0 %v6620
        %v7065 = vpop.f32.mrb[0].mxu0
        %v7066 = vadd.f32 %v6474, %v7065
        %v7067 = vpop.f32.mrb[0].mxu0
        %v7068 = vpop.f32.mrb[0].mxu0
        %v7069 = vadd.f32 %v6474, %v7068
        %v7070 = vpop.f32.mrb[0].mxu0
        %7071 = vmatprep.mubr.bf16.mxu0 0
        %7072 = vmatmul.mubr.bf16.gmra.mrb[0].mxu0 %v6623
        %v7073 = vpop.f32.mrb[0].mxu0
        %v7074 = vadd.f32 %v6474, %v7073
        %v7075 = vpop.f32.mrb[0].mxu0
        %v7076 = vpop.f32.mrb[0].mxu0
        %v7077 = vadd.f32 %v6474, %v7076
        %v7078 = vpop.f32.mrb[0].mxu0
        %7079 = vmatprep.mubr.bf16.mxu0 0
        %7080 = vmatmul.mubr.bf16.gmra.mrb[0].mxu0 %v6626
        %v7081 = vpop.f32.mrb[0].mxu0
        %v7082 = vadd.f32 %v6474, %v7081
        %v7083 = vpop.f32.mrb[0].mxu0
        %v7084 = vpop.f32.mrb[0].mxu0
        %v7085 = vadd.f32 %v6474, %v7084
        %v7086 = vpop.f32.mrb[0].mxu0
        %7087 = vmatprep.mubr.bf16.mxu0 0
        %7088 = vmatmul.mubr.bf16.gmra.mrb[0].mxu0 %v6629
        %v7089 = vpop.f32.mrb[0].mxu0
        %v7090 = vadd.f32 %v6474, %v7089
        %v7091 = vpop.f32.mrb[0].mxu0
        %v7092 = vpop.f32.mrb[0].mxu0
        %v7093 = vadd.f32 %v6474, %v7092
        %v7094 = vpop.f32.mrb[0].mxu0
        %7095 = vmatprep.mubr.bf16.mxu0 0
        %7096 = vmatmul.mubr.bf16.gmra.mrb[0].mxu0 %v6632
        %v7097 = vpop.f32.mrb[0].mxu0
        %v7098 = vadd.f32 %v6474, %v7097
        %v7099 = vpop.f32.mrb[0].mxu0
        %v7100 = vpop.f32.mrb[0].mxu0
        %v7101 = vadd.f32 %v6474, %v7100
        %v7102 = vpop.f32.mrb[0].mxu0
        %7103 = vmatprep.mubr.bf16.mxu0 0
        %7104 = vmatmul.mubr.bf16.gmra.mrb[0].mxu0 %v6635
        %v7105 = vpop.f32.mrb[0].mxu0
        %v7106 = vadd.f32 %v6474, %v7105
        %v7107 = vpop.f32.mrb[0].mxu0
        %v7108 = vpop.f32.mrb[0].mxu0
        %v7109 = vadd.f32 %v6474, %v7108
        %v7110 = vpop.f32.mrb[0].mxu0
        %7111 = vmatprep.mubr.bf16.mxu0 0
        %7112 = vmatmul.mubr.bf16.gmra.mrb[0].mxu0 %v6638
        %v7113 = vpop.f32.mrb[0].mxu0
        %v7114 = vadd.f32 %v6474, %v7113
        %v7115 = vpop.f32.mrb[0].mxu0
        %v7116 = vpop.f32.mrb[0].mxu0
        %v7117 = vadd.f32 %v6474, %v7116
        %v7118 = vpop.f32.mrb[0].mxu0
        %7119 = vmatprep.mubr.bf16.mxu0 0
        %7120 = vmatmul.mubr.bf16.gmra.mrb[0].mxu0 %v6641
        %v7121 = vpop.f32.mrb[0].mxu0
        %v7122 = vadd.f32 %v6474, %v7121
        %v7123 = vpop.f32.mrb[0].mxu0
        %v7124 = vpop.f32.mrb[0].mxu0
        %v7125 = vadd.f32 %v6474, %v7124
        %v7126 = vpop.f32.mrb[0].mxu0
        %7127 = vmatprep.mubr.bf16.mxu0 0
        %7128 = vmatmul.mubr.bf16.gmra.mrb[0].mxu0 %v6644
        %v7129 = vpop.f32.mrb[0].mxu0
        %v7130 = vadd.f32 %v6474, %v7129
        %v7131 = vpop.f32.mrb[0].mxu0
        %v7132 = vpop.f32.mrb[0].mxu0
        %v7133 = vadd.f32 %v6474, %v7132
        %v7134 = vpop.f32.mrb[0].mxu0
        %7135 = vmatprep.mubr.bf16.mxu0 0
        %7136 = vmatmul.mubr.bf16.gmra.mrb[0].mxu0 %v6647
        %v7137 = vpop.f32.mrb[0].mxu0
        %v7138 = vadd.f32 %v6474, %v7137
        %v7139 = vpop.f32.mrb[0].mxu0
        %v7140 = vpop.f32.mrb[0].mxu0
        %v7141 = vadd.f32 %v6474, %v7140
        %v7142 = vpop.f32.mrb[0].mxu0
        %7143 = vmatprep.mubr.bf16.mxu0 0
        %7144 = vmatmul.mubr.bf16.gmra.mrb[0].mxu0 %v6650
        %v7145 = vpop.f32.mrb[0].mxu0
        %v7146 = vadd.f32 %v6474, %v7145
        %v7147 = vpop.f32.mrb[0].mxu0
        %v7148 = vpop.f32.mrb[0].mxu0
        %v7149 = vadd.f32 %v6474, %v7148
        %v7150 = vpop.f32.mrb[0].mxu0
        %7151 = vmatprep.mubr.bf16.mxu0 0
        %7152 = vmatmul.mubr.bf16.gmra.mrb[0].mxu0 %v6653
        %v7153 = vpop.f32.mrb[0].mxu0
        %v7154 = vadd.f32 %v6474, %v7153
        %v7155 = vpop.f32.mrb[0].mxu0
        %v7156 = vpop.f32.mrb[0].mxu0
        %v7157 = vadd.f32 %v6474, %v7156
        %v7158 = vpop.f32.mrb[0].mxu0
        %7159 = vmatprep.mubr.bf16.mxu0 0
        %7160 = vmatmul.mubr.bf16.gmra.mrb[0].mxu0 %v6656
        %v7161 = vpop.f32.mrb[0].mxu0
        %v7162 = vadd.f32 %v6474, %v7161
        %v7163 = vpop.f32.mrb[0].mxu0
        %v7164 = vpop.f32.mrb[0].mxu0
        %v7165 = vadd.f32 %v6474, %v7164
        %v7166 = vpop.f32.mrb[0].mxu0
        %7167 = vmatprep.mubr.bf16.mxu0 0
        %7168 = vmatmul.mubr.bf16.gmra.mrb[0].mxu0 %v6659
        %v7169 = vpop.f32.mrb[0].mxu0
        %v7170 = vadd.f32 %v6474, %v7169
        %v7171 = vpop.f32.mrb[0].mxu0
        %v7172 = vpop.f32.mrb[0].mxu0
        %v7173 = vadd.f32 %v6474, %v7172
        %v7174 = vpop.f32.mrb[0].mxu0
        %7175 = vmatprep.mubr.bf16.mxu0 0
        %7176 = vmatmul.mubr.bf16.gmra.mrb[0].mxu0 %v6662
        %v7177 = vpop.f32.mrb[0].mxu0
        %v7178 = vadd.f32 %v6474, %v7177
        %v7179 = vpop.f32.mrb[0].mxu0
        %v7180 = vpop.f32.mrb[0].mxu0
        %v7181 = vadd.f32 %v6474, %v7180
        %v7182 = vpop.f32.mrb[0].mxu0
        %7183 = vmatprep.mubr.bf16.mxu0 0
        %7184 = vmatmul.mubr.bf16.gmra.mrb[0].mxu0 %v6665
        %v7185 = vpop.f32.mrb[0].mxu0
        %v7186 = vadd.f32 %v6474, %v7185
        %v7187 = vpop.f32.mrb[0].mxu0
        %v7188 = vpop.f32.mrb[0].mxu0
        %v7189 = vadd.f32 %v6474, %v7188
        %v7190 = vpop.f32.mrb[0].mxu0
        %7191 = vmatprep.mubr.bf16.mxu0 0
        %7192 = vmatmul.mubr.bf16.gmra.mrb[0].mxu0 %v6668
        %v7193 = vpop.f32.mrb[0].mxu0
        %v7194 = vadd.f32 %v6474, %v7193
        %v7195 = vpop.f32.mrb[0].mxu0
        %v7196 = vpop.f32.mrb[0].mxu0
        %v7197 = vadd.f32 %v6474, %v7196
        %v7198 = vpop.f32.mrb[0].mxu0
        %7199 = vmatprep.mubr.bf16.mxu0 0
        %7200 = vmatmul.mubr.bf16.gmra.mrb[0].mxu0 %v6671
        %v7201 = vpop.f32.mrb[0].mxu0
        %v7202 = vadd.f32 %v6474, %v7201
        %v7203 = vpop.f32.mrb[0].mxu0
        %v7204 = vpop.f32.mrb[0].mxu0
        %v7205 = vadd.f32 %v6474, %v7204
        %v7206 = vpop.f32.mrb[0].mxu0
        %7207 = vmatprep.mubr.bf16.mxu0 0
        %7208 = vmatmul.mubr.bf16.gmra.mrb[0].mxu0 %v6674
        %v7209 = vpop.f32.mrb[0].mxu0
        %v7210 = vadd.f32 %v6474, %v7209
        %v7211 = vpop.f32.mrb[0].mxu0
        %v7212 = vpop.f32.mrb[0].mxu0
        %v7213 = vadd.f32 %v6474, %v7212
        %v7214 = vpop.f32.mrb[0].mxu0
        %7215 = vmatprep.mubr.bf16.mxu0 0
        %7216 = vmatmul.mubr.bf16.gmra.mrb[0].mxu0 %v6677
        %v7217 = vpop.f32.mrb[0].mxu0
        %v7218 = vadd.f32 %v6474, %v7217
        %v7219 = vpop.f32.mrb[0].mxu0
        %v7220 = vpop.f32.mrb[0].mxu0
        %v7221 = vadd.f32 %v6474, %v7220
        %v7222 = vpop.f32.mrb[0].mxu0
        %7223 = vdwg.mxu0
        %v7224 = vmax.f32 %v6714, 0.0
        %v7225 = vmax.f32 %v6717, 0.0
        %v7226 = vmax.f32 %v6722, 0.0
        %v7227 = vmax.f32 %v6725, 0.0
        %v7228 = vmax.f32 %v6730, 0.0
        %v7229 = vmax.f32 %v6733, 0.0
        %v7230 = vmax.f32 %v6738, 0.0
        %v7231 = vmax.f32 %v6741, 0.0
        %v7232 = vmax.f32 %v6746, 0.0
        %v7233 = vmax.f32 %v6749, 0.0
        %v7234 = vmax.f32 %v6754, 0.0
        %v7235 = vmax.f32 %v6757, 0.0
        %v7236 = vmax.f32 %v6762, 0.0
        %v7237 = vmax.f32 %v6765, 0.0
        %v7238 = vmax.f32 %v6770, 0.0
        %v7239 = vmax.f32 %v6773, 0.0
        %v7240 = vmax.f32 %v6778, 0.0
        %v7241 = vmax.f32 %v6781, 0.0
        %v7242 = vmax.f32 %v6786, 0.0
        %v7243 = vmax.f32 %v6789, 0.0
        %v7244 = vmax.f32 %v6794, 0.0
        %v7245 = vmax.f32 %v6797, 0.0
        %v7246 = vmax.f32 %v6802, 0.0
        %v7247 = vmax.f32 %v6805, 0.0
        %v7248 = vmax.f32 %v6810, 0.0
        %v7249 = vmax.f32 %v6813, 0.0
        %v7250 = vmax.f32 %v6818, 0.0
        %v7251 = vmax.f32 %v6821, 0.0
        %v7252 = vmax.f32 %v6826, 0.0
        %v7253 = vmax.f32 %v6829, 0.0
        %v7254 = vmax.f32 %v6834, 0.0
        %v7255 = vmax.f32 %v6837, 0.0
        %v7256 = vmax.f32 %v6842, 0.0
        %v7257 = vmax.f32 %v6845, 0.0
        %v7258 = vmax.f32 %v6850, 0.0
        %v7259 = vmax.f32 %v6853, 0.0
        %v7260 = vmax.f32 %v6858, 0.0
        %v7261 = vmax.f32 %v6861, 0.0
        %v7262 = vmax.f32 %v6866, 0.0
        %v7263 = vmax.f32 %v6869, 0.0
        %v7264 = vmax.f32 %v6874, 0.0
        %v7265 = vmax.f32 %v6877, 0.0
        %v7266 = vmax.f32 %v6882, 0.0
        %v7267 = vmax.f32 %v6885, 0.0
        %v7268 = vmax.f32 %v6890, 0.0
        %v7269 = vmax.f32 %v6893, 0.0
        %v7270 = vmax.f32 %v6898, 0.0
        %v7271 = vmax.f32 %v6901, 0.0
        %v7272 = vmax.f32 %v6906, 0.0
        %v7273 = vmax.f32 %v6909, 0.0
        %v7274 = vmax.f32 %v6914, 0.0
        %v7275 = vmax.f32 %v6917, 0.0
        %v7276 = vmax.f32 %v6922, 0.0
        %v7277 = vmax.f32 %v6925, 0.0
        %v7278 = vmax.f32 %v6930, 0.0
        %v7279 = vmax.f32 %v6933, 0.0
        %v7280 = vmax.f32 %v6938, 0.0
        %v7281 = vmax.f32 %v6941, 0.0
        %v7282 = vmax.f32 %v6946, 0.0
        %v7283 = vmax.f32 %v6949, 0.0
        %v7284 = vmax.f32 %v6954, 0.0
        %v7285 = vmax.f32 %v6957, 0.0
        %v7286 = vmax.f32 %v6962, 0.0
        %v7287 = vmax.f32 %v6965, 0.0
        %v7288 = vmax.f32 %v6970, 0.0
        %v7289 = vmax.f32 %v6973, 0.0
        %v7290 = vmax.f32 %v6978, 0.0
        %v7291 = vmax.f32 %v6981, 0.0
        %v7292 = vmax.f32 %v6986, 0.0
        %v7293 = vmax.f32 %v6989, 0.0
        %v7294 = vmax.f32 %v6994, 0.0
        %v7295 = vmax.f32 %v6997, 0.0
        %v7296 = vmax.f32 %v7002, 0.0
        %v7297 = vmax.f32 %v7005, 0.0
        %v7298 = vmax.f32 %v7010, 0.0
        %v7299 = vmax.f32 %v7013, 0.0
        %v7300 = vmax.f32 %v7018, 0.0
        %v7301 = vmax.f32 %v7021, 0.0
        %v7302 = vmax.f32 %v7026, 0.0
        %v7303 = vmax.f32 %v7029, 0.0
        %v7304 = vmax.f32 %v7034, 0.0
        %v7305 = vmax.f32 %v7037, 0.0
        %v7306 = vmax.f32 %v7042, 0.0
        %v7307 = vmax.f32 %v7045, 0.0
        %v7308 = vmax.f32 %v7050, 0.0
        %v7309 = vmax.f32 %v7053, 0.0
        %v7310 = vmax.f32 %v7058, 0.0
        %v7311 = vmax.f32 %v7061, 0.0
        %v7312 = vmax.f32 %v7066, 0.0
        %v7313 = vmax.f32 %v7069, 0.0
        %v7314 = vmax.f32 %v7074, 0.0
        %v7315 = vmax.f32 %v7077, 0.0
        %v7316 = vmax.f32 %v7082, 0.0
        %v7317 = vmax.f32 %v7085, 0.0
        %v7318 = vmax.f32 %v7090, 0.0
        %v7319 = vmax.f32 %v7093, 0.0
        %v7320 = vmax.f32 %v7098, 0.0
        %v7321 = vmax.f32 %v7101, 0.0
        %v7322 = vmax.f32 %v7106, 0.0
        %v7323 = vmax.f32 %v7109, 0.0
        %v7324 = vmax.f32 %v7114, 0.0
        %v7325 = vmax.f32 %v7117, 0.0
        %v7326 = vmax.f32 %v7122, 0.0
        %v7327 = vmax.f32 %v7125, 0.0
        %v7328 = vmax.f32 %v7130, 0.0
        %v7329 = vmax.f32 %v7133, 0.0
        %v7330 = vmax.f32 %v7138, 0.0
        %v7331 = vmax.f32 %v7141, 0.0
        %v7332 = vmax.f32 %v7146, 0.0
        %v7333 = vmax.f32 %v7149, 0.0
        %v7334 = vmax.f32 %v7154, 0.0
        %v7335 = vmax.f32 %v7157, 0.0
        %v7336 = vmax.f32 %v7162, 0.0
        %v7337 = vmax.f32 %v7165, 0.0
        %v7338 = vmax.f32 %v7170, 0.0
        %v7339 = vmax.f32 %v7173, 0.0
        %v7340 = vmax.f32 %v7178, 0.0
        %v7341 = vmax.f32 %v7181, 0.0
        %v7342 = vmax.f32 %v7186, 0.0
        %v7343 = vmax.f32 %v7189, 0.0
        %v7344 = vmax.f32 %v7194, 0.0
        %v7345 = vmax.f32 %v7197, 0.0
        %v7346 = vmax.f32 %v7202, 0.0
        %v7347 = vmax.f32 %v7205, 0.0
        %v7348 = vmax.f32 %v7210, 0.0
        %v7349 = vmax.f32 %v7213, 0.0
        %v7350 = vmax.f32 %v7218, 0.0
        %v7351 = vmax.f32 %v7221, 0.0
        %v7352 = vmul.f32 %v7224, %v2924
        %v7353 = vmul.f32 %v7225, %v2929
        %v7354 = vmul.f32 %v7226, %v2934
        %v7355 = vmul.f32 %v7227, %v2939
        %v7356 = vmul.f32 %v7228, %v2944
        %v7357 = vmul.f32 %v7229, %v2949
        %v7358 = vmul.f32 %v7230, %v2954
        %v7359 = vmul.f32 %v7231, %v2959
        %v7360 = vmul.f32 %v7232, %v2964
        %v7361 = vmul.f32 %v7233, %v2969
        %v7362 = vmul.f32 %v7234, %v2974
        %v7363 = vmul.f32 %v7235, %v2979
        %v7364 = vmul.f32 %v7236, %v2984
        %v7365 = vmul.f32 %v7237, %v2989
        %v7366 = vmul.f32 %v7238, %v2994
        %v7367 = vmul.f32 %v7239, %v2999
        %v7368 = vmul.f32 %v7240, %v3004
        %v7369 = vmul.f32 %v7241, %v3009
        %v7370 = vmul.f32 %v7242, %v3014
        %v7371 = vmul.f32 %v7243, %v3019
        %v7372 = vmul.f32 %v7244, %v3024
        %v7373 = vmul.f32 %v7245, %v3029
        %v7374 = vmul.f32 %v7246, %v3034
        %v7375 = vmul.f32 %v7247, %v3039
        %v7376 = vmul.f32 %v7248, %v3044
        %v7377 = vmul.f32 %v7249, %v3049
        %v7378 = vmul.f32 %v7250, %v3054
        %v7379 = vmul.f32 %v7251, %v3059
        %v7380 = vmul.f32 %v7252, %v3064
        %v7381 = vmul.f32 %v7253, %v3069
        %v7382 = vmul.f32 %v7254, %v3074
        %v7383 = vmul.f32 %v7255, %v3079
        %v7384 = vmul.f32 %v7256, %v3084
        %v7385 = vmul.f32 %v7257, %v3089
        %v7386 = vmul.f32 %v7258, %v3094
        %v7387 = vmul.f32 %v7259, %v3099
        %v7388 = vmul.f32 %v7260, %v3104
        %v7389 = vmul.f32 %v7261, %v3109
        %v7390 = vmul.f32 %v7262, %v3114
        %v7391 = vmul.f32 %v7263, %v3119
        %v7392 = vmul.f32 %v7264, %v3124
        %v7393 = vmul.f32 %v7265, %v3129
        %v7394 = vmul.f32 %v7266, %v3134
        %v7395 = vmul.f32 %v7267, %v3139
        %v7396 = vmul.f32 %v7268, %v3144
        %v7397 = vmul.f32 %v7269, %v3149
        %v7398 = vmul.f32 %v7270, %v3154
        %v7399 = vmul.f32 %v7271, %v3159
        %v7400 = vmul.f32 %v7272, %v3164
        %v7401 = vmul.f32 %v7273, %v3169
        %v7402 = vmul.f32 %v7274, %v3174
        %v7403 = vmul.f32 %v7275, %v3179
        %v7404 = vmul.f32 %v7276, %v3184
        %v7405 = vmul.f32 %v7277, %v3189
        %v7406 = vmul.f32 %v7278, %v3194
        %v7407 = vmul.f32 %v7279, %v3199
        %v7408 = vmul.f32 %v7280, %v3204
        %v7409 = vmul.f32 %v7281, %v3209
        %v7410 = vmul.f32 %v7282, %v3214
        %v7411 = vmul.f32 %v7283, %v3219
        %v7412 = vmul.f32 %v7284, %v3224
        %v7413 = vmul.f32 %v7285, %v3229
        %v7414 = vmul.f32 %v7286, %v3234
        %v7415 = vmul.f32 %v7287, %v3239
        %v7416 = vmul.f32 %v7288, %v3244
        %v7417 = vmul.f32 %v7289, %v3249
        %v7418 = vmul.f32 %v7290, %v3254
        %v7419 = vmul.f32 %v7291, %v3259
        %v7420 = vmul.f32 %v7292, %v3264
        %v7421 = vmul.f32 %v7293, %v3269
        %v7422 = vmul.f32 %v7294, %v3274
        %v7423 = vmul.f32 %v7295, %v3279
        %v7424 = vmul.f32 %v7296, %v3284
        %v7425 = vmul.f32 %v7297, %v3289
        %v7426 = vmul.f32 %v7298, %v3294
        %v7427 = vmul.f32 %v7299, %v3299
        %v7428 = vmul.f32 %v7300, %v3304
        %v7429 = vmul.f32 %v7301, %v3309
        %v7430 = vmul.f32 %v7302, %v3314
        %v7431 = vmul.f32 %v7303, %v3319
        %v7432 = vmul.f32 %v7304, %v3324
        %v7433 = vmul.f32 %v7305, %v3329
        %v7434 = vmul.f32 %v7306, %v3334
        %v7435 = vmul.f32 %v7307, %v3339
        %v7436 = vmul.f32 %v7308, %v3344
        %v7437 = vmul.f32 %v7309, %v3349
        %v7438 = vmul.f32 %v7310, %v3354
        %v7439 = vmul.f32 %v7311, %v3359
        %v7440 = vmul.f32 %v7312, %v3364
        %v7441 = vmul.f32 %v7313, %v3369
        %v7442 = vmul.f32 %v7314, %v3374
        %v7443 = vmul.f32 %v7315, %v3379
        %v7444 = vmul.f32 %v7316, %v3384
        %v7445 = vmul.f32 %v7317, %v3389
        %v7446 = vmul.f32 %v7318, %v3394
        %v7447 = vmul.f32 %v7319, %v3399
        %v7448 = vmul.f32 %v7320, %v3404
        %v7449 = vmul.f32 %v7321, %v3409
        %v7450 = vmul.f32 %v7322, %v3414
        %v7451 = vmul.f32 %v7323, %v3419
        %v7452 = vmul.f32 %v7324, %v3424
        %v7453 = vmul.f32 %v7325, %v3429
        %v7454 = vmul.f32 %v7326, %v3434
        %v7455 = vmul.f32 %v7327, %v3439
        %v7456 = vmul.f32 %v7328, %v3444
        %v7457 = vmul.f32 %v7329, %v3449
        %v7458 = vmul.f32 %v7330, %v3454
        %v7459 = vmul.f32 %v7331, %v3459
        %v7460 = vmul.f32 %v7332, %v3464
        %v7461 = vmul.f32 %v7333, %v3469
        %v7462 = vmul.f32 %v7334, %v3474
        %v7463 = vmul.f32 %v7335, %v3479
        %v7464 = vmul.f32 %v7336, %v3484
        %v7465 = vmul.f32 %v7337, %v3489
        %v7466 = vmul.f32 %v7338, %v3494
        %v7467 = vmul.f32 %v7339, %v3499
        %v7468 = vmul.f32 %v7340, %v3504
        %v7469 = vmul.f32 %v7341, %v3509
        %v7470 = vmul.f32 %v7342, %v3514
        %v7471 = vmul.f32 %v7343, %v3519
        %v7472 = vmul.f32 %v7344, %v3524
        %v7473 = vmul.f32 %v7345, %v3529
        %v7474 = vmul.f32 %v7346, %v3534
        %v7475 = vmul.f32 %v7347, %v3539
        %v7476 = vmul.f32 %v7348, %v3544
        %v7477 = vmul.f32 %v7349, %v3549
        %v7478 = vmul.f32 %v7350, %v3554
        %v7479 = vmul.f32 %v7351, %v3559
        %v7480 = vsel %vm3689, %v7352, -inf
        %v7481 = vsel %vm3689, %v7353, -inf
        %v7482 = vmax.f32 %v7480, %v7481
        %v7483 = vrot.slane %v7482, 4
        %v7484 = vmax.f32 %v7482, %v7483
        %v7485 = vrot.slane %v7484, 2
        %v7486 = vmax.f32 %v7484, %v7485
        %v7487 = vrot.slane %v7486, 1
        %v7488 = vmax.f32 %v7486, %v7487
        %v7489 = vsel %vm3689, %v7354, -inf
        %v7490 = vsel %vm3689, %v7355, -inf
        %v7491 = vmax.f32 %v7489, %v7490
        %v7492 = vrot.slane %v7491, 4
        %v7493 = vmax.f32 %v7491, %v7492
        %v7494 = vrot.slane %v7493, 2
        %v7495 = vmax.f32 %v7493, %v7494
        %v7496 = vrot.slane %v7495, 1
        %v7497 = vmax.f32 %v7495, %v7496
        %v7498 = vsel %vm3689, %v7356, -inf
        %v7499 = vsel %vm3689, %v7357, -inf
        %v7500 = vmax.f32 %v7498, %v7499
        %v7501 = vrot.slane %v7500, 4
        %v7502 = vmax.f32 %v7500, %v7501
        %v7503 = vrot.slane %v7502, 2
        %v7504 = vmax.f32 %v7502, %v7503
        %v7505 = vrot.slane %v7504, 1
        %v7506 = vmax.f32 %v7504, %v7505
        %v7507 = vsel %vm3689, %v7358, -inf
        %v7508 = vsel %vm3689, %v7359, -inf
        %v7509 = vmax.f32 %v7507, %v7508
        %v7510 = vrot.slane %v7509, 4
        %v7511 = vmax.f32 %v7509, %v7510
        %v7512 = vrot.slane %v7511, 2
        %v7513 = vmax.f32 %v7511, %v7512
        %v7514 = vrot.slane %v7513, 1
        %v7515 = vmax.f32 %v7513, %v7514
        %v7516 = vsel %vm3689, %v7360, -inf
        %v7517 = vsel %vm3689, %v7361, -inf
        %v7518 = vmax.f32 %v7516, %v7517
        %v7519 = vrot.slane %v7518, 4
        %v7520 = vmax.f32 %v7518, %v7519
        %v7521 = vrot.slane %v7520, 2
        %v7522 = vmax.f32 %v7520, %v7521
        %v7523 = vrot.slane %v7522, 1
        %v7524 = vmax.f32 %v7522, %v7523
        %v7525 = vsel %vm3689, %v7362, -inf
        %v7526 = vsel %vm3689, %v7363, -inf
        %v7527 = vmax.f32 %v7525, %v7526
        %v7528 = vrot.slane %v7527, 4
        %v7529 = vmax.f32 %v7527, %v7528
        %v7530 = vrot.slane %v7529, 2
        %v7531 = vmax.f32 %v7529, %v7530
        %v7532 = vrot.slane %v7531, 1
        %v7533 = vmax.f32 %v7531, %v7532
        %v7534 = vsel %vm3689, %v7364, -inf
        %v7535 = vsel %vm3689, %v7365, -inf
        %v7536 = vmax.f32 %v7534, %v7535
        %v7537 = vrot.slane %v7536, 4
        %v7538 = vmax.f32 %v7536, %v7537
        %v7539 = vrot.slane %v7538, 2
        %v7540 = vmax.f32 %v7538, %v7539
        %v7541 = vrot.slane %v7540, 1
        %v7542 = vmax.f32 %v7540, %v7541
        %v7543 = vsel %vm3689, %v7366, -inf
        %v7544 = vsel %vm3689, %v7367, -inf
        %v7545 = vmax.f32 %v7543, %v7544
        %v7546 = vrot.slane %v7545, 4
        %v7547 = vmax.f32 %v7545, %v7546
        %v7548 = vrot.slane %v7547, 2
        %v7549 = vmax.f32 %v7547, %v7548
        %v7550 = vrot.slane %v7549, 1
        %v7551 = vmax.f32 %v7549, %v7550
        %v7552 = vsel %vm3689, %v7368, -inf
        %v7553 = vsel %vm3689, %v7369, -inf
        %v7554 = vmax.f32 %v7552, %v7553
        %v7555 = vrot.slane %v7554, 4
        %v7556 = vmax.f32 %v7554, %v7555
        %v7557 = vrot.slane %v7556, 2
        %v7558 = vmax.f32 %v7556, %v7557
        %v7559 = vrot.slane %v7558, 1
        %v7560 = vmax.f32 %v7558, %v7559
        %v7561 = vsel %vm3689, %v7370, -inf
        %v7562 = vsel %vm3689, %v7371, -inf
        %v7563 = vmax.f32 %v7561, %v7562
        %v7564 = vrot.slane %v7563, 4
        %v7565 = vmax.f32 %v7563, %v7564
        %v7566 = vrot.slane %v7565, 2
        %v7567 = vmax.f32 %v7565, %v7566
        %v7568 = vrot.slane %v7567, 1
        %v7569 = vmax.f32 %v7567, %v7568
        %v7570 = vsel %vm3689, %v7372, -inf
        %v7571 = vsel %vm3689, %v7373, -inf
        %v7572 = vmax.f32 %v7570, %v7571
        %v7573 = vrot.slane %v7572, 4
        %v7574 = vmax.f32 %v7572, %v7573
        %v7575 = vrot.slane %v7574, 2
        %v7576 = vmax.f32 %v7574, %v7575
        %v7577 = vrot.slane %v7576, 1
        %v7578 = vmax.f32 %v7576, %v7577
        %v7579 = vsel %vm3689, %v7374, -inf
        %v7580 = vsel %vm3689, %v7375, -inf
        %v7581 = vmax.f32 %v7579, %v7580
        %v7582 = vrot.slane %v7581, 4
        %v7583 = vmax.f32 %v7581, %v7582
        %v7584 = vrot.slane %v7583, 2
        %v7585 = vmax.f32 %v7583, %v7584
        %v7586 = vrot.slane %v7585, 1
        %v7587 = vmax.f32 %v7585, %v7586
        %v7588 = vsel %vm3689, %v7376, -inf
        %v7589 = vsel %vm3689, %v7377, -inf
        %v7590 = vmax.f32 %v7588, %v7589
        %v7591 = vrot.slane %v7590, 4
        %v7592 = vmax.f32 %v7590, %v7591
        %v7593 = vrot.slane %v7592, 2
        %v7594 = vmax.f32 %v7592, %v7593
        %v7595 = vrot.slane %v7594, 1
        %v7596 = vmax.f32 %v7594, %v7595
        %v7597 = vsel %vm3689, %v7378, -inf
        %v7598 = vsel %vm3689, %v7379, -inf
        %v7599 = vmax.f32 %v7597, %v7598
        %v7600 = vrot.slane %v7599, 4
        %v7601 = vmax.f32 %v7599, %v7600
        %v7602 = vrot.slane %v7601, 2
        %v7603 = vmax.f32 %v7601, %v7602
        %v7604 = vrot.slane %v7603, 1
        %v7605 = vmax.f32 %v7603, %v7604
        %v7606 = vsel %vm3689, %v7380, -inf
        %v7607 = vsel %vm3689, %v7381, -inf
        %v7608 = vmax.f32 %v7606, %v7607
        %v7609 = vrot.slane %v7608, 4
        %v7610 = vmax.f32 %v7608, %v7609
        %v7611 = vrot.slane %v7610, 2
        %v7612 = vmax.f32 %v7610, %v7611
        %v7613 = vrot.slane %v7612, 1
        %v7614 = vmax.f32 %v7612, %v7613
        %v7615 = vsel %vm3689, %v7382, -inf
        %v7616 = vsel %vm3689, %v7383, -inf
        %v7617 = vmax.f32 %v7615, %v7616
        %v7618 = vrot.slane %v7617, 4
        %v7619 = vmax.f32 %v7617, %v7618
        %v7620 = vrot.slane %v7619, 2
        %v7621 = vmax.f32 %v7619, %v7620
        %v7622 = vrot.slane %v7621, 1
        %v7623 = vmax.f32 %v7621, %v7622
        %v7624 = vsel %vm3689, %v7384, -inf
        %v7625 = vsel %vm3689, %v7385, -inf
        %v7626 = vmax.f32 %v7624, %v7625
        %v7627 = vrot.slane %v7626, 4
        %v7628 = vmax.f32 %v7626, %v7627
        %v7629 = vrot.slane %v7628, 2
        %v7630 = vmax.f32 %v7628, %v7629
        %v7631 = vrot.slane %v7630, 1
        %v7632 = vmax.f32 %v7630, %v7631
        %v7633 = vsel %vm3689, %v7386, -inf
        %v7634 = vsel %vm3689, %v7387, -inf
        %v7635 = vmax.f32 %v7633, %v7634
        %v7636 = vrot.slane %v7635, 4
        %v7637 = vmax.f32 %v7635, %v7636
        %v7638 = vrot.slane %v7637, 2
        %v7639 = vmax.f32 %v7637, %v7638
        %v7640 = vrot.slane %v7639, 1
        %v7641 = vmax.f32 %v7639, %v7640
        %v7642 = vsel %vm3689, %v7388, -inf
        %v7643 = vsel %vm3689, %v7389, -inf
        %v7644 = vmax.f32 %v7642, %v7643
        %v7645 = vrot.slane %v7644, 4
        %v7646 = vmax.f32 %v7644, %v7645
        %v7647 = vrot.slane %v7646, 2
        %v7648 = vmax.f32 %v7646, %v7647
        %v7649 = vrot.slane %v7648, 1
        %v7650 = vmax.f32 %v7648, %v7649
        %v7651 = vsel %vm3689, %v7390, -inf
        %v7652 = vsel %vm3689, %v7391, -inf
        %v7653 = vmax.f32 %v7651, %v7652
        %v7654 = vrot.slane %v7653, 4
        %v7655 = vmax.f32 %v7653, %v7654
        %v7656 = vrot.slane %v7655, 2
        %v7657 = vmax.f32 %v7655, %v7656
        %v7658 = vrot.slane %v7657, 1
        %v7659 = vmax.f32 %v7657, %v7658
        %v7660 = vsel %vm3689, %v7392, -inf
        %v7661 = vsel %vm3689, %v7393, -inf
        %v7662 = vmax.f32 %v7660, %v7661
        %v7663 = vrot.slane %v7662, 4
        %v7664 = vmax.f32 %v7662, %v7663
        %v7665 = vrot.slane %v7664, 2
        %v7666 = vmax.f32 %v7664, %v7665
        %v7667 = vrot.slane %v7666, 1
        %v7668 = vmax.f32 %v7666, %v7667
        %v7669 = vsel %vm3689, %v7394, -inf
        %v7670 = vsel %vm3689, %v7395, -inf
        %v7671 = vmax.f32 %v7669, %v7670
        %v7672 = vrot.slane %v7671, 4
        %v7673 = vmax.f32 %v7671, %v7672
        %v7674 = vrot.slane %v7673, 2
        %v7675 = vmax.f32 %v7673, %v7674
        %v7676 = vrot.slane %v7675, 1
        %v7677 = vmax.f32 %v7675, %v7676
        %v7678 = vsel %vm3689, %v7396, -inf
        %v7679 = vsel %vm3689, %v7397, -inf
        %v7680 = vmax.f32 %v7678, %v7679
        %v7681 = vrot.slane %v7680, 4
        %v7682 = vmax.f32 %v7680, %v7681
        %v7683 = vrot.slane %v7682, 2
        %v7684 = vmax.f32 %v7682, %v7683
        %v7685 = vrot.slane %v7684, 1
        %v7686 = vmax.f32 %v7684, %v7685
        %v7687 = vsel %vm3689, %v7398, -inf
        %v7688 = vsel %vm3689, %v7399, -inf
        %v7689 = vmax.f32 %v7687, %v7688
        %v7690 = vrot.slane %v7689, 4
        %v7691 = vmax.f32 %v7689, %v7690
        %v7692 = vrot.slane %v7691, 2
        %v7693 = vmax.f32 %v7691, %v7692
        %v7694 = vrot.slane %v7693, 1
        %v7695 = vmax.f32 %v7693, %v7694
        %v7696 = vsel %vm3689, %v7400, -inf
        %v7697 = vsel %vm3689, %v7401, -inf
        %v7698 = vmax.f32 %v7696, %v7697
        %v7699 = vrot.slane %v7698, 4
        %v7700 = vmax.f32 %v7698, %v7699
        %v7701 = vrot.slane %v7700, 2
        %v7702 = vmax.f32 %v7700, %v7701
        %v7703 = vrot.slane %v7702, 1
        %v7704 = vmax.f32 %v7702, %v7703
        %v7705 = vsel %vm3689, %v7402, -inf
        %v7706 = vsel %vm3689, %v7403, -inf
        %v7707 = vmax.f32 %v7705, %v7706
        %v7708 = vrot.slane %v7707, 4
        %v7709 = vmax.f32 %v7707, %v7708
        %v7710 = vrot.slane %v7709, 2
        %v7711 = vmax.f32 %v7709, %v7710
        %v7712 = vrot.slane %v7711, 1
        %v7713 = vmax.f32 %v7711, %v7712
        %v7714 = vsel %vm3689, %v7404, -inf
        %v7715 = vsel %vm3689, %v7405, -inf
        %v7716 = vmax.f32 %v7714, %v7715
        %v7717 = vrot.slane %v7716, 4
        %v7718 = vmax.f32 %v7716, %v7717
        %v7719 = vrot.slane %v7718, 2
        %v7720 = vmax.f32 %v7718, %v7719
        %v7721 = vrot.slane %v7720, 1
        %v7722 = vmax.f32 %v7720, %v7721
        %v7723 = vsel %vm3689, %v7406, -inf
        %v7724 = vsel %vm3689, %v7407, -inf
        %v7725 = vmax.f32 %v7723, %v7724
        %v7726 = vrot.slane %v7725, 4
        %v7727 = vmax.f32 %v7725, %v7726
        %v7728 = vrot.slane %v7727, 2
        %v7729 = vmax.f32 %v7727, %v7728
        %v7730 = vrot.slane %v7729, 1
        %v7731 = vmax.f32 %v7729, %v7730
        %v7732 = vsel %vm3689, %v7408, -inf
        %v7733 = vsel %vm3689, %v7409, -inf
        %v7734 = vmax.f32 %v7732, %v7733
        %v7735 = vrot.slane %v7734, 4
        %v7736 = vmax.f32 %v7734, %v7735
        %v7737 = vrot.slane %v7736, 2
        %v7738 = vmax.f32 %v7736, %v7737
        %v7739 = vrot.slane %v7738, 1
        %v7740 = vmax.f32 %v7738, %v7739
        %v7741 = vsel %vm3689, %v7410, -inf
        %v7742 = vsel %vm3689, %v7411, -inf
        %v7743 = vmax.f32 %v7741, %v7742
        %v7744 = vrot.slane %v7743, 4
        %v7745 = vmax.f32 %v7743, %v7744
        %v7746 = vrot.slane %v7745, 2
        %v7747 = vmax.f32 %v7745, %v7746
        %v7748 = vrot.slane %v7747, 1
        %v7749 = vmax.f32 %v7747, %v7748
        %v7750 = vsel %vm3689, %v7412, -inf
        %v7751 = vsel %vm3689, %v7413, -inf
        %v7752 = vmax.f32 %v7750, %v7751
        %v7753 = vrot.slane %v7752, 4
        %v7754 = vmax.f32 %v7752, %v7753
        %v7755 = vrot.slane %v7754, 2
        %v7756 = vmax.f32 %v7754, %v7755
        %v7757 = vrot.slane %v7756, 1
        %v7758 = vmax.f32 %v7756, %v7757
        %v7759 = vsel %vm3689, %v7414, -inf
        %v7760 = vsel %vm3689, %v7415, -inf
        %v7761 = vmax.f32 %v7759, %v7760
        %v7762 = vrot.slane %v7761, 4
        %v7763 = vmax.f32 %v7761, %v7762
        %v7764 = vrot.slane %v7763, 2
        %v7765 = vmax.f32 %v7763, %v7764
        %v7766 = vrot.slane %v7765, 1
        %v7767 = vmax.f32 %v7765, %v7766
        %v7768 = vsel %vm3689, %v7416, -inf
        %v7769 = vsel %vm3689, %v7417, -inf
        %v7770 = vmax.f32 %v7768, %v7769
        %v7771 = vrot.slane %v7770, 4
        %v7772 = vmax.f32 %v7770, %v7771
        %v7773 = vrot.slane %v7772, 2
        %v7774 = vmax.f32 %v7772, %v7773
        %v7775 = vrot.slane %v7774, 1
        %v7776 = vmax.f32 %v7774, %v7775
        %v7777 = vsel %vm3689, %v7418, -inf
        %v7778 = vsel %vm3689, %v7419, -inf
        %v7779 = vmax.f32 %v7777, %v7778
        %v7780 = vrot.slane %v7779, 4
        %v7781 = vmax.f32 %v7779, %v7780
        %v7782 = vrot.slane %v7781, 2
        %v7783 = vmax.f32 %v7781, %v7782
        %v7784 = vrot.slane %v7783, 1
        %v7785 = vmax.f32 %v7783, %v7784
        %v7786 = vsel %vm3689, %v7420, -inf
        %v7787 = vsel %vm3689, %v7421, -inf
        %v7788 = vmax.f32 %v7786, %v7787
        %v7789 = vrot.slane %v7788, 4
        %v7790 = vmax.f32 %v7788, %v7789
        %v7791 = vrot.slane %v7790, 2
        %v7792 = vmax.f32 %v7790, %v7791
        %v7793 = vrot.slane %v7792, 1
        %v7794 = vmax.f32 %v7792, %v7793
        %v7795 = vsel %vm3689, %v7422, -inf
        %v7796 = vsel %vm3689, %v7423, -inf
        %v7797 = vmax.f32 %v7795, %v7796
        %v7798 = vrot.slane %v7797, 4
        %v7799 = vmax.f32 %v7797, %v7798
        %v7800 = vrot.slane %v7799, 2
        %v7801 = vmax.f32 %v7799, %v7800
        %v7802 = vrot.slane %v7801, 1
        %v7803 = vmax.f32 %v7801, %v7802
        %v7804 = vsel %vm3689, %v7424, -inf
        %v7805 = vsel %vm3689, %v7425, -inf
        %v7806 = vmax.f32 %v7804, %v7805
        %v7807 = vrot.slane %v7806, 4
        %v7808 = vmax.f32 %v7806, %v7807
        %v7809 = vrot.slane %v7808, 2
        %v7810 = vmax.f32 %v7808, %v7809
        %v7811 = vrot.slane %v7810, 1
        %v7812 = vmax.f32 %v7810, %v7811
        %v7813 = vsel %vm3689, %v7426, -inf
        %v7814 = vsel %vm3689, %v7427, -inf
        %v7815 = vmax.f32 %v7813, %v7814
        %v7816 = vrot.slane %v7815, 4
        %v7817 = vmax.f32 %v7815, %v7816
        %v7818 = vrot.slane %v7817, 2
        %v7819 = vmax.f32 %v7817, %v7818
        %v7820 = vrot.slane %v7819, 1
        %v7821 = vmax.f32 %v7819, %v7820
        %v7822 = vsel %vm3689, %v7428, -inf
        %v7823 = vsel %vm3689, %v7429, -inf
        %v7824 = vmax.f32 %v7822, %v7823
        %v7825 = vrot.slane %v7824, 4
        %v7826 = vmax.f32 %v7824, %v7825
        %v7827 = vrot.slane %v7826, 2
        %v7828 = vmax.f32 %v7826, %v7827
        %v7829 = vrot.slane %v7828, 1
        %v7830 = vmax.f32 %v7828, %v7829
        %v7831 = vsel %vm3689, %v7430, -inf
        %v7832 = vsel %vm3689, %v7431, -inf
        %v7833 = vmax.f32 %v7831, %v7832
        %v7834 = vrot.slane %v7833, 4
        %v7835 = vmax.f32 %v7833, %v7834
        %v7836 = vrot.slane %v7835, 2
        %v7837 = vmax.f32 %v7835, %v7836
        %v7838 = vrot.slane %v7837, 1
        %v7839 = vmax.f32 %v7837, %v7838
        %v7840 = vsel %vm3689, %v7432, -inf
        %v7841 = vsel %vm3689, %v7433, -inf
        %v7842 = vmax.f32 %v7840, %v7841
        %v7843 = vrot.slane %v7842, 4
        %v7844 = vmax.f32 %v7842, %v7843
        %v7845 = vrot.slane %v7844, 2
        %v7846 = vmax.f32 %v7844, %v7845
        %v7847 = vrot.slane %v7846, 1
        %v7848 = vmax.f32 %v7846, %v7847
        %v7849 = vsel %vm3689, %v7434, -inf
        %v7850 = vsel %vm3689, %v7435, -inf
        %v7851 = vmax.f32 %v7849, %v7850
        %v7852 = vrot.slane %v7851, 4
        %v7853 = vmax.f32 %v7851, %v7852
        %v7854 = vrot.slane %v7853, 2
        %v7855 = vmax.f32 %v7853, %v7854
        %v7856 = vrot.slane %v7855, 1
        %v7857 = vmax.f32 %v7855, %v7856
        %v7858 = vsel %vm3689, %v7436, -inf
        %v7859 = vsel %vm3689, %v7437, -inf
        %v7860 = vmax.f32 %v7858, %v7859
        %v7861 = vrot.slane %v7860, 4
        %v7862 = vmax.f32 %v7860, %v7861
        %v7863 = vrot.slane %v7862, 2
        %v7864 = vmax.f32 %v7862, %v7863
        %v7865 = vrot.slane %v7864, 1
        %v7866 = vmax.f32 %v7864, %v7865
        %v7867 = vsel %vm3689, %v7438, -inf
        %v7868 = vsel %vm3689, %v7439, -inf
        %v7869 = vmax.f32 %v7867, %v7868
        %v7870 = vrot.slane %v7869, 4
        %v7871 = vmax.f32 %v7869, %v7870
        %v7872 = vrot.slane %v7871, 2
        %v7873 = vmax.f32 %v7871, %v7872
        %v7874 = vrot.slane %v7873, 1
        %v7875 = vmax.f32 %v7873, %v7874
        %v7876 = vsel %vm3689, %v7440, -inf
        %v7877 = vsel %vm3689, %v7441, -inf
        %v7878 = vmax.f32 %v7876, %v7877
        %v7879 = vrot.slane %v7878, 4
        %v7880 = vmax.f32 %v7878, %v7879
        %v7881 = vrot.slane %v7880, 2
        %v7882 = vmax.f32 %v7880, %v7881
        %v7883 = vrot.slane %v7882, 1
        %v7884 = vmax.f32 %v7882, %v7883
        %v7885 = vsel %vm3689, %v7442, -inf
        %v7886 = vsel %vm3689, %v7443, -inf
        %v7887 = vmax.f32 %v7885, %v7886
        %v7888 = vrot.slane %v7887, 4
        %v7889 = vmax.f32 %v7887, %v7888
        %v7890 = vrot.slane %v7889, 2
        %v7891 = vmax.f32 %v7889, %v7890
        %v7892 = vrot.slane %v7891, 1
        %v7893 = vmax.f32 %v7891, %v7892
        %v7894 = vsel %vm3689, %v7444, -inf
        %v7895 = vsel %vm3689, %v7445, -inf
        %v7896 = vmax.f32 %v7894, %v7895
        %v7897 = vrot.slane %v7896, 4
        %v7898 = vmax.f32 %v7896, %v7897
        %v7899 = vrot.slane %v7898, 2
        %v7900 = vmax.f32 %v7898, %v7899
        %v7901 = vrot.slane %v7900, 1
        %v7902 = vmax.f32 %v7900, %v7901
        %v7903 = vsel %vm3689, %v7446, -inf
        %v7904 = vsel %vm3689, %v7447, -inf
        %v7905 = vmax.f32 %v7903, %v7904
        %v7906 = vrot.slane %v7905, 4
        %v7907 = vmax.f32 %v7905, %v7906
        %v7908 = vrot.slane %v7907, 2
        %v7909 = vmax.f32 %v7907, %v7908
        %v7910 = vrot.slane %v7909, 1
        %v7911 = vmax.f32 %v7909, %v7910
        %v7912 = vsel %vm3689, %v7448, -inf
        %v7913 = vsel %vm3689, %v7449, -inf
        %v7914 = vmax.f32 %v7912, %v7913
        %v7915 = vrot.slane %v7914, 4
        %v7916 = vmax.f32 %v7914, %v7915
        %v7917 = vrot.slane %v7916, 2
        %v7918 = vmax.f32 %v7916, %v7917
        %v7919 = vrot.slane %v7918, 1
        %v7920 = vmax.f32 %v7918, %v7919
        %v7921 = vsel %vm3689, %v7450, -inf
        %v7922 = vsel %vm3689, %v7451, -inf
        %v7923 = vmax.f32 %v7921, %v7922
        %v7924 = vrot.slane %v7923, 4
        %v7925 = vmax.f32 %v7923, %v7924
        %v7926 = vrot.slane %v7925, 2
        %v7927 = vmax.f32 %v7925, %v7926
        %v7928 = vrot.slane %v7927, 1
        %v7929 = vmax.f32 %v7927, %v7928
        %v7930 = vsel %vm3689, %v7452, -inf
        %v7931 = vsel %vm3689, %v7453, -inf
        %v7932 = vmax.f32 %v7930, %v7931
        %v7933 = vrot.slane %v7932, 4
        %v7934 = vmax.f32 %v7932, %v7933
        %v7935 = vrot.slane %v7934, 2
        %v7936 = vmax.f32 %v7934, %v7935
        %v7937 = vrot.slane %v7936, 1
        %v7938 = vmax.f32 %v7936, %v7937
        %v7939 = vsel %vm3689, %v7454, -inf
        %v7940 = vsel %vm3689, %v7455, -inf
        %v7941 = vmax.f32 %v7939, %v7940
        %v7942 = vrot.slane %v7941, 4
        %v7943 = vmax.f32 %v7941, %v7942
        %v7944 = vrot.slane %v7943, 2
        %v7945 = vmax.f32 %v7943, %v7944
        %v7946 = vrot.slane %v7945, 1
        %v7947 = vmax.f32 %v7945, %v7946
        %v7948 = vsel %vm3689, %v7456, -inf
        %v7949 = vsel %vm3689, %v7457, -inf
        %v7950 = vmax.f32 %v7948, %v7949
        %v7951 = vrot.slane %v7950, 4
        %v7952 = vmax.f32 %v7950, %v7951
        %v7953 = vrot.slane %v7952, 2
        %v7954 = vmax.f32 %v7952, %v7953
        %v7955 = vrot.slane %v7954, 1
        %v7956 = vmax.f32 %v7954, %v7955
        %v7957 = vsel %vm3689, %v7458, -inf
        %v7958 = vsel %vm3689, %v7459, -inf
        %v7959 = vmax.f32 %v7957, %v7958
        %v7960 = vrot.slane %v7959, 4
        %v7961 = vmax.f32 %v7959, %v7960
        %v7962 = vrot.slane %v7961, 2
        %v7963 = vmax.f32 %v7961, %v7962
        %v7964 = vrot.slane %v7963, 1
        %v7965 = vmax.f32 %v7963, %v7964
        %v7966 = vsel %vm3689, %v7460, -inf
        %v7967 = vsel %vm3689, %v7461, -inf
        %v7968 = vmax.f32 %v7966, %v7967
        %v7969 = vrot.slane %v7968, 4
        %v7970 = vmax.f32 %v7968, %v7969
        %v7971 = vrot.slane %v7970, 2
        %v7972 = vmax.f32 %v7970, %v7971
        %v7973 = vrot.slane %v7972, 1
        %v7974 = vmax.f32 %v7972, %v7973
        %v7975 = vsel %vm3689, %v7462, -inf
        %v7976 = vsel %vm3689, %v7463, -inf
        %v7977 = vmax.f32 %v7975, %v7976
        %v7978 = vrot.slane %v7977, 4
        %v7979 = vmax.f32 %v7977, %v7978
        %v7980 = vrot.slane %v7979, 2
        %v7981 = vmax.f32 %v7979, %v7980
        %v7982 = vrot.slane %v7981, 1
        %v7983 = vmax.f32 %v7981, %v7982
        %v7984 = vsel %vm3689, %v7464, -inf
        %v7985 = vsel %vm3689, %v7465, -inf
        %v7986 = vmax.f32 %v7984, %v7985
        %v7987 = vrot.slane %v7986, 4
        %v7988 = vmax.f32 %v7986, %v7987
        %v7989 = vrot.slane %v7988, 2
        %v7990 = vmax.f32 %v7988, %v7989
        %v7991 = vrot.slane %v7990, 1
        %v7992 = vmax.f32 %v7990, %v7991
        %v7993 = vsel %vm3689, %v7466, -inf
        %v7994 = vsel %vm3689, %v7467, -inf
        %v7995 = vmax.f32 %v7993, %v7994
        %v7996 = vrot.slane %v7995, 4
        %v7997 = vmax.f32 %v7995, %v7996
        %v7998 = vrot.slane %v7997, 2
        %v7999 = vmax.f32 %v7997, %v7998
        %v8000 = vrot.slane %v7999, 1
        %v8001 = vmax.f32 %v7999, %v8000
        %v8002 = vsel %vm3689, %v7468, -inf
        %v8003 = vsel %vm3689, %v7469, -inf
        %v8004 = vmax.f32 %v8002, %v8003
        %v8005 = vrot.slane %v8004, 4
        %v8006 = vmax.f32 %v8004, %v8005
        %v8007 = vrot.slane %v8006, 2
        %v8008 = vmax.f32 %v8006, %v8007
        %v8009 = vrot.slane %v8008, 1
        %v8010 = vmax.f32 %v8008, %v8009
        %v8011 = vsel %vm3689, %v7470, -inf
        %v8012 = vsel %vm3689, %v7471, -inf
        %v8013 = vmax.f32 %v8011, %v8012
        %v8014 = vrot.slane %v8013, 4
        %v8015 = vmax.f32 %v8013, %v8014
        %v8016 = vrot.slane %v8015, 2
        %v8017 = vmax.f32 %v8015, %v8016
        %v8018 = vrot.slane %v8017, 1
        %v8019 = vmax.f32 %v8017, %v8018
        %v8020 = vsel %vm3689, %v7472, -inf
        %v8021 = vsel %vm3689, %v7473, -inf
        %v8022 = vmax.f32 %v8020, %v8021
        %v8023 = vrot.slane %v8022, 4
        %v8024 = vmax.f32 %v8022, %v8023
        %v8025 = vrot.slane %v8024, 2
        %v8026 = vmax.f32 %v8024, %v8025
        %v8027 = vrot.slane %v8026, 1
        %v8028 = vmax.f32 %v8026, %v8027
        %v8029 = vsel %vm3689, %v7474, -inf
        %v8030 = vsel %vm3689, %v7475, -inf
        %v8031 = vmax.f32 %v8029, %v8030
        %v8032 = vrot.slane %v8031, 4
        %v8033 = vmax.f32 %v8031, %v8032
        %v8034 = vrot.slane %v8033, 2
        %v8035 = vmax.f32 %v8033, %v8034
        %v8036 = vrot.slane %v8035, 1
        %v8037 = vmax.f32 %v8035, %v8036
        %v8038 = vsel %vm3689, %v7476, -inf
        %v8039 = vsel %vm3689, %v7477, -inf
        %v8040 = vmax.f32 %v8038, %v8039
        %v8041 = vrot.slane %v8040, 4
        %v8042 = vmax.f32 %v8040, %v8041
        %v8043 = vrot.slane %v8042, 2
        %v8044 = vmax.f32 %v8042, %v8043
        %v8045 = vrot.slane %v8044, 1
        %v8046 = vmax.f32 %v8044, %v8045
        %v8047 = vsel %vm3689, %v7478, -inf
        %v8048 = vsel %vm3689, %v7479, -inf
        %v8049 = vmax.f32 %v8047, %v8048
        %v8050 = vrot.slane %v8049, 4
        %v8051 = vmax.f32 %v8049, %v8050
        %v8052 = vrot.slane %v8051, 2
        %v8053 = vmax.f32 %v8051, %v8052
        %v8054 = vrot.slane %v8053, 1
        %v8055 = vmax.f32 %v8053, %v8054
        %vm8056 = vcmask 7168
        %v8057 = vsel %vm8056, %v1577, -inf
        %v8058 = vsel %vm8056, %v1578, -inf
        %v8059 = vmax.f32 %v8057, %v8058
        %v8060 = vrot.slane %v8059, 4
        %v8061 = vmax.f32 %v8059, %v8060
        %v8062 = vrot.slane %v8061, 2
        %v8063 = vmax.f32 %v8061, %v8062
        %v8064 = vrot.slane %v8063, 1
        %v8065 = vmax.f32 %v8063, %v8064
        %v8066 = vsel %vm8056, %v1579, -inf
        %v8067 = vsel %vm8056, %v1580, -inf
        %v8068 = vmax.f32 %v8066, %v8067
        %v8069 = vrot.slane %v8068, 4
        %v8070 = vmax.f32 %v8068, %v8069
        %v8071 = vrot.slane %v8070, 2
        %v8072 = vmax.f32 %v8070, %v8071
        %v8073 = vrot.slane %v8072, 1
        %v8074 = vmax.f32 %v8072, %v8073
        %v8075 = vsel %vm8056, %v1581, -inf
        %v8076 = vsel %vm8056, %v1582, -inf
        %v8077 = vmax.f32 %v8075, %v8076
        %v8078 = vrot.slane %v8077, 4
        %v8079 = vmax.f32 %v8077, %v8078
        %v8080 = vrot.slane %v8079, 2
        %v8081 = vmax.f32 %v8079, %v8080
        %v8082 = vrot.slane %v8081, 1
        %v8083 = vmax.f32 %v8081, %v8082
        %v8084 = vsel %vm8056, %v1583, -inf
        %v8085 = vsel %vm8056, %v1584, -inf
        %v8086 = vmax.f32 %v8084, %v8085
        %v8087 = vrot.slane %v8086, 4
        %v8088 = vmax.f32 %v8086, %v8087
        %v8089 = vrot.slane %v8088, 2
        %v8090 = vmax.f32 %v8088, %v8089
        %v8091 = vrot.slane %v8090, 1
        %v8092 = vmax.f32 %v8090, %v8091
        %v8093 = vsel %vm8056, %v1585, -inf
        %v8094 = vsel %vm8056, %v1586, -inf
        %v8095 = vmax.f32 %v8093, %v8094
        %v8096 = vrot.slane %v8095, 4
        %v8097 = vmax.f32 %v8095, %v8096
        %v8098 = vrot.slane %v8097, 2
        %v8099 = vmax.f32 %v8097, %v8098
        %v8100 = vrot.slane %v8099, 1
        %v8101 = vmax.f32 %v8099, %v8100
        %v8102 = vsel %vm8056, %v1587, -inf
        %v8103 = vsel %vm8056, %v1588, -inf
        %v8104 = vmax.f32 %v8102, %v8103
        %v8105 = vrot.slane %v8104, 4
        %v8106 = vmax.f32 %v8104, %v8105
        %v8107 = vrot.slane %v8106, 2
        %v8108 = vmax.f32 %v8106, %v8107
        %v8109 = vrot.slane %v8108, 1
        %v8110 = vmax.f32 %v8108, %v8109
        %v8111 = vsel %vm8056, %v1589, -inf
        %v8112 = vsel %vm8056, %v1590, -inf
        %v8113 = vmax.f32 %v8111, %v8112
        %v8114 = vrot.slane %v8113, 4
        %v8115 = vmax.f32 %v8113, %v8114
        %v8116 = vrot.slane %v8115, 2
        %v8117 = vmax.f32 %v8115, %v8116
        %v8118 = vrot.slane %v8117, 1
        %v8119 = vmax.f32 %v8117, %v8118
        %v8120 = vsel %vm8056, %v1591, -inf
        %v8121 = vsel %vm8056, %v1592, -inf
        %v8122 = vmax.f32 %v8120, %v8121
        %v8123 = vrot.slane %v8122, 4
        %v8124 = vmax.f32 %v8122, %v8123
        %v8125 = vrot.slane %v8124, 2
        %v8126 = vmax.f32 %v8124, %v8125
        %v8127 = vrot.slane %v8126, 1
        %v8128 = vmax.f32 %v8126, %v8127
        %v8129 = vsel %vm8056, %v1593, -inf
        %v8130 = vsel %vm8056, %v1594, -inf
        %v8131 = vmax.f32 %v8129, %v8130
        %v8132 = vrot.slane %v8131, 4
        %v8133 = vmax.f32 %v8131, %v8132
        %v8134 = vrot.slane %v8133, 2
        %v8135 = vmax.f32 %v8133, %v8134
        %v8136 = vrot.slane %v8135, 1
        %v8137 = vmax.f32 %v8135, %v8136
        %v8138 = vsel %vm8056, %v1595, -inf
        %v8139 = vsel %vm8056, %v1596, -inf
        %v8140 = vmax.f32 %v8138, %v8139
        %v8141 = vrot.slane %v8140, 4
        %v8142 = vmax.f32 %v8140, %v8141
        %v8143 = vrot.slane %v8142, 2
        %v8144 = vmax.f32 %v8142, %v8143
        %v8145 = vrot.slane %v8144, 1
        %v8146 = vmax.f32 %v8144, %v8145
        %v8147 = vsel %vm8056, %v1597, -inf
        %v8148 = vsel %vm8056, %v1598, -inf
        %v8149 = vmax.f32 %v8147, %v8148
        %v8150 = vrot.slane %v8149, 4
        %v8151 = vmax.f32 %v8149, %v8150
        %v8152 = vrot.slane %v8151, 2
        %v8153 = vmax.f32 %v8151, %v8152
        %v8154 = vrot.slane %v8153, 1
        %v8155 = vmax.f32 %v8153, %v8154
        %v8156 = vsel %vm8056, %v1599, -inf
        %v8157 = vsel %vm8056, %v1600, -inf
        %v8158 = vmax.f32 %v8156, %v8157
        %v8159 = vrot.slane %v8158, 4
        %v8160 = vmax.f32 %v8158, %v8159
        %v8161 = vrot.slane %v8160, 2
        %v8162 = vmax.f32 %v8160, %v8161
        %v8163 = vrot.slane %v8162, 1
        %v8164 = vmax.f32 %v8162, %v8163
        %v8165 = vsel %vm8056, %v1601, -inf
        %v8166 = vsel %vm8056, %v1602, -inf
        %v8167 = vmax.f32 %v8165, %v8166
        %v8168 = vrot.slane %v8167, 4
        %v8169 = vmax.f32 %v8167, %v8168
        %v8170 = vrot.slane %v8169, 2
        %v8171 = vmax.f32 %v8169, %v8170
        %v8172 = vrot.slane %v8171, 1
        %v8173 = vmax.f32 %v8171, %v8172
        %v8174 = vsel %vm8056, %v1603, -inf
        %v8175 = vsel %vm8056, %v1604, -inf
        %v8176 = vmax.f32 %v8174, %v8175
        %v8177 = vrot.slane %v8176, 4
        %v8178 = vmax.f32 %v8176, %v8177
        %v8179 = vrot.slane %v8178, 2
        %v8180 = vmax.f32 %v8178, %v8179
        %v8181 = vrot.slane %v8180, 1
        %v8182 = vmax.f32 %v8180, %v8181
        %v8183 = vsel %vm8056, %v1605, -inf
        %v8184 = vsel %vm8056, %v1606, -inf
        %v8185 = vmax.f32 %v8183, %v8184
        %v8186 = vrot.slane %v8185, 4
        %v8187 = vmax.f32 %v8185, %v8186
        %v8188 = vrot.slane %v8187, 2
        %v8189 = vmax.f32 %v8187, %v8188
        %v8190 = vrot.slane %v8189, 1
        %v8191 = vmax.f32 %v8189, %v8190
        %v8192 = vsel %vm8056, %v1607, -inf
        %v8193 = vsel %vm8056, %v1608, -inf
        %v8194 = vmax.f32 %v8192, %v8193
        %v8195 = vrot.slane %v8194, 4
        %v8196 = vmax.f32 %v8194, %v8195
        %v8197 = vrot.slane %v8196, 2
        %v8198 = vmax.f32 %v8196, %v8197
        %v8199 = vrot.slane %v8198, 1
        %v8200 = vmax.f32 %v8198, %v8199
        %v8201 = vsel %vm8056, %v1609, -inf
        %v8202 = vsel %vm8056, %v1610, -inf
        %v8203 = vmax.f32 %v8201, %v8202
        %v8204 = vrot.slane %v8203, 4
        %v8205 = vmax.f32 %v8203, %v8204
        %v8206 = vrot.slane %v8205, 2
        %v8207 = vmax.f32 %v8205, %v8206
        %v8208 = vrot.slane %v8207, 1
        %v8209 = vmax.f32 %v8207, %v8208
        %v8210 = vsel %vm8056, %v1611, -inf
        %v8211 = vsel %vm8056, %v1612, -inf
        %v8212 = vmax.f32 %v8210, %v8211
        %v8213 = vrot.slane %v8212, 4
        %v8214 = vmax.f32 %v8212, %v8213
        %v8215 = vrot.slane %v8214, 2
        %v8216 = vmax.f32 %v8214, %v8215
        %v8217 = vrot.slane %v8216, 1
        %v8218 = vmax.f32 %v8216, %v8217
        %v8219 = vsel %vm8056, %v1613, -inf
        %v8220 = vsel %vm8056, %v1614, -inf
        %v8221 = vmax.f32 %v8219, %v8220
        %v8222 = vrot.slane %v8221, 4
        %v8223 = vmax.f32 %v8221, %v8222
        %v8224 = vrot.slane %v8223, 2
        %v8225 = vmax.f32 %v8223, %v8224
        %v8226 = vrot.slane %v8225, 1
        %v8227 = vmax.f32 %v8225, %v8226
        %v8228 = vsel %vm8056, %v1615, -inf
        %v8229 = vsel %vm8056, %v1616, -inf
        %v8230 = vmax.f32 %v8228, %v8229
        %v8231 = vrot.slane %v8230, 4
        %v8232 = vmax.f32 %v8230, %v8231
        %v8233 = vrot.slane %v8232, 2
        %v8234 = vmax.f32 %v8232, %v8233
        %v8235 = vrot.slane %v8234, 1
        %v8236 = vmax.f32 %v8234, %v8235
        %v8237 = vsel %vm8056, %v1617, -inf
        %v8238 = vsel %vm8056, %v1618, -inf
        %v8239 = vmax.f32 %v8237, %v8238
        %v8240 = vrot.slane %v8239, 4
        %v8241 = vmax.f32 %v8239, %v8240
        %v8242 = vrot.slane %v8241, 2
        %v8243 = vmax.f32 %v8241, %v8242
        %v8244 = vrot.slane %v8243, 1
        %v8245 = vmax.f32 %v8243, %v8244
        %v8246 = vsel %vm8056, %v1619, -inf
        %v8247 = vsel %vm8056, %v1620, -inf
        %v8248 = vmax.f32 %v8246, %v8247
        %v8249 = vrot.slane %v8248, 4
        %v8250 = vmax.f32 %v8248, %v8249
        %v8251 = vrot.slane %v8250, 2
        %v8252 = vmax.f32 %v8250, %v8251
        %v8253 = vrot.slane %v8252, 1
        %v8254 = vmax.f32 %v8252, %v8253
        %v8255 = vsel %vm8056, %v1621, -inf
        %v8256 = vsel %vm8056, %v1622, -inf
        %v8257 = vmax.f32 %v8255, %v8256
        %v8258 = vrot.slane %v8257, 4
        %v8259 = vmax.f32 %v8257, %v8258
        %v8260 = vrot.slane %v8259, 2
        %v8261 = vmax.f32 %v8259, %v8260
        %v8262 = vrot.slane %v8261, 1
        %v8263 = vmax.f32 %v8261, %v8262
        %v8264 = vsel %vm8056, %v1623, -inf
        %v8265 = vsel %vm8056, %v1624, -inf
        %v8266 = vmax.f32 %v8264, %v8265
        %v8267 = vrot.slane %v8266, 4
        %v8268 = vmax.f32 %v8266, %v8267
        %v8269 = vrot.slane %v8268, 2
        %v8270 = vmax.f32 %v8268, %v8269
        %v8271 = vrot.slane %v8270, 1
        %v8272 = vmax.f32 %v8270, %v8271
        %v8273 = vsel %vm8056, %v1625, -inf
        %v8274 = vsel %vm8056, %v1626, -inf
        %v8275 = vmax.f32 %v8273, %v8274
        %v8276 = vrot.slane %v8275, 4
        %v8277 = vmax.f32 %v8275, %v8276
        %v8278 = vrot.slane %v8277, 2
        %v8279 = vmax.f32 %v8277, %v8278
        %v8280 = vrot.slane %v8279, 1
        %v8281 = vmax.f32 %v8279, %v8280
        %v8282 = vsel %vm8056, %v1627, -inf
        %v8283 = vsel %vm8056, %v1628, -inf
        %v8284 = vmax.f32 %v8282, %v8283
        %v8285 = vrot.slane %v8284, 4
        %v8286 = vmax.f32 %v8284, %v8285
        %v8287 = vrot.slane %v8286, 2
        %v8288 = vmax.f32 %v8286, %v8287
        %v8289 = vrot.slane %v8288, 1
        %v8290 = vmax.f32 %v8288, %v8289
        %v8291 = vsel %vm8056, %v1629, -inf
        %v8292 = vsel %vm8056, %v1630, -inf
        %v8293 = vmax.f32 %v8291, %v8292
        %v8294 = vrot.slane %v8293, 4
        %v8295 = vmax.f32 %v8293, %v8294
        %v8296 = vrot.slane %v8295, 2
        %v8297 = vmax.f32 %v8295, %v8296
        %v8298 = vrot.slane %v8297, 1
        %v8299 = vmax.f32 %v8297, %v8298
        %v8300 = vsel %vm8056, %v1631, -inf
        %v8301 = vsel %vm8056, %v1632, -inf
        %v8302 = vmax.f32 %v8300, %v8301
        %v8303 = vrot.slane %v8302, 4
        %v8304 = vmax.f32 %v8302, %v8303
        %v8305 = vrot.slane %v8304, 2
        %v8306 = vmax.f32 %v8304, %v8305
        %v8307 = vrot.slane %v8306, 1
        %v8308 = vmax.f32 %v8306, %v8307
        %v8309 = vsel %vm8056, %v1633, -inf
        %v8310 = vsel %vm8056, %v1634, -inf
        %v8311 = vmax.f32 %v8309, %v8310
        %v8312 = vrot.slane %v8311, 4
        %v8313 = vmax.f32 %v8311, %v8312
        %v8314 = vrot.slane %v8313, 2
        %v8315 = vmax.f32 %v8313, %v8314
        %v8316 = vrot.slane %v8315, 1
        %v8317 = vmax.f32 %v8315, %v8316
        %v8318 = vsel %vm8056, %v1635, -inf
        %v8319 = vsel %vm8056, %v1636, -inf
        %v8320 = vmax.f32 %v8318, %v8319
        %v8321 = vrot.slane %v8320, 4
        %v8322 = vmax.f32 %v8320, %v8321
        %v8323 = vrot.slane %v8322, 2
        %v8324 = vmax.f32 %v8322, %v8323
        %v8325 = vrot.slane %v8324, 1
        %v8326 = vmax.f32 %v8324, %v8325
        %v8327 = vsel %vm8056, %v1637, -inf
        %v8328 = vsel %vm8056, %v1638, -inf
        %v8329 = vmax.f32 %v8327, %v8328
        %v8330 = vrot.slane %v8329, 4
        %v8331 = vmax.f32 %v8329, %v8330
        %v8332 = vrot.slane %v8331, 2
        %v8333 = vmax.f32 %v8331, %v8332
        %v8334 = vrot.slane %v8333, 1
        %v8335 = vmax.f32 %v8333, %v8334
        %v8336 = vsel %vm8056, %v1639, -inf
        %v8337 = vsel %vm8056, %v1640, -inf
        %v8338 = vmax.f32 %v8336, %v8337
        %v8339 = vrot.slane %v8338, 4
        %v8340 = vmax.f32 %v8338, %v8339
        %v8341 = vrot.slane %v8340, 2
        %v8342 = vmax.f32 %v8340, %v8341
        %v8343 = vrot.slane %v8342, 1
        %v8344 = vmax.f32 %v8342, %v8343
        %v8345 = vsel %vm8056, %v1641, -inf
        %v8346 = vsel %vm8056, %v1642, -inf
        %v8347 = vmax.f32 %v8345, %v8346
        %v8348 = vrot.slane %v8347, 4
        %v8349 = vmax.f32 %v8347, %v8348
        %v8350 = vrot.slane %v8349, 2
        %v8351 = vmax.f32 %v8349, %v8350
        %v8352 = vrot.slane %v8351, 1
        %v8353 = vmax.f32 %v8351, %v8352
        %v8354 = vsel %vm8056, %v1643, -inf
        %v8355 = vsel %vm8056, %v1644, -inf
        %v8356 = vmax.f32 %v8354, %v8355
        %v8357 = vrot.slane %v8356, 4
        %v8358 = vmax.f32 %v8356, %v8357
        %v8359 = vrot.slane %v8358, 2
        %v8360 = vmax.f32 %v8358, %v8359
        %v8361 = vrot.slane %v8360, 1
        %v8362 = vmax.f32 %v8360, %v8361
        %v8363 = vsel %vm8056, %v1645, -inf
        %v8364 = vsel %vm8056, %v1646, -inf
        %v8365 = vmax.f32 %v8363, %v8364
        %v8366 = vrot.slane %v8365, 4
        %v8367 = vmax.f32 %v8365, %v8366
        %v8368 = vrot.slane %v8367, 2
        %v8369 = vmax.f32 %v8367, %v8368
        %v8370 = vrot.slane %v8369, 1
        %v8371 = vmax.f32 %v8369, %v8370
        %v8372 = vsel %vm8056, %v1647, -inf
        %v8373 = vsel %vm8056, %v1648, -inf
        %v8374 = vmax.f32 %v8372, %v8373
        %v8375 = vrot.slane %v8374, 4
        %v8376 = vmax.f32 %v8374, %v8375
        %v8377 = vrot.slane %v8376, 2
        %v8378 = vmax.f32 %v8376, %v8377
        %v8379 = vrot.slane %v8378, 1
        %v8380 = vmax.f32 %v8378, %v8379
        %v8381 = vsel %vm8056, %v1649, -inf
        %v8382 = vsel %vm8056, %v1650, -inf
        %v8383 = vmax.f32 %v8381, %v8382
        %v8384 = vrot.slane %v8383, 4
        %v8385 = vmax.f32 %v8383, %v8384
        %v8386 = vrot.slane %v8385, 2
        %v8387 = vmax.f32 %v8385, %v8386
        %v8388 = vrot.slane %v8387, 1
        %v8389 = vmax.f32 %v8387, %v8388
        %v8390 = vsel %vm8056, %v1651, -inf
        %v8391 = vsel %vm8056, %v1652, -inf
        %v8392 = vmax.f32 %v8390, %v8391
        %v8393 = vrot.slane %v8392, 4
        %v8394 = vmax.f32 %v8392, %v8393
        %v8395 = vrot.slane %v8394, 2
        %v8396 = vmax.f32 %v8394, %v8395
        %v8397 = vrot.slane %v8396, 1
        %v8398 = vmax.f32 %v8396, %v8397
        %v8399 = vsel %vm8056, %v1653, -inf
        %v8400 = vsel %vm8056, %v1654, -inf
        %v8401 = vmax.f32 %v8399, %v8400
        %v8402 = vrot.slane %v8401, 4
        %v8403 = vmax.f32 %v8401, %v8402
        %v8404 = vrot.slane %v8403, 2
        %v8405 = vmax.f32 %v8403, %v8404
        %v8406 = vrot.slane %v8405, 1
        %v8407 = vmax.f32 %v8405, %v8406
        %v8408 = vsel %vm8056, %v1655, -inf
        %v8409 = vsel %vm8056, %v1656, -inf
        %v8410 = vmax.f32 %v8408, %v8409
        %v8411 = vrot.slane %v8410, 4
        %v8412 = vmax.f32 %v8410, %v8411
        %v8413 = vrot.slane %v8412, 2
        %v8414 = vmax.f32 %v8412, %v8413
        %v8415 = vrot.slane %v8414, 1
        %v8416 = vmax.f32 %v8414, %v8415
        %v8417 = vsel %vm8056, %v1657, -inf
        %v8418 = vsel %vm8056, %v1658, -inf
        %v8419 = vmax.f32 %v8417, %v8418
        %v8420 = vrot.slane %v8419, 4
        %v8421 = vmax.f32 %v8419, %v8420
        %v8422 = vrot.slane %v8421, 2
        %v8423 = vmax.f32 %v8421, %v8422
        %v8424 = vrot.slane %v8423, 1
        %v8425 = vmax.f32 %v8423, %v8424
        %v8426 = vsel %vm8056, %v1659, -inf
        %v8427 = vsel %vm8056, %v1660, -inf
        %v8428 = vmax.f32 %v8426, %v8427
        %v8429 = vrot.slane %v8428, 4
        %v8430 = vmax.f32 %v8428, %v8429
        %v8431 = vrot.slane %v8430, 2
        %v8432 = vmax.f32 %v8430, %v8431
        %v8433 = vrot.slane %v8432, 1
        %v8434 = vmax.f32 %v8432, %v8433
        %v8435 = vsel %vm8056, %v1661, -inf
        %v8436 = vsel %vm8056, %v1662, -inf
        %v8437 = vmax.f32 %v8435, %v8436
        %v8438 = vrot.slane %v8437, 4
        %v8439 = vmax.f32 %v8437, %v8438
        %v8440 = vrot.slane %v8439, 2
        %v8441 = vmax.f32 %v8439, %v8440
        %v8442 = vrot.slane %v8441, 1
        %v8443 = vmax.f32 %v8441, %v8442
        %v8444 = vsel %vm8056, %v1663, -inf
        %v8445 = vsel %vm8056, %v1664, -inf
        %v8446 = vmax.f32 %v8444, %v8445
        %v8447 = vrot.slane %v8446, 4
        %v8448 = vmax.f32 %v8446, %v8447
        %v8449 = vrot.slane %v8448, 2
        %v8450 = vmax.f32 %v8448, %v8449
        %v8451 = vrot.slane %v8450, 1
        %v8452 = vmax.f32 %v8450, %v8451
        %v8453 = vsel %vm8056, %v1665, -inf
        %v8454 = vsel %vm8056, %v1666, -inf
        %v8455 = vmax.f32 %v8453, %v8454
        %v8456 = vrot.slane %v8455, 4
        %v8457 = vmax.f32 %v8455, %v8456
        %v8458 = vrot.slane %v8457, 2
        %v8459 = vmax.f32 %v8457, %v8458
        %v8460 = vrot.slane %v8459, 1
        %v8461 = vmax.f32 %v8459, %v8460
        %v8462 = vsel %vm8056, %v1667, -inf
        %v8463 = vsel %vm8056, %v1668, -inf
        %v8464 = vmax.f32 %v8462, %v8463
        %v8465 = vrot.slane %v8464, 4
        %v8466 = vmax.f32 %v8464, %v8465
        %v8467 = vrot.slane %v8466, 2
        %v8468 = vmax.f32 %v8466, %v8467
        %v8469 = vrot.slane %v8468, 1
        %v8470 = vmax.f32 %v8468, %v8469
        %v8471 = vsel %vm8056, %v1669, -inf
        %v8472 = vsel %vm8056, %v1670, -inf
        %v8473 = vmax.f32 %v8471, %v8472
        %v8474 = vrot.slane %v8473, 4
        %v8475 = vmax.f32 %v8473, %v8474
        %v8476 = vrot.slane %v8475, 2
        %v8477 = vmax.f32 %v8475, %v8476
        %v8478 = vrot.slane %v8477, 1
        %v8479 = vmax.f32 %v8477, %v8478
        %v8480 = vsel %vm8056, %v1671, -inf
        %v8481 = vsel %vm8056, %v1672, -inf
        %v8482 = vmax.f32 %v8480, %v8481
        %v8483 = vrot.slane %v8482, 4
        %v8484 = vmax.f32 %v8482, %v8483
        %v8485 = vrot.slane %v8484, 2
        %v8486 = vmax.f32 %v8484, %v8485
        %v8487 = vrot.slane %v8486, 1
        %v8488 = vmax.f32 %v8486, %v8487
        %v8489 = vsel %vm8056, %v1673, -inf
        %v8490 = vsel %vm8056, %v1674, -inf
        %v8491 = vmax.f32 %v8489, %v8490
        %v8492 = vrot.slane %v8491, 4
        %v8493 = vmax.f32 %v8491, %v8492
        %v8494 = vrot.slane %v8493, 2
        %v8495 = vmax.f32 %v8493, %v8494
        %v8496 = vrot.slane %v8495, 1
        %v8497 = vmax.f32 %v8495, %v8496
        %v8498 = vsel %vm8056, %v1675, -inf
        %v8499 = vsel %vm8056, %v1676, -inf
        %v8500 = vmax.f32 %v8498, %v8499
        %v8501 = vrot.slane %v8500, 4
        %v8502 = vmax.f32 %v8500, %v8501
        %v8503 = vrot.slane %v8502, 2
        %v8504 = vmax.f32 %v8502, %v8503
        %v8505 = vrot.slane %v8504, 1
        %v8506 = vmax.f32 %v8504, %v8505
        %v8507 = vsel %vm8056, %v1677, -inf
        %v8508 = vsel %vm8056, %v1678, -inf
        %v8509 = vmax.f32 %v8507, %v8508
        %v8510 = vrot.slane %v8509, 4
        %v8511 = vmax.f32 %v8509, %v8510
        %v8512 = vrot.slane %v8511, 2
        %v8513 = vmax.f32 %v8511, %v8512
        %v8514 = vrot.slane %v8513, 1
        %v8515 = vmax.f32 %v8513, %v8514
        %v8516 = vsel %vm8056, %v1679, -inf
        %v8517 = vsel %vm8056, %v1680, -inf
        %v8518 = vmax.f32 %v8516, %v8517
        %v8519 = vrot.slane %v8518, 4
        %v8520 = vmax.f32 %v8518, %v8519
        %v8521 = vrot.slane %v8520, 2
        %v8522 = vmax.f32 %v8520, %v8521
        %v8523 = vrot.slane %v8522, 1
        %v8524 = vmax.f32 %v8522, %v8523
        %v8525 = vsel %vm8056, %v1681, -inf
        %v8526 = vsel %vm8056, %v1682, -inf
        %v8527 = vmax.f32 %v8525, %v8526
        %v8528 = vrot.slane %v8527, 4
        %v8529 = vmax.f32 %v8527, %v8528
        %v8530 = vrot.slane %v8529, 2
        %v8531 = vmax.f32 %v8529, %v8530
        %v8532 = vrot.slane %v8531, 1
        %v8533 = vmax.f32 %v8531, %v8532
        %v8534 = vsel %vm8056, %v1683, -inf
        %v8535 = vsel %vm8056, %v1684, -inf
        %v8536 = vmax.f32 %v8534, %v8535
        %v8537 = vrot.slane %v8536, 4
        %v8538 = vmax.f32 %v8536, %v8537
        %v8539 = vrot.slane %v8538, 2
        %v8540 = vmax.f32 %v8538, %v8539
        %v8541 = vrot.slane %v8540, 1
        %v8542 = vmax.f32 %v8540, %v8541
        %v8543 = vsel %vm8056, %v1685, -inf
        %v8544 = vsel %vm8056, %v1686, -inf
        %v8545 = vmax.f32 %v8543, %v8544
        %v8546 = vrot.slane %v8545, 4
        %v8547 = vmax.f32 %v8545, %v8546
        %v8548 = vrot.slane %v8547, 2
        %v8549 = vmax.f32 %v8547, %v8548
        %v8550 = vrot.slane %v8549, 1
        %v8551 = vmax.f32 %v8549, %v8550
        %v8552 = vsel %vm8056, %v1687, -inf
        %v8553 = vsel %vm8056, %v1688, -inf
        %v8554 = vmax.f32 %v8552, %v8553
        %v8555 = vrot.slane %v8554, 4
        %v8556 = vmax.f32 %v8554, %v8555
        %v8557 = vrot.slane %v8556, 2
        %v8558 = vmax.f32 %v8556, %v8557
        %v8559 = vrot.slane %v8558, 1
        %v8560 = vmax.f32 %v8558, %v8559
        %v8561 = vsel %vm8056, %v1689, -inf
        %v8562 = vsel %vm8056, %v1690, -inf
        %v8563 = vmax.f32 %v8561, %v8562
        %v8564 = vrot.slane %v8563, 4
        %v8565 = vmax.f32 %v8563, %v8564
        %v8566 = vrot.slane %v8565, 2
        %v8567 = vmax.f32 %v8565, %v8566
        %v8568 = vrot.slane %v8567, 1
        %v8569 = vmax.f32 %v8567, %v8568
        %v8570 = vsel %vm8056, %v1691, -inf
        %v8571 = vsel %vm8056, %v1692, -inf
        %v8572 = vmax.f32 %v8570, %v8571
        %v8573 = vrot.slane %v8572, 4
        %v8574 = vmax.f32 %v8572, %v8573
        %v8575 = vrot.slane %v8574, 2
        %v8576 = vmax.f32 %v8574, %v8575
        %v8577 = vrot.slane %v8576, 1
        %v8578 = vmax.f32 %v8576, %v8577
        %v8579 = vsel %vm8056, %v1693, -inf
        %v8580 = vsel %vm8056, %v1694, -inf
        %v8581 = vmax.f32 %v8579, %v8580
        %v8582 = vrot.slane %v8581, 4
        %v8583 = vmax.f32 %v8581, %v8582
        %v8584 = vrot.slane %v8583, 2
        %v8585 = vmax.f32 %v8583, %v8584
        %v8586 = vrot.slane %v8585, 1
        %v8587 = vmax.f32 %v8585, %v8586
        %v8588 = vsel %vm8056, %v1695, -inf
        %v8589 = vsel %vm8056, %v1696, -inf
        %v8590 = vmax.f32 %v8588, %v8589
        %v8591 = vrot.slane %v8590, 4
        %v8592 = vmax.f32 %v8590, %v8591
        %v8593 = vrot.slane %v8592, 2
        %v8594 = vmax.f32 %v8592, %v8593
        %v8595 = vrot.slane %v8594, 1
        %v8596 = vmax.f32 %v8594, %v8595
        %v8597 = vsel %vm8056, %v1697, -inf
        %v8598 = vsel %vm8056, %v1698, -inf
        %v8599 = vmax.f32 %v8597, %v8598
        %v8600 = vrot.slane %v8599, 4
        %v8601 = vmax.f32 %v8599, %v8600
        %v8602 = vrot.slane %v8601, 2
        %v8603 = vmax.f32 %v8601, %v8602
        %v8604 = vrot.slane %v8603, 1
        %v8605 = vmax.f32 %v8603, %v8604
        %v8606 = vsel %vm8056, %v1699, -inf
        %v8607 = vsel %vm8056, %v1700, -inf
        %v8608 = vmax.f32 %v8606, %v8607
        %v8609 = vrot.slane %v8608, 4
        %v8610 = vmax.f32 %v8608, %v8609
        %v8611 = vrot.slane %v8610, 2
        %v8612 = vmax.f32 %v8610, %v8611
        %v8613 = vrot.slane %v8612, 1
        %v8614 = vmax.f32 %v8612, %v8613
        %v8615 = vsel %vm8056, %v1701, -inf
        %v8616 = vsel %vm8056, %v1702, -inf
        %v8617 = vmax.f32 %v8615, %v8616
        %v8618 = vrot.slane %v8617, 4
        %v8619 = vmax.f32 %v8617, %v8618
        %v8620 = vrot.slane %v8619, 2
        %v8621 = vmax.f32 %v8619, %v8620
        %v8622 = vrot.slane %v8621, 1
        %v8623 = vmax.f32 %v8621, %v8622
        %v8624 = vsel %vm8056, %v1703, -inf
        %v8625 = vsel %vm8056, %v1704, -inf
        %v8626 = vmax.f32 %v8624, %v8625
        %v8627 = vrot.slane %v8626, 4
        %v8628 = vmax.f32 %v8626, %v8627
        %v8629 = vrot.slane %v8628, 2
        %v8630 = vmax.f32 %v8628, %v8629
        %v8631 = vrot.slane %v8630, 1
        %v8632 = vmax.f32 %v8630, %v8631
        %vm8633 = vcmp.gt.f32.partialorder %v8065, 0.0
        %vm8634 = vcmp.gt.f32.partialorder %v8074, 0.0
        %vm8635 = vcmp.gt.f32.partialorder %v8083, 0.0
        %vm8636 = vcmp.gt.f32.partialorder %v8092, 0.0
        %vm8637 = vcmp.gt.f32.partialorder %v8101, 0.0
        %vm8638 = vcmp.gt.f32.partialorder %v8110, 0.0
        %vm8639 = vcmp.gt.f32.partialorder %v8119, 0.0
        %vm8640 = vcmp.gt.f32.partialorder %v8128, 0.0
        %vm8641 = vcmp.gt.f32.partialorder %v8137, 0.0
        %vm8642 = vcmp.gt.f32.partialorder %v8146, 0.0
        %vm8643 = vcmp.gt.f32.partialorder %v8155, 0.0
        %vm8644 = vcmp.gt.f32.partialorder %v8164, 0.0
        %vm8645 = vcmp.gt.f32.partialorder %v8173, 0.0
        %vm8646 = vcmp.gt.f32.partialorder %v8182, 0.0
        %vm8647 = vcmp.gt.f32.partialorder %v8191, 0.0
        %vm8648 = vcmp.gt.f32.partialorder %v8200, 0.0
        %vm8649 = vcmp.gt.f32.partialorder %v8209, 0.0
        %vm8650 = vcmp.gt.f32.partialorder %v8218, 0.0
        %vm8651 = vcmp.gt.f32.partialorder %v8227, 0.0
        %vm8652 = vcmp.gt.f32.partialorder %v8236, 0.0
        %vm8653 = vcmp.gt.f32.partialorder %v8245, 0.0
        %vm8654 = vcmp.gt.f32.partialorder %v8254, 0.0
        %vm8655 = vcmp.gt.f32.partialorder %v8263, 0.0
        %vm8656 = vcmp.gt.f32.partialorder %v8272, 0.0
        %vm8657 = vcmp.gt.f32.partialorder %v8281, 0.0
        %vm8658 = vcmp.gt.f32.partialorder %v8290, 0.0
        %vm8659 = vcmp.gt.f32.partialorder %v8299, 0.0
        %vm8660 = vcmp.gt.f32.partialorder %v8308, 0.0
        %vm8661 = vcmp.gt.f32.partialorder %v8317, 0.0
        %vm8662 = vcmp.gt.f32.partialorder %v8326, 0.0
        %vm8663 = vcmp.gt.f32.partialorder %v8335, 0.0
        %vm8664 = vcmp.gt.f32.partialorder %v8344, 0.0
        %vm8665 = vcmp.gt.f32.partialorder %v8353, 0.0
        %vm8666 = vcmp.gt.f32.partialorder %v8362, 0.0
        %vm8667 = vcmp.gt.f32.partialorder %v8371, 0.0
        %vm8668 = vcmp.gt.f32.partialorder %v8380, 0.0
        %vm8669 = vcmp.gt.f32.partialorder %v8389, 0.0
        %vm8670 = vcmp.gt.f32.partialorder %v8398, 0.0
        %vm8671 = vcmp.gt.f32.partialorder %v8407, 0.0
        %vm8672 = vcmp.gt.f32.partialorder %v8416, 0.0
        %vm8673 = vcmp.gt.f32.partialorder %v8425, 0.0
        %vm8674 = vcmp.gt.f32.partialorder %v8434, 0.0
        %vm8675 = vcmp.gt.f32.partialorder %v8443, 0.0
        %vm8676 = vcmp.gt.f32.partialorder %v8452, 0.0
        %vm8677 = vcmp.gt.f32.partialorder %v8461, 0.0
        %vm8678 = vcmp.gt.f32.partialorder %v8470, 0.0
        %vm8679 = vcmp.gt.f32.partialorder %v8479, 0.0
        %vm8680 = vcmp.gt.f32.partialorder %v8488, 0.0
        %vm8681 = vcmp.gt.f32.partialorder %v8497, 0.0
        %vm8682 = vcmp.gt.f32.partialorder %v8506, 0.0
        %vm8683 = vcmp.gt.f32.partialorder %v8515, 0.0
        %vm8684 = vcmp.gt.f32.partialorder %v8524, 0.0
        %vm8685 = vcmp.gt.f32.partialorder %v8533, 0.0
        %vm8686 = vcmp.gt.f32.partialorder %v8542, 0.0
        %vm8687 = vcmp.gt.f32.partialorder %v8551, 0.0
        %vm8688 = vcmp.gt.f32.partialorder %v8560, 0.0
        %vm8689 = vcmp.gt.f32.partialorder %v8569, 0.0
        %vm8690 = vcmp.gt.f32.partialorder %v8578, 0.0
        %vm8691 = vcmp.gt.f32.partialorder %v8587, 0.0
        %vm8692 = vcmp.gt.f32.partialorder %v8596, 0.0
        %vm8693 = vcmp.gt.f32.partialorder %v8605, 0.0
        %vm8694 = vcmp.gt.f32.partialorder %v8614, 0.0
        %vm8695 = vcmp.gt.f32.partialorder %v8623, 0.0
        %vm8696 = vcmp.gt.f32.partialorder %v8632, 0.0
        %v8697 = vsel %vm8633, 1, 0
        %v8698 = vsel %vm8634, 1, 0
        %v8699 = vsel %vm8635, 1, 0
        %v8700 = vsel %vm8636, 1, 0
        %v8701 = vsel %vm8637, 1, 0
        %v8702 = vsel %vm8638, 1, 0
        %v8703 = vsel %vm8639, 1, 0
        %v8704 = vsel %vm8640, 1, 0
        %v8705 = vsel %vm8641, 1, 0
        %v8706 = vsel %vm8642, 1, 0
        %v8707 = vsel %vm8643, 1, 0
        %v8708 = vsel %vm8644, 1, 0
        %v8709 = vsel %vm8645, 1, 0
        %v8710 = vsel %vm8646, 1, 0
        %v8711 = vsel %vm8647, 1, 0
        %v8712 = vsel %vm8648, 1, 0
        %v8713 = vsel %vm8649, 1, 0
        %v8714 = vsel %vm8650, 1, 0
        %v8715 = vsel %vm8651, 1, 0
        %v8716 = vsel %vm8652, 1, 0
        %v8717 = vsel %vm8653, 1, 0
        %v8718 = vsel %vm8654, 1, 0
        %v8719 = vsel %vm8655, 1, 0
        %v8720 = vsel %vm8656, 1, 0
        %v8721 = vsel %vm8657, 1, 0
        %v8722 = vsel %vm8658, 1, 0
        %v8723 = vsel %vm8659, 1, 0
        %v8724 = vsel %vm8660, 1, 0
        %v8725 = vsel %vm8661, 1, 0
        %v8726 = vsel %vm8662, 1, 0
        %v8727 = vsel %vm8663, 1, 0
        %v8728 = vsel %vm8664, 1, 0
        %v8729 = vsel %vm8665, 1, 0
        %v8730 = vsel %vm8666, 1, 0
        %v8731 = vsel %vm8667, 1, 0
        %v8732 = vsel %vm8668, 1, 0
        %v8733 = vsel %vm8669, 1, 0
        %v8734 = vsel %vm8670, 1, 0
        %v8735 = vsel %vm8671, 1, 0
        %v8736 = vsel %vm8672, 1, 0
        %v8737 = vsel %vm8673, 1, 0
        %v8738 = vsel %vm8674, 1, 0
        %v8739 = vsel %vm8675, 1, 0
        %v8740 = vsel %vm8676, 1, 0
        %v8741 = vsel %vm8677, 1, 0
        %v8742 = vsel %vm8678, 1, 0
        %v8743 = vsel %vm8679, 1, 0
        %v8744 = vsel %vm8680, 1, 0
        %v8745 = vsel %vm8681, 1, 0
        %v8746 = vsel %vm8682, 1, 0
        %v8747 = vsel %vm8683, 1, 0
        %v8748 = vsel %vm8684, 1, 0
        %v8749 = vsel %vm8685, 1, 0
        %v8750 = vsel %vm8686, 1, 0
        %v8751 = vsel %vm8687, 1, 0
        %v8752 = vsel %vm8688, 1, 0
        %v8753 = vsel %vm8689, 1, 0
        %v8754 = vsel %vm8690, 1, 0
        %v8755 = vsel %vm8691, 1, 0
        %v8756 = vsel %vm8692, 1, 0
        %v8757 = vsel %vm8693, 1, 0
        %v8758 = vsel %vm8694, 1, 0
        %v8759 = vsel %vm8695, 1, 0
        %v8760 = vsel %vm8696, 1, 0
        %v8761 = vcvt.s32.f32 %v8697
        %v8762 = vcvt.s32.f32 %v8698
        %v8763 = vcvt.s32.f32 %v8699
        %v8764 = vcvt.s32.f32 %v8700
        %v8765 = vcvt.s32.f32 %v8701
        %v8766 = vcvt.s32.f32 %v8702
        %v8767 = vcvt.s32.f32 %v8703
        %v8768 = vcvt.s32.f32 %v8704
        %v8769 = vcvt.s32.f32 %v8705
        %v8770 = vcvt.s32.f32 %v8706
        %v8771 = vcvt.s32.f32 %v8707
        %v8772 = vcvt.s32.f32 %v8708
        %v8773 = vcvt.s32.f32 %v8709
        %v8774 = vcvt.s32.f32 %v8710
        %v8775 = vcvt.s32.f32 %v8711
        %v8776 = vcvt.s32.f32 %v8712
        %v8777 = vcvt.s32.f32 %v8713
        %v8778 = vcvt.s32.f32 %v8714
        %v8779 = vcvt.s32.f32 %v8715
        %v8780 = vcvt.s32.f32 %v8716
        %v8781 = vcvt.s32.f32 %v8717
        %v8782 = vcvt.s32.f32 %v8718
        %v8783 = vcvt.s32.f32 %v8719
        %v8784 = vcvt.s32.f32 %v8720
        %v8785 = vcvt.s32.f32 %v8721
        %v8786 = vcvt.s32.f32 %v8722
        %v8787 = vcvt.s32.f32 %v8723
        %v8788 = vcvt.s32.f32 %v8724
        %v8789 = vcvt.s32.f32 %v8725
        %v8790 = vcvt.s32.f32 %v8726
        %v8791 = vcvt.s32.f32 %v8727
        %v8792 = vcvt.s32.f32 %v8728
        %v8793 = vcvt.s32.f32 %v8729
        %v8794 = vcvt.s32.f32 %v8730
        %v8795 = vcvt.s32.f32 %v8731
        %v8796 = vcvt.s32.f32 %v8732
        %v8797 = vcvt.s32.f32 %v8733
        %v8798 = vcvt.s32.f32 %v8734
        %v8799 = vcvt.s32.f32 %v8735
        %v8800 = vcvt.s32.f32 %v8736
        %v8801 = vcvt.s32.f32 %v8737
        %v8802 = vcvt.s32.f32 %v8738
        %v8803 = vcvt.s32.f32 %v8739
        %v8804 = vcvt.s32.f32 %v8740
        %v8805 = vcvt.s32.f32 %v8741
        %v8806 = vcvt.s32.f32 %v8742
        %v8807 = vcvt.s32.f32 %v8743
        %v8808 = vcvt.s32.f32 %v8744
        %v8809 = vcvt.s32.f32 %v8745
        %v8810 = vcvt.s32.f32 %v8746
        %v8811 = vcvt.s32.f32 %v8747
        %v8812 = vcvt.s32.f32 %v8748
        %v8813 = vcvt.s32.f32 %v8749
        %v8814 = vcvt.s32.f32 %v8750
        %v8815 = vcvt.s32.f32 %v8751
        %v8816 = vcvt.s32.f32 %v8752
        %v8817 = vcvt.s32.f32 %v8753
        %v8818 = vcvt.s32.f32 %v8754
        %v8819 = vcvt.s32.f32 %v8755
        %v8820 = vcvt.s32.f32 %v8756
        %v8821 = vcvt.s32.f32 %v8757
        %v8822 = vcvt.s32.f32 %v8758
        %v8823 = vcvt.s32.f32 %v8759
        %v8824 = vcvt.s32.f32 %v8760
        %v8825 = vpack.c.bf16 %v7488, %v7488
        %v8826 = vpack.c.bf16 %v7497, %v7497
        %v8827 = vpack.c.bf16 %v7506, %v7506
        %v8828 = vpack.c.bf16 %v7515, %v7515
        %v8829 = vpack.c.bf16 %v7524, %v7524
        %v8830 = vpack.c.bf16 %v7533, %v7533
        %v8831 = vpack.c.bf16 %v7542, %v7542
        %v8832 = vpack.c.bf16 %v7551, %v7551
        %v8833 = vpack.c.bf16 %v7560, %v7560
        %v8834 = vpack.c.bf16 %v7569, %v7569
        %v8835 = vpack.c.bf16 %v7578, %v7578
        %v8836 = vpack.c.bf16 %v7587, %v7587
        %v8837 = vpack.c.bf16 %v7596, %v7596
        %v8838 = vpack.c.bf16 %v7605, %v7605
        %v8839 = vpack.c.bf16 %v7614, %v7614
        %v8840 = vpack.c.bf16 %v7623, %v7623
        %v8841 = vpack.c.bf16 %v7632, %v7632
        %v8842 = vpack.c.bf16 %v7641, %v7641
        %v8843 = vpack.c.bf16 %v7650, %v7650
        %v8844 = vpack.c.bf16 %v7659, %v7659
        %v8845 = vpack.c.bf16 %v7668, %v7668
        %v8846 = vpack.c.bf16 %v7677, %v7677
        %v8847 = vpack.c.bf16 %v7686, %v7686
        %v8848 = vpack.c.bf16 %v7695, %v7695
        %v8849 = vpack.c.bf16 %v7704, %v7704
        %v8850 = vpack.c.bf16 %v7713, %v7713
        %v8851 = vpack.c.bf16 %v7722, %v7722
        %v8852 = vpack.c.bf16 %v7731, %v7731
        %v8853 = vpack.c.bf16 %v7740, %v7740
        %v8854 = vpack.c.bf16 %v7749, %v7749
        %v8855 = vpack.c.bf16 %v7758, %v7758
        %v8856 = vpack.c.bf16 %v7767, %v7767
        %v8857 = vpack.c.bf16 %v7776, %v7776
        %v8858 = vpack.c.bf16 %v7785, %v7785
        %v8859 = vpack.c.bf16 %v7794, %v7794
        %v8860 = vpack.c.bf16 %v7803, %v7803
        %v8861 = vpack.c.bf16 %v7812, %v7812
        %v8862 = vpack.c.bf16 %v7821, %v7821
        %v8863 = vpack.c.bf16 %v7830, %v7830
        %v8864 = vpack.c.bf16 %v7839, %v7839
        %v8865 = vpack.c.bf16 %v7848, %v7848
        %v8866 = vpack.c.bf16 %v7857, %v7857
        %v8867 = vpack.c.bf16 %v7866, %v7866
        %v8868 = vpack.c.bf16 %v7875, %v7875
        %v8869 = vpack.c.bf16 %v7884, %v7884
        %v8870 = vpack.c.bf16 %v7893, %v7893
        %v8871 = vpack.c.bf16 %v7902, %v7902
        %v8872 = vpack.c.bf16 %v7911, %v7911
        %v8873 = vpack.c.bf16 %v7920, %v7920
        %v8874 = vpack.c.bf16 %v7929, %v7929
        %v8875 = vpack.c.bf16 %v7938, %v7938
        %v8876 = vpack.c.bf16 %v7947, %v7947
        %v8877 = vpack.c.bf16 %v7956, %v7956
        %v8878 = vpack.c.bf16 %v7965, %v7965
        %v8879 = vpack.c.bf16 %v7974, %v7974
        %v8880 = vpack.c.bf16 %v7983, %v7983
        %v8881 = vpack.c.bf16 %v7992, %v7992
        %v8882 = vpack.c.bf16 %v8001, %v8001
        %v8883 = vpack.c.bf16 %v8010, %v8010
        %v8884 = vpack.c.bf16 %v8019, %v8019
        %v8885 = vpack.c.bf16 %v8028, %v8028
        %v8886 = vpack.c.bf16 %v8037, %v8037
        %v8887 = vpack.c.bf16 %v8046, %v8046
        %v8888 = vpack.c.bf16 %v8055, %v8055
        %v8889 = vld [vmem:[%s4] sm:$0xf]
        %v8890 = vld [vmem:[%s4 + $0x4] sm:$0xf]
        %v8891 = vld [vmem:[%s4 + $0x8] sm:$0xf]
        %v8892 = vld [vmem:[%s4 + $0xc] sm:$0xf]
        %v8893 = vlaneseq
        %v8894 = vshrl.u32 %v8893, 7
        %v8895 = vsub.s32 0, %v8894
        %v8896 = vrot.slane %v1708, %v8895
        %v8961 = vunpack.c.l.b16 %v8825
        %v8962 = vunpack.c.l.b16 %v8826
        %v8963 = vunpack.c.l.b16 %v8827
        %v8964 = vunpack.c.l.b16 %v8828
        %v8965 = vunpack.c.l.b16 %v8829
        %v8966 = vunpack.c.l.b16 %v8830
        %v8967 = vunpack.c.l.b16 %v8831
        %v8968 = vunpack.c.l.b16 %v8832
        %v8969 = vunpack.c.l.b16 %v8833
        %v8970 = vunpack.c.l.b16 %v8834
        %v8971 = vunpack.c.l.b16 %v8835
        %v8972 = vunpack.c.l.b16 %v8836
        %v8973 = vunpack.c.l.b16 %v8837
        %v8974 = vunpack.c.l.b16 %v8838
        %v8975 = vunpack.c.l.b16 %v8839
        %v8976 = vunpack.c.l.b16 %v8840
        %v8977 = vunpack.c.l.b16 %v8841
        %v8978 = vunpack.c.l.b16 %v8842
        %v8979 = vunpack.c.l.b16 %v8843
        %v8980 = vunpack.c.l.b16 %v8844
        %v8981 = vunpack.c.l.b16 %v8845
        %v8982 = vunpack.c.l.b16 %v8846
        %v8983 = vunpack.c.l.b16 %v8847
        %v8984 = vunpack.c.l.b16 %v8848
        %v8985 = vunpack.c.l.b16 %v8849
        %v8986 = vunpack.c.l.b16 %v8850
        %v8987 = vunpack.c.l.b16 %v8851
        %v8988 = vunpack.c.l.b16 %v8852
        %v8989 = vunpack.c.l.b16 %v8853
        %v8990 = vunpack.c.l.b16 %v8854
        %v8991 = vunpack.c.l.b16 %v8855
        %v8992 = vunpack.c.l.b16 %v8856
        %v8993 = vunpack.c.l.b16 %v8857
        %v8994 = vunpack.c.l.b16 %v8858
        %v8995 = vunpack.c.l.b16 %v8859
        %v8996 = vunpack.c.l.b16 %v8860
        %v8997 = vunpack.c.l.b16 %v8861
        %v8998 = vunpack.c.l.b16 %v8862
        %v8999 = vunpack.c.l.b16 %v8863
        %v9000 = vunpack.c.l.b16 %v8864
        %v9001 = vunpack.c.l.b16 %v8865
        %v9002 = vunpack.c.l.b16 %v8866
        %v9003 = vunpack.c.l.b16 %v8867
        %v9004 = vunpack.c.l.b16 %v8868
        %v9005 = vunpack.c.l.b16 %v8869
        %v9006 = vunpack.c.l.b16 %v8870
        %v9007 = vunpack.c.l.b16 %v8871
        %v9008 = vunpack.c.l.b16 %v8872
        %v9009 = vunpack.c.l.b16 %v8873
        %v9010 = vunpack.c.l.b16 %v8874
        %v9011 = vunpack.c.l.b16 %v8875
        %v9012 = vunpack.c.l.b16 %v8876
        %v9013 = vunpack.c.l.b16 %v8877
        %v9014 = vunpack.c.l.b16 %v8878
        %v9015 = vunpack.c.l.b16 %v8879
        %v9016 = vunpack.c.l.b16 %v8880
        %v9017 = vunpack.c.l.b16 %v8881
        %v9018 = vunpack.c.l.b16 %v8882
        %v9019 = vunpack.c.l.b16 %v8883
        %v9020 = vunpack.c.l.b16 %v8884
        %v9021 = vunpack.c.l.b16 %v8885
        %v9022 = vunpack.c.l.b16 %v8886
        %v9023 = vunpack.c.l.b16 %v8887
        %v9024 = vunpack.c.l.b16 %v8888
        %v9025 = vsel %vm4522, %v8962, %v8961
        %v9026 = vsel %vm4524, %v8963, %v9025
        %v9027 = vsel %vm4526, %v8964, %v9026
        %v9028 = vsel %vm4528, %v8965, %v9027
        %v9029 = vsel %vm4530, %v8966, %v9028
        %v9030 = vsel %vm4532, %v8967, %v9029
        %v9031 = vsel %vm4534, %v8968, %v9030
        %v9032 = vsel %vm4522, %v8970, %v8969
        %v9033 = vsel %vm4524, %v8971, %v9032
        %v9034 = vsel %vm4526, %v8972, %v9033
        %v9035 = vsel %vm4528, %v8973, %v9034
        %v9036 = vsel %vm4530, %v8974, %v9035
        %v9037 = vsel %vm4532, %v8975, %v9036
        %v9038 = vsel %vm4534, %v8976, %v9037
        %v9039 = vsel %vm4522, %v8978, %v8977
        %v9040 = vsel %vm4524, %v8979, %v9039
        %v9041 = vsel %vm4526, %v8980, %v9040
        %v9042 = vsel %vm4528, %v8981, %v9041
        %v9043 = vsel %vm4530, %v8982, %v9042
        %v9044 = vsel %vm4532, %v8983, %v9043
        %v9045 = vsel %vm4534, %v8984, %v9044
        %v9046 = vsel %vm4522, %v8986, %v8985
        %v9047 = vsel %vm4524, %v8987, %v9046
        %v9048 = vsel %vm4526, %v8988, %v9047
        %v9049 = vsel %vm4528, %v8989, %v9048
        %v9050 = vsel %vm4530, %v8990, %v9049
        %v9051 = vsel %vm4532, %v8991, %v9050
        %v9052 = vsel %vm4534, %v8992, %v9051
        %v9053 = vsel %vm4522, %v8994, %v8993
        %v9054 = vsel %vm4524, %v8995, %v9053
        %v9055 = vsel %vm4526, %v8996, %v9054
        %v9056 = vsel %vm4528, %v8997, %v9055
        %v9057 = vsel %vm4530, %v8998, %v9056
        %v9058 = vsel %vm4532, %v8999, %v9057
        %v9059 = vsel %vm4534, %v9000, %v9058
        %v9060 = vsel %vm4522, %v9002, %v9001
        %v9061 = vsel %vm4524, %v9003, %v9060
        %v9062 = vsel %vm4526, %v9004, %v9061
        %v9063 = vsel %vm4528, %v9005, %v9062
        %v9064 = vsel %vm4530, %v9006, %v9063
        %v9065 = vsel %vm4532, %v9007, %v9064
        %v9066 = vsel %vm4534, %v9008, %v9065
        %v9067 = vsel %vm4522, %v9010, %v9009
        %v9068 = vsel %vm4524, %v9011, %v9067
        %v9069 = vsel %vm4526, %v9012, %v9068
        %v9070 = vsel %vm4528, %v9013, %v9069
        %v9071 = vsel %vm4530, %v9014, %v9070
        %v9072 = vsel %vm4532, %v9015, %v9071
        %v9073 = vsel %vm4534, %v9016, %v9072
        %v9074 = vsel %vm4522, %v9018, %v9017
        %v9075 = vsel %vm4524, %v9019, %v9074
        %v9076 = vsel %vm4526, %v9020, %v9075
        %v9077 = vsel %vm4528, %v9021, %v9076
        %v9078 = vsel %vm4530, %v9022, %v9077
        %v9079 = vsel %vm4532, %v9023, %v9078
        %v9080 = vsel %vm4534, %v9024, %v9079
        %v9081 = vpack.c.b16 %v9038, %v9031
        %v9082 = vpack.c.b16 %v9052, %v9045
        %v9083 = vpack.c.b16 %v9066, %v9059
        %v9084 = vpack.c.b16 %v9080, %v9073
        %v9089 = vunpack.c.l.b16 %v8889
        %v9090 = vunpack.c.l.b16 %v8890
        %v9091 = vunpack.c.l.b16 %v8891
        %v9092 = vunpack.c.l.b16 %v8892
        %v9093 = vpack.c.b16 %v9090, %v9089
        %v9094 = vpack.c.b16 %v9092, %v9091
        %v9098 = vsel %vm3689, %v9081, 0
        %v9101 = vsel %vm3689, %v9082, 0
        %v9104 = vsel %vm3689, %v9083, 0
        %v9107 = vsel %vm3689, %v9084, 0
        %9109 = vmatprep.subr.bf16.mxu0 0
        %9110 = vmatpush1.bf16.msra.mxu0 %v9093
        %9111 = vmatprep.subr.bf16.mxu0 0
        %9112 = vmatpush1.bf16.msra.mxu0 %v9094
        %9113 = vmatprep.subr.bf16.mxu0 0
        %9114 = vmatpush1.bf16.msra.mxu0 0
        %9115 = vmatprep.subr.bf16.mxu0 0
        %9116 = vmatpush1.bf16.msra.mxu0 0
        %9117 = vmatprep.subr.bf16.mxu0 0
        %9118 = vmatpush1.bf16.msra.mxu0 0
        %9119 = vmatprep.subr.bf16.mxu0 0
        %9120 = vmatpush1.bf16.msra.mxu0 0
        %9121 = vmatprep.subr.bf16.mxu0 0
        %9122 = vmatpush1.bf16.msra.mxu0 0
        %9123 = vmatprep.subr.bf16.mxu0 0
        %9124 = vmatpush1.bf16.msra.mxu0 0
        %9125 = vmatprep.subr.bf16.mxu0 0
        %9126 = vmatpush1.bf16.msra.mxu0 0
        %9127 = vmatprep.subr.bf16.mxu0 0
        %9128 = vmatpush1.bf16.msra.mxu0 0
        %9129 = vmatprep.subr.bf16.mxu0 0
        %9130 = vmatpush1.bf16.msra.mxu0 0
        %9131 = vmatprep.subr.bf16.mxu0 0
        %9132 = vmatpush1.bf16.msra.mxu0 0
        %9133 = vmatprep.subr.bf16.mxu0 0
        %9134 = vmatpush1.bf16.msra.mxu0 0
        %9135 = vmatprep.subr.bf16.mxu0 0
        %9136 = vmatpush1.bf16.msra.mxu0 0
        %9137 = vmatprep.subr.bf16.mxu0 0
        %9138 = vmatpush1.bf16.msra.mxu0 0
        %9139 = vmatprep.subr.bf16.mxu0 0
        %9140 = vmatpush1.bf16.msra.mxu0 0
        %9141 = vmatprep.mubr.bf16.mxu0 0
        %9142 = vmatmul.mubr.bf16.gmra.mrb[0].mxu0 %v9098
        %v9143 = vpop.f32.mrb[0].mxu0
        %v9144 = vadd.f32 %v8896, %v9143
        %v9145 = vpop.f32.mrb[0].mxu0
        %v9146 = vpop.f32.mrb[0].mxu0
        %v9147 = vadd.f32 %v8896, %v9146
        %v9148 = vpop.f32.mrb[0].mxu0
        %9149 = vmatprep.mubr.bf16.mxu0 0
        %9150 = vmatmul.mubr.bf16.gmra.mrb[0].mxu0 %v9101
        %v9151 = vpop.f32.mrb[0].mxu0
        %v9152 = vadd.f32 %v8896, %v9151
        %v9153 = vpop.f32.mrb[0].mxu0
        %v9154 = vpop.f32.mrb[0].mxu0
        %v9155 = vadd.f32 %v8896, %v9154
        %v9156 = vpop.f32.mrb[0].mxu0
        %9157 = vmatprep.mubr.bf16.mxu0 0
        %9158 = vmatmul.mubr.bf16.gmra.mrb[0].mxu0 %v9104
        %v9159 = vpop.f32.mrb[0].mxu0
        %v9160 = vadd.f32 %v8896, %v9159
        %v9161 = vpop.f32.mrb[0].mxu0
        %v9162 = vpop.f32.mrb[0].mxu0
        %v9163 = vadd.f32 %v8896, %v9162
        %v9164 = vpop.f32.mrb[0].mxu0
        %9165 = vmatprep.mubr.bf16.mxu0 0
        %9166 = vmatmul.mubr.bf16.gmra.mrb[0].mxu0 %v9107
        %v9167 = vpop.f32.mrb[0].mxu0
        %v9168 = vadd.f32 %v8896, %v9167
        %v9169 = vpop.f32.mrb[0].mxu0
        %v9170 = vpop.f32.mrb[0].mxu0
        %v9171 = vadd.f32 %v8896, %v9170
        %v9172 = vpop.f32.mrb[0].mxu0
        %9173 = vdwg.mxu0
        %v9174 = vmax.f32 %v9144, 0.0
        %v9175 = vmax.f32 %v9147, 0.0
        %v9176 = vmax.f32 %v9152, 0.0
        %v9177 = vmax.f32 %v9155, 0.0
        %v9178 = vmax.f32 %v9160, 0.0
        %v9179 = vmax.f32 %v9163, 0.0
        %v9180 = vmax.f32 %v9168, 0.0
        %v9181 = vmax.f32 %v9171, 0.0
        %v9182 = vpack.c.bf16 %v9175, %v9174
        %v9183 = vpack.c.bf16 %v9177, %v9176
        %v9184 = vpack.c.bf16 %v9179, %v9178
        %v9185 = vpack.c.bf16 %v9181, %v9180
        %v9186 = vld [vmem:[%s5] sm:$0xf]
        %v9187 = vld [vmem:[%s5 + $0x4] sm:$0xf]
        %v9188 = vld [vmem:[%s5 + $0x8] sm:$0xf]
        %v9189 = vld [vmem:[%s5 + $0xc] sm:$0xf]
        %v9190 = vlaneseq
        %v9191 = vshrl.u32 %v9190, 7
        %v9192 = vsub.s32 0, %v9191
        %v9193 = vrot.slane %v1709, %v9192
        %v9198 = vunpack.c.l.b16 %v9186
        %v9199 = vunpack.c.l.b16 %v9187
        %v9200 = vunpack.c.l.b16 %v9188
        %v9201 = vunpack.c.l.b16 %v9189
        %v9202 = vpack.c.b16 %v9199, %v9198
        %v9203 = vpack.c.b16 %v9201, %v9200
        %v9207 = vsel %vm3689, %v9182, 0
        %v9210 = vsel %vm3689, %v9183, 0
        %v9213 = vsel %vm3689, %v9184, 0
        %v9216 = vsel %vm3689, %v9185, 0
        %9218 = vmatprep.subr.bf16.mxu0 0
        %9219 = vmatpush1.bf16.msra.mxu0 %v9202
        %9220 = vmatprep.subr.bf16.mxu0 0
        %9221 = vmatpush1.bf16.msra.mxu0 %v9203
        %9222 = vmatprep.subr.bf16.mxu0 0
        %9223 = vmatpush1.bf16.msra.mxu0 0
        %9224 = vmatprep.subr.bf16.mxu0 0
        %9225 = vmatpush1.bf16.msra.mxu0 0
        %9226 = vmatprep.subr.bf16.mxu0 0
        %9227 = vmatpush1.bf16.msra.mxu0 0
        %9228 = vmatprep.subr.bf16.mxu0 0
        %9229 = vmatpush1.bf16.msra.mxu0 0
        %9230 = vmatprep.subr.bf16.mxu0 0
        %9231 = vmatpush1.bf16.msra.mxu0 0
        %9232 = vmatprep.subr.bf16.mxu0 0
        %9233 = vmatpush1.bf16.msra.mxu0 0
        %9234 = vmatprep.subr.bf16.mxu0 0
        %9235 = vmatpush1.bf16.msra.mxu0 0
        %9236 = vmatprep.subr.bf16.mxu0 0
        %9237 = vmatpush1.bf16.msra.mxu0 0
        %9238 = vmatprep.subr.bf16.mxu0 0
        %9239 = vmatpush1.bf16.msra.mxu0 0
        %9240 = vmatprep.subr.bf16.mxu0 0
        %9241 = vmatpush1.bf16.msra.mxu0 0
        %9242 = vmatprep.subr.bf16.mxu0 0
        %9243 = vmatpush1.bf16.msra.mxu0 0
        %9244 = vmatprep.subr.bf16.mxu0 0
        %9245 = vmatpush1.bf16.msra.mxu0 0
        %9246 = vmatprep.subr.bf16.mxu0 0
        %9247 = vmatpush1.bf16.msra.mxu0 0
        %9248 = vmatprep.subr.bf16.mxu0 0
        %9249 = vmatpush1.bf16.msra.mxu0 0
        %9250 = vmatprep.mubr.bf16.mxu0 0
        %9251 = vmatmul.mubr.bf16.gmra.mrb[0].mxu0 %v9207
        %v9252 = vpop.f32.mrb[0].mxu0
        %v9253 = vadd.f32 %v9193, %v9252
        %v9254 = vpop.f32.mrb[0].mxu0
        %v9255 = vpop.f32.mrb[0].mxu0
        %v9256 = vadd.f32 %v9193, %v9255
        %v9257 = vpop.f32.mrb[0].mxu0
        %9258 = vmatprep.mubr.bf16.mxu0 0
        %9259 = vmatmul.mubr.bf16.gmra.mrb[0].mxu0 %v9210
        %v9260 = vpop.f32.mrb[0].mxu0
        %v9261 = vadd.f32 %v9193, %v9260
        %v9262 = vpop.f32.mrb[0].mxu0
        %v9263 = vpop.f32.mrb[0].mxu0
        %v9264 = vadd.f32 %v9193, %v9263
        %v9265 = vpop.f32.mrb[0].mxu0
        %9266 = vmatprep.mubr.bf16.mxu0 0
        %9267 = vmatmul.mubr.bf16.gmra.mrb[0].mxu0 %v9213
        %v9268 = vpop.f32.mrb[0].mxu0
        %v9269 = vadd.f32 %v9193, %v9268
        %v9270 = vpop.f32.mrb[0].mxu0
        %v9271 = vpop.f32.mrb[0].mxu0
        %v9272 = vadd.f32 %v9193, %v9271
        %v9273 = vpop.f32.mrb[0].mxu0
        %9274 = vmatprep.mubr.bf16.mxu0 0
        %9275 = vmatmul.mubr.bf16.gmra.mrb[0].mxu0 %v9216
        %v9276 = vpop.f32.mrb[0].mxu0
        %v9277 = vadd.f32 %v9193, %v9276
        %v9278 = vpop.f32.mrb[0].mxu0
        %v9279 = vpop.f32.mrb[0].mxu0
        %v9280 = vadd.f32 %v9193, %v9279
        %v9281 = vpop.f32.mrb[0].mxu0
        %9282 = vdwg.mxu0
        %9284 = vset.pattern.permute.xlu0 0
        %9285 = vperm.xlu0 %9284, %v8761
        %v9286 = vpop.permute.xlu0 %9285
        %9288 = vset.pattern.permute.xlu0 0
        %9289 = vperm.xlu0 %9288, %v8762
        %v9290 = vpop.permute.xlu0 %9289
        %9292 = vset.pattern.permute.xlu0 0
        %9293 = vperm.xlu0 %9292, %v8763
        %v9294 = vpop.permute.xlu0 %9293
        %9296 = vset.pattern.permute.xlu0 0
        %9297 = vperm.xlu0 %9296, %v8764
        %v9298 = vpop.permute.xlu0 %9297
        %9300 = vset.pattern.permute.xlu0 0
        %9301 = vperm.xlu0 %9300, %v8765
        %v9302 = vpop.permute.xlu0 %9301
        %9304 = vset.pattern.permute.xlu0 0
        %9305 = vperm.xlu0 %9304, %v8766
        %v9306 = vpop.permute.xlu0 %9305
        %9308 = vset.pattern.permute.xlu0 0
        %9309 = vperm.xlu0 %9308, %v8767
        %v9310 = vpop.permute.xlu0 %9309
        %9312 = vset.pattern.permute.xlu0 0
        %9313 = vperm.xlu0 %9312, %v8768
        %v9314 = vpop.permute.xlu0 %9313
        %9316 = vset.pattern.permute.xlu0 0
        %9317 = vperm.xlu0 %9316, %v8769
        %v9318 = vpop.permute.xlu0 %9317
        %9320 = vset.pattern.permute.xlu0 0
        %9321 = vperm.xlu0 %9320, %v8770
        %v9322 = vpop.permute.xlu0 %9321
        %9324 = vset.pattern.permute.xlu0 0
        %9325 = vperm.xlu0 %9324, %v8771
        %v9326 = vpop.permute.xlu0 %9325
        %9328 = vset.pattern.permute.xlu0 0
        %9329 = vperm.xlu0 %9328, %v8772
        %v9330 = vpop.permute.xlu0 %9329
        %9332 = vset.pattern.permute.xlu0 0
        %9333 = vperm.xlu0 %9332, %v8773
        %v9334 = vpop.permute.xlu0 %9333
        %9336 = vset.pattern.permute.xlu0 0
        %9337 = vperm.xlu0 %9336, %v8774
        %v9338 = vpop.permute.xlu0 %9337
        %9340 = vset.pattern.permute.xlu0 0
        %9341 = vperm.xlu0 %9340, %v8775
        %v9342 = vpop.permute.xlu0 %9341
        %9344 = vset.pattern.permute.xlu0 0
        %9345 = vperm.xlu0 %9344, %v8776
        %v9346 = vpop.permute.xlu0 %9345
        %9348 = vset.pattern.permute.xlu0 0
        %9349 = vperm.xlu0 %9348, %v8777
        %v9350 = vpop.permute.xlu0 %9349
        %9352 = vset.pattern.permute.xlu0 0
        %9353 = vperm.xlu0 %9352, %v8778
        %v9354 = vpop.permute.xlu0 %9353
        %9356 = vset.pattern.permute.xlu0 0
        %9357 = vperm.xlu0 %9356, %v8779
        %v9358 = vpop.permute.xlu0 %9357
        %9360 = vset.pattern.permute.xlu0 0
        %9361 = vperm.xlu0 %9360, %v8780
        %v9362 = vpop.permute.xlu0 %9361
        %9364 = vset.pattern.permute.xlu0 0
        %9365 = vperm.xlu0 %9364, %v8781
        %v9366 = vpop.permute.xlu0 %9365
        %9368 = vset.pattern.permute.xlu0 0
        %9369 = vperm.xlu0 %9368, %v8782
        %v9370 = vpop.permute.xlu0 %9369
        %9372 = vset.pattern.permute.xlu0 0
        %9373 = vperm.xlu0 %9372, %v8783
        %v9374 = vpop.permute.xlu0 %9373
        %9376 = vset.pattern.permute.xlu0 0
        %9377 = vperm.xlu0 %9376, %v8784
        %v9378 = vpop.permute.xlu0 %9377
        %9380 = vset.pattern.permute.xlu0 0
        %9381 = vperm.xlu0 %9380, %v8785
        %v9382 = vpop.permute.xlu0 %9381
        %9384 = vset.pattern.permute.xlu0 0
        %9385 = vperm.xlu0 %9384, %v8786
        %v9386 = vpop.permute.xlu0 %9385
        %9388 = vset.pattern.permute.xlu0 0
        %9389 = vperm.xlu0 %9388, %v8787
        %v9390 = vpop.permute.xlu0 %9389
        %9392 = vset.pattern.permute.xlu0 0
        %9393 = vperm.xlu0 %9392, %v8788
        %v9394 = vpop.permute.xlu0 %9393
        %9396 = vset.pattern.permute.xlu0 0
        %9397 = vperm.xlu0 %9396, %v8789
        %v9398 = vpop.permute.xlu0 %9397
        %9400 = vset.pattern.permute.xlu0 0
        %9401 = vperm.xlu0 %9400, %v8790
        %v9402 = vpop.permute.xlu0 %9401
        %9404 = vset.pattern.permute.xlu0 0
        %9405 = vperm.xlu0 %9404, %v8791
        %v9406 = vpop.permute.xlu0 %9405
        %9408 = vset.pattern.permute.xlu0 0
        %9409 = vperm.xlu0 %9408, %v8792
        %v9410 = vpop.permute.xlu0 %9409
        %9412 = vset.pattern.permute.xlu0 0
        %9413 = vperm.xlu0 %9412, %v8793
        %v9414 = vpop.permute.xlu0 %9413
        %9416 = vset.pattern.permute.xlu0 0
        %9417 = vperm.xlu0 %9416, %v8794
        %v9418 = vpop.permute.xlu0 %9417
        %9420 = vset.pattern.permute.xlu0 0
        %9421 = vperm.xlu0 %9420, %v8795
        %v9422 = vpop.permute.xlu0 %9421
        %9424 = vset.pattern.permute.xlu0 0
        %9425 = vperm.xlu0 %9424, %v8796
        %v9426 = vpop.permute.xlu0 %9425
        %9428 = vset.pattern.permute.xlu0 0
        %9429 = vperm.xlu0 %9428, %v8797
        %v9430 = vpop.permute.xlu0 %9429
        %9432 = vset.pattern.permute.xlu0 0
        %9433 = vperm.xlu0 %9432, %v8798
        %v9434 = vpop.permute.xlu0 %9433
        %9436 = vset.pattern.permute.xlu0 0
        %9437 = vperm.xlu0 %9436, %v8799
        %v9438 = vpop.permute.xlu0 %9437
        %9440 = vset.pattern.permute.xlu0 0
        %9441 = vperm.xlu0 %9440, %v8800
        %v9442 = vpop.permute.xlu0 %9441
        %9444 = vset.pattern.permute.xlu0 0
        %9445 = vperm.xlu0 %9444, %v8801
        %v9446 = vpop.permute.xlu0 %9445
        %9448 = vset.pattern.permute.xlu0 0
        %9449 = vperm.xlu0 %9448, %v8802
        %v9450 = vpop.permute.xlu0 %9449
        %9452 = vset.pattern.permute.xlu0 0
        %9453 = vperm.xlu0 %9452, %v8803
        %v9454 = vpop.permute.xlu0 %9453
        %9456 = vset.pattern.permute.xlu0 0
        %9457 = vperm.xlu0 %9456, %v8804
        %v9458 = vpop.permute.xlu0 %9457
        %9460 = vset.pattern.permute.xlu0 0
        %9461 = vperm.xlu0 %9460, %v8805
        %v9462 = vpop.permute.xlu0 %9461
        %9464 = vset.pattern.permute.xlu0 0
        %9465 = vperm.xlu0 %9464, %v8806
        %v9466 = vpop.permute.xlu0 %9465
        %9468 = vset.pattern.permute.xlu0 0
        %9469 = vperm.xlu0 %9468, %v8807
        %v9470 = vpop.permute.xlu0 %9469
        %9472 = vset.pattern.permute.xlu0 0
        %9473 = vperm.xlu0 %9472, %v8808
        %v9474 = vpop.permute.xlu0 %9473
        %9476 = vset.pattern.permute.xlu0 0
        %9477 = vperm.xlu0 %9476, %v8809
        %v9478 = vpop.permute.xlu0 %9477
        %9480 = vset.pattern.permute.xlu0 0
        %9481 = vperm.xlu0 %9480, %v8810
        %v9482 = vpop.permute.xlu0 %9481
        %9484 = vset.pattern.permute.xlu0 0
        %9485 = vperm.xlu0 %9484, %v8811
        %v9486 = vpop.permute.xlu0 %9485
        %9488 = vset.pattern.permute.xlu0 0
        %9489 = vperm.xlu0 %9488, %v8812
        %v9490 = vpop.permute.xlu0 %9489
        %9492 = vset.pattern.permute.xlu0 0
        %9493 = vperm.xlu0 %9492, %v8813
        %v9494 = vpop.permute.xlu0 %9493
        %9496 = vset.pattern.permute.xlu0 0
        %9497 = vperm.xlu0 %9496, %v8814
        %v9498 = vpop.permute.xlu0 %9497
        %9500 = vset.pattern.permute.xlu0 0
        %9501 = vperm.xlu0 %9500, %v8815
        %v9502 = vpop.permute.xlu0 %9501
        %9504 = vset.pattern.permute.xlu0 0
        %9505 = vperm.xlu0 %9504, %v8816
        %v9506 = vpop.permute.xlu0 %9505
        %9508 = vset.pattern.permute.xlu0 0
        %9509 = vperm.xlu0 %9508, %v8817
        %v9510 = vpop.permute.xlu0 %9509
        %9512 = vset.pattern.permute.xlu0 0
        %9513 = vperm.xlu0 %9512, %v8818
        %v9514 = vpop.permute.xlu0 %9513
        %9516 = vset.pattern.permute.xlu0 0
        %9517 = vperm.xlu0 %9516, %v8819
        %v9518 = vpop.permute.xlu0 %9517
        %9520 = vset.pattern.permute.xlu0 0
        %9521 = vperm.xlu0 %9520, %v8820
        %v9522 = vpop.permute.xlu0 %9521
        %9524 = vset.pattern.permute.xlu0 0
        %9525 = vperm.xlu0 %9524, %v8821
        %v9526 = vpop.permute.xlu0 %9525
        %9528 = vset.pattern.permute.xlu0 0
        %9529 = vperm.xlu0 %9528, %v8822
        %v9530 = vpop.permute.xlu0 %9529
        %9532 = vset.pattern.permute.xlu0 0
        %9533 = vperm.xlu0 %9532, %v8823
        %v9534 = vpop.permute.xlu0 %9533
        %9536 = vset.pattern.permute.xlu0 0
        %9537 = vperm.xlu0 %9536, %v8824
        %v9538 = vpop.permute.xlu0 %9537
        %v9539 = vsel %vm4522, %v9290, %v9286
        %v9540 = vsel %vm4524, %v9294, %v9539
        %v9541 = vsel %vm4526, %v9298, %v9540
        %v9542 = vsel %vm4528, %v9302, %v9541
        %v9543 = vsel %vm4530, %v9306, %v9542
        %v9544 = vsel %vm4532, %v9310, %v9543
        %v9545 = vsel %vm4534, %v9314, %v9544
        %v9546 = vsel %vm4522, %v9322, %v9318
        %v9547 = vsel %vm4524, %v9326, %v9546
        %v9548 = vsel %vm4526, %v9330, %v9547
        %v9549 = vsel %vm4528, %v9334, %v9548
        %v9550 = vsel %vm4530, %v9338, %v9549
        %v9551 = vsel %vm4532, %v9342, %v9550
        %v9552 = vsel %vm4534, %v9346, %v9551
        %v9553 = vsel %vm4522, %v9354, %v9350
        %v9554 = vsel %vm4524, %v9358, %v9553
        %v9555 = vsel %vm4526, %v9362, %v9554
        %v9556 = vsel %vm4528, %v9366, %v9555
        %v9557 = vsel %vm4530, %v9370, %v9556
        %v9558 = vsel %vm4532, %v9374, %v9557
        %v9559 = vsel %vm4534, %v9378, %v9558
        %v9560 = vsel %vm4522, %v9386, %v9382
        %v9561 = vsel %vm4524, %v9390, %v9560
        %v9562 = vsel %vm4526, %v9394, %v9561
        %v9563 = vsel %vm4528, %v9398, %v9562
        %v9564 = vsel %vm4530, %v9402, %v9563
        %v9565 = vsel %vm4532, %v9406, %v9564
        %v9566 = vsel %vm4534, %v9410, %v9565
        %v9567 = vsel %vm4522, %v9418, %v9414
        %v9568 = vsel %vm4524, %v9422, %v9567
        %v9569 = vsel %vm4526, %v9426, %v9568
        %v9570 = vsel %vm4528, %v9430, %v9569
        %v9571 = vsel %vm4530, %v9434, %v9570
        %v9572 = vsel %vm4532, %v9438, %v9571
        %v9573 = vsel %vm4534, %v9442, %v9572
        %v9574 = vsel %vm4522, %v9450, %v9446
        %v9575 = vsel %vm4524, %v9454, %v9574
        %v9576 = vsel %vm4526, %v9458, %v9575
        %v9577 = vsel %vm4528, %v9462, %v9576
        %v9578 = vsel %vm4530, %v9466, %v9577
        %v9579 = vsel %vm4532, %v9470, %v9578
        %v9580 = vsel %vm4534, %v9474, %v9579
        %v9581 = vsel %vm4522, %v9482, %v9478
        %v9582 = vsel %vm4524, %v9486, %v9581
        %v9583 = vsel %vm4526, %v9490, %v9582
        %v9584 = vsel %vm4528, %v9494, %v9583
        %v9585 = vsel %vm4530, %v9498, %v9584
        %v9586 = vsel %vm4532, %v9502, %v9585
        %v9587 = vsel %vm4534, %v9506, %v9586
        %v9588 = vsel %vm4522, %v9514, %v9510
        %v9589 = vsel %vm4524, %v9518, %v9588
        %v9590 = vsel %vm4526, %v9522, %v9589
        %v9591 = vsel %vm4528, %v9526, %v9590
        %v9592 = vsel %vm4530, %v9530, %v9591
        %v9593 = vsel %vm4532, %v9534, %v9592
        %v9594 = vsel %vm4534, %v9538, %v9593
        %v9603 = vmul.f32 %v9253, %v9545
        %v9604 = vmul.f32 %v9256, %v9552
        %v9605 = vmul.f32 %v9261, %v9559
        %v9606 = vmul.f32 %v9264, %v9566
        %v9607 = vmul.f32 %v9269, %v9573
        %v9608 = vmul.f32 %v9272, %v9580
        %v9609 = vmul.f32 %v9277, %v9587
        %v9610 = vmul.f32 %v9280, %v9594
        %v9611 = vpack.c.bf16 %v9603, %v9603
        %v9612 = vpack.c.bf16 %v9604, %v9604
        %v9613 = vpack.c.bf16 %v9605, %v9605
        %v9614 = vpack.c.bf16 %v9606, %v9606
        %v9615 = vpack.c.bf16 %v9607, %v9607
        %v9616 = vpack.c.bf16 %v9608, %v9608
        %v9617 = vpack.c.bf16 %v9609, %v9609
        %v9618 = vpack.c.bf16 %v9610, %v9610
        %v9619 = vld [vmem:[%s6] sm:$0xf]
        %v9620 = vld [vmem:[%s6 + $0x4] sm:$0xf]
        %v9621 = vld [vmem:[%s6 + $0x8] sm:$0xf]
        %v9622 = vld [vmem:[%s6 + $0xc] sm:$0xf]
        %v9623 = vld [vmem:[%s6 + $0x10] sm:$0xf]
        %v9624 = vld [vmem:[%s6 + $0x14] sm:$0xf]
        %v9625 = vld [vmem:[%s6 + $0x18] sm:$0xf]
        %v9626 = vld [vmem:[%s6 + $0x1c] sm:$0xf]
        %v9627 = vld [vmem:[%s6 + $0x20] sm:$0xf]
        %v9628 = vld [vmem:[%s6 + $0x24] sm:$0xf]
        %v9629 = vld [vmem:[%s6 + $0x28] sm:$0xf]
        %v9630 = vld [vmem:[%s6 + $0x2c] sm:$0xf]
        %v9631 = vld [vmem:[%s6 + $0x30] sm:$0xf]
        %v9632 = vld [vmem:[%s6 + $0x34] sm:$0xf]
        %v9633 = vld [vmem:[%s6 + $0x38] sm:$0xf]
        %v9634 = vld [vmem:[%s6 + $0x3c] sm:$0xf]
        %v9637 = vunpack.c.l.b16 %v9619
        %v9638 = vunpack.c.l.b16 %v9620
        %v9639 = vpack.c.b16 %v9638, %v9637
        %vm9641 = vcmask 130048
        %v9643 = vsel %vm9641, %v9611, 0
        %9645 = vmatprep.subr.bf16.mxu0 0
        %9646 = vmatpush1.bf16.msra.mxu0 %v9639
        %9647 = vmatprep.subr.bf16.mxu0 0
        %9648 = vmatpush1.bf16.msra.mxu0 0
        %9649 = vmatprep.subr.bf16.mxu0 0
        %9650 = vmatpush1.bf16.msra.mxu0 0
        %9651 = vmatprep.subr.bf16.mxu0 0
        %9652 = vmatpush1.bf16.msra.mxu0 0
        %9653 = vmatprep.subr.bf16.mxu0 0
        %9654 = vmatpush1.bf16.msra.mxu0 0
        %9655 = vmatprep.subr.bf16.mxu0 0
        %9656 = vmatpush1.bf16.msra.mxu0 0
        %9657 = vmatprep.subr.bf16.mxu0 0
        %9658 = vmatpush1.bf16.msra.mxu0 0
        %9659 = vmatprep.subr.bf16.mxu0 0
        %9660 = vmatpush1.bf16.msra.mxu0 0
        %9661 = vmatprep.subr.bf16.mxu0 0
        %9662 = vmatpush1.bf16.msra.mxu0 0
        %9663 = vmatprep.subr.bf16.mxu0 0
        %9664 = vmatpush1.bf16.msra.mxu0 0
        %9665 = vmatprep.subr.bf16.mxu0 0
        %9666 = vmatpush1.bf16.msra.mxu0 0
        %9667 = vmatprep.subr.bf16.mxu0 0
        %9668 = vmatpush1.bf16.msra.mxu0 0
        %9669 = vmatprep.subr.bf16.mxu0 0
        %9670 = vmatpush1.bf16.msra.mxu0 0
        %9671 = vmatprep.subr.bf16.mxu0 0
        %9672 = vmatpush1.bf16.msra.mxu0 0
        %9673 = vmatprep.subr.bf16.mxu0 0
        %9674 = vmatpush1.bf16.msra.mxu0 0
        %9675 = vmatprep.subr.bf16.mxu0 0
        %9676 = vmatpush1.bf16.msra.mxu0 0
        %9677 = vmatprep.mubr.bf16.mxu0 0
        %9678 = vmatmul.mubr.bf16.gmra.mrb[0].mxu0 %v9643
        %v9679 = vpop.f32.mrb[0].mxu0
        %v9680 = vadd.f32 0.0, %v9679
        %v9681 = vpop.f32.mrb[0].mxu0
        %v9682 = vpop.f32.mrb[0].mxu0
        %v9683 = vpop.f32.mrb[0].mxu0
        %9684 = vdwg.mxu0
        %v9687 = vunpack.c.l.b16 %v9621
        %v9688 = vunpack.c.l.b16 %v9622
        %v9689 = vpack.c.b16 %v9688, %v9687
        %v9692 = vsel %vm9641, %v9612, 0
        %9694 = vmatprep.subr.bf16.mxu0 0
        %9695 = vmatpush1.bf16.msra.mxu0 %v9689
        %9696 = vmatprep.subr.bf16.mxu0 0
        %9697 = vmatpush1.bf16.msra.mxu0 0
        %9698 = vmatprep.subr.bf16.mxu0 0
        %9699 = vmatpush1.bf16.msra.mxu0 0
        %9700 = vmatprep.subr.bf16.mxu0 0
        %9701 = vmatpush1.bf16.msra.mxu0 0
        %9702 = vmatprep.subr.bf16.mxu0 0
        %9703 = vmatpush1.bf16.msra.mxu0 0
        %9704 = vmatprep.subr.bf16.mxu0 0
        %9705 = vmatpush1.bf16.msra.mxu0 0
        %9706 = vmatprep.subr.bf16.mxu0 0
        %9707 = vmatpush1.bf16.msra.mxu0 0
        %9708 = vmatprep.subr.bf16.mxu0 0
        %9709 = vmatpush1.bf16.msra.mxu0 0
        %9710 = vmatprep.subr.bf16.mxu0 0
        %9711 = vmatpush1.bf16.msra.mxu0 0
        %9712 = vmatprep.subr.bf16.mxu0 0
        %9713 = vmatpush1.bf16.msra.mxu0 0
        %9714 = vmatprep.subr.bf16.mxu0 0
        %9715 = vmatpush1.bf16.msra.mxu0 0
        %9716 = vmatprep.subr.bf16.mxu0 0
        %9717 = vmatpush1.bf16.msra.mxu0 0
        %9718 = vmatprep.subr.bf16.mxu0 0
        %9719 = vmatpush1.bf16.msra.mxu0 0
        %9720 = vmatprep.subr.bf16.mxu0 0
        %9721 = vmatpush1.bf16.msra.mxu0 0
        %9722 = vmatprep.subr.bf16.mxu0 0
        %9723 = vmatpush1.bf16.msra.mxu0 0
        %9724 = vmatprep.subr.bf16.mxu0 0
        %9725 = vmatpush1.bf16.msra.mxu0 0
        %9726 = vmatprep.mubr.bf16.mxu0 0
        %9727 = vmatmul.mubr.bf16.gmra.mrb[0].mxu0 %v9692
        %v9728 = vpop.f32.mrb[0].mxu0
        %v9729 = vadd.f32 0.0, %v9728
        %v9730 = vpop.f32.mrb[0].mxu0
        %v9731 = vpop.f32.mrb[0].mxu0
        %v9732 = vpop.f32.mrb[0].mxu0
        %9733 = vdwg.mxu0
        %v9736 = vunpack.c.l.b16 %v9623
        %v9737 = vunpack.c.l.b16 %v9624
        %v9738 = vpack.c.b16 %v9737, %v9736
        %v9741 = vsel %vm9641, %v9613, 0
        %9743 = vmatprep.subr.bf16.mxu0 0
        %9744 = vmatpush1.bf16.msra.mxu0 %v9738
        %9745 = vmatprep.subr.bf16.mxu0 0
        %9746 = vmatpush1.bf16.msra.mxu0 0
        %9747 = vmatprep.subr.bf16.mxu0 0
        %9748 = vmatpush1.bf16.msra.mxu0 0
        %9749 = vmatprep.subr.bf16.mxu0 0
        %9750 = vmatpush1.bf16.msra.mxu0 0
        %9751 = vmatprep.subr.bf16.mxu0 0
        %9752 = vmatpush1.bf16.msra.mxu0 0
        %9753 = vmatprep.subr.bf16.mxu0 0
        %9754 = vmatpush1.bf16.msra.mxu0 0
        %9755 = vmatprep.subr.bf16.mxu0 0
        %9756 = vmatpush1.bf16.msra.mxu0 0
        %9757 = vmatprep.subr.bf16.mxu0 0
        %9758 = vmatpush1.bf16.msra.mxu0 0
        %9759 = vmatprep.subr.bf16.mxu0 0
        %9760 = vmatpush1.bf16.msra.mxu0 0
        %9761 = vmatprep.subr.bf16.mxu0 0
        %9762 = vmatpush1.bf16.msra.mxu0 0
        %9763 = vmatprep.subr.bf16.mxu0 0
        %9764 = vmatpush1.bf16.msra.mxu0 0
        %9765 = vmatprep.subr.bf16.mxu0 0
        %9766 = vmatpush1.bf16.msra.mxu0 0
        %9767 = vmatprep.subr.bf16.mxu0 0
        %9768 = vmatpush1.bf16.msra.mxu0 0
        %9769 = vmatprep.subr.bf16.mxu0 0
        %9770 = vmatpush1.bf16.msra.mxu0 0
        %9771 = vmatprep.subr.bf16.mxu0 0
        %9772 = vmatpush1.bf16.msra.mxu0 0
        %9773 = vmatprep.subr.bf16.mxu0 0
        %9774 = vmatpush1.bf16.msra.mxu0 0
        %9775 = vmatprep.mubr.bf16.mxu0 0
        %9776 = vmatmul.mubr.bf16.gmra.mrb[0].mxu0 %v9741
        %v9777 = vpop.f32.mrb[0].mxu0
        %v9778 = vadd.f32 0.0, %v9777
        %v9779 = vpop.f32.mrb[0].mxu0
        %v9780 = vpop.f32.mrb[0].mxu0
        %v9781 = vpop.f32.mrb[0].mxu0
        %9782 = vdwg.mxu0
        %v9785 = vunpack.c.l.b16 %v9625
        %v9786 = vunpack.c.l.b16 %v9626
        %v9787 = vpack.c.b16 %v9786, %v9785
        %v9790 = vsel %vm9641, %v9614, 0
        %9792 = vmatprep.subr.bf16.mxu0 0
        %9793 = vmatpush1.bf16.msra.mxu0 %v9787
        %9794 = vmatprep.subr.bf16.mxu0 0
        %9795 = vmatpush1.bf16.msra.mxu0 0
        %9796 = vmatprep.subr.bf16.mxu0 0
        %9797 = vmatpush1.bf16.msra.mxu0 0
        %9798 = vmatprep.subr.bf16.mxu0 0
        %9799 = vmatpush1.bf16.msra.mxu0 0
        %9800 = vmatprep.subr.bf16.mxu0 0
        %9801 = vmatpush1.bf16.msra.mxu0 0
        %9802 = vmatprep.subr.bf16.mxu0 0
        %9803 = vmatpush1.bf16.msra.mxu0 0
        %9804 = vmatprep.subr.bf16.mxu0 0
        %9805 = vmatpush1.bf16.msra.mxu0 0
        %9806 = vmatprep.subr.bf16.mxu0 0
        %9807 = vmatpush1.bf16.msra.mxu0 0
        %9808 = vmatprep.subr.bf16.mxu0 0
        %9809 = vmatpush1.bf16.msra.mxu0 0
        %9810 = vmatprep.subr.bf16.mxu0 0
        %9811 = vmatpush1.bf16.msra.mxu0 0
        %9812 = vmatprep.subr.bf16.mxu0 0
        %9813 = vmatpush1.bf16.msra.mxu0 0
        %9814 = vmatprep.subr.bf16.mxu0 0
        %9815 = vmatpush1.bf16.msra.mxu0 0
        %9816 = vmatprep.subr.bf16.mxu0 0
        %9817 = vmatpush1.bf16.msra.mxu0 0
        %9818 = vmatprep.subr.bf16.mxu0 0
        %9819 = vmatpush1.bf16.msra.mxu0 0
        %9820 = vmatprep.subr.bf16.mxu0 0
        %9821 = vmatpush1.bf16.msra.mxu0 0
        %9822 = vmatprep.subr.bf16.mxu0 0
        %9823 = vmatpush1.bf16.msra.mxu0 0
        %9824 = vmatprep.mubr.bf16.mxu0 0
        %9825 = vmatmul.mubr.bf16.gmra.mrb[0].mxu0 %v9790
        %v9826 = vpop.f32.mrb[0].mxu0
        %v9827 = vadd.f32 0.0, %v9826
        %v9828 = vpop.f32.mrb[0].mxu0
        %v9829 = vpop.f32.mrb[0].mxu0
        %v9830 = vpop.f32.mrb[0].mxu0
        %9831 = vdwg.mxu0
        %v9834 = vunpack.c.l.b16 %v9627
        %v9835 = vunpack.c.l.b16 %v9628
        %v9836 = vpack.c.b16 %v9835, %v9834
        %v9839 = vsel %vm9641, %v9615, 0
        %9841 = vmatprep.subr.bf16.mxu0 0
        %9842 = vmatpush1.bf16.msra.mxu0 %v9836
        %9843 = vmatprep.subr.bf16.mxu0 0
        %9844 = vmatpush1.bf16.msra.mxu0 0
        %9845 = vmatprep.subr.bf16.mxu0 0
        %9846 = vmatpush1.bf16.msra.mxu0 0
        %9847 = vmatprep.subr.bf16.mxu0 0
        %9848 = vmatpush1.bf16.msra.mxu0 0
        %9849 = vmatprep.subr.bf16.mxu0 0
        %9850 = vmatpush1.bf16.msra.mxu0 0
        %9851 = vmatprep.subr.bf16.mxu0 0
        %9852 = vmatpush1.bf16.msra.mxu0 0
        %9853 = vmatprep.subr.bf16.mxu0 0
        %9854 = vmatpush1.bf16.msra.mxu0 0
        %9855 = vmatprep.subr.bf16.mxu0 0
        %9856 = vmatpush1.bf16.msra.mxu0 0
        %9857 = vmatprep.subr.bf16.mxu0 0
        %9858 = vmatpush1.bf16.msra.mxu0 0
        %9859 = vmatprep.subr.bf16.mxu0 0
        %9860 = vmatpush1.bf16.msra.mxu0 0
        %9861 = vmatprep.subr.bf16.mxu0 0
        %9862 = vmatpush1.bf16.msra.mxu0 0
        %9863 = vmatprep.subr.bf16.mxu0 0
        %9864 = vmatpush1.bf16.msra.mxu0 0
        %9865 = vmatprep.subr.bf16.mxu0 0
        %9866 = vmatpush1.bf16.msra.mxu0 0
        %9867 = vmatprep.subr.bf16.mxu0 0
        %9868 = vmatpush1.bf16.msra.mxu0 0
        %9869 = vmatprep.subr.bf16.mxu0 0
        %9870 = vmatpush1.bf16.msra.mxu0 0
        %9871 = vmatprep.subr.bf16.mxu0 0
        %9872 = vmatpush1.bf16.msra.mxu0 0
        %9873 = vmatprep.mubr.bf16.mxu0 0
        %9874 = vmatmul.mubr.bf16.gmra.mrb[0].mxu0 %v9839
        %v9875 = vpop.f32.mrb[0].mxu0
        %v9876 = vadd.f32 0.0, %v9875
        %v9877 = vpop.f32.mrb[0].mxu0
        %v9878 = vpop.f32.mrb[0].mxu0
        %v9879 = vpop.f32.mrb[0].mxu0
        %9880 = vdwg.mxu0
        %v9883 = vunpack.c.l.b16 %v9629
        %v9884 = vunpack.c.l.b16 %v9630
        %v9885 = vpack.c.b16 %v9884, %v9883
        %v9888 = vsel %vm9641, %v9616, 0
        %9890 = vmatprep.subr.bf16.mxu0 0
        %9891 = vmatpush1.bf16.msra.mxu0 %v9885
        %9892 = vmatprep.subr.bf16.mxu0 0
        %9893 = vmatpush1.bf16.msra.mxu0 0
        %9894 = vmatprep.subr.bf16.mxu0 0
        %9895 = vmatpush1.bf16.msra.mxu0 0
        %9896 = vmatprep.subr.bf16.mxu0 0
        %9897 = vmatpush1.bf16.msra.mxu0 0
        %9898 = vmatprep.subr.bf16.mxu0 0
        %9899 = vmatpush1.bf16.msra.mxu0 0
        %9900 = vmatprep.subr.bf16.mxu0 0
        %9901 = vmatpush1.bf16.msra.mxu0 0
        %9902 = vmatprep.subr.bf16.mxu0 0
        %9903 = vmatpush1.bf16.msra.mxu0 0
        %9904 = vmatprep.subr.bf16.mxu0 0
        %9905 = vmatpush1.bf16.msra.mxu0 0
        %9906 = vmatprep.subr.bf16.mxu0 0
        %9907 = vmatpush1.bf16.msra.mxu0 0
        %9908 = vmatprep.subr.bf16.mxu0 0
        %9909 = vmatpush1.bf16.msra.mxu0 0
        %9910 = vmatprep.subr.bf16.mxu0 0
        %9911 = vmatpush1.bf16.msra.mxu0 0
        %9912 = vmatprep.subr.bf16.mxu0 0
        %9913 = vmatpush1.bf16.msra.mxu0 0
        %9914 = vmatprep.subr.bf16.mxu0 0
        %9915 = vmatpush1.bf16.msra.mxu0 0
        %9916 = vmatprep.subr.bf16.mxu0 0
        %9917 = vmatpush1.bf16.msra.mxu0 0
        %9918 = vmatprep.subr.bf16.mxu0 0
        %9919 = vmatpush1.bf16.msra.mxu0 0
        %9920 = vmatprep.subr.bf16.mxu0 0
        %9921 = vmatpush1.bf16.msra.mxu0 0
        %9922 = vmatprep.mubr.bf16.mxu0 0
        %9923 = vmatmul.mubr.bf16.gmra.mrb[0].mxu0 %v9888
        %v9924 = vpop.f32.mrb[0].mxu0
        %v9925 = vadd.f32 0.0, %v9924
        %v9926 = vpop.f32.mrb[0].mxu0
        %v9927 = vpop.f32.mrb[0].mxu0
        %v9928 = vpop.f32.mrb[0].mxu0
        %9929 = vdwg.mxu0
        %v9932 = vunpack.c.l.b16 %v9631
        %v9933 = vunpack.c.l.b16 %v9632
        %v9934 = vpack.c.b16 %v9933, %v9932
        %v9937 = vsel %vm9641, %v9617, 0
        %9939 = vmatprep.subr.bf16.mxu0 0
        %9940 = vmatpush1.bf16.msra.mxu0 %v9934
        %9941 = vmatprep.subr.bf16.mxu0 0
        %9942 = vmatpush1.bf16.msra.mxu0 0
        %9943 = vmatprep.subr.bf16.mxu0 0
        %9944 = vmatpush1.bf16.msra.mxu0 0
        %9945 = vmatprep.subr.bf16.mxu0 0
        %9946 = vmatpush1.bf16.msra.mxu0 0
        %9947 = vmatprep.subr.bf16.mxu0 0
        %9948 = vmatpush1.bf16.msra.mxu0 0
        %9949 = vmatprep.subr.bf16.mxu0 0
        %9950 = vmatpush1.bf16.msra.mxu0 0
        %9951 = vmatprep.subr.bf16.mxu0 0
        %9952 = vmatpush1.bf16.msra.mxu0 0
        %9953 = vmatprep.subr.bf16.mxu0 0
        %9954 = vmatpush1.bf16.msra.mxu0 0
        %9955 = vmatprep.subr.bf16.mxu0 0
        %9956 = vmatpush1.bf16.msra.mxu0 0
        %9957 = vmatprep.subr.bf16.mxu0 0
        %9958 = vmatpush1.bf16.msra.mxu0 0
        %9959 = vmatprep.subr.bf16.mxu0 0
        %9960 = vmatpush1.bf16.msra.mxu0 0
        %9961 = vmatprep.subr.bf16.mxu0 0
        %9962 = vmatpush1.bf16.msra.mxu0 0
        %9963 = vmatprep.subr.bf16.mxu0 0
        %9964 = vmatpush1.bf16.msra.mxu0 0
        %9965 = vmatprep.subr.bf16.mxu0 0
        %9966 = vmatpush1.bf16.msra.mxu0 0
        %9967 = vmatprep.subr.bf16.mxu0 0
        %9968 = vmatpush1.bf16.msra.mxu0 0
        %9969 = vmatprep.subr.bf16.mxu0 0
        %9970 = vmatpush1.bf16.msra.mxu0 0
        %9971 = vmatprep.mubr.bf16.mxu0 0
        %9972 = vmatmul.mubr.bf16.gmra.mrb[0].mxu0 %v9937
        %v9973 = vpop.f32.mrb[0].mxu0
        %v9974 = vadd.f32 0.0, %v9973
        %v9975 = vpop.f32.mrb[0].mxu0
        %v9976 = vpop.f32.mrb[0].mxu0
        %v9977 = vpop.f32.mrb[0].mxu0
        %9978 = vdwg.mxu0
        %v9981 = vunpack.c.l.b16 %v9633
        %v9982 = vunpack.c.l.b16 %v9634
        %v9983 = vpack.c.b16 %v9982, %v9981
        %v9986 = vsel %vm9641, %v9618, 0
        %9988 = vmatprep.subr.bf16.mxu0 0
        %9989 = vmatpush1.bf16.msra.mxu0 %v9983
        %9990 = vmatprep.subr.bf16.mxu0 0
        %9991 = vmatpush1.bf16.msra.mxu0 0
        %9992 = vmatprep.subr.bf16.mxu0 0
        %9993 = vmatpush1.bf16.msra.mxu0 0
        %9994 = vmatprep.subr.bf16.mxu0 0
        %9995 = vmatpush1.bf16.msra.mxu0 0
        %9996 = vmatprep.subr.bf16.mxu0 0
        %9997 = vmatpush1.bf16.msra.mxu0 0
        %9998 = vmatprep.subr.bf16.mxu0 0
        %9999 = vmatpush1.bf16.msra.mxu0 0
        %10000 = vmatprep.subr.bf16.mxu0 0
        %10001 = vmatpush1.bf16.msra.mxu0 0
        %10002 = vmatprep.subr.bf16.mxu0 0
        %10003 = vmatpush1.bf16.msra.mxu0 0
        %10004 = vmatprep.subr.bf16.mxu0 0
        %10005 = vmatpush1.bf16.msra.mxu0 0
        %10006 = vmatprep.subr.bf16.mxu0 0
        %10007 = vmatpush1.bf16.msra.mxu0 0
        %10008 = vmatprep.subr.bf16.mxu0 0
        %10009 = vmatpush1.bf16.msra.mxu0 0
        %10010 = vmatprep.subr.bf16.mxu0 0
        %10011 = vmatpush1.bf16.msra.mxu0 0
        %10012 = vmatprep.subr.bf16.mxu0 0
        %10013 = vmatpush1.bf16.msra.mxu0 0
        %10014 = vmatprep.subr.bf16.mxu0 0
        %10015 = vmatpush1.bf16.msra.mxu0 0
        %10016 = vmatprep.subr.bf16.mxu0 0
        %10017 = vmatpush1.bf16.msra.mxu0 0
        %10018 = vmatprep.subr.bf16.mxu0 0
        %10019 = vmatpush1.bf16.msra.mxu0 0
        %10020 = vmatprep.mubr.bf16.mxu0 0
        %10021 = vmatmul.mubr.bf16.gmra.mrb[0].mxu0 %v9986
        %v10022 = vpop.f32.mrb[0].mxu0
        %v10023 = vadd.f32 0.0, %v10022
        %v10024 = vpop.f32.mrb[0].mxu0
        %v10025 = vpop.f32.mrb[0].mxu0
        %v10026 = vpop.f32.mrb[0].mxu0
        %10027 = vdwg.mxu0
        %v10028 = vsel %vm3689, %v9680, 0.0
        %v10029 = vsel %vm3689, %v9729, 0.0
        %v10030 = vadd.f32 %v10028, %v10029
        %v10031 = vsel %vm3689, %v9778, 0.0
        %v10032 = vadd.f32 %v10030, %v10031
        %v10033 = vsel %vm3689, %v9827, 0.0
        %v10034 = vadd.f32 %v10032, %v10033
        %v10035 = vsel %vm3689, %v9876, 0.0
        %v10036 = vadd.f32 %v10034, %v10035
        %v10037 = vsel %vm3689, %v9925, 0.0
        %v10038 = vadd.f32 %v10036, %v10037
        %v10039 = vsel %vm3689, %v9974, 0.0
        %v10040 = vadd.f32 %v10038, %v10039
        %v10041 = vsel %vm3689, %v10023, 0.0
        %v10042 = vadd.f32 %v10040, %v10041
        %v10043 = vlaneseq
        %v10044 = vshrl.u32 %v10043, 7
        %v10045 = vsub.s32 0, %v10044
        %v10046 = vrot.slane %v1710, %v10045
        %v10047 = vadd.f32 %v10042, %v10046
        %v10048 = vmax.f32 %v10047, 0.0
        %v10049 = vpack.c.bf16 %v10048, %v10048
        %v10050 = vld [vmem:[%s7] sm:$0xf]
        %v10051 = vld [vmem:[%s7 + $0x4] sm:$0xf]
        %v10052 = vld [vmem:[%s7 + $0x8] sm:$0xf]
        %v10053 = vld [vmem:[%s7 + $0xc] sm:$0xf]
        %v10054 = vlaneseq
        %v10055 = vshrl.u32 %v10054, 7
        %v10056 = vsub.s32 0, %v10055
        %v10057 = vrot.slane %v1711, %v10056
        %v10062 = vunpack.c.l.b16 %v10050
        %v10063 = vunpack.c.l.b16 %v10051
        %v10064 = vunpack.c.l.b16 %v10052
        %v10065 = vunpack.c.l.b16 %v10053
        %v10066 = vpack.c.b16 %v10063, %v10062
        %v10067 = vpack.c.b16 %v10065, %v10064
        %v10071 = vsel %vm3689, %v10049, 0
        %10073 = vmatprep.subr.bf16.mxu0 0
        %10074 = vmatpush1.bf16.msra.mxu0 %v10066
        %10075 = vmatprep.subr.bf16.mxu0 0
        %10076 = vmatpush1.bf16.msra.mxu0 %v10067
        %10077 = vmatprep.subr.bf16.mxu0 0
        %10078 = vmatpush1.bf16.msra.mxu0 0
        %10079 = vmatprep.subr.bf16.mxu0 0
        %10080 = vmatpush1.bf16.msra.mxu0 0
        %10081 = vmatprep.subr.bf16.mxu0 0
        %10082 = vmatpush1.bf16.msra.mxu0 0
        %10083 = vmatprep.subr.bf16.mxu0 0
        %10084 = vmatpush1.bf16.msra.mxu0 0
        %10085 = vmatprep.subr.bf16.mxu0 0
        %10086 = vmatpush1.bf16.msra.mxu0 0
        %10087 = vmatprep.subr.bf16.mxu0 0
        %10088 = vmatpush1.bf16.msra.mxu0 0
        %10089 = vmatprep.subr.bf16.mxu0 0
        %10090 = vmatpush1.bf16.msra.mxu0 0
        %10091 = vmatprep.subr.bf16.mxu0 0
        %10092 = vmatpush1.bf16.msra.mxu0 0
        %10093 = vmatprep.subr.bf16.mxu0 0
        %10094 = vmatpush1.bf16.msra.mxu0 0
        %10095 = vmatprep.subr.bf16.mxu0 0
        %10096 = vmatpush1.bf16.msra.mxu0 0
        %10097 = vmatprep.subr.bf16.mxu0 0
        %10098 = vmatpush1.bf16.msra.mxu0 0
        %10099 = vmatprep.subr.bf16.mxu0 0
        %10100 = vmatpush1.bf16.msra.mxu0 0
        %10101 = vmatprep.subr.bf16.mxu0 0
        %10102 = vmatpush1.bf16.msra.mxu0 0
        %10103 = vmatprep.subr.bf16.mxu0 0
        %10104 = vmatpush1.bf16.msra.mxu0 0
        %10105 = vmatprep.mubr.bf16.mxu0 0
        %10106 = vmatmul.mubr.bf16.gmra.mrb[0].mxu0 %v10071
        %v10107 = vpop.f32.mrb[0].mxu0
        %v10108 = vadd.f32 %v10057, %v10107
        %v10109 = vpop.f32.mrb[0].mxu0
        %v10110 = vpop.f32.mrb[0].mxu0
        %v10111 = vpop.f32.mrb[0].mxu0
        %10112 = vdwg.mxu0
        %10113 = vst.msk [vmem:[%s1447] sm:$0xff] %vm9641, %v10108
        %p10114 = scmp.lt.s32.totalorder %s20, 1
        %s10115 = scalar_select %p10114, %s20, 1
        %s10116 = smul.addr %s10115, 8
        %s10117 = scalar_lea.vmem %s9, %s10116
        // Predicated region
        $region136: #{mlp_with_polyline_encoder.1} parent=126 // pred_check
          %p10118 = pneg %p237
        $region137: #{mlp_with_polyline_encoder.1} parent=126 // pred_check_branch
          %10120 = sbr.rel (%p10118) target = $region139
        $region138: #{mlp_with_polyline_encoder.1} parent=126 // pred_region
          _
        $region139: #{mlp_with_polyline_encoder.1} parent=126 // pred_fallthru
          _
      $region127: #{mlp_with_polyline_encoder.1} parent=5 // pred_fallthru
        _
      %p10121 = scmp.le.s32.totalorder 2, %s15
      // Predicated region
      $region140: #{mlp_with_polyline_encoder.1} parent=5 // pred_check
        %p10122 = pneg %p10121
      $region141: #{mlp_with_polyline_encoder.1} parent=5 // pred_check_branch
        %10124 = sbr.rel (%p10122) target = $region143
      $region142: #{mlp_with_polyline_encoder.1} parent=5 // pred_region
        %s10125 = ssub.s32 %s15, 2
        // Predicated region
        $region144: #{mlp_with_polyline_encoder.1} parent=142 // pred_check
          %p10126 = pneg %p243
        $region145: #{mlp_with_polyline_encoder.1} parent=142 // pred_check_branch
          %10128 = sbr.rel (%p10126) target = $region147
        $region146: #{mlp_with_polyline_encoder.1} parent=142 // pred_region
          %p10129 = scmp.lt.s32.totalorder %s21, 1
          %s10130 = scalar_select %p10129, %s21, 1
          %s10131 = smul.addr %s10130, 8
          %s10132 = scalar_lea.vmem %s9, %s10131
        $region147: #{mlp_with_polyline_encoder.1} parent=142 // pred_fallthru
          _
      $region143: #{mlp_with_polyline_encoder.1} parent=5 // pred_fallthru
        _
    $region6: #{mlp_with_polyline_encoder.1} parent=1 // loop_footer
      %s19 = sadd.s32 1, %s15
    $region7: #{mlp_with_polyline_encoder.1} parent=1 // loop_footer_branch
      %14 = sbr.rel target = $region3
    $region8: #{mlp_with_polyline_encoder.1} parent=1 // loop_exit
      _

</llo_original>
